<compile_context>
chip_gen: v5e
topology: v5e:2x2
jax: 0.10.0
libtpu: 0.0.40
codegen_flags: <defaults>
</compile_context>

<pallas_src>
import jax
import jax.numpy as jnp
from jax import lax
from jax.experimental import pallas as pl
from jax.experimental.pallas import tpu as pltpu


_LANE = 128
_SUBLANE = 8


def _round_up(x, m):
    return ((x + m - 1) // m) * m


def _vmem_limit_bytes():
    """Generation-aware scoped-VMEM request (bytes)."""
    cap = None
    try:
        cap = int(getattr(pltpu.get_tpu_info(), "vmem_capacity_bytes"))
    except Exception:
        cap = None
    if cap is None:
        kind = ""
        try:
            kind = jax.devices()[0].device_kind.lower()
        except Exception:
            pass
        cap = 64 * 1024 * 1024 if "v7" in kind else 128 * 1024 * 1024
    # Leave headroom for compiler-internal scratch / semaphores:
    #   128 MiB physical (v5e/v6e) -> 80 MiB request; 64 MiB (v7x) -> 40 MiB.
    return min(int(cap * 0.625), 100 * 1024 * 1024)


def _tile_vmem_bytes(TH, Wg, Cin, Cmid, Cout, act_itemsize):
    """Per-grid-step VMEM footprint estimate, incl. (8,128) lane padding."""
    ci = _round_up(max(Cin, 1), _LANE)
    cm = _round_up(max(Cmid, 1), _LANE)
    co = _round_up(max(Cout, 1), _LANE)
    LT = (TH + 5) * Wg
    L1 = (TH + 2) * Wg
    L2 = TH * Wg
    b = 2 * LT * ci * act_itemsize            # input slab, double buffered
    b += 2 * L2 * co * 4                      # output tile, double buffered
    b += 2 * L1 * _LANE * 4                   # column-mask block
    b += (TH + 3) * Wg * cm * act_itemsize    # conv2 padded-intermediate scratch
    b += L1 * cm * 4                          # conv1 pre-BN (identity) spill
    b += 2 * L1 * cm * 4                      # headroom: acc / masked-act temporaries
    return b


def _pick_tile_h(H, W, Cin, Cmid, Cout, act_itemsize, budget_bytes):
    """Largest multiple-of-8 tile height whose working set fits the budget."""
    Wg = _round_up(W + 4, _SUBLANE)
    th_cap = min(_round_up(H, _SUBLANE), 256)   # also bound per-step latency
    TH = _SUBLANE
    cand = _SUBLANE
    while cand <= th_cap:
        if _tile_vmem_bytes(cand, Wg, Cin, Cmid, Cout, act_itemsize) <= budget_bytes:
            TH = cand
        else:
            break
        cand += _SUBLANE
    return TH, Wg


def conv_block_nested(x_nhwc, w1_hwio, b1, s1, t1, w2_hwio, b2, s2, t2,
                      *, tile_h=None, matmul_dtype=jnp.float32,
                      x_buffers=2, vmem_limit_bytes=None):
    """Fused conv3x3 + BN(eval) + ReLU + conv3x3 + BN(eval) + skip + ReLU."""
    N, H, W, Cin = x_nhwc.shape
    Cmid = w1_hwio.shape[-1]
    Cout = w2_hwio.shape[-1]
    assert Cmid == Cout, "SNUNet skip-add requires mid_ch == out_ch"

    act_itemsize = jnp.dtype(matmul_dtype).itemsize
    if vmem_limit_bytes is None:
        vmem_limit_bytes = _vmem_limit_bytes()

    if tile_h is None:
        TH, Wg = _pick_tile_h(H, W, Cin, Cmid, Cout, act_itemsize,
                              int(0.65 * vmem_limit_bytes))
        NT = -(-H // TH)
        # v7x megacore balance: prefer an even number of grid steps when tiled.
        if NT > 1 and (N * NT) % 2 == 1:
            TH2 = max(_SUBLANE, _round_up(-(-H // (NT + 1)), _SUBLANE))
            NT2 = -(-H // TH2)
            if (N * NT2) % 2 == 0:
                TH, NT = TH2, NT2
    else:
        TH = max(1, int(tile_h))
        Wg = _round_up(W + 4, _SUBLANE)
        NT = -(-H // TH)

    LT = (TH + 5) * Wg    # per-tile flattened input length (incl. halo + overrun row)
    L1 = (TH + 2) * Wg    # conv1 output length (TH output rows + 2 halo rows)
    L2 = TH * Wg          # conv2 / final output length per tile

    # --- wrapper-side layout prep: single source-side cast, plain XLA ops ---
    # zero-pad 2 rows/cols top/left, enough bottom/right so every tile's
    # flat-offset tap reads stay in-bounds (overruns only feed discarded cols).
    xsrc = x_nhwc.astype(matmul_dtype)
    xpad = jnp.pad(xsrc, ((0, 0), (2, NT * TH + 3 - H), (2, Wg - W - 2), (0, 0)))
    xt = jnp.stack([xpad[:, t * TH: t * TH + TH + 5, :, :] for t in range(NT)], axis=1)
    xt = xt.reshape(N, NT, LT, Cin)

    w1s = w1_hwio.reshape(9, Cin, Cmid).astype(matmul_dtype)
    w2s = w2_hwio.reshape(9, Cmid, Cout).astype(matmul_dtype)
    b1_, s1_, t1_ = (v.reshape(1, Cmid).astype(jnp.float32) for v in (b1, s1, t1))
    b2_, s2_, t2_ = (v.reshape(1, Cout).astype(jnp.float32) for v in (b2, s2, t2))

    # column validity for the conv2 padded intermediate: keep cols 1..W of each
    # flattened row; zero left/right zero-pad and wrap-garbage columns.
    col = jnp.arange(L1, dtype=jnp.int32) % Wg
    cmask = ((col >= 1) & (col <= W)).astype(jnp.float32).reshape(L1, 1)

    g_dtype = matmul_dtype

    def kernel(x_ref, cm_ref, w1_ref, b1_ref, s1_ref, t1_ref,
               w2_ref, b2_ref, s2_ref, t2_ref, out_ref, g_ref, z1_ref):
        t = pl.program_id(1)

        # ---- conv1: 9 flat-offset taps (contiguous, ky*Wg sublane-aligned),
        #      MXU feed already in matmul_dtype (no per-tap cast), f32 acc ----
        acc1 = jnp.zeros((L1, Cmid), jnp.float32)
        for k in range(9):
            ky, kx = divmod(k, 3)
            acc1 = acc1 + jnp.dot(x_ref[pl.ds(ky * Wg + kx, L1), :], w1_ref[k],
                                  preferred_element_type=jnp.float32)
        z1 = acc1 + b1_ref[...]                    # conv1 output (+bias), pre-BN
        z1_ref[...] = z1                           # spill: skip "identity" source

        # ---- bn1 + ReLU, masked once into conv2's zero-padded intermediate ----
        a = jnp.maximum(z1 * s1_ref[...] + t1_ref[...], 0.0)
        p = lax.broadcasted_iota(jnp.int32, (L1, 1), 0)
        row_lo = jnp.where(t == 0, Wg, 0)          # top zero-pad row (tile 0 only)
        row_hi = (H + 1 - t * TH) * Wg             # rows at/after global row H are pad
        keep = (p >= row_lo) & (p < row_hi) & (cm_ref[...] != 0.0)
        g_ref[pl.ds(0, L1), :] = jnp.where(keep, a, 0.0).astype(g_dtype)
        g_ref[pl.ds(L1, Wg), :] = jnp.zeros((Wg, Cmid), g_dtype)  # tiny tail only

        # ---- conv2: same flat-offset tap scheme over the padded intermediate ----
        acc2 = jnp.zeros((L2, Cout), jnp.float32)
        for k in range(9):
            ky, kx = divmod(k, 3)
            acc2 = acc2 + jnp.dot(g_ref[pl.ds(ky * Wg + kx, L2), :], w2_ref[k],
                                  preferred_element_type=jnp.float32)
        y = (acc2 + b2_ref[...]) * s2_ref[...] + t2_ref[...]          # bn2

        # skip-add with conv1(+bias), shifted into the output frame, then ReLU
        identity = z1_ref[pl.ds(Wg + 1, L2), :]
        out_ref[...] = jnp.maximum(y + identity, 0.0)

    cost = pl.CostEstimate(
        flops=2 * N * NT * 9 * (L1 * Cin * Cmid + L2 * Cmid * Cout),
        transcendentals=0,
        bytes_accessed=(N * NT * LT * Cin * act_itemsize
                        + N * NT * L2 * Cout * 4
                        + 9 * (Cin * Cmid + Cmid * Cout) * act_itemsize
                        + 3 * (Cmid + Cout) * 4 + L1 * 4),
    )

    x_index = lambda n, t: (n, t, 0, 0)
    if int(x_buffers) == 2:
        x_spec = pl.BlockSpec((None, None, LT, Cin), x_index)
    else:
        x_spec = pl.BlockSpec((None, None, LT, Cin), x_index,
                              pipeline_mode=pl.Buffered(int(x_buffers)))

    const2 = lambda n, t: (0, 0)
    const3 = lambda n, t: (0, 0, 0)
    out_tiles = pl.pallas_call(
        kernel,
        out_shape=jax.ShapeDtypeStruct((N, NT, L2, Cout), jnp.float32),
        grid=(N, NT),
        in_specs=[
            x_spec,
            pl.BlockSpec((L1, 1), const2),          # column mask (resident)
            pl.BlockSpec((9, Cin, Cmid), const3),   # weights resident across grid
            pl.BlockSpec((1, Cmid), const2),
            pl.BlockSpec((1, Cmid), const2),
            pl.BlockSpec((1, Cmid), const2),
            pl.BlockSpec((9, Cmid, Cout), const3),
            pl.BlockSpec((1, Cout), const2),
            pl.BlockSpec((1, Cout), const2),
            pl.BlockSpec((1, Cout), const2),
        ],
        out_specs=pl.BlockSpec((None, None, L2, Cout), lambda n, t: (n, t, 0, 0)),
        scratch_shapes=[
            pltpu.VMEM(((TH + 3) * Wg, Cmid), g_dtype),   # conv2 padded intermediate
            pltpu.VMEM((L1, Cmid), jnp.float32),          # conv1 pre-BN (identity) spill
        ],
        compiler_params=pltpu.CompilerParams(
            dimension_semantics=("parallel", "parallel"),
            vmem_limit_bytes=int(vmem_limit_bytes),
        ),
        cost_estimate=cost,
    )(xt, cmask, w1s, b1_, s1_, t1_, w2s, b2_, s2_, t2_)

    # drop the padded-width / padded-height garbage columns & rows.
    out = out_tiles.reshape(N, NT * TH, Wg, Cout)[:, :H, :W, :]
    return out


def ref_forward(x_nhwc, w1_hwio, b1, g1, be1, m1, v1,
                w2_hwio, b2, g2, be2, m2, v2, eps=1e-5):
    dn = ('NHWC', 'HWIO', 'NHWC')
    c1 = lax.conv_general_dilated(x_nhwc, w1_hwio, (1, 1), 'SAME',
                                  dimension_numbers=dn) + b1
    identity = c1
    a = jnp.maximum((c1 - m1) / jnp.sqrt(v1 + eps) * g1 + be1, 0.0)
    c2 = lax.conv_general_dilated(a, w2_hwio, (1, 1), 'SAME',
                                  dimension_numbers=dn) + b2
    y = (c2 - m2) / jnp.sqrt(v2 + eps) * g2 + be2
    return jnp.maximum(y + identity, 0.0)


if __name__ == "__main__":
    N, H, W = 2, 16, 16
    in_ch, mid_ch, out_ch = 4, 8, 8   # SNUNet uses mid_ch == out_ch (needed by skip add)
    eps = 1e-5

    key = jax.random.PRNGKey(0)
    ks = jax.random.split(key, 12)

    x = jax.random.normal(ks[0], (N, in_ch, H, W), jnp.float32)        # NCHW like PyTorch
    x_nhwc = jnp.transpose(x, (0, 2, 3, 1))

    # conv1 / conv2 params (HWIO)
    w1 = jax.random.normal(ks[1], (3, 3, in_ch, mid_ch), jnp.float32) * 0.1
    b1 = jax.random.normal(ks[2], (mid_ch,), jnp.float32) * 0.1
    w2 = jax.random.normal(ks[3], (3, 3, mid_ch, out_ch), jnp.float32) * 0.1
    b2 = jax.random.normal(ks[4], (out_ch,), jnp.float32) * 0.1

    # BatchNorm (eval-mode) params: gamma, beta, running_mean, running_var
    g1 = 1.0 + 0.1 * jax.random.normal(ks[5], (mid_ch,), jnp.float32)
    be1 = 0.1 * jax.random.normal(ks[6], (mid_ch,), jnp.float32)
    m1 = 0.1 * jax.random.normal(ks[7], (mid_ch,), jnp.float32)
    v1 = 1.0 + 0.5 * jax.random.uniform(ks[8], (mid_ch,), jnp.float32)
    g2 = 1.0 + 0.1 * jax.random.normal(ks[9], (out_ch,), jnp.float32)
    be2 = 0.1 * jax.random.normal(ks[10], (out_ch,), jnp.float32)
    m2 = 0.1 * jax.random.normal(ks[11], (out_ch,), jnp.float32)
    v2 = 1.0 + 0.5 * jax.random.uniform(ks[0], (out_ch,), jnp.float32)

    # fold eval-mode BN into scale/shift:  bn(z) = z * s + t
    s1 = g1 / jnp.sqrt(v1 + eps)
    t1 = be1 - m1 * s1
    s2 = g2 / jnp.sqrt(v2 + eps)
    t2 = be2 - m2 * s2

    ref = ref_forward(x_nhwc, w1, b1, g1, be1, m1, v1, w2, b2, g2, be2, m2, v2, eps)

    # f32 MXU feed, auto-sized tile (must match the reference to 1e-4).
    out = conv_block_nested(x_nhwc, w1, b1, s1, t1, w2, b2, s2, t2)
    out = jax.block_until_ready(out)
    assert out.shape == (N, H, W, out_ch)
    err = float(jnp.max(jnp.abs(out - ref)))
    assert jnp.allclose(out, ref, atol=1e-4, rtol=1e-4), err

    # bf16 MXU feed (v6e/v7x production mode) + explicit multi-tile path.
    out_bf16 = conv_block_nested(x_nhwc, w1, b1, s1, t1, w2, b2, s2, t2,
                                 tile_h=8, matmul_dtype=jnp.bfloat16)
    out_bf16 = jax.block_until_ready(out_bf16)
    assert out_bf16.shape == (N, H, W, out_ch)
    err_bf16 = float(jnp.max(jnp.abs(out_bf16 - ref)))
    assert jnp.allclose(out_bf16, ref, atol=1e-1, rtol=1e-1), err_bf16

    print("KERNEL_OK")
</pallas_src>

<mosaic_0001>
module attributes {stable_mosaic.version = 11 : i64} {
  func.func @kernel(%arg0: i32, %arg1: i32, %arg2: memref<1x1x504x4xf32, #tpu.memory_space<vmem>>, %arg3: memref<432x1xf32, #tpu.memory_space<vmem>>, %arg4: memref<9x4x8xf32, #tpu.memory_space<vmem>>, %arg5: memref<1x8xf32, #tpu.memory_space<vmem>>, %arg6: memref<1x8xf32, #tpu.memory_space<vmem>>, %arg7: memref<1x8xf32, #tpu.memory_space<vmem>>, %arg8: memref<9x8x8xf32, #tpu.memory_space<vmem>>, %arg9: memref<1x8xf32, #tpu.memory_space<vmem>>, %arg10: memref<1x8xf32, #tpu.memory_space<vmem>>, %arg11: memref<1x8xf32, #tpu.memory_space<vmem>>, %arg12: memref<1x1x384x8xf32, #tpu.memory_space<vmem>>, %arg13: memref<456x8xf32, #tpu.memory_space<vmem>>, %arg14: memref<432x8xf32, #tpu.memory_space<vmem>>) attributes {dimension_semantics = [#tpu.dimension_semantics<parallel>, #tpu.dimension_semantics<parallel>], iteration_bounds = array<i64: 2, 1>, scalar_prefetch = 0 : i64, scratch_operands = 2 : i64, tpu.core_type = #tpu.core_type<tc>, window_params = [{transform_indices = @transform_0, window_bounds = array<i64: 1, 1, 504, 4>}, {pipeline_mode = #tpu.pipeline_mode<synchronous>, transform_indices = @transform_1, window_bounds = array<i64: 432, 1>}, {pipeline_mode = #tpu.pipeline_mode<synchronous>, transform_indices = @transform_2, window_bounds = array<i64: 9, 4, 8>}, {pipeline_mode = #tpu.pipeline_mode<synchronous>, transform_indices = @transform_3, window_bounds = array<i64: 1, 8>}, {pipeline_mode = #tpu.pipeline_mode<synchronous>, transform_indices = @transform_4, window_bounds = array<i64: 1, 8>}, {pipeline_mode = #tpu.pipeline_mode<synchronous>, transform_indices = @transform_5, window_bounds = array<i64: 1, 8>}, {pipeline_mode = #tpu.pipeline_mode<synchronous>, transform_indices = @transform_6, window_bounds = array<i64: 9, 8, 8>}, {pipeline_mode = #tpu.pipeline_mode<synchronous>, transform_indices = @transform_7, window_bounds = array<i64: 1, 8>}, {pipeline_mode = #tpu.pipeline_mode<synchronous>, transform_indices = @transform_8, window_bounds = array<i64: 1, 8>}, {pipeline_mode = #tpu.pipeline_mode<synchronous>, transform_indices = @transform_9, window_bounds = array<i64: 1, 8>}, {transform_indices = @transform_10, window_bounds = array<i64: 1, 1, 384, 8>}]} {
    %cst = arith.constant 0.000000e+00 : f32
    %0 = vector.broadcast %cst : f32 to vector<432x8xf32>
    %c0 = arith.constant 0 : index
    %c0_0 = arith.constant 0 : index
    %c0_1 = arith.constant 0 : index
    %c0_2 = arith.constant 0 : index
    %1 = vector.load %arg2[%c0, %c0_0, %c0_1, %c0_2] : memref<1x1x504x4xf32, #tpu.memory_space<vmem>>, vector<1x1x432x4xf32>
    %2 = vector.shape_cast %1 : vector<1x1x432x4xf32> to vector<432x4xf32>
    %c0_3 = arith.constant 0 : index
    %c0_4 = arith.constant 0 : index
    %c0_5 = arith.constant 0 : index
    %3 = vector.load %arg4[%c0_3, %c0_4, %c0_5] : memref<9x4x8xf32, #tpu.memory_space<vmem>>, vector<1x4x8xf32>
    %4 = vector.shape_cast %3 : vector<1x4x8xf32> to vector<4x8xf32>
    %cst_6 = arith.constant dense<0.000000e+00> : vector<432x8xf32>
    %5 = tpu.matmul %2, %4, %cst_6 {dimension_numbers = #tpu.dot_dimension_numbers<[1], [0], [0], [1], [0, 0, 1, 1], [], []>} : vector<432x4xf32>, vector<4x8xf32>, vector<432x8xf32> -> vector<432x8xf32>
    %6 = arith.addf %0, %5 : vector<432x8xf32>
    %c0_7 = arith.constant 0 : index
    %c0_8 = arith.constant 0 : index
    %c1 = arith.constant 1 : index
    %c0_9 = arith.constant 0 : index
    %7 = vector.load %arg2[%c0_7, %c0_8, %c1, %c0_9] : memref<1x1x504x4xf32, #tpu.memory_space<vmem>>, vector<1x1x432x4xf32>
    %8 = vector.shape_cast %7 : vector<1x1x432x4xf32> to vector<432x4xf32>
    %c1_10 = arith.constant 1 : index
    %c0_11 = arith.constant 0 : index
    %c0_12 = arith.constant 0 : index
    %9 = vector.load %arg4[%c1_10, %c0_11, %c0_12] : memref<9x4x8xf32, #tpu.memory_space<vmem>>, vector<1x4x8xf32>
    %10 = vector.shape_cast %9 : vector<1x4x8xf32> to vector<4x8xf32>
    %cst_13 = arith.constant dense<0.000000e+00> : vector<432x8xf32>
    %11 = tpu.matmul %8, %10, %cst_13 {dimension_numbers = #tpu.dot_dimension_numbers<[1], [0], [0], [1], [0, 0, 1, 1], [], []>} : vector<432x4xf32>, vector<4x8xf32>, vector<432x8xf32> -> vector<432x8xf32>
    %12 = arith.addf %6, %11 : vector<432x8xf32>
    %c0_14 = arith.constant 0 : index
    %c0_15 = arith.constant 0 : index
    %c2 = arith.constant 2 : index
    %c0_16 = arith.constant 0 : index
    %13 = vector.load %arg2[%c0_14, %c0_15, %c2, %c0_16] : memref<1x1x504x4xf32, #tpu.memory_space<vmem>>, vector<1x1x432x4xf32>
    %14 = vector.shape_cast %13 : vector<1x1x432x4xf32> to vector<432x4xf32>
    %c2_17 = arith.constant 2 : index
    %c0_18 = arith.constant 0 : index
    %c0_19 = arith.constant 0 : index
    %15 = vector.load %arg4[%c2_17, %c0_18, %c0_19] : memref<9x4x8xf32, #tpu.memory_space<vmem>>, vector<1x4x8xf32>
    %16 = vector.shape_cast %15 : vector<1x4x8xf32> to vector<4x8xf32>
    %cst_20 = arith.constant dense<0.000000e+00> : vector<432x8xf32>
    %17 = tpu.matmul %14, %16, %cst_20 {dimension_numbers = #tpu.dot_dimension_numbers<[1], [0], [0], [1], [0, 0, 1, 1], [], []>} : vector<432x4xf32>, vector<4x8xf32>, vector<432x8xf32> -> vector<432x8xf32>
    %18 = arith.addf %12, %17 : vector<432x8xf32>
    %c0_21 = arith.constant 0 : index
    %c0_22 = arith.constant 0 : index
    %c24 = arith.constant 24 : index
    %c0_23 = arith.constant 0 : index
    %19 = vector.load %arg2[%c0_21, %c0_22, %c24, %c0_23] : memref<1x1x504x4xf32, #tpu.memory_space<vmem>>, vector<1x1x432x4xf32>
    %20 = vector.shape_cast %19 : vector<1x1x432x4xf32> to vector<432x4xf32>
    %c3 = arith.constant 3 : index
    %c0_24 = arith.constant 0 : index
    %c0_25 = arith.constant 0 : index
    %21 = vector.load %arg4[%c3, %c0_24, %c0_25] : memref<9x4x8xf32, #tpu.memory_space<vmem>>, vector<1x4x8xf32>
    %22 = vector.shape_cast %21 : vector<1x4x8xf32> to vector<4x8xf32>
    %cst_26 = arith.constant dense<0.000000e+00> : vector<432x8xf32>
    %23 = tpu.matmul %20, %22, %cst_26 {dimension_numbers = #tpu.dot_dimension_numbers<[1], [0], [0], [1], [0, 0, 1, 1], [], []>} : vector<432x4xf32>, vector<4x8xf32>, vector<432x8xf32> -> vector<432x8xf32>
    %24 = arith.addf %18, %23 : vector<432x8xf32>
    %c0_27 = arith.constant 0 : index
    %c0_28 = arith.constant 0 : index
    %c25 = arith.constant 25 : index
    %c0_29 = arith.constant 0 : index
    %25 = vector.load %arg2[%c0_27, %c0_28, %c25, %c0_29] : memref<1x1x504x4xf32, #tpu.memory_space<vmem>>, vector<1x1x432x4xf32>
    %26 = vector.shape_cast %25 : vector<1x1x432x4xf32> to vector<432x4xf32>
    %c4 = arith.constant 4 : index
    %c0_30 = arith.constant 0 : index
    %c0_31 = arith.constant 0 : index
    %27 = vector.load %arg4[%c4, %c0_30, %c0_31] : memref<9x4x8xf32, #tpu.memory_space<vmem>>, vector<1x4x8xf32>
    %28 = vector.shape_cast %27 : vector<1x4x8xf32> to vector<4x8xf32>
    %cst_32 = arith.constant dense<0.000000e+00> : vector<432x8xf32>
    %29 = tpu.matmul %26, %28, %cst_32 {dimension_numbers = #tpu.dot_dimension_numbers<[1], [0], [0], [1], [0, 0, 1, 1], [], []>} : vector<432x4xf32>, vector<4x8xf32>, vector<432x8xf32> -> vector<432x8xf32>
    %30 = arith.addf %24, %29 : vector<432x8xf32>
    %c0_33 = arith.constant 0 : index
    %c0_34 = arith.constant 0 : index
    %c26 = arith.constant 26 : index
    %c0_35 = arith.constant 0 : index
    %31 = vector.load %arg2[%c0_33, %c0_34, %c26, %c0_35] : memref<1x1x504x4xf32, #tpu.memory_space<vmem>>, vector<1x1x432x4xf32>
    %32 = vector.shape_cast %31 : vector<1x1x432x4xf32> to vector<432x4xf32>
    %c5 = arith.constant 5 : index
    %c0_36 = arith.constant 0 : index
    %c0_37 = arith.constant 0 : index
    %33 = vector.load %arg4[%c5, %c0_36, %c0_37] : memref<9x4x8xf32, #tpu.memory_space<vmem>>, vector<1x4x8xf32>
    %34 = vector.shape_cast %33 : vector<1x4x8xf32> to vector<4x8xf32>
    %cst_38 = arith.constant dense<0.000000e+00> : vector<432x8xf32>
    %35 = tpu.matmul %32, %34, %cst_38 {dimension_numbers = #tpu.dot_dimension_numbers<[1], [0], [0], [1], [0, 0, 1, 1], [], []>} : vector<432x4xf32>, vector<4x8xf32>, vector<432x8xf32> -> vector<432x8xf32>
    %36 = arith.addf %30, %35 : vector<432x8xf32>
    %c0_39 = arith.constant 0 : index
    %c0_40 = arith.constant 0 : index
    %c48 = arith.constant 48 : index
    %c0_41 = arith.constant 0 : index
    %37 = vector.load %arg2[%c0_39, %c0_40, %c48, %c0_41] : memref<1x1x504x4xf32, #tpu.memory_space<vmem>>, vector<1x1x432x4xf32>
    %38 = vector.shape_cast %37 : vector<1x1x432x4xf32> to vector<432x4xf32>
    %c6 = arith.constant 6 : index
    %c0_42 = arith.constant 0 : index
    %c0_43 = arith.constant 0 : index
    %39 = vector.load %arg4[%c6, %c0_42, %c0_43] : memref<9x4x8xf32, #tpu.memory_space<vmem>>, vector<1x4x8xf32>
    %40 = vector.shape_cast %39 : vector<1x4x8xf32> to vector<4x8xf32>
    %cst_44 = arith.constant dense<0.000000e+00> : vector<432x8xf32>
    %41 = tpu.matmul %38, %40, %cst_44 {dimension_numbers = #tpu.dot_dimension_numbers<[1], [0], [0], [1], [0, 0, 1, 1], [], []>} : vector<432x4xf32>, vector<4x8xf32>, vector<432x8xf32> -> vector<432x8xf32>
    %42 = arith.addf %36, %41 : vector<432x8xf32>
    %c0_45 = arith.constant 0 : index
    %c0_46 = arith.constant 0 : index
    %c49 = arith.constant 49 : index
    %c0_47 = arith.constant 0 : index
    %43 = vector.load %arg2[%c0_45, %c0_46, %c49, %c0_47] : memref<1x1x504x4xf32, #tpu.memory_space<vmem>>, vector<1x1x432x4xf32>
    %44 = vector.shape_cast %43 : vector<1x1x432x4xf32> to vector<432x4xf32>
    %c7 = arith.constant 7 : index
    %c0_48 = arith.constant 0 : index
    %c0_49 = arith.constant 0 : index
    %45 = vector.load %arg4[%c7, %c0_48, %c0_49] : memref<9x4x8xf32, #tpu.memory_space<vmem>>, vector<1x4x8xf32>
    %46 = vector.shape_cast %45 : vector<1x4x8xf32> to vector<4x8xf32>
    %cst_50 = arith.constant dense<0.000000e+00> : vector<432x8xf32>
    %47 = tpu.matmul %44, %46, %cst_50 {dimension_numbers = #tpu.dot_dimension_numbers<[1], [0], [0], [1], [0, 0, 1, 1], [], []>} : vector<432x4xf32>, vector<4x8xf32>, vector<432x8xf32> -> vector<432x8xf32>
    %48 = arith.addf %42, %47 : vector<432x8xf32>
    %c0_51 = arith.constant 0 : index
    %c0_52 = arith.constant 0 : index
    %c50 = arith.constant 50 : index
    %c0_53 = arith.constant 0 : index
    %49 = vector.load %arg2[%c0_51, %c0_52, %c50, %c0_53] : memref<1x1x504x4xf32, #tpu.memory_space<vmem>>, vector<1x1x432x4xf32>
    %50 = vector.shape_cast %49 : vector<1x1x432x4xf32> to vector<432x4xf32>
    %c8 = arith.constant 8 : index
    %c0_54 = arith.constant 0 : index
    %c0_55 = arith.constant 0 : index
    %51 = vector.load %arg4[%c8, %c0_54, %c0_55] : memref<9x4x8xf32, #tpu.memory_space<vmem>>, vector<1x4x8xf32>
    %52 = vector.shape_cast %51 : vector<1x4x8xf32> to vector<4x8xf32>
    %cst_56 = arith.constant dense<0.000000e+00> : vector<432x8xf32>
    %53 = tpu.matmul %50, %52, %cst_56 {dimension_numbers = #tpu.dot_dimension_numbers<[1], [0], [0], [1], [0, 0, 1, 1], [], []>} : vector<432x4xf32>, vector<4x8xf32>, vector<432x8xf32> -> vector<432x8xf32>
    %54 = arith.addf %48, %53 : vector<432x8xf32>
    %c0_57 = arith.constant 0 : index
    %c0_58 = arith.constant 0 : index
    %55 = vector.load %arg5[%c0_57, %c0_58] : memref<1x8xf32, #tpu.memory_space<vmem>>, vector<1x8xf32>
    %56 = vector.broadcast %55 : vector<1x8xf32> to vector<432x8xf32>
    %57 = arith.addf %54, %56 : vector<432x8xf32>
    %c0_59 = arith.constant 0 : index
    %c0_60 = arith.constant 0 : index
    %58 = vector.load %arg14[%c0_59, %c0_60] : memref<432x8xf32, #tpu.memory_space<vmem>>, vector<432x8xf32>
    tpu.vector_store %arg14[%c0_59, %c0_60], %57 {strides = array<i32>} : memref<432x8xf32, #tpu.memory_space<vmem>>, vector<432x8xf32>,
    %c0_61 = arith.constant 0 : index
    %c0_62 = arith.constant 0 : index
    %59 = vector.load %arg6[%c0_61, %c0_62] : memref<1x8xf32, #tpu.memory_space<vmem>>, vector<1x8xf32>
    %60 = vector.broadcast %59 : vector<1x8xf32> to vector<432x8xf32>
    %61 = arith.mulf %57, %60 : vector<432x8xf32>
    %c0_63 = arith.constant 0 : index
    %c0_64 = arith.constant 0 : index
    %62 = vector.load %arg7[%c0_63, %c0_64] : memref<1x8xf32, #tpu.memory_space<vmem>>, vector<1x8xf32>
    %63 = vector.broadcast %62 : vector<1x8xf32> to vector<432x8xf32>
    %64 = arith.addf %61, %63 : vector<432x8xf32>
    %cst_65 = arith.constant 0.000000e+00 : f32
    %65 = vector.broadcast %cst_65 : f32 to vector<432x8xf32>
    %66 = arith.maximumf %64, %65 : vector<432x8xf32>
    %67 = tpu.iota {dimensions = array<i32: 0>} : vector<432x1xi32>
    %c0_i32 = arith.constant 0 : i32
    %68 = arith.cmpi eq, %arg1, %c0_i32 : i32
    %c24_i32 = arith.constant 24 : i32
    %c0_i32_66 = arith.constant 0 : i32
    %69 = arith.select %68, %c24_i32, %c0_i32_66 : i32
    %c16_i32 = arith.constant 16 : i32
    %70 = arith.muli %arg1, %c16_i32 : i32
    %c17_i32 = arith.constant 17 : i32
    %71 = arith.subi %c17_i32, %70 : i32
    %c24_i32_67 = arith.constant 24 : i32
    %72 = arith.muli %71, %c24_i32_67 : i32
    %73 = vector.broadcast %69 : i32 to vector<432x1xi32>
    %74 = arith.cmpi sge, %67, %73 : vector<432x1xi32>
    %75 = vector.broadcast %72 : i32 to vector<432x1xi32>
    %76 = arith.cmpi slt, %67, %75 : vector<432x1xi32>
    %77 = arith.andi %74, %76 : vector<432x1xi1>
    %c0_68 = arith.constant 0 : index
    %c0_69 = arith.constant 0 : index
    %78 = vector.load %arg3[%c0_68, %c0_69] : memref<432x1xf32, #tpu.memory_space<vmem>>, vector<432x1xf32>
    %cst_70 = arith.constant 0.000000e+00 : f32
    %79 = vector.broadcast %cst_70 : f32 to vector<432x1xf32>
    %80 = arith.cmpf one, %78, %79 : vector<432x1xf32>
    %81 = arith.andi %77, %80 : vector<432x1xi1>
    %cst_71 = arith.constant 0.000000e+00 : f32
    %82 = vector.shape_cast %81 : vector<432x1xi1> to vector<432x1xi1>
    %83 = vector.broadcast %82 : vector<432x1xi1> to vector<432x8xi1>
    %84 = vector.broadcast %cst_71 : f32 to vector<432x8xf32>
    %85 = arith.select %83, %66, %84 : vector<432x8xi1>, vector<432x8xf32>
    %c0_72 = arith.constant 0 : index
    %c0_73 = arith.constant 0 : index
    %86 = vector.load %arg13[%c0_72, %c0_73] : memref<456x8xf32, #tpu.memory_space<vmem>>, vector<432x8xf32>
    tpu.vector_store %arg13[%c0_72, %c0_73], %85 {strides = array<i32>} : memref<456x8xf32, #tpu.memory_space<vmem>>, vector<432x8xf32>,
    %cst_74 = arith.constant 0.000000e+00 : f32
    %87 = vector.broadcast %cst_74 : f32 to vector<24x8xf32>
    %c432 = arith.constant 432 : index
    %c0_75 = arith.constant 0 : index
    %88 = vector.load %arg13[%c432, %c0_75] : memref<456x8xf32, #tpu.memory_space<vmem>>, vector<24x8xf32>
    tpu.vector_store %arg13[%c432, %c0_75], %87 {strides = array<i32>} : memref<456x8xf32, #tpu.memory_space<vmem>>, vector<24x8xf32>,
    %cst_76 = arith.constant 0.000000e+00 : f32
    %89 = vector.broadcast %cst_76 : f32 to vector<384x8xf32>
    %c0_77 = arith.constant 0 : index
    %c0_78 = arith.constant 0 : index
    %90 = vector.load %arg13[%c0_77, %c0_78] : memref<456x8xf32, #tpu.memory_space<vmem>>, vector<384x8xf32>
    %c0_79 = arith.constant 0 : index
    %c0_80 = arith.constant 0 : index
    %c0_81 = arith.constant 0 : index
    %91 = vector.load %arg8[%c0_79, %c0_80, %c0_81] : memref<9x8x8xf32, #tpu.memory_space<vmem>>, vector<1x8x8xf32>
    %92 = vector.shape_cast %91 : vector<1x8x8xf32> to vector<8x8xf32>
    %cst_82 = arith.constant dense<0.000000e+00> : vector<384x8xf32>
    %93 = tpu.matmul %90, %92, %cst_82 {dimension_numbers = #tpu.dot_dimension_numbers<[1], [0], [0], [1], [0, 0, 1, 1], [], []>} : vector<384x8xf32>, vector<8x8xf32>, vector<384x8xf32> -> vector<384x8xf32>
    %94 = arith.addf %89, %93 : vector<384x8xf32>
    %c1_83 = arith.constant 1 : index
    %c0_84 = arith.constant 0 : index
    %95 = vector.load %arg13[%c1_83, %c0_84] : memref<456x8xf32, #tpu.memory_space<vmem>>, vector<384x8xf32>
    %c1_85 = arith.constant 1 : index
    %c0_86 = arith.constant 0 : index
    %c0_87 = arith.constant 0 : index
    %96 = vector.load %arg8[%c1_85, %c0_86, %c0_87] : memref<9x8x8xf32, #tpu.memory_space<vmem>>, vector<1x8x8xf32>
    %97 = vector.shape_cast %96 : vector<1x8x8xf32> to vector<8x8xf32>
    %cst_88 = arith.constant dense<0.000000e+00> : vector<384x8xf32>
    %98 = tpu.matmul %95, %97, %cst_88 {dimension_numbers = #tpu.dot_dimension_numbers<[1], [0], [0], [1], [0, 0, 1, 1], [], []>} : vector<384x8xf32>, vector<8x8xf32>, vector<384x8xf32> -> vector<384x8xf32>
    %99 = arith.addf %94, %98 : vector<384x8xf32>
    %c2_89 = arith.constant 2 : index
    %c0_90 = arith.constant 0 : index
    %100 = vector.load %arg13[%c2_89, %c0_90] : memref<456x8xf32, #tpu.memory_space<vmem>>, vector<384x8xf32>
    %c2_91 = arith.constant 2 : index
    %c0_92 = arith.constant 0 : index
    %c0_93 = arith.constant 0 : index
    %101 = vector.load %arg8[%c2_91, %c0_92, %c0_93] : memref<9x8x8xf32, #tpu.memory_space<vmem>>, vector<1x8x8xf32>
    %102 = vector.shape_cast %101 : vector<1x8x8xf32> to vector<8x8xf32>
    %cst_94 = arith.constant dense<0.000000e+00> : vector<384x8xf32>
    %103 = tpu.matmul %100, %102, %cst_94 {dimension_numbers = #tpu.dot_dimension_numbers<[1], [0], [0], [1], [0, 0, 1, 1], [], []>} : vector<384x8xf32>, vector<8x8xf32>, vector<384x8xf32> -> vector<384x8xf32>
    %104 = arith.addf %99, %103 : vector<384x8xf32>
    %c24_95 = arith.constant 24 : index
    %c0_96 = arith.constant 0 : index
    %105 = vector.load %arg13[%c24_95, %c0_96] : memref<456x8xf32, #tpu.memory_space<vmem>>, vector<384x8xf32>
    %c3_97 = arith.constant 3 : index
    %c0_98 = arith.constant 0 : index
    %c0_99 = arith.constant 0 : index
    %106 = vector.load %arg8[%c3_97, %c0_98, %c0_99] : memref<9x8x8xf32, #tpu.memory_space<vmem>>, vector<1x8x8xf32>
    %107 = vector.shape_cast %106 : vector<1x8x8xf32> to vector<8x8xf32>
    %cst_100 = arith.constant dense<0.000000e+00> : vector<384x8xf32>
    %108 = tpu.matmul %105, %107, %cst_100 {dimension_numbers = #tpu.dot_dimension_numbers<[1], [0], [0], [1], [0, 0, 1, 1], [], []>} : vector<384x8xf32>, vector<8x8xf32>, vector<384x8xf32> -> vector<384x8xf32>
    %109 = arith.addf %104, %108 : vector<384x8xf32>
    %c25_101 = arith.constant 25 : index
    %c0_102 = arith.constant 0 : index
    %110 = vector.load %arg13[%c25_101, %c0_102] : memref<456x8xf32, #tpu.memory_space<vmem>>, vector<384x8xf32>
    %c4_103 = arith.constant 4 : index
    %c0_104 = arith.constant 0 : index
    %c0_105 = arith.constant 0 : index
    %111 = vector.load %arg8[%c4_103, %c0_104, %c0_105] : memref<9x8x8xf32, #tpu.memory_space<vmem>>, vector<1x8x8xf32>
    %112 = vector.shape_cast %111 : vector<1x8x8xf32> to vector<8x8xf32>
    %cst_106 = arith.constant dense<0.000000e+00> : vector<384x8xf32>
    %113 = tpu.matmul %110, %112, %cst_106 {dimension_numbers = #tpu.dot_dimension_numbers<[1], [0], [0], [1], [0, 0, 1, 1], [], []>} : vector<384x8xf32>, vector<8x8xf32>, vector<384x8xf32> -> vector<384x8xf32>
    %114 = arith.addf %109, %113 : vector<384x8xf32>
    %c26_107 = arith.constant 26 : index
    %c0_108 = arith.constant 0 : index
    %115 = vector.load %arg13[%c26_107, %c0_108] : memref<456x8xf32, #tpu.memory_space<vmem>>, vector<384x8xf32>
    %c5_109 = arith.constant 5 : index
    %c0_110 = arith.constant 0 : index
    %c0_111 = arith.constant 0 : index
    %116 = vector.load %arg8[%c5_109, %c0_110, %c0_111] : memref<9x8x8xf32, #tpu.memory_space<vmem>>, vector<1x8x8xf32>
    %117 = vector.shape_cast %116 : vector<1x8x8xf32> to vector<8x8xf32>
    %cst_112 = arith.constant dense<0.000000e+00> : vector<384x8xf32>
    %118 = tpu.matmul %115, %117, %cst_112 {dimension_numbers = #tpu.dot_dimension_numbers<[1], [0], [0], [1], [0, 0, 1, 1], [], []>} : vector<384x8xf32>, vector<8x8xf32>, vector<384x8xf32> -> vector<384x8xf32>
    %119 = arith.addf %114, %118 : vector<384x8xf32>
    %c48_113 = arith.constant 48 : index
    %c0_114 = arith.constant 0 : index
    %120 = vector.load %arg13[%c48_113, %c0_114] : memref<456x8xf32, #tpu.memory_space<vmem>>, vector<384x8xf32>
    %c6_115 = arith.constant 6 : index
    %c0_116 = arith.constant 0 : index
    %c0_117 = arith.constant 0 : index
    %121 = vector.load %arg8[%c6_115, %c0_116, %c0_117] : memref<9x8x8xf32, #tpu.memory_space<vmem>>, vector<1x8x8xf32>
    %122 = vector.shape_cast %121 : vector<1x8x8xf32> to vector<8x8xf32>
    %cst_118 = arith.constant dense<0.000000e+00> : vector<384x8xf32>
    %123 = tpu.matmul %120, %122, %cst_118 {dimension_numbers = #tpu.dot_dimension_numbers<[1], [0], [0], [1], [0, 0, 1, 1], [], []>} : vector<384x8xf32>, vector<8x8xf32>, vector<384x8xf32> -> vector<384x8xf32>
    %124 = arith.addf %119, %123 : vector<384x8xf32>
    %c49_119 = arith.constant 49 : index
    %c0_120 = arith.constant 0 : index
    %125 = vector.load %arg13[%c49_119, %c0_120] : memref<456x8xf32, #tpu.memory_space<vmem>>, vector<384x8xf32>
    %c7_121 = arith.constant 7 : index
    %c0_122 = arith.constant 0 : index
    %c0_123 = arith.constant 0 : index
    %126 = vector.load %arg8[%c7_121, %c0_122, %c0_123] : memref<9x8x8xf32, #tpu.memory_space<vmem>>, vector<1x8x8xf32>
    %127 = vector.shape_cast %126 : vector<1x8x8xf32> to vector<8x8xf32>
    %cst_124 = arith.constant dense<0.000000e+00> : vector<384x8xf32>
    %128 = tpu.matmul %125, %127, %cst_124 {dimension_numbers = #tpu.dot_dimension_numbers<[1], [0], [0], [1], [0, 0, 1, 1], [], []>} : vector<384x8xf32>, vector<8x8xf32>, vector<384x8xf32> -> vector<384x8xf32>
    %129 = arith.addf %124, %128 : vector<384x8xf32>
    %c50_125 = arith.constant 50 : index
    %c0_126 = arith.constant 0 : index
    %130 = vector.load %arg13[%c50_125, %c0_126] : memref<456x8xf32, #tpu.memory_space<vmem>>, vector<384x8xf32>
    %c8_127 = arith.constant 8 : index
    %c0_128 = arith.constant 0 : index
    %c0_129 = arith.constant 0 : index
    %131 = vector.load %arg8[%c8_127, %c0_128, %c0_129] : memref<9x8x8xf32, #tpu.memory_space<vmem>>, vector<1x8x8xf32>
    %132 = vector.shape_cast %131 : vector<1x8x8xf32> to vector<8x8xf32>
    %cst_130 = arith.constant dense<0.000000e+00> : vector<384x8xf32>
    %133 = tpu.matmul %130, %132, %cst_130 {dimension_numbers = #tpu.dot_dimension_numbers<[1], [0], [0], [1], [0, 0, 1, 1], [], []>} : vector<384x8xf32>, vector<8x8xf32>, vector<384x8xf32> -> vector<384x8xf32>
    %134 = arith.addf %129, %133 : vector<384x8xf32>
    %c0_131 = arith.constant 0 : index
    %c0_132 = arith.constant 0 : index
    %135 = vector.load %arg9[%c0_131, %c0_132] : memref<1x8xf32, #tpu.memory_space<vmem>>, vector<1x8xf32>
    %136 = vector.broadcast %135 : vector<1x8xf32> to vector<384x8xf32>
    %137 = arith.addf %134, %136 : vector<384x8xf32>
    %c0_133 = arith.constant 0 : index
    %c0_134 = arith.constant 0 : index
    %138 = vector.load %arg10[%c0_133, %c0_134] : memref<1x8xf32, #tpu.memory_space<vmem>>, vector<1x8xf32>
    %139 = vector.broadcast %138 : vector<1x8xf32> to vector<384x8xf32>
    %140 = arith.mulf %137, %139 : vector<384x8xf32>
    %c0_135 = arith.constant 0 : index
    %c0_136 = arith.constant 0 : index
    %141 = vector.load %arg11[%c0_135, %c0_136] : memref<1x8xf32, #tpu.memory_space<vmem>>, vector<1x8xf32>
    %142 = vector.broadcast %141 : vector<1x8xf32> to vector<384x8xf32>
    %143 = arith.addf %140, %142 : vector<384x8xf32>
    %c25_137 = arith.constant 25 : index
    %c0_138 = arith.constant 0 : index
    %144 = vector.load %arg14[%c25_137, %c0_138] : memref<432x8xf32, #tpu.memory_space<vmem>>, vector<384x8xf32>
    %145 = arith.addf %143, %144 : vector<384x8xf32>
    %cst_139 = arith.constant 0.000000e+00 : f32
    %146 = vector.broadcast %cst_139 : f32 to vector<384x8xf32>
    %147 = arith.maximumf %145, %146 : vector<384x8xf32>
    %c0_140 = arith.constant 0 : index
    %c0_141 = arith.constant 0 : index
    %c0_142 = arith.constant 0 : index
    %c0_143 = arith.constant 0 : index
    %148 = vector.load %arg12[%c0_140, %c0_141, %c0_142, %c0_143] : memref<1x1x384x8xf32, #tpu.memory_space<vmem>>, vector<1x1x384x8xf32>
    %149 = vector.shape_cast %148 : vector<1x1x384x8xf32> to vector<384x8xf32>
    %150 = vector.shape_cast %147 : vector<384x8xf32> to vector<1x1x384x8xf32>
    tpu.vector_store %arg12[%c0_140, %c0_141, %c0_142, %c0_143], %150 {strides = array<i32>} : memref<1x1x384x8xf32, #tpu.memory_space<vmem>>, vector<1x1x384x8xf32>,
    return
  }
  func.func @transform_0(%arg0: i32, %arg1: i32) -> (i32, i32, i32, i32) {
    %c0_i32 = arith.constant 0 : i32
    %c0_i32_0 = arith.constant 0 : i32
    %c0_i32_1 = arith.constant 0 : i32
    return %arg0, %arg1, %c0_i32, %c0_i32_0 : i32, i32, i32, i32
  }
  func.func @transform_1(%arg0: i32, %arg1: i32) -> (i32, i32) {
    %c0_i32 = arith.constant 0 : i32
    %c0_i32_0 = arith.constant 0 : i32
    %c0_i32_1 = arith.constant 0 : i32
    return %c0_i32, %c0_i32_0 : i32, i32
  }
  func.func @transform_2(%arg0: i32, %arg1: i32) -> (i32, i32, i32) {
    %c0_i32 = arith.constant 0 : i32
    %c0_i32_0 = arith.constant 0 : i32
    %c0_i32_1 = arith.constant 0 : i32
    %c0_i32_2 = arith.constant 0 : i32
    return %c0_i32, %c0_i32_0, %c0_i32_1 : i32, i32, i32
  }
  func.func @transform_3(%arg0: i32, %arg1: i32) -> (i32, i32) {
    %c0_i32 = arith.constant 0 : i32
    %c0_i32_0 = arith.constant 0 : i32
    %c0_i32_1 = arith.constant 0 : i32
    return %c0_i32, %c0_i32_0 : i32, i32
  }
  func.func @transform_4(%arg0: i32, %arg1: i32) -> (i32, i32) {
    %c0_i32 = arith.constant 0 : i32
    %c0_i32_0 = arith.constant 0 : i32
    %c0_i32_1 = arith.constant 0 : i32
    return %c0_i32, %c0_i32_0 : i32, i32
  }
  func.func @transform_5(%arg0: i32, %arg1: i32) -> (i32, i32) {
    %c0_i32 = arith.constant 0 : i32
    %c0_i32_0 = arith.constant 0 : i32
    %c0_i32_1 = arith.constant 0 : i32
    return %c0_i32, %c0_i32_0 : i32, i32
  }
  func.func @transform_6(%arg0: i32, %arg1: i32) -> (i32, i32, i32) {
    %c0_i32 = arith.constant 0 : i32
    %c0_i32_0 = arith.constant 0 : i32
    %c0_i32_1 = arith.constant 0 : i32
    %c0_i32_2 = arith.constant 0 : i32
    return %c0_i32, %c0_i32_0, %c0_i32_1 : i32, i32, i32
  }
  func.func @transform_7(%arg0: i32, %arg1: i32) -> (i32, i32) {
    %c0_i32 = arith.constant 0 : i32
    %c0_i32_0 = arith.constant 0 : i32
    %c0_i32_1 = arith.constant 0 : i32
    return %c0_i32, %c0_i32_0 : i32, i32
  }
  func.func @transform_8(%arg0: i32, %arg1: i32) -> (i32, i32) {
    %c0_i32 = arith.constant 0 : i32
    %c0_i32_0 = arith.constant 0 : i32
    %c0_i32_1 = arith.constant 0 : i32
    return %c0_i32, %c0_i32_0 : i32, i32
  }
  func.func @transform_9(%arg0: i32, %arg1: i32) -> (i32, i32) {
    %c0_i32 = arith.constant 0 : i32
    %c0_i32_0 = arith.constant 0 : i32
    %c0_i32_1 = arith.constant 0 : i32
    return %c0_i32, %c0_i32_0 : i32, i32
  }
  func.func @transform_10(%arg0: i32, %arg1: i32) -> (i32, i32, i32, i32) {
    %c0_i32 = arith.constant 0 : i32
    %c0_i32_0 = arith.constant 0 : i32
    %c0_i32_1 = arith.constant 0 : i32
    return %arg0, %arg1, %c0_i32, %c0_i32_0 : i32, i32, i32, i32
  }
}

</mosaic_0001>

<llo_original>
// kernel: tpu_custom_call.1
$region0: #{tpu_custom_call.1}
  #allocation0 [shape = 'u32[]', space=smem, size = 0x4, offset = 0x4, fixed_abs, tag = 'smem constant byte address 0x4 - core index']
  #allocation1 [shape = 'u32[72,128]{1,0:T(1,128)}', space=vmem, size = 0x9000, scoped, tag = 'internal scratch']
  #allocation2 [shape = 'f32[456,8]{1,0:T(8,128)}', space=vmem, size = 0x39000, scoped, tag = 'scratch operand']
  #allocation3 [shape = 'f32[432,8]{1,0:T(8,128)}', space=vmem, size = 0x36000, scoped, tag = 'scratch operand']
  %s0 = inlined_call_operand.vmem [shape: f32[2,1,504,4], index: 0, kind: input, shape index: {}]
  %s1 = inlined_call_operand.vmem [shape: f32[432,1], index: 1, kind: input, shape index: {}]
  %s2 = inlined_call_operand.vmem [shape: f32[9,4,8], index: 2, kind: input, shape index: {}]
  %s3 = inlined_call_operand.vmem [shape: f32[1,8], index: 3, kind: input, shape index: {}]
  %s4 = inlined_call_operand.vmem [shape: f32[1,8], index: 4, kind: input, shape index: {}]
  %s5 = inlined_call_operand.vmem [shape: f32[1,8], index: 5, kind: input, shape index: {}]
  %s6 = inlined_call_operand.vmem [shape: f32[9,8,8], index: 6, kind: input, shape index: {}]
  %s7 = inlined_call_operand.vmem [shape: f32[1,8], index: 7, kind: input, shape index: {}]
  %s8 = inlined_call_operand.vmem [shape: f32[1,8], index: 8, kind: input, shape index: {}]
  %s9 = inlined_call_operand.vmem [shape: f32[1,8], index: 9, kind: input, shape index: {}]
  %s10 = inlined_call_operand.vmem [shape: f32[2,1,384,8], index: 10, kind: output, shape index: {}]
  %s11 = sld [smem:[#allocation0]]
  $region73: #{tpu_custom_call.1} parent=0
    _
  %s13 = ssub.s32 1, %s11
  %s14 = scalar_select 0, %s13, %s11
  loop: start=0, step=1, limit=4
  $region2: #{tpu_custom_call.1} parent=0 // loop_pre_header
    _
  $region3: #{tpu_custom_call.1} parent=0 // loop_header
    %s16 = sphi 0, %s20
    %p17 = scmp.ge.s32.totalorder %s16, 4
    %s23 = sphi 0, %s35
    %s24 = sphi 0, %s31
    %s25 = sphi 0, %s23
    %s26 = sphi 0, %s24
    %s27 = sphi 0, %s25
    %s28 = sphi 0, %s26
    %s40 = sphi 0, %s42
    %s43 = sphi 0, %s40
    %s44 = sphi 0, %s43
    %s60 = sphi 0, %s44
    %s64 = sphi 0, %s64
    %s66 = sphi 0, %s64
    %s67 = sphi 0, %s66
    %s81 = sphi 0, %s67
    %s85 = sphi 0, %s85
    %s87 = sphi 0, %s85
    %s88 = sphi 0, %s87
    %s102 = sphi 0, %s88
    %s106 = sphi 0, %s106
    %s108 = sphi 0, %s106
    %s109 = sphi 0, %s108
    %s123 = sphi 0, %s109
    %s127 = sphi 0, %s127
    %s129 = sphi 0, %s127
    %s130 = sphi 0, %s129
    %s144 = sphi 0, %s130
    %s148 = sphi 0, %s148
    %s150 = sphi 0, %s148
    %s151 = sphi 0, %s150
    %s165 = sphi 0, %s151
    %s169 = sphi 0, %s169
    %s171 = sphi 0, %s169
    %s172 = sphi 0, %s171
    %s186 = sphi 0, %s172
    %s190 = sphi 0, %s190
    %s192 = sphi 0, %s190
    %s193 = sphi 0, %s192
    %s207 = sphi 0, %s193
    %s211 = sphi 0, %s211
    %s213 = sphi 0, %s211
    %s214 = sphi 0, %s213
    %s228 = sphi 0, %s214
    %s232 = sphi 0, %s232
    %s234 = sphi 0, %s232
    %s235 = sphi 0, %s234
    %s249 = sphi 0, %s235
    %s257 = sphi 0, %s259
    %s260 = sphi 0, %s257
    %s261 = sphi 0, %s260
    %s277 = sphi 0, %s261
  $region4: #{tpu_custom_call.1} parent=0 // loop_header_branch
    %19 = sbr.rel (%p17) target = $region8
  $region5: #{tpu_custom_call.1} parent=0 // loop_body
    %s21 = ssub.s32 %s16, 1
    %s22 = ssub.s32 %s16, 2
    %s29 = sadd.s32 1, %s24
    %p30 = scmp.ge.s32.totalorder %s29, 1
    %s31 = scalar_select %p30, 0, %s29
    %s32 = sadd.s32 1, %s23
    %s33 = scalar_select %p30, %s32, %s23
    %p34 = scmp.ge.s32.totalorder %s33, 2
    %s35 = scalar_select %p34, 0, %s33
    %s36 = ssub.s32 %s23, %s35
    %s37 = ssub.s32 %s24, %s31
    %s38 = sor.u32 %s36, %s37
    %p39 = scmp.eq.s32.totalorder %s38, 0
    %s41 = sadd.s32 %s40, 1
    %s42 = scalar_select %p39, %s40, %s41
    %p45 = pneg %p39
    %p46 = scmp.eq.s32.totalorder %s16, 1
    %p47 = por %p45, %p46
    %p48 = scmp.ne.s32.totalorder %s40, %s43
    %p49 = scmp.eq.s32.totalorder %s16, 0
    %p50 = por %p48, %p49
    %p51 = scmp.ne.s32.totalorder %s40, %s43
    %p52 = scmp.eq.s32.totalorder %s21, 1
    %p53 = por %p51, %p52
    %p54 = scmp.ne.s32.totalorder %s43, %s44
    %p55 = scmp.eq.s32.totalorder %s21, 0
    %p56 = por %p54, %p55
    %p57 = scmp.ne.s32.totalorder %s43, %s44
    %p58 = scmp.eq.s32.totalorder %s22, 1
    %p59 = por %p57, %p58
    %p61 = scmp.ne.s32.totalorder %s44, %s60
    %p62 = scmp.eq.s32.totalorder %s22, 0
    %p63 = por %p61, %p62
    %s65 = sadd.s32 %s64, 1
    %p68 = scmp.eq.s32.totalorder %s16, 1
    %p69 = scmp.ne.s32.totalorder %s64, %s66
    %p70 = scmp.eq.s32.totalorder %s16, 0
    %p71 = por %p69, %p70
    %p72 = scmp.ne.s32.totalorder %s64, %s66
    %p73 = scmp.eq.s32.totalorder %s21, 1
    %p74 = por %p72, %p73
    %p75 = scmp.ne.s32.totalorder %s66, %s67
    %p76 = scmp.eq.s32.totalorder %s21, 0
    %p77 = por %p75, %p76
    %p78 = scmp.ne.s32.totalorder %s66, %s67
    %p79 = scmp.eq.s32.totalorder %s22, 1
    %p80 = por %p78, %p79
    %p82 = scmp.ne.s32.totalorder %s67, %s81
    %p83 = scmp.eq.s32.totalorder %s22, 0
    %p84 = por %p82, %p83
    %s86 = sadd.s32 %s85, 1
    %p89 = scmp.eq.s32.totalorder %s16, 1
    %p90 = scmp.ne.s32.totalorder %s85, %s87
    %p91 = scmp.eq.s32.totalorder %s16, 0
    %p92 = por %p90, %p91
    %p93 = scmp.ne.s32.totalorder %s85, %s87
    %p94 = scmp.eq.s32.totalorder %s21, 1
    %p95 = por %p93, %p94
    %p96 = scmp.ne.s32.totalorder %s87, %s88
    %p97 = scmp.eq.s32.totalorder %s21, 0
    %p98 = por %p96, %p97
    %p99 = scmp.ne.s32.totalorder %s87, %s88
    %p100 = scmp.eq.s32.totalorder %s22, 1
    %p101 = por %p99, %p100
    %p103 = scmp.ne.s32.totalorder %s88, %s102
    %p104 = scmp.eq.s32.totalorder %s22, 0
    %p105 = por %p103, %p104
    %s107 = sadd.s32 %s106, 1
    %p110 = scmp.eq.s32.totalorder %s16, 1
    %p111 = scmp.ne.s32.totalorder %s106, %s108
    %p112 = scmp.eq.s32.totalorder %s16, 0
    %p113 = por %p111, %p112
    %p114 = scmp.ne.s32.totalorder %s106, %s108
    %p115 = scmp.eq.s32.totalorder %s21, 1
    %p116 = por %p114, %p115
    %p117 = scmp.ne.s32.totalorder %s108, %s109
    %p118 = scmp.eq.s32.totalorder %s21, 0
    %p119 = por %p117, %p118
    %p120 = scmp.ne.s32.totalorder %s108, %s109
    %p121 = scmp.eq.s32.totalorder %s22, 1
    %p122 = por %p120, %p121
    %p124 = scmp.ne.s32.totalorder %s109, %s123
    %p125 = scmp.eq.s32.totalorder %s22, 0
    %p126 = por %p124, %p125
    %s128 = sadd.s32 %s127, 1
    %p131 = scmp.eq.s32.totalorder %s16, 1
    %p132 = scmp.ne.s32.totalorder %s127, %s129
    %p133 = scmp.eq.s32.totalorder %s16, 0
    %p134 = por %p132, %p133
    %p135 = scmp.ne.s32.totalorder %s127, %s129
    %p136 = scmp.eq.s32.totalorder %s21, 1
    %p137 = por %p135, %p136
    %p138 = scmp.ne.s32.totalorder %s129, %s130
    %p139 = scmp.eq.s32.totalorder %s21, 0
    %p140 = por %p138, %p139
    %p141 = scmp.ne.s32.totalorder %s129, %s130
    %p142 = scmp.eq.s32.totalorder %s22, 1
    %p143 = por %p141, %p142
    %p145 = scmp.ne.s32.totalorder %s130, %s144
    %p146 = scmp.eq.s32.totalorder %s22, 0
    %p147 = por %p145, %p146
    %s149 = sadd.s32 %s148, 1
    %p152 = scmp.eq.s32.totalorder %s16, 1
    %p153 = scmp.ne.s32.totalorder %s148, %s150
    %p154 = scmp.eq.s32.totalorder %s16, 0
    %p155 = por %p153, %p154
    %p156 = scmp.ne.s32.totalorder %s148, %s150
    %p157 = scmp.eq.s32.totalorder %s21, 1
    %p158 = por %p156, %p157
    %p159 = scmp.ne.s32.totalorder %s150, %s151
    %p160 = scmp.eq.s32.totalorder %s21, 0
    %p161 = por %p159, %p160
    %p162 = scmp.ne.s32.totalorder %s150, %s151
    %p163 = scmp.eq.s32.totalorder %s22, 1
    %p164 = por %p162, %p163
    %p166 = scmp.ne.s32.totalorder %s151, %s165
    %p167 = scmp.eq.s32.totalorder %s22, 0
    %p168 = por %p166, %p167
    %s170 = sadd.s32 %s169, 1
    %p173 = scmp.eq.s32.totalorder %s16, 1
    %p174 = scmp.ne.s32.totalorder %s169, %s171
    %p175 = scmp.eq.s32.totalorder %s16, 0
    %p176 = por %p174, %p175
    %p177 = scmp.ne.s32.totalorder %s169, %s171
    %p178 = scmp.eq.s32.totalorder %s21, 1
    %p179 = por %p177, %p178
    %p180 = scmp.ne.s32.totalorder %s171, %s172
    %p181 = scmp.eq.s32.totalorder %s21, 0
    %p182 = por %p180, %p181
    %p183 = scmp.ne.s32.totalorder %s171, %s172
    %p184 = scmp.eq.s32.totalorder %s22, 1
    %p185 = por %p183, %p184
    %p187 = scmp.ne.s32.totalorder %s172, %s186
    %p188 = scmp.eq.s32.totalorder %s22, 0
    %p189 = por %p187, %p188
    %s191 = sadd.s32 %s190, 1
    %p194 = scmp.eq.s32.totalorder %s16, 1
    %p195 = scmp.ne.s32.totalorder %s190, %s192
    %p196 = scmp.eq.s32.totalorder %s16, 0
    %p197 = por %p195, %p196
    %p198 = scmp.ne.s32.totalorder %s190, %s192
    %p199 = scmp.eq.s32.totalorder %s21, 1
    %p200 = por %p198, %p199
    %p201 = scmp.ne.s32.totalorder %s192, %s193
    %p202 = scmp.eq.s32.totalorder %s21, 0
    %p203 = por %p201, %p202
    %p204 = scmp.ne.s32.totalorder %s192, %s193
    %p205 = scmp.eq.s32.totalorder %s22, 1
    %p206 = por %p204, %p205
    %p208 = scmp.ne.s32.totalorder %s193, %s207
    %p209 = scmp.eq.s32.totalorder %s22, 0
    %p210 = por %p208, %p209
    %s212 = sadd.s32 %s211, 1
    %p215 = scmp.eq.s32.totalorder %s16, 1
    %p216 = scmp.ne.s32.totalorder %s211, %s213
    %p217 = scmp.eq.s32.totalorder %s16, 0
    %p218 = por %p216, %p217
    %p219 = scmp.ne.s32.totalorder %s211, %s213
    %p220 = scmp.eq.s32.totalorder %s21, 1
    %p221 = por %p219, %p220
    %p222 = scmp.ne.s32.totalorder %s213, %s214
    %p223 = scmp.eq.s32.totalorder %s21, 0
    %p224 = por %p222, %p223
    %p225 = scmp.ne.s32.totalorder %s213, %s214
    %p226 = scmp.eq.s32.totalorder %s22, 1
    %p227 = por %p225, %p226
    %p229 = scmp.ne.s32.totalorder %s214, %s228
    %p230 = scmp.eq.s32.totalorder %s22, 0
    %p231 = por %p229, %p230
    %s233 = sadd.s32 %s232, 1
    %p236 = scmp.eq.s32.totalorder %s16, 1
    %p237 = scmp.ne.s32.totalorder %s232, %s234
    %p238 = scmp.eq.s32.totalorder %s16, 0
    %p239 = por %p237, %p238
    %p240 = scmp.ne.s32.totalorder %s232, %s234
    %p241 = scmp.eq.s32.totalorder %s21, 1
    %p242 = por %p240, %p241
    %p243 = scmp.ne.s32.totalorder %s234, %s235
    %p244 = scmp.eq.s32.totalorder %s21, 0
    %p245 = por %p243, %p244
    %p246 = scmp.ne.s32.totalorder %s234, %s235
    %p247 = scmp.eq.s32.totalorder %s22, 1
    %p248 = por %p246, %p247
    %p250 = scmp.ne.s32.totalorder %s235, %s249
    %p251 = scmp.eq.s32.totalorder %s22, 0
    %p252 = por %p250, %p251
    %s253 = ssub.s32 %s23, %s35
    %s254 = ssub.s32 %s24, %s31
    %s255 = sor.u32 %s253, %s254
    %p256 = scmp.eq.s32.totalorder %s255, 0
    %s258 = sadd.s32 %s257, 1
    %s259 = scalar_select %p256, %s257, %s258
    %p262 = pneg %p256
    %p263 = scmp.eq.s32.totalorder %s16, 1
    %p264 = por %p262, %p263
    %p265 = scmp.ne.s32.totalorder %s257, %s260
    %p266 = scmp.eq.s32.totalorder %s16, 0
    %p267 = por %p265, %p266
    %p268 = scmp.ne.s32.totalorder %s257, %s260
    %p269 = scmp.eq.s32.totalorder %s21, 1
    %p270 = por %p268, %p269
    %p271 = scmp.ne.s32.totalorder %s260, %s261
    %p272 = scmp.eq.s32.totalorder %s21, 0
    %p273 = por %p271, %p272
    %p274 = scmp.ne.s32.totalorder %s260, %s261
    %p275 = scmp.eq.s32.totalorder %s22, 1
    %p276 = por %p274, %p275
    %p278 = scmp.ne.s32.totalorder %s261, %s277
    %p279 = scmp.eq.s32.totalorder %s22, 0
    %p280 = por %p278, %p279
    %p281 = scmp.le.s32.totalorder 1, %s16
    %p282 = scmp.lt.s32.totalorder %s16, 3
    %p283 = pnand %p281, %p282
    %p284 = pneg %p283
    // Predicated region
    $region9: #{tpu_custom_call.1} parent=5 // pred_check
      _
    $region10: #{tpu_custom_call.1} parent=5 // pred_check_branch
      %286 = sbr.rel (%p283) target = $region12
    $region11: #{tpu_custom_call.1} parent=5 // pred_region
      %s287 = ssub.s32 %s16, 1
      // Predicated region
      $region13: #{tpu_custom_call.1} parent=11 // pred_check
        %p288 = pneg %p77
      $region14: #{tpu_custom_call.1} parent=11 // pred_check_branch
        %290 = sbr.rel (%p288) target = $region16
      $region15: #{tpu_custom_call.1} parent=11 // pred_region
        _
      $region16: #{tpu_custom_call.1} parent=11 // pred_fallthru
        _
      // Predicated region
      $region17: #{tpu_custom_call.1} parent=11 // pred_check
        %p291 = pneg %p98
      $region18: #{tpu_custom_call.1} parent=11 // pred_check_branch
        %293 = sbr.rel (%p291) target = $region20
      $region19: #{tpu_custom_call.1} parent=11 // pred_region
        _
      $region20: #{tpu_custom_call.1} parent=11 // pred_fallthru
        _
      // Predicated region
      $region21: #{tpu_custom_call.1} parent=11 // pred_check
        %p294 = pneg %p119
      $region22: #{tpu_custom_call.1} parent=11 // pred_check_branch
        %296 = sbr.rel (%p294) target = $region24
      $region23: #{tpu_custom_call.1} parent=11 // pred_region
        _
      $region24: #{tpu_custom_call.1} parent=11 // pred_fallthru
        _
      // Predicated region
      $region25: #{tpu_custom_call.1} parent=11 // pred_check
        %p297 = pneg %p140
      $region26: #{tpu_custom_call.1} parent=11 // pred_check_branch
        %299 = sbr.rel (%p297) target = $region28
      $region27: #{tpu_custom_call.1} parent=11 // pred_region
        _
      $region28: #{tpu_custom_call.1} parent=11 // pred_fallthru
        _
      // Predicated region
      $region29: #{tpu_custom_call.1} parent=11 // pred_check
        %p300 = pneg %p161
      $region30: #{tpu_custom_call.1} parent=11 // pred_check_branch
        %302 = sbr.rel (%p300) target = $region32
      $region31: #{tpu_custom_call.1} parent=11 // pred_region
        _
      $region32: #{tpu_custom_call.1} parent=11 // pred_fallthru
        _
      // Predicated region
      $region33: #{tpu_custom_call.1} parent=11 // pred_check
        %p303 = pneg %p182
      $region34: #{tpu_custom_call.1} parent=11 // pred_check_branch
        %305 = sbr.rel (%p303) target = $region36
      $region35: #{tpu_custom_call.1} parent=11 // pred_region
        _
      $region36: #{tpu_custom_call.1} parent=11 // pred_fallthru
        _
      // Predicated region
      $region37: #{tpu_custom_call.1} parent=11 // pred_check
        %p306 = pneg %p203
      $region38: #{tpu_custom_call.1} parent=11 // pred_check_branch
        %308 = sbr.rel (%p306) target = $region40
      $region39: #{tpu_custom_call.1} parent=11 // pred_region
        _
      $region40: #{tpu_custom_call.1} parent=11 // pred_fallthru
        _
      // Predicated region
      $region41: #{tpu_custom_call.1} parent=11 // pred_check
        %p309 = pneg %p224
      $region42: #{tpu_custom_call.1} parent=11 // pred_check_branch
        %311 = sbr.rel (%p309) target = $region44
      $region43: #{tpu_custom_call.1} parent=11 // pred_region
        _
      $region44: #{tpu_custom_call.1} parent=11 // pred_fallthru
        _
      // Predicated region
      $region45: #{tpu_custom_call.1} parent=11 // pred_check
        %p312 = pneg %p245
      $region46: #{tpu_custom_call.1} parent=11 // pred_check_branch
        %314 = sbr.rel (%p312) target = $region48
      $region47: #{tpu_custom_call.1} parent=11 // pred_region
        _
      $region48: #{tpu_custom_call.1} parent=11 // pred_fallthru
        _
    $region12: #{tpu_custom_call.1} parent=5 // pred_fallthru
      _
    %p315 = scmp.lt.s32.totalorder %s16, 2
    // Predicated region
    $region49: #{tpu_custom_call.1} parent=5 // pred_check
      %p316 = pneg %p315
    $region50: #{tpu_custom_call.1} parent=5 // pred_check_branch
      %318 = sbr.rel (%p316) target = $region52
    $region51: #{tpu_custom_call.1} parent=5 // pred_region
      // Predicated region
      $region53: #{tpu_custom_call.1} parent=51 // pred_check
        %p319 = pneg %p50
      $region54: #{tpu_custom_call.1} parent=51 // pred_check_branch
        %321 = sbr.rel (%p319) target = $region56
      $region55: #{tpu_custom_call.1} parent=51 // pred_region
        %p322 = scmp.lt.s32.totalorder %s23, 1
        %s323 = scalar_select %p322, %s23, 1
        %p324 = scmp.lt.s32.totalorder %s24, 0
        %s325 = scalar_select %p324, %s24, 0
        %s326 = smul.addr %s325, 63
        %s327 = smul.addr %s323, 63
        %s328 = sadd.s32 %s326, %s327
        %s329 = smul.addr %s328, 8
        %s330 = scalar_lea.vmem %s0, %s329
      $region56: #{tpu_custom_call.1} parent=51 // pred_fallthru
        _
    $region52: #{tpu_custom_call.1} parent=5 // pred_fallthru
      _
    %p331 = scmp.le.s32.totalorder 1, %s16
    %p332 = scmp.lt.s32.totalorder %s16, 3
    %p333 = pnand %p331, %p332
    %p334 = pneg %p333
    // Predicated region
    $region57: #{tpu_custom_call.1} parent=5 // pred_check
      _
    $region58: #{tpu_custom_call.1} parent=5 // pred_check_branch
      %336 = sbr.rel (%p333) target = $region60
    $region59: #{tpu_custom_call.1} parent=5 // pred_region
      %s337 = ssub.s32 %s16, 1
      %p338 = scmp.lt.s32.totalorder %s25, 1
      %s339 = scalar_select %p338, %s25, 1
      %p340 = scmp.lt.s32.totalorder %s26, 0
      %s341 = scalar_select %p340, %s26, 0
      %s342 = smul.addr %s341, 63
      %s343 = smul.addr %s339, 63
      %s344 = sadd.s32 %s342, %s343
      %s345 = smul.addr %s344, 8
      %s346 = scalar_lea.vmem %s0, %s345
      %p347 = pneg %p56
      %p348 = pneg %p53
      %p349 = pneg %p77
      %p350 = pneg %p74
      %p351 = pneg %p98
      %p352 = pneg %p95
      %p353 = pneg %p119
      %p354 = pneg %p116
      %p355 = pneg %p140
      %p356 = pneg %p137
      %p357 = pneg %p161
      %p358 = pneg %p158
      %p359 = pneg %p182
      %p360 = pneg %p179
      %p361 = pneg %p203
      %p362 = pneg %p200
      %p363 = pneg %p224
      %p364 = pneg %p221
      %p365 = pneg %p245
      %p366 = pneg %p242
      %p367 = pneg %p273
      %p368 = pneg %p270
      %p369 = scmp.lt.s32.totalorder %s25, 1
      %s370 = scalar_select %p369, %s25, 1
      %p371 = scmp.lt.s32.totalorder %s26, 0
      %s372 = scalar_select %p371, %s26, 0
      %s373 = smul.addr %s372, 48
      %s374 = smul.addr %s370, 48
      %s375 = sadd.s32 %s373, %s374
      %s376 = smul.addr %s375, 8
      %s377 = scalar_lea.vmem %s10, %s376
      %p378 = scmp.lt.s32.totalorder %s25, 1
      %s379 = scalar_select %p378, %s25, 1
      %p380 = scmp.lt.s32.totalorder %s26, 0
      %s381 = scalar_select %p380, %s26, 0
      %s382 = smul.addr %s381, 63
      %s383 = smul.addr %s379, 63
      %s384 = sadd.s32 %s382, %s383
      %s385 = smul.addr %s384, 8
      %s386 = scalar_lea.vmem %s0, %s385
      %p387 = scmp.lt.s32.totalorder %s25, 1
      %s388 = scalar_select %p387, %s25, 1
      %p389 = scmp.lt.s32.totalorder %s26, 0
      %s390 = scalar_select %p389, %s26, 0
      %s391 = smul.addr %s390, 48
      %s392 = smul.addr %s388, 48
      %s393 = sadd.s32 %s391, %s392
      %s394 = smul.addr %s393, 8
      %s395 = scalar_lea.vmem %s10, %s394
      %v396 = vld [vmem:[%s386] sm:$0xff]
      %v397 = vld [vmem:[%s386 + $0x8] sm:$0xff]
      %v398 = vld [vmem:[%s386 + $0x10] sm:$0xff]
      %v399 = vld [vmem:[%s386 + $0x18] sm:$0xff]
      %v400 = vld [vmem:[%s386 + $0x20] sm:$0xff]
      %v401 = vld [vmem:[%s386 + $0x28] sm:$0xff]
      %v402 = vld [vmem:[%s386 + $0x30] sm:$0xff]
      %v403 = vld [vmem:[%s386 + $0x38] sm:$0xff]
      %v404 = vld [vmem:[%s386 + $0x40] sm:$0xff]
      %v405 = vld [vmem:[%s386 + $0x48] sm:$0xff]
      %v406 = vld [vmem:[%s386 + $0x50] sm:$0xff]
      %v407 = vld [vmem:[%s386 + $0x58] sm:$0xff]
      %v408 = vld [vmem:[%s386 + $0x60] sm:$0xff]
      %v409 = vld [vmem:[%s386 + $0x68] sm:$0xff]
      %v410 = vld [vmem:[%s386 + $0x70] sm:$0xff]
      %v411 = vld [vmem:[%s386 + $0x78] sm:$0xff]
      %v412 = vld [vmem:[%s386 + $0x80] sm:$0xff]
      %v413 = vld [vmem:[%s386 + $0x88] sm:$0xff]
      %v414 = vld [vmem:[%s386 + $0x90] sm:$0xff]
      %v415 = vld [vmem:[%s386 + $0x98] sm:$0xff]
      %v416 = vld [vmem:[%s386 + $0xa0] sm:$0xff]
      %v417 = vld [vmem:[%s386 + $0xa8] sm:$0xff]
      %v418 = vld [vmem:[%s386 + $0xb0] sm:$0xff]
      %v419 = vld [vmem:[%s386 + $0xb8] sm:$0xff]
      %v420 = vld [vmem:[%s386 + $0xc0] sm:$0xff]
      %v421 = vld [vmem:[%s386 + $0xc8] sm:$0xff]
      %v422 = vld [vmem:[%s386 + $0xd0] sm:$0xff]
      %v423 = vld [vmem:[%s386 + $0xd8] sm:$0xff]
      %v424 = vld [vmem:[%s386 + $0xe0] sm:$0xff]
      %v425 = vld [vmem:[%s386 + $0xe8] sm:$0xff]
      %v426 = vld [vmem:[%s386 + $0xf0] sm:$0xff]
      %v427 = vld [vmem:[%s386 + $0xf8] sm:$0xff]
      %v428 = vld [vmem:[%s386 + $0x100] sm:$0xff]
      %v429 = vld [vmem:[%s386 + $0x108] sm:$0xff]
      %v430 = vld [vmem:[%s386 + $0x110] sm:$0xff]
      %v431 = vld [vmem:[%s386 + $0x118] sm:$0xff]
      %v432 = vld [vmem:[%s386 + $0x120] sm:$0xff]
      %v433 = vld [vmem:[%s386 + $0x128] sm:$0xff]
      %v434 = vld [vmem:[%s386 + $0x130] sm:$0xff]
      %v435 = vld [vmem:[%s386 + $0x138] sm:$0xff]
      %v436 = vld [vmem:[%s386 + $0x140] sm:$0xff]
      %v437 = vld [vmem:[%s386 + $0x148] sm:$0xff]
      %v438 = vld [vmem:[%s386 + $0x150] sm:$0xff]
      %v439 = vld [vmem:[%s386 + $0x158] sm:$0xff]
      %v440 = vld [vmem:[%s386 + $0x160] sm:$0xff]
      %v441 = vld [vmem:[%s386 + $0x168] sm:$0xff]
      %v442 = vld [vmem:[%s386 + $0x170] sm:$0xff]
      %v443 = vld [vmem:[%s386 + $0x178] sm:$0xff]
      %v444 = vld [vmem:[%s386 + $0x180] sm:$0xff]
      %v445 = vld [vmem:[%s386 + $0x188] sm:$0xff]
      %v446 = vld [vmem:[%s386 + $0x190] sm:$0xff]
      %v447 = vld [vmem:[%s386 + $0x198] sm:$0xff]
      %v448 = vld [vmem:[%s386 + $0x1a0] sm:$0xff]
      %v449 = vld [vmem:[%s386 + $0x1a8] sm:$0xff]
      %v450 = vld [vmem:[%s2] sm:$0xf]
      %v451 = vld [vmem:[%s386 + $0x1] sm:$0xff]
      %v452 = vld [vmem:[%s386 + $0x9] sm:$0xff]
      %v453 = vld [vmem:[%s386 + $0x11] sm:$0xff]
      %v454 = vld [vmem:[%s386 + $0x19] sm:$0xff]
      %v455 = vld [vmem:[%s386 + $0x21] sm:$0xff]
      %v456 = vld [vmem:[%s386 + $0x29] sm:$0xff]
      %v457 = vld [vmem:[%s386 + $0x31] sm:$0xff]
      %v458 = vld [vmem:[%s386 + $0x39] sm:$0xff]
      %v459 = vld [vmem:[%s386 + $0x41] sm:$0xff]
      %v460 = vld [vmem:[%s386 + $0x49] sm:$0xff]
      %v461 = vld [vmem:[%s386 + $0x51] sm:$0xff]
      %v462 = vld [vmem:[%s386 + $0x59] sm:$0xff]
      %v463 = vld [vmem:[%s386 + $0x61] sm:$0xff]
      %v464 = vld [vmem:[%s386 + $0x69] sm:$0xff]
      %v465 = vld [vmem:[%s386 + $0x71] sm:$0xff]
      %v466 = vld [vmem:[%s386 + $0x79] sm:$0xff]
      %v467 = vld [vmem:[%s386 + $0x81] sm:$0xff]
      %v468 = vld [vmem:[%s386 + $0x89] sm:$0xff]
      %v469 = vld [vmem:[%s386 + $0x91] sm:$0xff]
      %v470 = vld [vmem:[%s386 + $0x99] sm:$0xff]
      %v471 = vld [vmem:[%s386 + $0xa1] sm:$0xff]
      %v472 = vld [vmem:[%s386 + $0xa9] sm:$0xff]
      %v473 = vld [vmem:[%s386 + $0xb1] sm:$0xff]
      %v474 = vld [vmem:[%s386 + $0xb9] sm:$0xff]
      %v475 = vld [vmem:[%s386 + $0xc1] sm:$0xff]
      %v476 = vld [vmem:[%s386 + $0xc9] sm:$0xff]
      %v477 = vld [vmem:[%s386 + $0xd1] sm:$0xff]
      %v478 = vld [vmem:[%s386 + $0xd9] sm:$0xff]
      %v479 = vld [vmem:[%s386 + $0xe1] sm:$0xff]
      %v480 = vld [vmem:[%s386 + $0xe9] sm:$0xff]
      %v481 = vld [vmem:[%s386 + $0xf1] sm:$0xff]
      %v482 = vld [vmem:[%s386 + $0xf9] sm:$0xff]
      %v483 = vld [vmem:[%s386 + $0x101] sm:$0xff]
      %v484 = vld [vmem:[%s386 + $0x109] sm:$0xff]
      %v485 = vld [vmem:[%s386 + $0x111] sm:$0xff]
      %v486 = vld [vmem:[%s386 + $0x119] sm:$0xff]
      %v487 = vld [vmem:[%s386 + $0x121] sm:$0xff]
      %v488 = vld [vmem:[%s386 + $0x129] sm:$0xff]
      %v489 = vld [vmem:[%s386 + $0x131] sm:$0xff]
      %v490 = vld [vmem:[%s386 + $0x139] sm:$0xff]
      %v491 = vld [vmem:[%s386 + $0x141] sm:$0xff]
      %v492 = vld [vmem:[%s386 + $0x149] sm:$0xff]
      %v493 = vld [vmem:[%s386 + $0x151] sm:$0xff]
      %v494 = vld [vmem:[%s386 + $0x159] sm:$0xff]
      %v495 = vld [vmem:[%s386 + $0x161] sm:$0xff]
      %v496 = vld [vmem:[%s386 + $0x169] sm:$0xff]
      %v497 = vld [vmem:[%s386 + $0x171] sm:$0xff]
      %v498 = vld [vmem:[%s386 + $0x179] sm:$0xff]
      %v499 = vld [vmem:[%s386 + $0x181] sm:$0xff]
      %v500 = vld [vmem:[%s386 + $0x189] sm:$0xff]
      %v501 = vld [vmem:[%s386 + $0x191] sm:$0xff]
      %v502 = vld [vmem:[%s386 + $0x199] sm:$0xff]
      %v503 = vld [vmem:[%s386 + $0x1a1] sm:$0xff]
      %v504 = vld [vmem:[%s386 + $0x1a9] sm:$0xff]
      %s505 = scalar_lea.vmem %s2, 4
      %v506 = vld [vmem:[%s505] sm:$0xf]
      %vm507 = vcmask 31744
      %v509 = vsel %vm507, %v451, 0
      %v512 = vsel %vm507, %v452, 0
      %v515 = vsel %vm507, %v453, 0
      %v518 = vsel %vm507, %v454, 0
      %v521 = vsel %vm507, %v455, 0
      %v524 = vsel %vm507, %v456, 0
      %v527 = vsel %vm507, %v457, 0
      %v530 = vsel %vm507, %v458, 0
      %v533 = vsel %vm507, %v459, 0
      %v536 = vsel %vm507, %v460, 0
      %v539 = vsel %vm507, %v461, 0
      %v542 = vsel %vm507, %v462, 0
      %v545 = vsel %vm507, %v463, 0
      %v548 = vsel %vm507, %v464, 0
      %v551 = vsel %vm507, %v465, 0
      %v554 = vsel %vm507, %v466, 0
      %v557 = vsel %vm507, %v467, 0
      %v560 = vsel %vm507, %v468, 0
      %v563 = vsel %vm507, %v469, 0
      %v566 = vsel %vm507, %v470, 0
      %v569 = vsel %vm507, %v471, 0
      %v572 = vsel %vm507, %v472, 0
      %v575 = vsel %vm507, %v473, 0
      %v578 = vsel %vm507, %v474, 0
      %v581 = vsel %vm507, %v475, 0
      %v584 = vsel %vm507, %v476, 0
      %v587 = vsel %vm507, %v477, 0
      %v590 = vsel %vm507, %v478, 0
      %v593 = vsel %vm507, %v479, 0
      %v596 = vsel %vm507, %v480, 0
      %v599 = vsel %vm507, %v481, 0
      %v602 = vsel %vm507, %v482, 0
      %v605 = vsel %vm507, %v483, 0
      %v608 = vsel %vm507, %v484, 0
      %v611 = vsel %vm507, %v485, 0
      %v614 = vsel %vm507, %v486, 0
      %v617 = vsel %vm507, %v487, 0
      %v620 = vsel %vm507, %v488, 0
      %v623 = vsel %vm507, %v489, 0
      %v626 = vsel %vm507, %v490, 0
      %v629 = vsel %vm507, %v491, 0
      %v632 = vsel %vm507, %v492, 0
      %v635 = vsel %vm507, %v493, 0
      %v638 = vsel %vm507, %v494, 0
      %v641 = vsel %vm507, %v495, 0
      %v644 = vsel %vm507, %v496, 0
      %v647 = vsel %vm507, %v497, 0
      %v650 = vsel %vm507, %v498, 0
      %v653 = vsel %vm507, %v499, 0
      %v656 = vsel %vm507, %v500, 0
      %v659 = vsel %vm507, %v501, 0
      %v662 = vsel %vm507, %v502, 0
      %v665 = vsel %vm507, %v503, 0
      %v668 = vsel %vm507, %v504, 0
      %vm670 = vcmask 1043456
      %v672 = vsel %vm670, %v506, 0
      %674 = vmatpush.msra.mxu0 0.0
      %675 = vmatpush.msra.mxu0 0.0
      %676 = vmatpush.msra.mxu0 0.0
      %677 = vmatpush.msra.mxu0 0.0
      %678 = vmatpush.msra.mxu0 0.0
      %679 = vmatpush.msra.mxu0 0.0
      %680 = vmatpush.msra.mxu0 0.0
      %681 = vmatpush.msra.mxu0 0.0
      %682 = vmatpush.msra.mxu0 0.0
      %683 = vmatpush.msra.mxu0 0.0
      %684 = vmatpush.msra.mxu0 0.0
      %685 = vmatpush.msra.mxu0 0.0
      %686 = vmatpush.msra.mxu0 0.0
      %687 = vmatpush.msra.mxu0 0.0
      %688 = vmatpush.msra.mxu0 0.0
      %689 = vmatpush.msra.mxu0 %v672
      %690 = vmatmul.f32.gmra.mxu0 %v509
      %v691 = vpop.f32.mrf.mxu0
      %v692 = vadd.f32 0.0, %v691
      %693 = vmatmul.f32.gmra.mxu0 %v512
      %v694 = vpop.f32.mrf.mxu0
      %v695 = vadd.f32 0.0, %v694
      %696 = vmatmul.f32.gmra.mxu0 %v515
      %v697 = vpop.f32.mrf.mxu0
      %v698 = vadd.f32 0.0, %v697
      %699 = vmatmul.f32.gmra.mxu0 %v518
      %v700 = vpop.f32.mrf.mxu0
      %v701 = vadd.f32 0.0, %v700
      %702 = vmatmul.f32.gmra.mxu0 %v521
      %v703 = vpop.f32.mrf.mxu0
      %v704 = vadd.f32 0.0, %v703
      %705 = vmatmul.f32.gmra.mxu0 %v524
      %v706 = vpop.f32.mrf.mxu0
      %v707 = vadd.f32 0.0, %v706
      %708 = vmatmul.f32.gmra.mxu0 %v527
      %v709 = vpop.f32.mrf.mxu0
      %v710 = vadd.f32 0.0, %v709
      %711 = vmatmul.f32.gmra.mxu0 %v530
      %v712 = vpop.f32.mrf.mxu0
      %v713 = vadd.f32 0.0, %v712
      %714 = vmatmul.f32.gmra.mxu0 %v533
      %v715 = vpop.f32.mrf.mxu0
      %v716 = vadd.f32 0.0, %v715
      %717 = vmatmul.f32.gmra.mxu0 %v536
      %v718 = vpop.f32.mrf.mxu0
      %v719 = vadd.f32 0.0, %v718
      %720 = vmatmul.f32.gmra.mxu0 %v539
      %v721 = vpop.f32.mrf.mxu0
      %v722 = vadd.f32 0.0, %v721
      %723 = vmatmul.f32.gmra.mxu0 %v542
      %v724 = vpop.f32.mrf.mxu0
      %v725 = vadd.f32 0.0, %v724
      %726 = vmatmul.f32.gmra.mxu0 %v545
      %v727 = vpop.f32.mrf.mxu0
      %v728 = vadd.f32 0.0, %v727
      %729 = vmatmul.f32.gmra.mxu0 %v548
      %v730 = vpop.f32.mrf.mxu0
      %v731 = vadd.f32 0.0, %v730
      %732 = vmatmul.f32.gmra.mxu0 %v551
      %v733 = vpop.f32.mrf.mxu0
      %v734 = vadd.f32 0.0, %v733
      %735 = vmatmul.f32.gmra.mxu0 %v554
      %v736 = vpop.f32.mrf.mxu0
      %v737 = vadd.f32 0.0, %v736
      %738 = vmatmul.f32.gmra.mxu0 %v557
      %v739 = vpop.f32.mrf.mxu0
      %v740 = vadd.f32 0.0, %v739
      %741 = vmatmul.f32.gmra.mxu0 %v560
      %v742 = vpop.f32.mrf.mxu0
      %v743 = vadd.f32 0.0, %v742
      %744 = vmatmul.f32.gmra.mxu0 %v563
      %v745 = vpop.f32.mrf.mxu0
      %v746 = vadd.f32 0.0, %v745
      %747 = vmatmul.f32.gmra.mxu0 %v566
      %v748 = vpop.f32.mrf.mxu0
      %v749 = vadd.f32 0.0, %v748
      %750 = vmatmul.f32.gmra.mxu0 %v569
      %v751 = vpop.f32.mrf.mxu0
      %v752 = vadd.f32 0.0, %v751
      %753 = vmatmul.f32.gmra.mxu0 %v572
      %v754 = vpop.f32.mrf.mxu0
      %v755 = vadd.f32 0.0, %v754
      %756 = vmatmul.f32.gmra.mxu0 %v575
      %v757 = vpop.f32.mrf.mxu0
      %v758 = vadd.f32 0.0, %v757
      %759 = vmatmul.f32.gmra.mxu0 %v578
      %v760 = vpop.f32.mrf.mxu0
      %v761 = vadd.f32 0.0, %v760
      %762 = vmatmul.f32.gmra.mxu0 %v581
      %v763 = vpop.f32.mrf.mxu0
      %v764 = vadd.f32 0.0, %v763
      %765 = vmatmul.f32.gmra.mxu0 %v584
      %v766 = vpop.f32.mrf.mxu0
      %v767 = vadd.f32 0.0, %v766
      %768 = vmatmul.f32.gmra.mxu0 %v587
      %v769 = vpop.f32.mrf.mxu0
      %v770 = vadd.f32 0.0, %v769
      %771 = vmatmul.f32.gmra.mxu0 %v590
      %v772 = vpop.f32.mrf.mxu0
      %v773 = vadd.f32 0.0, %v772
      %774 = vmatmul.f32.gmra.mxu0 %v593
      %v775 = vpop.f32.mrf.mxu0
      %v776 = vadd.f32 0.0, %v775
      %777 = vmatmul.f32.gmra.mxu0 %v596
      %v778 = vpop.f32.mrf.mxu0
      %v779 = vadd.f32 0.0, %v778
      %780 = vmatmul.f32.gmra.mxu0 %v599
      %v781 = vpop.f32.mrf.mxu0
      %v782 = vadd.f32 0.0, %v781
      %783 = vmatmul.f32.gmra.mxu0 %v602
      %v784 = vpop.f32.mrf.mxu0
      %v785 = vadd.f32 0.0, %v784
      %786 = vmatmul.f32.gmra.mxu0 %v605
      %v787 = vpop.f32.mrf.mxu0
      %v788 = vadd.f32 0.0, %v787
      %789 = vmatmul.f32.gmra.mxu0 %v608
      %v790 = vpop.f32.mrf.mxu0
      %v791 = vadd.f32 0.0, %v790
      %792 = vmatmul.f32.gmra.mxu0 %v611
      %v793 = vpop.f32.mrf.mxu0
      %v794 = vadd.f32 0.0, %v793
      %795 = vmatmul.f32.gmra.mxu0 %v614
      %v796 = vpop.f32.mrf.mxu0
      %v797 = vadd.f32 0.0, %v796
      %798 = vmatmul.f32.gmra.mxu0 %v617
      %v799 = vpop.f32.mrf.mxu0
      %v800 = vadd.f32 0.0, %v799
      %801 = vmatmul.f32.gmra.mxu0 %v620
      %v802 = vpop.f32.mrf.mxu0
      %v803 = vadd.f32 0.0, %v802
      %804 = vmatmul.f32.gmra.mxu0 %v623
      %v805 = vpop.f32.mrf.mxu0
      %v806 = vadd.f32 0.0, %v805
      %807 = vmatmul.f32.gmra.mxu0 %v626
      %v808 = vpop.f32.mrf.mxu0
      %v809 = vadd.f32 0.0, %v808
      %810 = vmatmul.f32.gmra.mxu0 %v629
      %v811 = vpop.f32.mrf.mxu0
      %v812 = vadd.f32 0.0, %v811
      %813 = vmatmul.f32.gmra.mxu0 %v632
      %v814 = vpop.f32.mrf.mxu0
      %v815 = vadd.f32 0.0, %v814
      %816 = vmatmul.f32.gmra.mxu0 %v635
      %v817 = vpop.f32.mrf.mxu0
      %v818 = vadd.f32 0.0, %v817
      %819 = vmatmul.f32.gmra.mxu0 %v638
      %v820 = vpop.f32.mrf.mxu0
      %v821 = vadd.f32 0.0, %v820
      %822 = vmatmul.f32.gmra.mxu0 %v641
      %v823 = vpop.f32.mrf.mxu0
      %v824 = vadd.f32 0.0, %v823
      %825 = vmatmul.f32.gmra.mxu0 %v644
      %v826 = vpop.f32.mrf.mxu0
      %v827 = vadd.f32 0.0, %v826
      %828 = vmatmul.f32.gmra.mxu0 %v647
      %v829 = vpop.f32.mrf.mxu0
      %v830 = vadd.f32 0.0, %v829
      %831 = vmatmul.f32.gmra.mxu0 %v650
      %v832 = vpop.f32.mrf.mxu0
      %v833 = vadd.f32 0.0, %v832
      %834 = vmatmul.f32.gmra.mxu0 %v653
      %v835 = vpop.f32.mrf.mxu0
      %v836 = vadd.f32 0.0, %v835
      %837 = vmatmul.f32.gmra.mxu0 %v656
      %v838 = vpop.f32.mrf.mxu0
      %v839 = vadd.f32 0.0, %v838
      %840 = vmatmul.f32.gmra.mxu0 %v659
      %v841 = vpop.f32.mrf.mxu0
      %v842 = vadd.f32 0.0, %v841
      %843 = vmatmul.f32.gmra.mxu0 %v662
      %v844 = vpop.f32.mrf.mxu0
      %v845 = vadd.f32 0.0, %v844
      %846 = vmatmul.f32.gmra.mxu0 %v665
      %v847 = vpop.f32.mrf.mxu0
      %v848 = vadd.f32 0.0, %v847
      %849 = vmatmul.f32.gmra.mxu0 %v668
      %v850 = vpop.f32.mrf.mxu0
      %v851 = vadd.f32 0.0, %v850
      %852 = vdwg.mxu0
      %v854 = vsel %vm507, %v396, 0
      %v857 = vsel %vm507, %v397, 0
      %v860 = vsel %vm507, %v398, 0
      %v863 = vsel %vm507, %v399, 0
      %v866 = vsel %vm507, %v400, 0
      %v869 = vsel %vm507, %v401, 0
      %v872 = vsel %vm507, %v402, 0
      %v875 = vsel %vm507, %v403, 0
      %v878 = vsel %vm507, %v404, 0
      %v881 = vsel %vm507, %v405, 0
      %v884 = vsel %vm507, %v406, 0
      %v887 = vsel %vm507, %v407, 0
      %v890 = vsel %vm507, %v408, 0
      %v893 = vsel %vm507, %v409, 0
      %v896 = vsel %vm507, %v410, 0
      %v899 = vsel %vm507, %v411, 0
      %v902 = vsel %vm507, %v412, 0
      %v905 = vsel %vm507, %v413, 0
      %v908 = vsel %vm507, %v414, 0
      %v911 = vsel %vm507, %v415, 0
      %v914 = vsel %vm507, %v416, 0
      %v917 = vsel %vm507, %v417, 0
      %v920 = vsel %vm507, %v418, 0
      %v923 = vsel %vm507, %v419, 0
      %v926 = vsel %vm507, %v420, 0
      %v929 = vsel %vm507, %v421, 0
      %v932 = vsel %vm507, %v422, 0
      %v935 = vsel %vm507, %v423, 0
      %v938 = vsel %vm507, %v424, 0
      %v941 = vsel %vm507, %v425, 0
      %v944 = vsel %vm507, %v426, 0
      %v947 = vsel %vm507, %v427, 0
      %v950 = vsel %vm507, %v428, 0
      %v953 = vsel %vm507, %v429, 0
      %v956 = vsel %vm507, %v430, 0
      %v959 = vsel %vm507, %v431, 0
      %v962 = vsel %vm507, %v432, 0
      %v965 = vsel %vm507, %v433, 0
      %v968 = vsel %vm507, %v434, 0
      %v971 = vsel %vm507, %v435, 0
      %v974 = vsel %vm507, %v436, 0
      %v977 = vsel %vm507, %v437, 0
      %v980 = vsel %vm507, %v438, 0
      %v983 = vsel %vm507, %v439, 0
      %v986 = vsel %vm507, %v440, 0
      %v989 = vsel %vm507, %v441, 0
      %v992 = vsel %vm507, %v442, 0
      %v995 = vsel %vm507, %v443, 0
      %v998 = vsel %vm507, %v444, 0
      %v1001 = vsel %vm507, %v445, 0
      %v1004 = vsel %vm507, %v446, 0
      %v1007 = vsel %vm507, %v447, 0
      %v1010 = vsel %vm507, %v448, 0
      %v1013 = vsel %vm507, %v449, 0
      %v1016 = vsel %vm670, %v450, 0
      %1018 = vmatpush.msra.mxu0 0.0
      %1019 = vmatpush.msra.mxu0 0.0
      %1020 = vmatpush.msra.mxu0 0.0
      %1021 = vmatpush.msra.mxu0 0.0
      %1022 = vmatpush.msra.mxu0 0.0
      %1023 = vmatpush.msra.mxu0 0.0
      %1024 = vmatpush.msra.mxu0 0.0
      %1025 = vmatpush.msra.mxu0 0.0
      %1026 = vmatpush.msra.mxu0 0.0
      %1027 = vmatpush.msra.mxu0 0.0
      %1028 = vmatpush.msra.mxu0 0.0
      %1029 = vmatpush.msra.mxu0 0.0
      %1030 = vmatpush.msra.mxu0 0.0
      %1031 = vmatpush.msra.mxu0 0.0
      %1032 = vmatpush.msra.mxu0 0.0
      %1033 = vmatpush.msra.mxu0 %v1016
      %1034 = vmatmul.f32.gmra.mxu0 %v854
      %v1035 = vpop.f32.mrf.mxu0
      %v1036 = vadd.f32 %v692, %v1035
      %1037 = vmatmul.f32.gmra.mxu0 %v857
      %v1038 = vpop.f32.mrf.mxu0
      %v1039 = vadd.f32 %v695, %v1038
      %1040 = vmatmul.f32.gmra.mxu0 %v860
      %v1041 = vpop.f32.mrf.mxu0
      %v1042 = vadd.f32 %v698, %v1041
      %1043 = vmatmul.f32.gmra.mxu0 %v863
      %v1044 = vpop.f32.mrf.mxu0
      %v1045 = vadd.f32 %v701, %v1044
      %1046 = vmatmul.f32.gmra.mxu0 %v866
      %v1047 = vpop.f32.mrf.mxu0
      %v1048 = vadd.f32 %v704, %v1047
      %1049 = vmatmul.f32.gmra.mxu0 %v869
      %v1050 = vpop.f32.mrf.mxu0
      %v1051 = vadd.f32 %v707, %v1050
      %1052 = vmatmul.f32.gmra.mxu0 %v872
      %v1053 = vpop.f32.mrf.mxu0
      %v1054 = vadd.f32 %v710, %v1053
      %1055 = vmatmul.f32.gmra.mxu0 %v875
      %v1056 = vpop.f32.mrf.mxu0
      %v1057 = vadd.f32 %v713, %v1056
      %1058 = vmatmul.f32.gmra.mxu0 %v878
      %v1059 = vpop.f32.mrf.mxu0
      %v1060 = vadd.f32 %v716, %v1059
      %1061 = vmatmul.f32.gmra.mxu0 %v881
      %v1062 = vpop.f32.mrf.mxu0
      %v1063 = vadd.f32 %v719, %v1062
      %1064 = vmatmul.f32.gmra.mxu0 %v884
      %v1065 = vpop.f32.mrf.mxu0
      %v1066 = vadd.f32 %v722, %v1065
      %1067 = vmatmul.f32.gmra.mxu0 %v887
      %v1068 = vpop.f32.mrf.mxu0
      %v1069 = vadd.f32 %v725, %v1068
      %1070 = vmatmul.f32.gmra.mxu0 %v890
      %v1071 = vpop.f32.mrf.mxu0
      %v1072 = vadd.f32 %v728, %v1071
      %1073 = vmatmul.f32.gmra.mxu0 %v893
      %v1074 = vpop.f32.mrf.mxu0
      %v1075 = vadd.f32 %v731, %v1074
      %1076 = vmatmul.f32.gmra.mxu0 %v896
      %v1077 = vpop.f32.mrf.mxu0
      %v1078 = vadd.f32 %v734, %v1077
      %1079 = vmatmul.f32.gmra.mxu0 %v899
      %v1080 = vpop.f32.mrf.mxu0
      %v1081 = vadd.f32 %v737, %v1080
      %1082 = vmatmul.f32.gmra.mxu0 %v902
      %v1083 = vpop.f32.mrf.mxu0
      %v1084 = vadd.f32 %v740, %v1083
      %1085 = vmatmul.f32.gmra.mxu0 %v905
      %v1086 = vpop.f32.mrf.mxu0
      %v1087 = vadd.f32 %v743, %v1086
      %1088 = vmatmul.f32.gmra.mxu0 %v908
      %v1089 = vpop.f32.mrf.mxu0
      %v1090 = vadd.f32 %v746, %v1089
      %1091 = vmatmul.f32.gmra.mxu0 %v911
      %v1092 = vpop.f32.mrf.mxu0
      %v1093 = vadd.f32 %v749, %v1092
      %1094 = vmatmul.f32.gmra.mxu0 %v914
      %v1095 = vpop.f32.mrf.mxu0
      %v1096 = vadd.f32 %v752, %v1095
      %1097 = vmatmul.f32.gmra.mxu0 %v917
      %v1098 = vpop.f32.mrf.mxu0
      %v1099 = vadd.f32 %v755, %v1098
      %1100 = vmatmul.f32.gmra.mxu0 %v920
      %v1101 = vpop.f32.mrf.mxu0
      %v1102 = vadd.f32 %v758, %v1101
      %1103 = vmatmul.f32.gmra.mxu0 %v923
      %v1104 = vpop.f32.mrf.mxu0
      %v1105 = vadd.f32 %v761, %v1104
      %1106 = vmatmul.f32.gmra.mxu0 %v926
      %v1107 = vpop.f32.mrf.mxu0
      %v1108 = vadd.f32 %v764, %v1107
      %1109 = vmatmul.f32.gmra.mxu0 %v929
      %v1110 = vpop.f32.mrf.mxu0
      %v1111 = vadd.f32 %v767, %v1110
      %1112 = vmatmul.f32.gmra.mxu0 %v932
      %v1113 = vpop.f32.mrf.mxu0
      %v1114 = vadd.f32 %v770, %v1113
      %1115 = vmatmul.f32.gmra.mxu0 %v935
      %v1116 = vpop.f32.mrf.mxu0
      %v1117 = vadd.f32 %v773, %v1116
      %1118 = vmatmul.f32.gmra.mxu0 %v938
      %v1119 = vpop.f32.mrf.mxu0
      %v1120 = vadd.f32 %v776, %v1119
      %1121 = vmatmul.f32.gmra.mxu0 %v941
      %v1122 = vpop.f32.mrf.mxu0
      %v1123 = vadd.f32 %v779, %v1122
      %1124 = vmatmul.f32.gmra.mxu0 %v944
      %v1125 = vpop.f32.mrf.mxu0
      %v1126 = vadd.f32 %v782, %v1125
      %1127 = vmatmul.f32.gmra.mxu0 %v947
      %v1128 = vpop.f32.mrf.mxu0
      %v1129 = vadd.f32 %v785, %v1128
      %1130 = vmatmul.f32.gmra.mxu0 %v950
      %v1131 = vpop.f32.mrf.mxu0
      %v1132 = vadd.f32 %v788, %v1131
      %1133 = vmatmul.f32.gmra.mxu0 %v953
      %v1134 = vpop.f32.mrf.mxu0
      %v1135 = vadd.f32 %v791, %v1134
      %1136 = vmatmul.f32.gmra.mxu0 %v956
      %v1137 = vpop.f32.mrf.mxu0
      %v1138 = vadd.f32 %v794, %v1137
      %1139 = vmatmul.f32.gmra.mxu0 %v959
      %v1140 = vpop.f32.mrf.mxu0
      %v1141 = vadd.f32 %v797, %v1140
      %1142 = vmatmul.f32.gmra.mxu0 %v962
      %v1143 = vpop.f32.mrf.mxu0
      %v1144 = vadd.f32 %v800, %v1143
      %1145 = vmatmul.f32.gmra.mxu0 %v965
      %v1146 = vpop.f32.mrf.mxu0
      %v1147 = vadd.f32 %v803, %v1146
      %1148 = vmatmul.f32.gmra.mxu0 %v968
      %v1149 = vpop.f32.mrf.mxu0
      %v1150 = vadd.f32 %v806, %v1149
      %1151 = vmatmul.f32.gmra.mxu0 %v971
      %v1152 = vpop.f32.mrf.mxu0
      %v1153 = vadd.f32 %v809, %v1152
      %1154 = vmatmul.f32.gmra.mxu0 %v974
      %v1155 = vpop.f32.mrf.mxu0
      %v1156 = vadd.f32 %v812, %v1155
      %1157 = vmatmul.f32.gmra.mxu0 %v977
      %v1158 = vpop.f32.mrf.mxu0
      %v1159 = vadd.f32 %v815, %v1158
      %1160 = vmatmul.f32.gmra.mxu0 %v980
      %v1161 = vpop.f32.mrf.mxu0
      %v1162 = vadd.f32 %v818, %v1161
      %1163 = vmatmul.f32.gmra.mxu0 %v983
      %v1164 = vpop.f32.mrf.mxu0
      %v1165 = vadd.f32 %v821, %v1164
      %1166 = vmatmul.f32.gmra.mxu0 %v986
      %v1167 = vpop.f32.mrf.mxu0
      %v1168 = vadd.f32 %v824, %v1167
      %1169 = vmatmul.f32.gmra.mxu0 %v989
      %v1170 = vpop.f32.mrf.mxu0
      %v1171 = vadd.f32 %v827, %v1170
      %1172 = vmatmul.f32.gmra.mxu0 %v992
      %v1173 = vpop.f32.mrf.mxu0
      %v1174 = vadd.f32 %v830, %v1173
      %1175 = vmatmul.f32.gmra.mxu0 %v995
      %v1176 = vpop.f32.mrf.mxu0
      %v1177 = vadd.f32 %v833, %v1176
      %1178 = vmatmul.f32.gmra.mxu0 %v998
      %v1179 = vpop.f32.mrf.mxu0
      %v1180 = vadd.f32 %v836, %v1179
      %1181 = vmatmul.f32.gmra.mxu0 %v1001
      %v1182 = vpop.f32.mrf.mxu0
      %v1183 = vadd.f32 %v839, %v1182
      %1184 = vmatmul.f32.gmra.mxu0 %v1004
      %v1185 = vpop.f32.mrf.mxu0
      %v1186 = vadd.f32 %v842, %v1185
      %1187 = vmatmul.f32.gmra.mxu0 %v1007
      %v1188 = vpop.f32.mrf.mxu0
      %v1189 = vadd.f32 %v845, %v1188
      %1190 = vmatmul.f32.gmra.mxu0 %v1010
      %v1191 = vpop.f32.mrf.mxu0
      %v1192 = vadd.f32 %v848, %v1191
      %1193 = vmatmul.f32.gmra.mxu0 %v1013
      %v1194 = vpop.f32.mrf.mxu0
      %v1195 = vadd.f32 %v851, %v1194
      %1196 = vdwg.mxu0
      %v1197 = vld [vmem:[%s386 + $0x2] sm:$0xff]
      %v1198 = vld [vmem:[%s386 + $0xa] sm:$0xff]
      %v1199 = vld [vmem:[%s386 + $0x12] sm:$0xff]
      %v1200 = vld [vmem:[%s386 + $0x1a] sm:$0xff]
      %v1201 = vld [vmem:[%s386 + $0x22] sm:$0xff]
      %v1202 = vld [vmem:[%s386 + $0x2a] sm:$0xff]
      %v1203 = vld [vmem:[%s386 + $0x32] sm:$0xff]
      %v1204 = vld [vmem:[%s386 + $0x3a] sm:$0xff]
      %v1205 = vld [vmem:[%s386 + $0x42] sm:$0xff]
      %v1206 = vld [vmem:[%s386 + $0x4a] sm:$0xff]
      %v1207 = vld [vmem:[%s386 + $0x52] sm:$0xff]
      %v1208 = vld [vmem:[%s386 + $0x5a] sm:$0xff]
      %v1209 = vld [vmem:[%s386 + $0x62] sm:$0xff]
      %v1210 = vld [vmem:[%s386 + $0x6a] sm:$0xff]
      %v1211 = vld [vmem:[%s386 + $0x72] sm:$0xff]
      %v1212 = vld [vmem:[%s386 + $0x7a] sm:$0xff]
      %v1213 = vld [vmem:[%s386 + $0x82] sm:$0xff]
      %v1214 = vld [vmem:[%s386 + $0x8a] sm:$0xff]
      %v1215 = vld [vmem:[%s386 + $0x92] sm:$0xff]
      %v1216 = vld [vmem:[%s386 + $0x9a] sm:$0xff]
      %v1217 = vld [vmem:[%s386 + $0xa2] sm:$0xff]
      %v1218 = vld [vmem:[%s386 + $0xaa] sm:$0xff]
      %v1219 = vld [vmem:[%s386 + $0xb2] sm:$0xff]
      %v1220 = vld [vmem:[%s386 + $0xba] sm:$0xff]
      %v1221 = vld [vmem:[%s386 + $0xc2] sm:$0xff]
      %v1222 = vld [vmem:[%s386 + $0xca] sm:$0xff]
      %v1223 = vld [vmem:[%s386 + $0xd2] sm:$0xff]
      %v1224 = vld [vmem:[%s386 + $0xda] sm:$0xff]
      %v1225 = vld [vmem:[%s386 + $0xe2] sm:$0xff]
      %v1226 = vld [vmem:[%s386 + $0xea] sm:$0xff]
      %v1227 = vld [vmem:[%s386 + $0xf2] sm:$0xff]
      %v1228 = vld [vmem:[%s386 + $0xfa] sm:$0xff]
      %v1229 = vld [vmem:[%s386 + $0x102] sm:$0xff]
      %v1230 = vld [vmem:[%s386 + $0x10a] sm:$0xff]
      %v1231 = vld [vmem:[%s386 + $0x112] sm:$0xff]
      %v1232 = vld [vmem:[%s386 + $0x11a] sm:$0xff]
      %v1233 = vld [vmem:[%s386 + $0x122] sm:$0xff]
      %v1234 = vld [vmem:[%s386 + $0x12a] sm:$0xff]
      %v1235 = vld [vmem:[%s386 + $0x132] sm:$0xff]
      %v1236 = vld [vmem:[%s386 + $0x13a] sm:$0xff]
      %v1237 = vld [vmem:[%s386 + $0x142] sm:$0xff]
      %v1238 = vld [vmem:[%s386 + $0x14a] sm:$0xff]
      %v1239 = vld [vmem:[%s386 + $0x152] sm:$0xff]
      %v1240 = vld [vmem:[%s386 + $0x15a] sm:$0xff]
      %v1241 = vld [vmem:[%s386 + $0x162] sm:$0xff]
      %v1242 = vld [vmem:[%s386 + $0x16a] sm:$0xff]
      %v1243 = vld [vmem:[%s386 + $0x172] sm:$0xff]
      %v1244 = vld [vmem:[%s386 + $0x17a] sm:$0xff]
      %v1245 = vld [vmem:[%s386 + $0x182] sm:$0xff]
      %v1246 = vld [vmem:[%s386 + $0x18a] sm:$0xff]
      %v1247 = vld [vmem:[%s386 + $0x192] sm:$0xff]
      %v1248 = vld [vmem:[%s386 + $0x19a] sm:$0xff]
      %v1249 = vld [vmem:[%s386 + $0x1a2] sm:$0xff]
      %v1250 = vld [vmem:[%s386 + $0x1aa] sm:$0xff]
      %s1251 = scalar_lea.vmem %s2, 8
      %v1252 = vld [vmem:[%s1251] sm:$0xf]
      %v1254 = vsel %vm507, %v1197, 0
      %v1257 = vsel %vm507, %v1198, 0
      %v1260 = vsel %vm507, %v1199, 0
      %v1263 = vsel %vm507, %v1200, 0
      %v1266 = vsel %vm507, %v1201, 0
      %v1269 = vsel %vm507, %v1202, 0
      %v1272 = vsel %vm507, %v1203, 0
      %v1275 = vsel %vm507, %v1204, 0
      %v1278 = vsel %vm507, %v1205, 0
      %v1281 = vsel %vm507, %v1206, 0
      %v1284 = vsel %vm507, %v1207, 0
      %v1287 = vsel %vm507, %v1208, 0
      %v1290 = vsel %vm507, %v1209, 0
      %v1293 = vsel %vm507, %v1210, 0
      %v1296 = vsel %vm507, %v1211, 0
      %v1299 = vsel %vm507, %v1212, 0
      %v1302 = vsel %vm507, %v1213, 0
      %v1305 = vsel %vm507, %v1214, 0
      %v1308 = vsel %vm507, %v1215, 0
      %v1311 = vsel %vm507, %v1216, 0
      %v1314 = vsel %vm507, %v1217, 0
      %v1317 = vsel %vm507, %v1218, 0
      %v1320 = vsel %vm507, %v1219, 0
      %v1323 = vsel %vm507, %v1220, 0
      %v1326 = vsel %vm507, %v1221, 0
      %v1329 = vsel %vm507, %v1222, 0
      %v1332 = vsel %vm507, %v1223, 0
      %v1335 = vsel %vm507, %v1224, 0
      %v1338 = vsel %vm507, %v1225, 0
      %v1341 = vsel %vm507, %v1226, 0
      %v1344 = vsel %vm507, %v1227, 0
      %v1347 = vsel %vm507, %v1228, 0
      %v1350 = vsel %vm507, %v1229, 0
      %v1353 = vsel %vm507, %v1230, 0
      %v1356 = vsel %vm507, %v1231, 0
      %v1359 = vsel %vm507, %v1232, 0
      %v1362 = vsel %vm507, %v1233, 0
      %v1365 = vsel %vm507, %v1234, 0
      %v1368 = vsel %vm507, %v1235, 0
      %v1371 = vsel %vm507, %v1236, 0
      %v1374 = vsel %vm507, %v1237, 0
      %v1377 = vsel %vm507, %v1238, 0
      %v1380 = vsel %vm507, %v1239, 0
      %v1383 = vsel %vm507, %v1240, 0
      %v1386 = vsel %vm507, %v1241, 0
      %v1389 = vsel %vm507, %v1242, 0
      %v1392 = vsel %vm507, %v1243, 0
      %v1395 = vsel %vm507, %v1244, 0
      %v1398 = vsel %vm507, %v1245, 0
      %v1401 = vsel %vm507, %v1246, 0
      %v1404 = vsel %vm507, %v1247, 0
      %v1407 = vsel %vm507, %v1248, 0
      %v1410 = vsel %vm507, %v1249, 0
      %v1413 = vsel %vm507, %v1250, 0
      %v1416 = vsel %vm670, %v1252, 0
      %1418 = vmatpush.msra.mxu0 0.0
      %1419 = vmatpush.msra.mxu0 0.0
      %1420 = vmatpush.msra.mxu0 0.0
      %1421 = vmatpush.msra.mxu0 0.0
      %1422 = vmatpush.msra.mxu0 0.0
      %1423 = vmatpush.msra.mxu0 0.0
      %1424 = vmatpush.msra.mxu0 0.0
      %1425 = vmatpush.msra.mxu0 0.0
      %1426 = vmatpush.msra.mxu0 0.0
      %1427 = vmatpush.msra.mxu0 0.0
      %1428 = vmatpush.msra.mxu0 0.0
      %1429 = vmatpush.msra.mxu0 0.0
      %1430 = vmatpush.msra.mxu0 0.0
      %1431 = vmatpush.msra.mxu0 0.0
      %1432 = vmatpush.msra.mxu0 0.0
      %1433 = vmatpush.msra.mxu0 %v1416
      %1434 = vmatmul.f32.gmra.mxu0 %v1254
      %v1435 = vpop.f32.mrf.mxu0
      %v1436 = vadd.f32 0.0, %v1435
      %1437 = vmatmul.f32.gmra.mxu0 %v1257
      %v1438 = vpop.f32.mrf.mxu0
      %v1439 = vadd.f32 0.0, %v1438
      %1440 = vmatmul.f32.gmra.mxu0 %v1260
      %v1441 = vpop.f32.mrf.mxu0
      %v1442 = vadd.f32 0.0, %v1441
      %1443 = vmatmul.f32.gmra.mxu0 %v1263
      %v1444 = vpop.f32.mrf.mxu0
      %v1445 = vadd.f32 0.0, %v1444
      %1446 = vmatmul.f32.gmra.mxu0 %v1266
      %v1447 = vpop.f32.mrf.mxu0
      %v1448 = vadd.f32 0.0, %v1447
      %1449 = vmatmul.f32.gmra.mxu0 %v1269
      %v1450 = vpop.f32.mrf.mxu0
      %v1451 = vadd.f32 0.0, %v1450
      %1452 = vmatmul.f32.gmra.mxu0 %v1272
      %v1453 = vpop.f32.mrf.mxu0
      %v1454 = vadd.f32 0.0, %v1453
      %1455 = vmatmul.f32.gmra.mxu0 %v1275
      %v1456 = vpop.f32.mrf.mxu0
      %v1457 = vadd.f32 0.0, %v1456
      %1458 = vmatmul.f32.gmra.mxu0 %v1278
      %v1459 = vpop.f32.mrf.mxu0
      %v1460 = vadd.f32 0.0, %v1459
      %1461 = vmatmul.f32.gmra.mxu0 %v1281
      %v1462 = vpop.f32.mrf.mxu0
      %v1463 = vadd.f32 0.0, %v1462
      %1464 = vmatmul.f32.gmra.mxu0 %v1284
      %v1465 = vpop.f32.mrf.mxu0
      %v1466 = vadd.f32 0.0, %v1465
      %1467 = vmatmul.f32.gmra.mxu0 %v1287
      %v1468 = vpop.f32.mrf.mxu0
      %v1469 = vadd.f32 0.0, %v1468
      %1470 = vmatmul.f32.gmra.mxu0 %v1290
      %v1471 = vpop.f32.mrf.mxu0
      %v1472 = vadd.f32 0.0, %v1471
      %1473 = vmatmul.f32.gmra.mxu0 %v1293
      %v1474 = vpop.f32.mrf.mxu0
      %v1475 = vadd.f32 0.0, %v1474
      %1476 = vmatmul.f32.gmra.mxu0 %v1296
      %v1477 = vpop.f32.mrf.mxu0
      %v1478 = vadd.f32 0.0, %v1477
      %1479 = vmatmul.f32.gmra.mxu0 %v1299
      %v1480 = vpop.f32.mrf.mxu0
      %v1481 = vadd.f32 0.0, %v1480
      %1482 = vmatmul.f32.gmra.mxu0 %v1302
      %v1483 = vpop.f32.mrf.mxu0
      %v1484 = vadd.f32 0.0, %v1483
      %1485 = vmatmul.f32.gmra.mxu0 %v1305
      %v1486 = vpop.f32.mrf.mxu0
      %v1487 = vadd.f32 0.0, %v1486
      %1488 = vmatmul.f32.gmra.mxu0 %v1308
      %v1489 = vpop.f32.mrf.mxu0
      %v1490 = vadd.f32 0.0, %v1489
      %1491 = vmatmul.f32.gmra.mxu0 %v1311
      %v1492 = vpop.f32.mrf.mxu0
      %v1493 = vadd.f32 0.0, %v1492
      %1494 = vmatmul.f32.gmra.mxu0 %v1314
      %v1495 = vpop.f32.mrf.mxu0
      %v1496 = vadd.f32 0.0, %v1495
      %1497 = vmatmul.f32.gmra.mxu0 %v1317
      %v1498 = vpop.f32.mrf.mxu0
      %v1499 = vadd.f32 0.0, %v1498
      %1500 = vmatmul.f32.gmra.mxu0 %v1320
      %v1501 = vpop.f32.mrf.mxu0
      %v1502 = vadd.f32 0.0, %v1501
      %1503 = vmatmul.f32.gmra.mxu0 %v1323
      %v1504 = vpop.f32.mrf.mxu0
      %v1505 = vadd.f32 0.0, %v1504
      %1506 = vmatmul.f32.gmra.mxu0 %v1326
      %v1507 = vpop.f32.mrf.mxu0
      %v1508 = vadd.f32 0.0, %v1507
      %1509 = vmatmul.f32.gmra.mxu0 %v1329
      %v1510 = vpop.f32.mrf.mxu0
      %v1511 = vadd.f32 0.0, %v1510
      %1512 = vmatmul.f32.gmra.mxu0 %v1332
      %v1513 = vpop.f32.mrf.mxu0
      %v1514 = vadd.f32 0.0, %v1513
      %1515 = vmatmul.f32.gmra.mxu0 %v1335
      %v1516 = vpop.f32.mrf.mxu0
      %v1517 = vadd.f32 0.0, %v1516
      %1518 = vmatmul.f32.gmra.mxu0 %v1338
      %v1519 = vpop.f32.mrf.mxu0
      %v1520 = vadd.f32 0.0, %v1519
      %1521 = vmatmul.f32.gmra.mxu0 %v1341
      %v1522 = vpop.f32.mrf.mxu0
      %v1523 = vadd.f32 0.0, %v1522
      %1524 = vmatmul.f32.gmra.mxu0 %v1344
      %v1525 = vpop.f32.mrf.mxu0
      %v1526 = vadd.f32 0.0, %v1525
      %1527 = vmatmul.f32.gmra.mxu0 %v1347
      %v1528 = vpop.f32.mrf.mxu0
      %v1529 = vadd.f32 0.0, %v1528
      %1530 = vmatmul.f32.gmra.mxu0 %v1350
      %v1531 = vpop.f32.mrf.mxu0
      %v1532 = vadd.f32 0.0, %v1531
      %1533 = vmatmul.f32.gmra.mxu0 %v1353
      %v1534 = vpop.f32.mrf.mxu0
      %v1535 = vadd.f32 0.0, %v1534
      %1536 = vmatmul.f32.gmra.mxu0 %v1356
      %v1537 = vpop.f32.mrf.mxu0
      %v1538 = vadd.f32 0.0, %v1537
      %1539 = vmatmul.f32.gmra.mxu0 %v1359
      %v1540 = vpop.f32.mrf.mxu0
      %v1541 = vadd.f32 0.0, %v1540
      %1542 = vmatmul.f32.gmra.mxu0 %v1362
      %v1543 = vpop.f32.mrf.mxu0
      %v1544 = vadd.f32 0.0, %v1543
      %1545 = vmatmul.f32.gmra.mxu0 %v1365
      %v1546 = vpop.f32.mrf.mxu0
      %v1547 = vadd.f32 0.0, %v1546
      %1548 = vmatmul.f32.gmra.mxu0 %v1368
      %v1549 = vpop.f32.mrf.mxu0
      %v1550 = vadd.f32 0.0, %v1549
      %1551 = vmatmul.f32.gmra.mxu0 %v1371
      %v1552 = vpop.f32.mrf.mxu0
      %v1553 = vadd.f32 0.0, %v1552
      %1554 = vmatmul.f32.gmra.mxu0 %v1374
      %v1555 = vpop.f32.mrf.mxu0
      %v1556 = vadd.f32 0.0, %v1555
      %1557 = vmatmul.f32.gmra.mxu0 %v1377
      %v1558 = vpop.f32.mrf.mxu0
      %v1559 = vadd.f32 0.0, %v1558
      %1560 = vmatmul.f32.gmra.mxu0 %v1380
      %v1561 = vpop.f32.mrf.mxu0
      %v1562 = vadd.f32 0.0, %v1561
      %1563 = vmatmul.f32.gmra.mxu0 %v1383
      %v1564 = vpop.f32.mrf.mxu0
      %v1565 = vadd.f32 0.0, %v1564
      %1566 = vmatmul.f32.gmra.mxu0 %v1386
      %v1567 = vpop.f32.mrf.mxu0
      %v1568 = vadd.f32 0.0, %v1567
      %1569 = vmatmul.f32.gmra.mxu0 %v1389
      %v1570 = vpop.f32.mrf.mxu0
      %v1571 = vadd.f32 0.0, %v1570
      %1572 = vmatmul.f32.gmra.mxu0 %v1392
      %v1573 = vpop.f32.mrf.mxu0
      %v1574 = vadd.f32 0.0, %v1573
      %1575 = vmatmul.f32.gmra.mxu0 %v1395
      %v1576 = vpop.f32.mrf.mxu0
      %v1577 = vadd.f32 0.0, %v1576
      %1578 = vmatmul.f32.gmra.mxu0 %v1398
      %v1579 = vpop.f32.mrf.mxu0
      %v1580 = vadd.f32 0.0, %v1579
      %1581 = vmatmul.f32.gmra.mxu0 %v1401
      %v1582 = vpop.f32.mrf.mxu0
      %v1583 = vadd.f32 0.0, %v1582
      %1584 = vmatmul.f32.gmra.mxu0 %v1404
      %v1585 = vpop.f32.mrf.mxu0
      %v1586 = vadd.f32 0.0, %v1585
      %1587 = vmatmul.f32.gmra.mxu0 %v1407
      %v1588 = vpop.f32.mrf.mxu0
      %v1589 = vadd.f32 0.0, %v1588
      %1590 = vmatmul.f32.gmra.mxu0 %v1410
      %v1591 = vpop.f32.mrf.mxu0
      %v1592 = vadd.f32 0.0, %v1591
      %1593 = vmatmul.f32.gmra.mxu0 %v1413
      %v1594 = vpop.f32.mrf.mxu0
      %v1595 = vadd.f32 0.0, %v1594
      %1596 = vdwg.mxu0
      %v1597 = vadd.f32 %v1036, %v1436
      %v1598 = vadd.f32 %v1039, %v1439
      %v1599 = vadd.f32 %v1042, %v1442
      %v1600 = vadd.f32 %v1045, %v1445
      %v1601 = vadd.f32 %v1048, %v1448
      %v1602 = vadd.f32 %v1051, %v1451
      %v1603 = vadd.f32 %v1054, %v1454
      %v1604 = vadd.f32 %v1057, %v1457
      %v1605 = vadd.f32 %v1060, %v1460
      %v1606 = vadd.f32 %v1063, %v1463
      %v1607 = vadd.f32 %v1066, %v1466
      %v1608 = vadd.f32 %v1069, %v1469
      %v1609 = vadd.f32 %v1072, %v1472
      %v1610 = vadd.f32 %v1075, %v1475
      %v1611 = vadd.f32 %v1078, %v1478
      %v1612 = vadd.f32 %v1081, %v1481
      %v1613 = vadd.f32 %v1084, %v1484
      %v1614 = vadd.f32 %v1087, %v1487
      %v1615 = vadd.f32 %v1090, %v1490
      %v1616 = vadd.f32 %v1093, %v1493
      %v1617 = vadd.f32 %v1096, %v1496
      %v1618 = vadd.f32 %v1099, %v1499
      %v1619 = vadd.f32 %v1102, %v1502
      %v1620 = vadd.f32 %v1105, %v1505
      %v1621 = vadd.f32 %v1108, %v1508
      %v1622 = vadd.f32 %v1111, %v1511
      %v1623 = vadd.f32 %v1114, %v1514
      %v1624 = vadd.f32 %v1117, %v1517
      %v1625 = vadd.f32 %v1120, %v1520
      %v1626 = vadd.f32 %v1123, %v1523
      %v1627 = vadd.f32 %v1126, %v1526
      %v1628 = vadd.f32 %v1129, %v1529
      %v1629 = vadd.f32 %v1132, %v1532
      %v1630 = vadd.f32 %v1135, %v1535
      %v1631 = vadd.f32 %v1138, %v1538
      %v1632 = vadd.f32 %v1141, %v1541
      %v1633 = vadd.f32 %v1144, %v1544
      %v1634 = vadd.f32 %v1147, %v1547
      %v1635 = vadd.f32 %v1150, %v1550
      %v1636 = vadd.f32 %v1153, %v1553
      %v1637 = vadd.f32 %v1156, %v1556
      %v1638 = vadd.f32 %v1159, %v1559
      %v1639 = vadd.f32 %v1162, %v1562
      %v1640 = vadd.f32 %v1165, %v1565
      %v1641 = vadd.f32 %v1168, %v1568
      %v1642 = vadd.f32 %v1171, %v1571
      %v1643 = vadd.f32 %v1174, %v1574
      %v1644 = vadd.f32 %v1177, %v1577
      %v1645 = vadd.f32 %v1180, %v1580
      %v1646 = vadd.f32 %v1183, %v1583
      %v1647 = vadd.f32 %v1186, %v1586
      %v1648 = vadd.f32 %v1189, %v1589
      %v1649 = vadd.f32 %v1192, %v1592
      %v1650 = vadd.f32 %v1195, %v1595
      %v1651 = vld [vmem:[%s386 + $0x18] sm:$0xff]
      %v1652 = vld [vmem:[%s386 + $0x20] sm:$0xff]
      %v1653 = vld [vmem:[%s386 + $0x28] sm:$0xff]
      %v1654 = vld [vmem:[%s386 + $0x30] sm:$0xff]
      %v1655 = vld [vmem:[%s386 + $0x38] sm:$0xff]
      %v1656 = vld [vmem:[%s386 + $0x40] sm:$0xff]
      %v1657 = vld [vmem:[%s386 + $0x48] sm:$0xff]
      %v1658 = vld [vmem:[%s386 + $0x50] sm:$0xff]
      %v1659 = vld [vmem:[%s386 + $0x58] sm:$0xff]
      %v1660 = vld [vmem:[%s386 + $0x60] sm:$0xff]
      %v1661 = vld [vmem:[%s386 + $0x68] sm:$0xff]
      %v1662 = vld [vmem:[%s386 + $0x70] sm:$0xff]
      %v1663 = vld [vmem:[%s386 + $0x78] sm:$0xff]
      %v1664 = vld [vmem:[%s386 + $0x80] sm:$0xff]
      %v1665 = vld [vmem:[%s386 + $0x88] sm:$0xff]
      %v1666 = vld [vmem:[%s386 + $0x90] sm:$0xff]
      %v1667 = vld [vmem:[%s386 + $0x98] sm:$0xff]
      %v1668 = vld [vmem:[%s386 + $0xa0] sm:$0xff]
      %v1669 = vld [vmem:[%s386 + $0xa8] sm:$0xff]
      %v1670 = vld [vmem:[%s386 + $0xb0] sm:$0xff]
      %v1671 = vld [vmem:[%s386 + $0xb8] sm:$0xff]
      %v1672 = vld [vmem:[%s386 + $0xc0] sm:$0xff]
      %v1673 = vld [vmem:[%s386 + $0xc8] sm:$0xff]
      %v1674 = vld [vmem:[%s386 + $0xd0] sm:$0xff]
      %v1675 = vld [vmem:[%s386 + $0xd8] sm:$0xff]
      %v1676 = vld [vmem:[%s386 + $0xe0] sm:$0xff]
      %v1677 = vld [vmem:[%s386 + $0xe8] sm:$0xff]
      %v1678 = vld [vmem:[%s386 + $0xf0] sm:$0xff]
      %v1679 = vld [vmem:[%s386 + $0xf8] sm:$0xff]
      %v1680 = vld [vmem:[%s386 + $0x100] sm:$0xff]
      %v1681 = vld [vmem:[%s386 + $0x108] sm:$0xff]
      %v1682 = vld [vmem:[%s386 + $0x110] sm:$0xff]
      %v1683 = vld [vmem:[%s386 + $0x118] sm:$0xff]
      %v1684 = vld [vmem:[%s386 + $0x120] sm:$0xff]
      %v1685 = vld [vmem:[%s386 + $0x128] sm:$0xff]
      %v1686 = vld [vmem:[%s386 + $0x130] sm:$0xff]
      %v1687 = vld [vmem:[%s386 + $0x138] sm:$0xff]
      %v1688 = vld [vmem:[%s386 + $0x140] sm:$0xff]
      %v1689 = vld [vmem:[%s386 + $0x148] sm:$0xff]
      %v1690 = vld [vmem:[%s386 + $0x150] sm:$0xff]
      %v1691 = vld [vmem:[%s386 + $0x158] sm:$0xff]
      %v1692 = vld [vmem:[%s386 + $0x160] sm:$0xff]
      %v1693 = vld [vmem:[%s386 + $0x168] sm:$0xff]
      %v1694 = vld [vmem:[%s386 + $0x170] sm:$0xff]
      %v1695 = vld [vmem:[%s386 + $0x178] sm:$0xff]
      %v1696 = vld [vmem:[%s386 + $0x180] sm:$0xff]
      %v1697 = vld [vmem:[%s386 + $0x188] sm:$0xff]
      %v1698 = vld [vmem:[%s386 + $0x190] sm:$0xff]
      %v1699 = vld [vmem:[%s386 + $0x198] sm:$0xff]
      %v1700 = vld [vmem:[%s386 + $0x1a0] sm:$0xff]
      %v1701 = vld [vmem:[%s386 + $0x1a8] sm:$0xff]
      %v1702 = vld [vmem:[%s386 + $0x1b0] sm:$0xff]
      %v1703 = vld [vmem:[%s386 + $0x1b8] sm:$0xff]
      %v1704 = vld [vmem:[%s386 + $0x1c0] sm:$0xff]
      %s1705 = scalar_lea.vmem %s2, 12
      %v1706 = vld [vmem:[%s1705] sm:$0xf]
      %v1708 = vsel %vm507, %v1651, 0
      %v1711 = vsel %vm507, %v1652, 0
      %v1714 = vsel %vm507, %v1653, 0
      %v1717 = vsel %vm507, %v1654, 0
      %v1720 = vsel %vm507, %v1655, 0
      %v1723 = vsel %vm507, %v1656, 0
      %v1726 = vsel %vm507, %v1657, 0
      %v1729 = vsel %vm507, %v1658, 0
      %v1732 = vsel %vm507, %v1659, 0
      %v1735 = vsel %vm507, %v1660, 0
      %v1738 = vsel %vm507, %v1661, 0
      %v1741 = vsel %vm507, %v1662, 0
      %v1744 = vsel %vm507, %v1663, 0
      %v1747 = vsel %vm507, %v1664, 0
      %v1750 = vsel %vm507, %v1665, 0
      %v1753 = vsel %vm507, %v1666, 0
      %v1756 = vsel %vm507, %v1667, 0
      %v1759 = vsel %vm507, %v1668, 0
      %v1762 = vsel %vm507, %v1669, 0
      %v1765 = vsel %vm507, %v1670, 0
      %v1768 = vsel %vm507, %v1671, 0
      %v1771 = vsel %vm507, %v1672, 0
      %v1774 = vsel %vm507, %v1673, 0
      %v1777 = vsel %vm507, %v1674, 0
      %v1780 = vsel %vm507, %v1675, 0
      %v1783 = vsel %vm507, %v1676, 0
      %v1786 = vsel %vm507, %v1677, 0
      %v1789 = vsel %vm507, %v1678, 0
      %v1792 = vsel %vm507, %v1679, 0
      %v1795 = vsel %vm507, %v1680, 0
      %v1798 = vsel %vm507, %v1681, 0
      %v1801 = vsel %vm507, %v1682, 0
      %v1804 = vsel %vm507, %v1683, 0
      %v1807 = vsel %vm507, %v1684, 0
      %v1810 = vsel %vm507, %v1685, 0
      %v1813 = vsel %vm507, %v1686, 0
      %v1816 = vsel %vm507, %v1687, 0
      %v1819 = vsel %vm507, %v1688, 0
      %v1822 = vsel %vm507, %v1689, 0
      %v1825 = vsel %vm507, %v1690, 0
      %v1828 = vsel %vm507, %v1691, 0
      %v1831 = vsel %vm507, %v1692, 0
      %v1834 = vsel %vm507, %v1693, 0
      %v1837 = vsel %vm507, %v1694, 0
      %v1840 = vsel %vm507, %v1695, 0
      %v1843 = vsel %vm507, %v1696, 0
      %v1846 = vsel %vm507, %v1697, 0
      %v1849 = vsel %vm507, %v1698, 0
      %v1852 = vsel %vm507, %v1699, 0
      %v1855 = vsel %vm507, %v1700, 0
      %v1858 = vsel %vm507, %v1701, 0
      %v1861 = vsel %vm507, %v1702, 0
      %v1864 = vsel %vm507, %v1703, 0
      %v1867 = vsel %vm507, %v1704, 0
      %v1870 = vsel %vm670, %v1706, 0
      %1872 = vmatpush.msra.mxu0 0.0
      %1873 = vmatpush.msra.mxu0 0.0
      %1874 = vmatpush.msra.mxu0 0.0
      %1875 = vmatpush.msra.mxu0 0.0
      %1876 = vmatpush.msra.mxu0 0.0
      %1877 = vmatpush.msra.mxu0 0.0
      %1878 = vmatpush.msra.mxu0 0.0
      %1879 = vmatpush.msra.mxu0 0.0
      %1880 = vmatpush.msra.mxu0 0.0
      %1881 = vmatpush.msra.mxu0 0.0
      %1882 = vmatpush.msra.mxu0 0.0
      %1883 = vmatpush.msra.mxu0 0.0
      %1884 = vmatpush.msra.mxu0 0.0
      %1885 = vmatpush.msra.mxu0 0.0
      %1886 = vmatpush.msra.mxu0 0.0
      %1887 = vmatpush.msra.mxu0 %v1870
      %1888 = vmatmul.f32.gmra.mxu0 %v1708
      %v1889 = vpop.f32.mrf.mxu0
      %v1890 = vadd.f32 0.0, %v1889
      %1891 = vmatmul.f32.gmra.mxu0 %v1711
      %v1892 = vpop.f32.mrf.mxu0
      %v1893 = vadd.f32 0.0, %v1892
      %1894 = vmatmul.f32.gmra.mxu0 %v1714
      %v1895 = vpop.f32.mrf.mxu0
      %v1896 = vadd.f32 0.0, %v1895
      %1897 = vmatmul.f32.gmra.mxu0 %v1717
      %v1898 = vpop.f32.mrf.mxu0
      %v1899 = vadd.f32 0.0, %v1898
      %1900 = vmatmul.f32.gmra.mxu0 %v1720
      %v1901 = vpop.f32.mrf.mxu0
      %v1902 = vadd.f32 0.0, %v1901
      %1903 = vmatmul.f32.gmra.mxu0 %v1723
      %v1904 = vpop.f32.mrf.mxu0
      %v1905 = vadd.f32 0.0, %v1904
      %1906 = vmatmul.f32.gmra.mxu0 %v1726
      %v1907 = vpop.f32.mrf.mxu0
      %v1908 = vadd.f32 0.0, %v1907
      %1909 = vmatmul.f32.gmra.mxu0 %v1729
      %v1910 = vpop.f32.mrf.mxu0
      %v1911 = vadd.f32 0.0, %v1910
      %1912 = vmatmul.f32.gmra.mxu0 %v1732
      %v1913 = vpop.f32.mrf.mxu0
      %v1914 = vadd.f32 0.0, %v1913
      %1915 = vmatmul.f32.gmra.mxu0 %v1735
      %v1916 = vpop.f32.mrf.mxu0
      %v1917 = vadd.f32 0.0, %v1916
      %1918 = vmatmul.f32.gmra.mxu0 %v1738
      %v1919 = vpop.f32.mrf.mxu0
      %v1920 = vadd.f32 0.0, %v1919
      %1921 = vmatmul.f32.gmra.mxu0 %v1741
      %v1922 = vpop.f32.mrf.mxu0
      %v1923 = vadd.f32 0.0, %v1922
      %1924 = vmatmul.f32.gmra.mxu0 %v1744
      %v1925 = vpop.f32.mrf.mxu0
      %v1926 = vadd.f32 0.0, %v1925
      %1927 = vmatmul.f32.gmra.mxu0 %v1747
      %v1928 = vpop.f32.mrf.mxu0
      %v1929 = vadd.f32 0.0, %v1928
      %1930 = vmatmul.f32.gmra.mxu0 %v1750
      %v1931 = vpop.f32.mrf.mxu0
      %v1932 = vadd.f32 0.0, %v1931
      %1933 = vmatmul.f32.gmra.mxu0 %v1753
      %v1934 = vpop.f32.mrf.mxu0
      %v1935 = vadd.f32 0.0, %v1934
      %1936 = vmatmul.f32.gmra.mxu0 %v1756
      %v1937 = vpop.f32.mrf.mxu0
      %v1938 = vadd.f32 0.0, %v1937
      %1939 = vmatmul.f32.gmra.mxu0 %v1759
      %v1940 = vpop.f32.mrf.mxu0
      %v1941 = vadd.f32 0.0, %v1940
      %1942 = vmatmul.f32.gmra.mxu0 %v1762
      %v1943 = vpop.f32.mrf.mxu0
      %v1944 = vadd.f32 0.0, %v1943
      %1945 = vmatmul.f32.gmra.mxu0 %v1765
      %v1946 = vpop.f32.mrf.mxu0
      %v1947 = vadd.f32 0.0, %v1946
      %1948 = vmatmul.f32.gmra.mxu0 %v1768
      %v1949 = vpop.f32.mrf.mxu0
      %v1950 = vadd.f32 0.0, %v1949
      %1951 = vmatmul.f32.gmra.mxu0 %v1771
      %v1952 = vpop.f32.mrf.mxu0
      %v1953 = vadd.f32 0.0, %v1952
      %1954 = vmatmul.f32.gmra.mxu0 %v1774
      %v1955 = vpop.f32.mrf.mxu0
      %v1956 = vadd.f32 0.0, %v1955
      %1957 = vmatmul.f32.gmra.mxu0 %v1777
      %v1958 = vpop.f32.mrf.mxu0
      %v1959 = vadd.f32 0.0, %v1958
      %1960 = vmatmul.f32.gmra.mxu0 %v1780
      %v1961 = vpop.f32.mrf.mxu0
      %v1962 = vadd.f32 0.0, %v1961
      %1963 = vmatmul.f32.gmra.mxu0 %v1783
      %v1964 = vpop.f32.mrf.mxu0
      %v1965 = vadd.f32 0.0, %v1964
      %1966 = vmatmul.f32.gmra.mxu0 %v1786
      %v1967 = vpop.f32.mrf.mxu0
      %v1968 = vadd.f32 0.0, %v1967
      %1969 = vmatmul.f32.gmra.mxu0 %v1789
      %v1970 = vpop.f32.mrf.mxu0
      %v1971 = vadd.f32 0.0, %v1970
      %1972 = vmatmul.f32.gmra.mxu0 %v1792
      %v1973 = vpop.f32.mrf.mxu0
      %v1974 = vadd.f32 0.0, %v1973
      %1975 = vmatmul.f32.gmra.mxu0 %v1795
      %v1976 = vpop.f32.mrf.mxu0
      %v1977 = vadd.f32 0.0, %v1976
      %1978 = vmatmul.f32.gmra.mxu0 %v1798
      %v1979 = vpop.f32.mrf.mxu0
      %v1980 = vadd.f32 0.0, %v1979
      %1981 = vmatmul.f32.gmra.mxu0 %v1801
      %v1982 = vpop.f32.mrf.mxu0
      %v1983 = vadd.f32 0.0, %v1982
      %1984 = vmatmul.f32.gmra.mxu0 %v1804
      %v1985 = vpop.f32.mrf.mxu0
      %v1986 = vadd.f32 0.0, %v1985
      %1987 = vmatmul.f32.gmra.mxu0 %v1807
      %v1988 = vpop.f32.mrf.mxu0
      %v1989 = vadd.f32 0.0, %v1988
      %1990 = vmatmul.f32.gmra.mxu0 %v1810
      %v1991 = vpop.f32.mrf.mxu0
      %v1992 = vadd.f32 0.0, %v1991
      %1993 = vmatmul.f32.gmra.mxu0 %v1813
      %v1994 = vpop.f32.mrf.mxu0
      %v1995 = vadd.f32 0.0, %v1994
      %1996 = vmatmul.f32.gmra.mxu0 %v1816
      %v1997 = vpop.f32.mrf.mxu0
      %v1998 = vadd.f32 0.0, %v1997
      %1999 = vmatmul.f32.gmra.mxu0 %v1819
      %v2000 = vpop.f32.mrf.mxu0
      %v2001 = vadd.f32 0.0, %v2000
      %2002 = vmatmul.f32.gmra.mxu0 %v1822
      %v2003 = vpop.f32.mrf.mxu0
      %v2004 = vadd.f32 0.0, %v2003
      %2005 = vmatmul.f32.gmra.mxu0 %v1825
      %v2006 = vpop.f32.mrf.mxu0
      %v2007 = vadd.f32 0.0, %v2006
      %2008 = vmatmul.f32.gmra.mxu0 %v1828
      %v2009 = vpop.f32.mrf.mxu0
      %v2010 = vadd.f32 0.0, %v2009
      %2011 = vmatmul.f32.gmra.mxu0 %v1831
      %v2012 = vpop.f32.mrf.mxu0
      %v2013 = vadd.f32 0.0, %v2012
      %2014 = vmatmul.f32.gmra.mxu0 %v1834
      %v2015 = vpop.f32.mrf.mxu0
      %v2016 = vadd.f32 0.0, %v2015
      %2017 = vmatmul.f32.gmra.mxu0 %v1837
      %v2018 = vpop.f32.mrf.mxu0
      %v2019 = vadd.f32 0.0, %v2018
      %2020 = vmatmul.f32.gmra.mxu0 %v1840
      %v2021 = vpop.f32.mrf.mxu0
      %v2022 = vadd.f32 0.0, %v2021
      %2023 = vmatmul.f32.gmra.mxu0 %v1843
      %v2024 = vpop.f32.mrf.mxu0
      %v2025 = vadd.f32 0.0, %v2024
      %2026 = vmatmul.f32.gmra.mxu0 %v1846
      %v2027 = vpop.f32.mrf.mxu0
      %v2028 = vadd.f32 0.0, %v2027
      %2029 = vmatmul.f32.gmra.mxu0 %v1849
      %v2030 = vpop.f32.mrf.mxu0
      %v2031 = vadd.f32 0.0, %v2030
      %2032 = vmatmul.f32.gmra.mxu0 %v1852
      %v2033 = vpop.f32.mrf.mxu0
      %v2034 = vadd.f32 0.0, %v2033
      %2035 = vmatmul.f32.gmra.mxu0 %v1855
      %v2036 = vpop.f32.mrf.mxu0
      %v2037 = vadd.f32 0.0, %v2036
      %2038 = vmatmul.f32.gmra.mxu0 %v1858
      %v2039 = vpop.f32.mrf.mxu0
      %v2040 = vadd.f32 0.0, %v2039
      %2041 = vmatmul.f32.gmra.mxu0 %v1861
      %v2042 = vpop.f32.mrf.mxu0
      %v2043 = vadd.f32 0.0, %v2042
      %2044 = vmatmul.f32.gmra.mxu0 %v1864
      %v2045 = vpop.f32.mrf.mxu0
      %v2046 = vadd.f32 0.0, %v2045
      %2047 = vmatmul.f32.gmra.mxu0 %v1867
      %v2048 = vpop.f32.mrf.mxu0
      %v2049 = vadd.f32 0.0, %v2048
      %2050 = vdwg.mxu0
      %v2051 = vadd.f32 %v1597, %v1890
      %v2052 = vadd.f32 %v1598, %v1893
      %v2053 = vadd.f32 %v1599, %v1896
      %v2054 = vadd.f32 %v1600, %v1899
      %v2055 = vadd.f32 %v1601, %v1902
      %v2056 = vadd.f32 %v1602, %v1905
      %v2057 = vadd.f32 %v1603, %v1908
      %v2058 = vadd.f32 %v1604, %v1911
      %v2059 = vadd.f32 %v1605, %v1914
      %v2060 = vadd.f32 %v1606, %v1917
      %v2061 = vadd.f32 %v1607, %v1920
      %v2062 = vadd.f32 %v1608, %v1923
      %v2063 = vadd.f32 %v1609, %v1926
      %v2064 = vadd.f32 %v1610, %v1929
      %v2065 = vadd.f32 %v1611, %v1932
      %v2066 = vadd.f32 %v1612, %v1935
      %v2067 = vadd.f32 %v1613, %v1938
      %v2068 = vadd.f32 %v1614, %v1941
      %v2069 = vadd.f32 %v1615, %v1944
      %v2070 = vadd.f32 %v1616, %v1947
      %v2071 = vadd.f32 %v1617, %v1950
      %v2072 = vadd.f32 %v1618, %v1953
      %v2073 = vadd.f32 %v1619, %v1956
      %v2074 = vadd.f32 %v1620, %v1959
      %v2075 = vadd.f32 %v1621, %v1962
      %v2076 = vadd.f32 %v1622, %v1965
      %v2077 = vadd.f32 %v1623, %v1968
      %v2078 = vadd.f32 %v1624, %v1971
      %v2079 = vadd.f32 %v1625, %v1974
      %v2080 = vadd.f32 %v1626, %v1977
      %v2081 = vadd.f32 %v1627, %v1980
      %v2082 = vadd.f32 %v1628, %v1983
      %v2083 = vadd.f32 %v1629, %v1986
      %v2084 = vadd.f32 %v1630, %v1989
      %v2085 = vadd.f32 %v1631, %v1992
      %v2086 = vadd.f32 %v1632, %v1995
      %v2087 = vadd.f32 %v1633, %v1998
      %v2088 = vadd.f32 %v1634, %v2001
      %v2089 = vadd.f32 %v1635, %v2004
      %v2090 = vadd.f32 %v1636, %v2007
      %v2091 = vadd.f32 %v1637, %v2010
      %v2092 = vadd.f32 %v1638, %v2013
      %v2093 = vadd.f32 %v1639, %v2016
      %v2094 = vadd.f32 %v1640, %v2019
      %v2095 = vadd.f32 %v1641, %v2022
      %v2096 = vadd.f32 %v1642, %v2025
      %v2097 = vadd.f32 %v1643, %v2028
      %v2098 = vadd.f32 %v1644, %v2031
      %v2099 = vadd.f32 %v1645, %v2034
      %v2100 = vadd.f32 %v1646, %v2037
      %v2101 = vadd.f32 %v1647, %v2040
      %v2102 = vadd.f32 %v1648, %v2043
      %v2103 = vadd.f32 %v1649, %v2046
      %v2104 = vadd.f32 %v1650, %v2049
      %v2105 = vld [vmem:[%s386 + $0x19] sm:$0xff]
      %v2106 = vld [vmem:[%s386 + $0x21] sm:$0xff]
      %v2107 = vld [vmem:[%s386 + $0x29] sm:$0xff]
      %v2108 = vld [vmem:[%s386 + $0x31] sm:$0xff]
      %v2109 = vld [vmem:[%s386 + $0x39] sm:$0xff]
      %v2110 = vld [vmem:[%s386 + $0x41] sm:$0xff]
      %v2111 = vld [vmem:[%s386 + $0x49] sm:$0xff]
      %v2112 = vld [vmem:[%s386 + $0x51] sm:$0xff]
      %v2113 = vld [vmem:[%s386 + $0x59] sm:$0xff]
      %v2114 = vld [vmem:[%s386 + $0x61] sm:$0xff]
      %v2115 = vld [vmem:[%s386 + $0x69] sm:$0xff]
      %v2116 = vld [vmem:[%s386 + $0x71] sm:$0xff]
      %v2117 = vld [vmem:[%s386 + $0x79] sm:$0xff]
      %v2118 = vld [vmem:[%s386 + $0x81] sm:$0xff]
      %v2119 = vld [vmem:[%s386 + $0x89] sm:$0xff]
      %v2120 = vld [vmem:[%s386 + $0x91] sm:$0xff]
      %v2121 = vld [vmem:[%s386 + $0x99] sm:$0xff]
      %v2122 = vld [vmem:[%s386 + $0xa1] sm:$0xff]
      %v2123 = vld [vmem:[%s386 + $0xa9] sm:$0xff]
      %v2124 = vld [vmem:[%s386 + $0xb1] sm:$0xff]
      %v2125 = vld [vmem:[%s386 + $0xb9] sm:$0xff]
      %v2126 = vld [vmem:[%s386 + $0xc1] sm:$0xff]
      %v2127 = vld [vmem:[%s386 + $0xc9] sm:$0xff]
      %v2128 = vld [vmem:[%s386 + $0xd1] sm:$0xff]
      %v2129 = vld [vmem:[%s386 + $0xd9] sm:$0xff]
      %v2130 = vld [vmem:[%s386 + $0xe1] sm:$0xff]
      %v2131 = vld [vmem:[%s386 + $0xe9] sm:$0xff]
      %v2132 = vld [vmem:[%s386 + $0xf1] sm:$0xff]
      %v2133 = vld [vmem:[%s386 + $0xf9] sm:$0xff]
      %v2134 = vld [vmem:[%s386 + $0x101] sm:$0xff]
      %v2135 = vld [vmem:[%s386 + $0x109] sm:$0xff]
      %v2136 = vld [vmem:[%s386 + $0x111] sm:$0xff]
      %v2137 = vld [vmem:[%s386 + $0x119] sm:$0xff]
      %v2138 = vld [vmem:[%s386 + $0x121] sm:$0xff]
      %v2139 = vld [vmem:[%s386 + $0x129] sm:$0xff]
      %v2140 = vld [vmem:[%s386 + $0x131] sm:$0xff]
      %v2141 = vld [vmem:[%s386 + $0x139] sm:$0xff]
      %v2142 = vld [vmem:[%s386 + $0x141] sm:$0xff]
      %v2143 = vld [vmem:[%s386 + $0x149] sm:$0xff]
      %v2144 = vld [vmem:[%s386 + $0x151] sm:$0xff]
      %v2145 = vld [vmem:[%s386 + $0x159] sm:$0xff]
      %v2146 = vld [vmem:[%s386 + $0x161] sm:$0xff]
      %v2147 = vld [vmem:[%s386 + $0x169] sm:$0xff]
      %v2148 = vld [vmem:[%s386 + $0x171] sm:$0xff]
      %v2149 = vld [vmem:[%s386 + $0x179] sm:$0xff]
      %v2150 = vld [vmem:[%s386 + $0x181] sm:$0xff]
      %v2151 = vld [vmem:[%s386 + $0x189] sm:$0xff]
      %v2152 = vld [vmem:[%s386 + $0x191] sm:$0xff]
      %v2153 = vld [vmem:[%s386 + $0x199] sm:$0xff]
      %v2154 = vld [vmem:[%s386 + $0x1a1] sm:$0xff]
      %v2155 = vld [vmem:[%s386 + $0x1a9] sm:$0xff]
      %v2156 = vld [vmem:[%s386 + $0x1b1] sm:$0xff]
      %v2157 = vld [vmem:[%s386 + $0x1b9] sm:$0xff]
      %v2158 = vld [vmem:[%s386 + $0x1c1] sm:$0xff]
      %s2159 = scalar_lea.vmem %s2, 16
      %v2160 = vld [vmem:[%s2159] sm:$0xf]
      %v2162 = vsel %vm507, %v2105, 0
      %v2165 = vsel %vm507, %v2106, 0
      %v2168 = vsel %vm507, %v2107, 0
      %v2171 = vsel %vm507, %v2108, 0
      %v2174 = vsel %vm507, %v2109, 0
      %v2177 = vsel %vm507, %v2110, 0
      %v2180 = vsel %vm507, %v2111, 0
      %v2183 = vsel %vm507, %v2112, 0
      %v2186 = vsel %vm507, %v2113, 0
      %v2189 = vsel %vm507, %v2114, 0
      %v2192 = vsel %vm507, %v2115, 0
      %v2195 = vsel %vm507, %v2116, 0
      %v2198 = vsel %vm507, %v2117, 0
      %v2201 = vsel %vm507, %v2118, 0
      %v2204 = vsel %vm507, %v2119, 0
      %v2207 = vsel %vm507, %v2120, 0
      %v2210 = vsel %vm507, %v2121, 0
      %v2213 = vsel %vm507, %v2122, 0
      %v2216 = vsel %vm507, %v2123, 0
      %v2219 = vsel %vm507, %v2124, 0
      %v2222 = vsel %vm507, %v2125, 0
      %v2225 = vsel %vm507, %v2126, 0
      %v2228 = vsel %vm507, %v2127, 0
      %v2231 = vsel %vm507, %v2128, 0
      %v2234 = vsel %vm507, %v2129, 0
      %v2237 = vsel %vm507, %v2130, 0
      %v2240 = vsel %vm507, %v2131, 0
      %v2243 = vsel %vm507, %v2132, 0
      %v2246 = vsel %vm507, %v2133, 0
      %v2249 = vsel %vm507, %v2134, 0
      %v2252 = vsel %vm507, %v2135, 0
      %v2255 = vsel %vm507, %v2136, 0
      %v2258 = vsel %vm507, %v2137, 0
      %v2261 = vsel %vm507, %v2138, 0
      %v2264 = vsel %vm507, %v2139, 0
      %v2267 = vsel %vm507, %v2140, 0
      %v2270 = vsel %vm507, %v2141, 0
      %v2273 = vsel %vm507, %v2142, 0
      %v2276 = vsel %vm507, %v2143, 0
      %v2279 = vsel %vm507, %v2144, 0
      %v2282 = vsel %vm507, %v2145, 0
      %v2285 = vsel %vm507, %v2146, 0
      %v2288 = vsel %vm507, %v2147, 0
      %v2291 = vsel %vm507, %v2148, 0
      %v2294 = vsel %vm507, %v2149, 0
      %v2297 = vsel %vm507, %v2150, 0
      %v2300 = vsel %vm507, %v2151, 0
      %v2303 = vsel %vm507, %v2152, 0
      %v2306 = vsel %vm507, %v2153, 0
      %v2309 = vsel %vm507, %v2154, 0
      %v2312 = vsel %vm507, %v2155, 0
      %v2315 = vsel %vm507, %v2156, 0
      %v2318 = vsel %vm507, %v2157, 0
      %v2321 = vsel %vm507, %v2158, 0
      %v2324 = vsel %vm670, %v2160, 0
      %2326 = vmatpush.msra.mxu0 0.0
      %2327 = vmatpush.msra.mxu0 0.0
      %2328 = vmatpush.msra.mxu0 0.0
      %2329 = vmatpush.msra.mxu0 0.0
      %2330 = vmatpush.msra.mxu0 0.0
      %2331 = vmatpush.msra.mxu0 0.0
      %2332 = vmatpush.msra.mxu0 0.0
      %2333 = vmatpush.msra.mxu0 0.0
      %2334 = vmatpush.msra.mxu0 0.0
      %2335 = vmatpush.msra.mxu0 0.0
      %2336 = vmatpush.msra.mxu0 0.0
      %2337 = vmatpush.msra.mxu0 0.0
      %2338 = vmatpush.msra.mxu0 0.0
      %2339 = vmatpush.msra.mxu0 0.0
      %2340 = vmatpush.msra.mxu0 0.0
      %2341 = vmatpush.msra.mxu0 %v2324
      %2342 = vmatmul.f32.gmra.mxu0 %v2162
      %v2343 = vpop.f32.mrf.mxu0
      %v2344 = vadd.f32 0.0, %v2343
      %2345 = vmatmul.f32.gmra.mxu0 %v2165
      %v2346 = vpop.f32.mrf.mxu0
      %v2347 = vadd.f32 0.0, %v2346
      %2348 = vmatmul.f32.gmra.mxu0 %v2168
      %v2349 = vpop.f32.mrf.mxu0
      %v2350 = vadd.f32 0.0, %v2349
      %2351 = vmatmul.f32.gmra.mxu0 %v2171
      %v2352 = vpop.f32.mrf.mxu0
      %v2353 = vadd.f32 0.0, %v2352
      %2354 = vmatmul.f32.gmra.mxu0 %v2174
      %v2355 = vpop.f32.mrf.mxu0
      %v2356 = vadd.f32 0.0, %v2355
      %2357 = vmatmul.f32.gmra.mxu0 %v2177
      %v2358 = vpop.f32.mrf.mxu0
      %v2359 = vadd.f32 0.0, %v2358
      %2360 = vmatmul.f32.gmra.mxu0 %v2180
      %v2361 = vpop.f32.mrf.mxu0
      %v2362 = vadd.f32 0.0, %v2361
      %2363 = vmatmul.f32.gmra.mxu0 %v2183
      %v2364 = vpop.f32.mrf.mxu0
      %v2365 = vadd.f32 0.0, %v2364
      %2366 = vmatmul.f32.gmra.mxu0 %v2186
      %v2367 = vpop.f32.mrf.mxu0
      %v2368 = vadd.f32 0.0, %v2367
      %2369 = vmatmul.f32.gmra.mxu0 %v2189
      %v2370 = vpop.f32.mrf.mxu0
      %v2371 = vadd.f32 0.0, %v2370
      %2372 = vmatmul.f32.gmra.mxu0 %v2192
      %v2373 = vpop.f32.mrf.mxu0
      %v2374 = vadd.f32 0.0, %v2373
      %2375 = vmatmul.f32.gmra.mxu0 %v2195
      %v2376 = vpop.f32.mrf.mxu0
      %v2377 = vadd.f32 0.0, %v2376
      %2378 = vmatmul.f32.gmra.mxu0 %v2198
      %v2379 = vpop.f32.mrf.mxu0
      %v2380 = vadd.f32 0.0, %v2379
      %2381 = vmatmul.f32.gmra.mxu0 %v2201
      %v2382 = vpop.f32.mrf.mxu0
      %v2383 = vadd.f32 0.0, %v2382
      %2384 = vmatmul.f32.gmra.mxu0 %v2204
      %v2385 = vpop.f32.mrf.mxu0
      %v2386 = vadd.f32 0.0, %v2385
      %2387 = vmatmul.f32.gmra.mxu0 %v2207
      %v2388 = vpop.f32.mrf.mxu0
      %v2389 = vadd.f32 0.0, %v2388
      %2390 = vmatmul.f32.gmra.mxu0 %v2210
      %v2391 = vpop.f32.mrf.mxu0
      %v2392 = vadd.f32 0.0, %v2391
      %2393 = vmatmul.f32.gmra.mxu0 %v2213
      %v2394 = vpop.f32.mrf.mxu0
      %v2395 = vadd.f32 0.0, %v2394
      %2396 = vmatmul.f32.gmra.mxu0 %v2216
      %v2397 = vpop.f32.mrf.mxu0
      %v2398 = vadd.f32 0.0, %v2397
      %2399 = vmatmul.f32.gmra.mxu0 %v2219
      %v2400 = vpop.f32.mrf.mxu0
      %v2401 = vadd.f32 0.0, %v2400
      %2402 = vmatmul.f32.gmra.mxu0 %v2222
      %v2403 = vpop.f32.mrf.mxu0
      %v2404 = vadd.f32 0.0, %v2403
      %2405 = vmatmul.f32.gmra.mxu0 %v2225
      %v2406 = vpop.f32.mrf.mxu0
      %v2407 = vadd.f32 0.0, %v2406
      %2408 = vmatmul.f32.gmra.mxu0 %v2228
      %v2409 = vpop.f32.mrf.mxu0
      %v2410 = vadd.f32 0.0, %v2409
      %2411 = vmatmul.f32.gmra.mxu0 %v2231
      %v2412 = vpop.f32.mrf.mxu0
      %v2413 = vadd.f32 0.0, %v2412
      %2414 = vmatmul.f32.gmra.mxu0 %v2234
      %v2415 = vpop.f32.mrf.mxu0
      %v2416 = vadd.f32 0.0, %v2415
      %2417 = vmatmul.f32.gmra.mxu0 %v2237
      %v2418 = vpop.f32.mrf.mxu0
      %v2419 = vadd.f32 0.0, %v2418
      %2420 = vmatmul.f32.gmra.mxu0 %v2240
      %v2421 = vpop.f32.mrf.mxu0
      %v2422 = vadd.f32 0.0, %v2421
      %2423 = vmatmul.f32.gmra.mxu0 %v2243
      %v2424 = vpop.f32.mrf.mxu0
      %v2425 = vadd.f32 0.0, %v2424
      %2426 = vmatmul.f32.gmra.mxu0 %v2246
      %v2427 = vpop.f32.mrf.mxu0
      %v2428 = vadd.f32 0.0, %v2427
      %2429 = vmatmul.f32.gmra.mxu0 %v2249
      %v2430 = vpop.f32.mrf.mxu0
      %v2431 = vadd.f32 0.0, %v2430
      %2432 = vmatmul.f32.gmra.mxu0 %v2252
      %v2433 = vpop.f32.mrf.mxu0
      %v2434 = vadd.f32 0.0, %v2433
      %2435 = vmatmul.f32.gmra.mxu0 %v2255
      %v2436 = vpop.f32.mrf.mxu0
      %v2437 = vadd.f32 0.0, %v2436
      %2438 = vmatmul.f32.gmra.mxu0 %v2258
      %v2439 = vpop.f32.mrf.mxu0
      %v2440 = vadd.f32 0.0, %v2439
      %2441 = vmatmul.f32.gmra.mxu0 %v2261
      %v2442 = vpop.f32.mrf.mxu0
      %v2443 = vadd.f32 0.0, %v2442
      %2444 = vmatmul.f32.gmra.mxu0 %v2264
      %v2445 = vpop.f32.mrf.mxu0
      %v2446 = vadd.f32 0.0, %v2445
      %2447 = vmatmul.f32.gmra.mxu0 %v2267
      %v2448 = vpop.f32.mrf.mxu0
      %v2449 = vadd.f32 0.0, %v2448
      %2450 = vmatmul.f32.gmra.mxu0 %v2270
      %v2451 = vpop.f32.mrf.mxu0
      %v2452 = vadd.f32 0.0, %v2451
      %2453 = vmatmul.f32.gmra.mxu0 %v2273
      %v2454 = vpop.f32.mrf.mxu0
      %v2455 = vadd.f32 0.0, %v2454
      %2456 = vmatmul.f32.gmra.mxu0 %v2276
      %v2457 = vpop.f32.mrf.mxu0
      %v2458 = vadd.f32 0.0, %v2457
      %2459 = vmatmul.f32.gmra.mxu0 %v2279
      %v2460 = vpop.f32.mrf.mxu0
      %v2461 = vadd.f32 0.0, %v2460
      %2462 = vmatmul.f32.gmra.mxu0 %v2282
      %v2463 = vpop.f32.mrf.mxu0
      %v2464 = vadd.f32 0.0, %v2463
      %2465 = vmatmul.f32.gmra.mxu0 %v2285
      %v2466 = vpop.f32.mrf.mxu0
      %v2467 = vadd.f32 0.0, %v2466
      %2468 = vmatmul.f32.gmra.mxu0 %v2288
      %v2469 = vpop.f32.mrf.mxu0
      %v2470 = vadd.f32 0.0, %v2469
      %2471 = vmatmul.f32.gmra.mxu0 %v2291
      %v2472 = vpop.f32.mrf.mxu0
      %v2473 = vadd.f32 0.0, %v2472
      %2474 = vmatmul.f32.gmra.mxu0 %v2294
      %v2475 = vpop.f32.mrf.mxu0
      %v2476 = vadd.f32 0.0, %v2475
      %2477 = vmatmul.f32.gmra.mxu0 %v2297
      %v2478 = vpop.f32.mrf.mxu0
      %v2479 = vadd.f32 0.0, %v2478
      %2480 = vmatmul.f32.gmra.mxu0 %v2300
      %v2481 = vpop.f32.mrf.mxu0
      %v2482 = vadd.f32 0.0, %v2481
      %2483 = vmatmul.f32.gmra.mxu0 %v2303
      %v2484 = vpop.f32.mrf.mxu0
      %v2485 = vadd.f32 0.0, %v2484
      %2486 = vmatmul.f32.gmra.mxu0 %v2306
      %v2487 = vpop.f32.mrf.mxu0
      %v2488 = vadd.f32 0.0, %v2487
      %2489 = vmatmul.f32.gmra.mxu0 %v2309
      %v2490 = vpop.f32.mrf.mxu0
      %v2491 = vadd.f32 0.0, %v2490
      %2492 = vmatmul.f32.gmra.mxu0 %v2312
      %v2493 = vpop.f32.mrf.mxu0
      %v2494 = vadd.f32 0.0, %v2493
      %2495 = vmatmul.f32.gmra.mxu0 %v2315
      %v2496 = vpop.f32.mrf.mxu0
      %v2497 = vadd.f32 0.0, %v2496
      %2498 = vmatmul.f32.gmra.mxu0 %v2318
      %v2499 = vpop.f32.mrf.mxu0
      %v2500 = vadd.f32 0.0, %v2499
      %2501 = vmatmul.f32.gmra.mxu0 %v2321
      %v2502 = vpop.f32.mrf.mxu0
      %v2503 = vadd.f32 0.0, %v2502
      %2504 = vdwg.mxu0
      %v2505 = vadd.f32 %v2051, %v2344
      %v2506 = vadd.f32 %v2052, %v2347
      %v2507 = vadd.f32 %v2053, %v2350
      %v2508 = vadd.f32 %v2054, %v2353
      %v2509 = vadd.f32 %v2055, %v2356
      %v2510 = vadd.f32 %v2056, %v2359
      %v2511 = vadd.f32 %v2057, %v2362
      %v2512 = vadd.f32 %v2058, %v2365
      %v2513 = vadd.f32 %v2059, %v2368
      %v2514 = vadd.f32 %v2060, %v2371
      %v2515 = vadd.f32 %v2061, %v2374
      %v2516 = vadd.f32 %v2062, %v2377
      %v2517 = vadd.f32 %v2063, %v2380
      %v2518 = vadd.f32 %v2064, %v2383
      %v2519 = vadd.f32 %v2065, %v2386
      %v2520 = vadd.f32 %v2066, %v2389
      %v2521 = vadd.f32 %v2067, %v2392
      %v2522 = vadd.f32 %v2068, %v2395
      %v2523 = vadd.f32 %v2069, %v2398
      %v2524 = vadd.f32 %v2070, %v2401
      %v2525 = vadd.f32 %v2071, %v2404
      %v2526 = vadd.f32 %v2072, %v2407
      %v2527 = vadd.f32 %v2073, %v2410
      %v2528 = vadd.f32 %v2074, %v2413
      %v2529 = vadd.f32 %v2075, %v2416
      %v2530 = vadd.f32 %v2076, %v2419
      %v2531 = vadd.f32 %v2077, %v2422
      %v2532 = vadd.f32 %v2078, %v2425
      %v2533 = vadd.f32 %v2079, %v2428
      %v2534 = vadd.f32 %v2080, %v2431
      %v2535 = vadd.f32 %v2081, %v2434
      %v2536 = vadd.f32 %v2082, %v2437
      %v2537 = vadd.f32 %v2083, %v2440
      %v2538 = vadd.f32 %v2084, %v2443
      %v2539 = vadd.f32 %v2085, %v2446
      %v2540 = vadd.f32 %v2086, %v2449
      %v2541 = vadd.f32 %v2087, %v2452
      %v2542 = vadd.f32 %v2088, %v2455
      %v2543 = vadd.f32 %v2089, %v2458
      %v2544 = vadd.f32 %v2090, %v2461
      %v2545 = vadd.f32 %v2091, %v2464
      %v2546 = vadd.f32 %v2092, %v2467
      %v2547 = vadd.f32 %v2093, %v2470
      %v2548 = vadd.f32 %v2094, %v2473
      %v2549 = vadd.f32 %v2095, %v2476
      %v2550 = vadd.f32 %v2096, %v2479
      %v2551 = vadd.f32 %v2097, %v2482
      %v2552 = vadd.f32 %v2098, %v2485
      %v2553 = vadd.f32 %v2099, %v2488
      %v2554 = vadd.f32 %v2100, %v2491
      %v2555 = vadd.f32 %v2101, %v2494
      %v2556 = vadd.f32 %v2102, %v2497
      %v2557 = vadd.f32 %v2103, %v2500
      %v2558 = vadd.f32 %v2104, %v2503
      %v2559 = vld [vmem:[%s386 + $0x1a] sm:$0xff]
      %v2560 = vld [vmem:[%s386 + $0x22] sm:$0xff]
      %v2561 = vld [vmem:[%s386 + $0x2a] sm:$0xff]
      %v2562 = vld [vmem:[%s386 + $0x32] sm:$0xff]
      %v2563 = vld [vmem:[%s386 + $0x3a] sm:$0xff]
      %v2564 = vld [vmem:[%s386 + $0x42] sm:$0xff]
      %v2565 = vld [vmem:[%s386 + $0x4a] sm:$0xff]
      %v2566 = vld [vmem:[%s386 + $0x52] sm:$0xff]
      %v2567 = vld [vmem:[%s386 + $0x5a] sm:$0xff]
      %v2568 = vld [vmem:[%s386 + $0x62] sm:$0xff]
      %v2569 = vld [vmem:[%s386 + $0x6a] sm:$0xff]
      %v2570 = vld [vmem:[%s386 + $0x72] sm:$0xff]
      %v2571 = vld [vmem:[%s386 + $0x7a] sm:$0xff]
      %v2572 = vld [vmem:[%s386 + $0x82] sm:$0xff]
      %v2573 = vld [vmem:[%s386 + $0x8a] sm:$0xff]
      %v2574 = vld [vmem:[%s386 + $0x92] sm:$0xff]
      %v2575 = vld [vmem:[%s386 + $0x9a] sm:$0xff]
      %v2576 = vld [vmem:[%s386 + $0xa2] sm:$0xff]
      %v2577 = vld [vmem:[%s386 + $0xaa] sm:$0xff]
      %v2578 = vld [vmem:[%s386 + $0xb2] sm:$0xff]
      %v2579 = vld [vmem:[%s386 + $0xba] sm:$0xff]
      %v2580 = vld [vmem:[%s386 + $0xc2] sm:$0xff]
      %v2581 = vld [vmem:[%s386 + $0xca] sm:$0xff]
      %v2582 = vld [vmem:[%s386 + $0xd2] sm:$0xff]
      %v2583 = vld [vmem:[%s386 + $0xda] sm:$0xff]
      %v2584 = vld [vmem:[%s386 + $0xe2] sm:$0xff]
      %v2585 = vld [vmem:[%s386 + $0xea] sm:$0xff]
      %v2586 = vld [vmem:[%s386 + $0xf2] sm:$0xff]
      %v2587 = vld [vmem:[%s386 + $0xfa] sm:$0xff]
      %v2588 = vld [vmem:[%s386 + $0x102] sm:$0xff]
      %v2589 = vld [vmem:[%s386 + $0x10a] sm:$0xff]
      %v2590 = vld [vmem:[%s386 + $0x112] sm:$0xff]
      %v2591 = vld [vmem:[%s386 + $0x11a] sm:$0xff]
      %v2592 = vld [vmem:[%s386 + $0x122] sm:$0xff]
      %v2593 = vld [vmem:[%s386 + $0x12a] sm:$0xff]
      %v2594 = vld [vmem:[%s386 + $0x132] sm:$0xff]
      %v2595 = vld [vmem:[%s386 + $0x13a] sm:$0xff]
      %v2596 = vld [vmem:[%s386 + $0x142] sm:$0xff]
      %v2597 = vld [vmem:[%s386 + $0x14a] sm:$0xff]
      %v2598 = vld [vmem:[%s386 + $0x152] sm:$0xff]
      %v2599 = vld [vmem:[%s386 + $0x15a] sm:$0xff]
      %v2600 = vld [vmem:[%s386 + $0x162] sm:$0xff]
      %v2601 = vld [vmem:[%s386 + $0x16a] sm:$0xff]
      %v2602 = vld [vmem:[%s386 + $0x172] sm:$0xff]
      %v2603 = vld [vmem:[%s386 + $0x17a] sm:$0xff]
      %v2604 = vld [vmem:[%s386 + $0x182] sm:$0xff]
      %v2605 = vld [vmem:[%s386 + $0x18a] sm:$0xff]
      %v2606 = vld [vmem:[%s386 + $0x192] sm:$0xff]
      %v2607 = vld [vmem:[%s386 + $0x19a] sm:$0xff]
      %v2608 = vld [vmem:[%s386 + $0x1a2] sm:$0xff]
      %v2609 = vld [vmem:[%s386 + $0x1aa] sm:$0xff]
      %v2610 = vld [vmem:[%s386 + $0x1b2] sm:$0xff]
      %v2611 = vld [vmem:[%s386 + $0x1ba] sm:$0xff]
      %v2612 = vld [vmem:[%s386 + $0x1c2] sm:$0xff]
      %s2613 = scalar_lea.vmem %s2, 20
      %v2614 = vld [vmem:[%s2613] sm:$0xf]
      %v2616 = vsel %vm507, %v2559, 0
      %v2619 = vsel %vm507, %v2560, 0
      %v2622 = vsel %vm507, %v2561, 0
      %v2625 = vsel %vm507, %v2562, 0
      %v2628 = vsel %vm507, %v2563, 0
      %v2631 = vsel %vm507, %v2564, 0
      %v2634 = vsel %vm507, %v2565, 0
      %v2637 = vsel %vm507, %v2566, 0
      %v2640 = vsel %vm507, %v2567, 0
      %v2643 = vsel %vm507, %v2568, 0
      %v2646 = vsel %vm507, %v2569, 0
      %v2649 = vsel %vm507, %v2570, 0
      %v2652 = vsel %vm507, %v2571, 0
      %v2655 = vsel %vm507, %v2572, 0
      %v2658 = vsel %vm507, %v2573, 0
      %v2661 = vsel %vm507, %v2574, 0
      %v2664 = vsel %vm507, %v2575, 0
      %v2667 = vsel %vm507, %v2576, 0
      %v2670 = vsel %vm507, %v2577, 0
      %v2673 = vsel %vm507, %v2578, 0
      %v2676 = vsel %vm507, %v2579, 0
      %v2679 = vsel %vm507, %v2580, 0
      %v2682 = vsel %vm507, %v2581, 0
      %v2685 = vsel %vm507, %v2582, 0
      %v2688 = vsel %vm507, %v2583, 0
      %v2691 = vsel %vm507, %v2584, 0
      %v2694 = vsel %vm507, %v2585, 0
      %v2697 = vsel %vm507, %v2586, 0
      %v2700 = vsel %vm507, %v2587, 0
      %v2703 = vsel %vm507, %v2588, 0
      %v2706 = vsel %vm507, %v2589, 0
      %v2709 = vsel %vm507, %v2590, 0
      %v2712 = vsel %vm507, %v2591, 0
      %v2715 = vsel %vm507, %v2592, 0
      %v2718 = vsel %vm507, %v2593, 0
      %v2721 = vsel %vm507, %v2594, 0
      %v2724 = vsel %vm507, %v2595, 0
      %v2727 = vsel %vm507, %v2596, 0
      %v2730 = vsel %vm507, %v2597, 0
      %v2733 = vsel %vm507, %v2598, 0
      %v2736 = vsel %vm507, %v2599, 0
      %v2739 = vsel %vm507, %v2600, 0
      %v2742 = vsel %vm507, %v2601, 0
      %v2745 = vsel %vm507, %v2602, 0
      %v2748 = vsel %vm507, %v2603, 0
      %v2751 = vsel %vm507, %v2604, 0
      %v2754 = vsel %vm507, %v2605, 0
      %v2757 = vsel %vm507, %v2606, 0
      %v2760 = vsel %vm507, %v2607, 0
      %v2763 = vsel %vm507, %v2608, 0
      %v2766 = vsel %vm507, %v2609, 0
      %v2769 = vsel %vm507, %v2610, 0
      %v2772 = vsel %vm507, %v2611, 0
      %v2775 = vsel %vm507, %v2612, 0
      %v2778 = vsel %vm670, %v2614, 0
      %2780 = vmatpush.msra.mxu0 0.0
      %2781 = vmatpush.msra.mxu0 0.0
      %2782 = vmatpush.msra.mxu0 0.0
      %2783 = vmatpush.msra.mxu0 0.0
      %2784 = vmatpush.msra.mxu0 0.0
      %2785 = vmatpush.msra.mxu0 0.0
      %2786 = vmatpush.msra.mxu0 0.0
      %2787 = vmatpush.msra.mxu0 0.0
      %2788 = vmatpush.msra.mxu0 0.0
      %2789 = vmatpush.msra.mxu0 0.0
      %2790 = vmatpush.msra.mxu0 0.0
      %2791 = vmatpush.msra.mxu0 0.0
      %2792 = vmatpush.msra.mxu0 0.0
      %2793 = vmatpush.msra.mxu0 0.0
      %2794 = vmatpush.msra.mxu0 0.0
      %2795 = vmatpush.msra.mxu0 %v2778
      %2796 = vmatmul.f32.gmra.mxu0 %v2616
      %v2797 = vpop.f32.mrf.mxu0
      %v2798 = vadd.f32 0.0, %v2797
      %2799 = vmatmul.f32.gmra.mxu0 %v2619
      %v2800 = vpop.f32.mrf.mxu0
      %v2801 = vadd.f32 0.0, %v2800
      %2802 = vmatmul.f32.gmra.mxu0 %v2622
      %v2803 = vpop.f32.mrf.mxu0
      %v2804 = vadd.f32 0.0, %v2803
      %2805 = vmatmul.f32.gmra.mxu0 %v2625
      %v2806 = vpop.f32.mrf.mxu0
      %v2807 = vadd.f32 0.0, %v2806
      %2808 = vmatmul.f32.gmra.mxu0 %v2628
      %v2809 = vpop.f32.mrf.mxu0
      %v2810 = vadd.f32 0.0, %v2809
      %2811 = vmatmul.f32.gmra.mxu0 %v2631
      %v2812 = vpop.f32.mrf.mxu0
      %v2813 = vadd.f32 0.0, %v2812
      %2814 = vmatmul.f32.gmra.mxu0 %v2634
      %v2815 = vpop.f32.mrf.mxu0
      %v2816 = vadd.f32 0.0, %v2815
      %2817 = vmatmul.f32.gmra.mxu0 %v2637
      %v2818 = vpop.f32.mrf.mxu0
      %v2819 = vadd.f32 0.0, %v2818
      %2820 = vmatmul.f32.gmra.mxu0 %v2640
      %v2821 = vpop.f32.mrf.mxu0
      %v2822 = vadd.f32 0.0, %v2821
      %2823 = vmatmul.f32.gmra.mxu0 %v2643
      %v2824 = vpop.f32.mrf.mxu0
      %v2825 = vadd.f32 0.0, %v2824
      %2826 = vmatmul.f32.gmra.mxu0 %v2646
      %v2827 = vpop.f32.mrf.mxu0
      %v2828 = vadd.f32 0.0, %v2827
      %2829 = vmatmul.f32.gmra.mxu0 %v2649
      %v2830 = vpop.f32.mrf.mxu0
      %v2831 = vadd.f32 0.0, %v2830
      %2832 = vmatmul.f32.gmra.mxu0 %v2652
      %v2833 = vpop.f32.mrf.mxu0
      %v2834 = vadd.f32 0.0, %v2833
      %2835 = vmatmul.f32.gmra.mxu0 %v2655
      %v2836 = vpop.f32.mrf.mxu0
      %v2837 = vadd.f32 0.0, %v2836
      %2838 = vmatmul.f32.gmra.mxu0 %v2658
      %v2839 = vpop.f32.mrf.mxu0
      %v2840 = vadd.f32 0.0, %v2839
      %2841 = vmatmul.f32.gmra.mxu0 %v2661
      %v2842 = vpop.f32.mrf.mxu0
      %v2843 = vadd.f32 0.0, %v2842
      %2844 = vmatmul.f32.gmra.mxu0 %v2664
      %v2845 = vpop.f32.mrf.mxu0
      %v2846 = vadd.f32 0.0, %v2845
      %2847 = vmatmul.f32.gmra.mxu0 %v2667
      %v2848 = vpop.f32.mrf.mxu0
      %v2849 = vadd.f32 0.0, %v2848
      %2850 = vmatmul.f32.gmra.mxu0 %v2670
      %v2851 = vpop.f32.mrf.mxu0
      %v2852 = vadd.f32 0.0, %v2851
      %2853 = vmatmul.f32.gmra.mxu0 %v2673
      %v2854 = vpop.f32.mrf.mxu0
      %v2855 = vadd.f32 0.0, %v2854
      %2856 = vmatmul.f32.gmra.mxu0 %v2676
      %v2857 = vpop.f32.mrf.mxu0
      %v2858 = vadd.f32 0.0, %v2857
      %2859 = vmatmul.f32.gmra.mxu0 %v2679
      %v2860 = vpop.f32.mrf.mxu0
      %v2861 = vadd.f32 0.0, %v2860
      %2862 = vmatmul.f32.gmra.mxu0 %v2682
      %v2863 = vpop.f32.mrf.mxu0
      %v2864 = vadd.f32 0.0, %v2863
      %2865 = vmatmul.f32.gmra.mxu0 %v2685
      %v2866 = vpop.f32.mrf.mxu0
      %v2867 = vadd.f32 0.0, %v2866
      %2868 = vmatmul.f32.gmra.mxu0 %v2688
      %v2869 = vpop.f32.mrf.mxu0
      %v2870 = vadd.f32 0.0, %v2869
      %2871 = vmatmul.f32.gmra.mxu0 %v2691
      %v2872 = vpop.f32.mrf.mxu0
      %v2873 = vadd.f32 0.0, %v2872
      %2874 = vmatmul.f32.gmra.mxu0 %v2694
      %v2875 = vpop.f32.mrf.mxu0
      %v2876 = vadd.f32 0.0, %v2875
      %2877 = vmatmul.f32.gmra.mxu0 %v2697
      %v2878 = vpop.f32.mrf.mxu0
      %v2879 = vadd.f32 0.0, %v2878
      %2880 = vmatmul.f32.gmra.mxu0 %v2700
      %v2881 = vpop.f32.mrf.mxu0
      %v2882 = vadd.f32 0.0, %v2881
      %2883 = vmatmul.f32.gmra.mxu0 %v2703
      %v2884 = vpop.f32.mrf.mxu0
      %v2885 = vadd.f32 0.0, %v2884
      %2886 = vmatmul.f32.gmra.mxu0 %v2706
      %v2887 = vpop.f32.mrf.mxu0
      %v2888 = vadd.f32 0.0, %v2887
      %2889 = vmatmul.f32.gmra.mxu0 %v2709
      %v2890 = vpop.f32.mrf.mxu0
      %v2891 = vadd.f32 0.0, %v2890
      %2892 = vmatmul.f32.gmra.mxu0 %v2712
      %v2893 = vpop.f32.mrf.mxu0
      %v2894 = vadd.f32 0.0, %v2893
      %2895 = vmatmul.f32.gmra.mxu0 %v2715
      %v2896 = vpop.f32.mrf.mxu0
      %v2897 = vadd.f32 0.0, %v2896
      %2898 = vmatmul.f32.gmra.mxu0 %v2718
      %v2899 = vpop.f32.mrf.mxu0
      %v2900 = vadd.f32 0.0, %v2899
      %2901 = vmatmul.f32.gmra.mxu0 %v2721
      %v2902 = vpop.f32.mrf.mxu0
      %v2903 = vadd.f32 0.0, %v2902
      %2904 = vmatmul.f32.gmra.mxu0 %v2724
      %v2905 = vpop.f32.mrf.mxu0
      %v2906 = vadd.f32 0.0, %v2905
      %2907 = vmatmul.f32.gmra.mxu0 %v2727
      %v2908 = vpop.f32.mrf.mxu0
      %v2909 = vadd.f32 0.0, %v2908
      %2910 = vmatmul.f32.gmra.mxu0 %v2730
      %v2911 = vpop.f32.mrf.mxu0
      %v2912 = vadd.f32 0.0, %v2911
      %2913 = vmatmul.f32.gmra.mxu0 %v2733
      %v2914 = vpop.f32.mrf.mxu0
      %v2915 = vadd.f32 0.0, %v2914
      %2916 = vmatmul.f32.gmra.mxu0 %v2736
      %v2917 = vpop.f32.mrf.mxu0
      %v2918 = vadd.f32 0.0, %v2917
      %2919 = vmatmul.f32.gmra.mxu0 %v2739
      %v2920 = vpop.f32.mrf.mxu0
      %v2921 = vadd.f32 0.0, %v2920
      %2922 = vmatmul.f32.gmra.mxu0 %v2742
      %v2923 = vpop.f32.mrf.mxu0
      %v2924 = vadd.f32 0.0, %v2923
      %2925 = vmatmul.f32.gmra.mxu0 %v2745
      %v2926 = vpop.f32.mrf.mxu0
      %v2927 = vadd.f32 0.0, %v2926
      %2928 = vmatmul.f32.gmra.mxu0 %v2748
      %v2929 = vpop.f32.mrf.mxu0
      %v2930 = vadd.f32 0.0, %v2929
      %2931 = vmatmul.f32.gmra.mxu0 %v2751
      %v2932 = vpop.f32.mrf.mxu0
      %v2933 = vadd.f32 0.0, %v2932
      %2934 = vmatmul.f32.gmra.mxu0 %v2754
      %v2935 = vpop.f32.mrf.mxu0
      %v2936 = vadd.f32 0.0, %v2935
      %2937 = vmatmul.f32.gmra.mxu0 %v2757
      %v2938 = vpop.f32.mrf.mxu0
      %v2939 = vadd.f32 0.0, %v2938
      %2940 = vmatmul.f32.gmra.mxu0 %v2760
      %v2941 = vpop.f32.mrf.mxu0
      %v2942 = vadd.f32 0.0, %v2941
      %2943 = vmatmul.f32.gmra.mxu0 %v2763
      %v2944 = vpop.f32.mrf.mxu0
      %v2945 = vadd.f32 0.0, %v2944
      %2946 = vmatmul.f32.gmra.mxu0 %v2766
      %v2947 = vpop.f32.mrf.mxu0
      %v2948 = vadd.f32 0.0, %v2947
      %2949 = vmatmul.f32.gmra.mxu0 %v2769
      %v2950 = vpop.f32.mrf.mxu0
      %v2951 = vadd.f32 0.0, %v2950
      %2952 = vmatmul.f32.gmra.mxu0 %v2772
      %v2953 = vpop.f32.mrf.mxu0
      %v2954 = vadd.f32 0.0, %v2953
      %2955 = vmatmul.f32.gmra.mxu0 %v2775
      %v2956 = vpop.f32.mrf.mxu0
      %v2957 = vadd.f32 0.0, %v2956
      %2958 = vdwg.mxu0
      %v2959 = vadd.f32 %v2505, %v2798
      %v2960 = vadd.f32 %v2506, %v2801
      %v2961 = vadd.f32 %v2507, %v2804
      %v2962 = vadd.f32 %v2508, %v2807
      %v2963 = vadd.f32 %v2509, %v2810
      %v2964 = vadd.f32 %v2510, %v2813
      %v2965 = vadd.f32 %v2511, %v2816
      %v2966 = vadd.f32 %v2512, %v2819
      %v2967 = vadd.f32 %v2513, %v2822
      %v2968 = vadd.f32 %v2514, %v2825
      %v2969 = vadd.f32 %v2515, %v2828
      %v2970 = vadd.f32 %v2516, %v2831
      %v2971 = vadd.f32 %v2517, %v2834
      %v2972 = vadd.f32 %v2518, %v2837
      %v2973 = vadd.f32 %v2519, %v2840
      %v2974 = vadd.f32 %v2520, %v2843
      %v2975 = vadd.f32 %v2521, %v2846
      %v2976 = vadd.f32 %v2522, %v2849
      %v2977 = vadd.f32 %v2523, %v2852
      %v2978 = vadd.f32 %v2524, %v2855
      %v2979 = vadd.f32 %v2525, %v2858
      %v2980 = vadd.f32 %v2526, %v2861
      %v2981 = vadd.f32 %v2527, %v2864
      %v2982 = vadd.f32 %v2528, %v2867
      %v2983 = vadd.f32 %v2529, %v2870
      %v2984 = vadd.f32 %v2530, %v2873
      %v2985 = vadd.f32 %v2531, %v2876
      %v2986 = vadd.f32 %v2532, %v2879
      %v2987 = vadd.f32 %v2533, %v2882
      %v2988 = vadd.f32 %v2534, %v2885
      %v2989 = vadd.f32 %v2535, %v2888
      %v2990 = vadd.f32 %v2536, %v2891
      %v2991 = vadd.f32 %v2537, %v2894
      %v2992 = vadd.f32 %v2538, %v2897
      %v2993 = vadd.f32 %v2539, %v2900
      %v2994 = vadd.f32 %v2540, %v2903
      %v2995 = vadd.f32 %v2541, %v2906
      %v2996 = vadd.f32 %v2542, %v2909
      %v2997 = vadd.f32 %v2543, %v2912
      %v2998 = vadd.f32 %v2544, %v2915
      %v2999 = vadd.f32 %v2545, %v2918
      %v3000 = vadd.f32 %v2546, %v2921
      %v3001 = vadd.f32 %v2547, %v2924
      %v3002 = vadd.f32 %v2548, %v2927
      %v3003 = vadd.f32 %v2549, %v2930
      %v3004 = vadd.f32 %v2550, %v2933
      %v3005 = vadd.f32 %v2551, %v2936
      %v3006 = vadd.f32 %v2552, %v2939
      %v3007 = vadd.f32 %v2553, %v2942
      %v3008 = vadd.f32 %v2554, %v2945
      %v3009 = vadd.f32 %v2555, %v2948
      %v3010 = vadd.f32 %v2556, %v2951
      %v3011 = vadd.f32 %v2557, %v2954
      %v3012 = vadd.f32 %v2558, %v2957
      %v3013 = vld [vmem:[%s386 + $0x30] sm:$0xff]
      %v3014 = vld [vmem:[%s386 + $0x38] sm:$0xff]
      %v3015 = vld [vmem:[%s386 + $0x40] sm:$0xff]
      %v3016 = vld [vmem:[%s386 + $0x48] sm:$0xff]
      %v3017 = vld [vmem:[%s386 + $0x50] sm:$0xff]
      %v3018 = vld [vmem:[%s386 + $0x58] sm:$0xff]
      %v3019 = vld [vmem:[%s386 + $0x60] sm:$0xff]
      %v3020 = vld [vmem:[%s386 + $0x68] sm:$0xff]
      %v3021 = vld [vmem:[%s386 + $0x70] sm:$0xff]
      %v3022 = vld [vmem:[%s386 + $0x78] sm:$0xff]
      %v3023 = vld [vmem:[%s386 + $0x80] sm:$0xff]
      %v3024 = vld [vmem:[%s386 + $0x88] sm:$0xff]
      %v3025 = vld [vmem:[%s386 + $0x90] sm:$0xff]
      %v3026 = vld [vmem:[%s386 + $0x98] sm:$0xff]
      %v3027 = vld [vmem:[%s386 + $0xa0] sm:$0xff]
      %v3028 = vld [vmem:[%s386 + $0xa8] sm:$0xff]
      %v3029 = vld [vmem:[%s386 + $0xb0] sm:$0xff]
      %v3030 = vld [vmem:[%s386 + $0xb8] sm:$0xff]
      %v3031 = vld [vmem:[%s386 + $0xc0] sm:$0xff]
      %v3032 = vld [vmem:[%s386 + $0xc8] sm:$0xff]
      %v3033 = vld [vmem:[%s386 + $0xd0] sm:$0xff]
      %v3034 = vld [vmem:[%s386 + $0xd8] sm:$0xff]
      %v3035 = vld [vmem:[%s386 + $0xe0] sm:$0xff]
      %v3036 = vld [vmem:[%s386 + $0xe8] sm:$0xff]
      %v3037 = vld [vmem:[%s386 + $0xf0] sm:$0xff]
      %v3038 = vld [vmem:[%s386 + $0xf8] sm:$0xff]
      %v3039 = vld [vmem:[%s386 + $0x100] sm:$0xff]
      %v3040 = vld [vmem:[%s386 + $0x108] sm:$0xff]
      %v3041 = vld [vmem:[%s386 + $0x110] sm:$0xff]
      %v3042 = vld [vmem:[%s386 + $0x118] sm:$0xff]
      %v3043 = vld [vmem:[%s386 + $0x120] sm:$0xff]
      %v3044 = vld [vmem:[%s386 + $0x128] sm:$0xff]
      %v3045 = vld [vmem:[%s386 + $0x130] sm:$0xff]
      %v3046 = vld [vmem:[%s386 + $0x138] sm:$0xff]
      %v3047 = vld [vmem:[%s386 + $0x140] sm:$0xff]
      %v3048 = vld [vmem:[%s386 + $0x148] sm:$0xff]
      %v3049 = vld [vmem:[%s386 + $0x150] sm:$0xff]
      %v3050 = vld [vmem:[%s386 + $0x158] sm:$0xff]
      %v3051 = vld [vmem:[%s386 + $0x160] sm:$0xff]
      %v3052 = vld [vmem:[%s386 + $0x168] sm:$0xff]
      %v3053 = vld [vmem:[%s386 + $0x170] sm:$0xff]
      %v3054 = vld [vmem:[%s386 + $0x178] sm:$0xff]
      %v3055 = vld [vmem:[%s386 + $0x180] sm:$0xff]
      %v3056 = vld [vmem:[%s386 + $0x188] sm:$0xff]
      %v3057 = vld [vmem:[%s386 + $0x190] sm:$0xff]
      %v3058 = vld [vmem:[%s386 + $0x198] sm:$0xff]
      %v3059 = vld [vmem:[%s386 + $0x1a0] sm:$0xff]
      %v3060 = vld [vmem:[%s386 + $0x1a8] sm:$0xff]
      %v3061 = vld [vmem:[%s386 + $0x1b0] sm:$0xff]
      %v3062 = vld [vmem:[%s386 + $0x1b8] sm:$0xff]
      %v3063 = vld [vmem:[%s386 + $0x1c0] sm:$0xff]
      %v3064 = vld [vmem:[%s386 + $0x1c8] sm:$0xff]
      %v3065 = vld [vmem:[%s386 + $0x1d0] sm:$0xff]
      %v3066 = vld [vmem:[%s386 + $0x1d8] sm:$0xff]
      %s3067 = scalar_lea.vmem %s2, 24
      %v3068 = vld [vmem:[%s3067] sm:$0xf]
      %v3070 = vsel %vm507, %v3013, 0
      %v3073 = vsel %vm507, %v3014, 0
      %v3076 = vsel %vm507, %v3015, 0
      %v3079 = vsel %vm507, %v3016, 0
      %v3082 = vsel %vm507, %v3017, 0
      %v3085 = vsel %vm507, %v3018, 0
      %v3088 = vsel %vm507, %v3019, 0
      %v3091 = vsel %vm507, %v3020, 0
      %v3094 = vsel %vm507, %v3021, 0
      %v3097 = vsel %vm507, %v3022, 0
      %v3100 = vsel %vm507, %v3023, 0
      %v3103 = vsel %vm507, %v3024, 0
      %v3106 = vsel %vm507, %v3025, 0
      %v3109 = vsel %vm507, %v3026, 0
      %v3112 = vsel %vm507, %v3027, 0
      %v3115 = vsel %vm507, %v3028, 0
      %v3118 = vsel %vm507, %v3029, 0
      %v3121 = vsel %vm507, %v3030, 0
      %v3124 = vsel %vm507, %v3031, 0
      %v3127 = vsel %vm507, %v3032, 0
      %v3130 = vsel %vm507, %v3033, 0
      %v3133 = vsel %vm507, %v3034, 0
      %v3136 = vsel %vm507, %v3035, 0
      %v3139 = vsel %vm507, %v3036, 0
      %v3142 = vsel %vm507, %v3037, 0
      %v3145 = vsel %vm507, %v3038, 0
      %v3148 = vsel %vm507, %v3039, 0
      %v3151 = vsel %vm507, %v3040, 0
      %v3154 = vsel %vm507, %v3041, 0
      %v3157 = vsel %vm507, %v3042, 0
      %v3160 = vsel %vm507, %v3043, 0
      %v3163 = vsel %vm507, %v3044, 0
      %v3166 = vsel %vm507, %v3045, 0
      %v3169 = vsel %vm507, %v3046, 0
      %v3172 = vsel %vm507, %v3047, 0
      %v3175 = vsel %vm507, %v3048, 0
      %v3178 = vsel %vm507, %v3049, 0
      %v3181 = vsel %vm507, %v3050, 0
      %v3184 = vsel %vm507, %v3051, 0
      %v3187 = vsel %vm507, %v3052, 0
      %v3190 = vsel %vm507, %v3053, 0
      %v3193 = vsel %vm507, %v3054, 0
      %v3196 = vsel %vm507, %v3055, 0
      %v3199 = vsel %vm507, %v3056, 0
      %v3202 = vsel %vm507, %v3057, 0
      %v3205 = vsel %vm507, %v3058, 0
      %v3208 = vsel %vm507, %v3059, 0
      %v3211 = vsel %vm507, %v3060, 0
      %v3214 = vsel %vm507, %v3061, 0
      %v3217 = vsel %vm507, %v3062, 0
      %v3220 = vsel %vm507, %v3063, 0
      %v3223 = vsel %vm507, %v3064, 0
      %v3226 = vsel %vm507, %v3065, 0
      %v3229 = vsel %vm507, %v3066, 0
      %v3232 = vsel %vm670, %v3068, 0
      %3234 = vmatpush.msra.mxu0 0.0
      %3235 = vmatpush.msra.mxu0 0.0
      %3236 = vmatpush.msra.mxu0 0.0
      %3237 = vmatpush.msra.mxu0 0.0
      %3238 = vmatpush.msra.mxu0 0.0
      %3239 = vmatpush.msra.mxu0 0.0
      %3240 = vmatpush.msra.mxu0 0.0
      %3241 = vmatpush.msra.mxu0 0.0
      %3242 = vmatpush.msra.mxu0 0.0
      %3243 = vmatpush.msra.mxu0 0.0
      %3244 = vmatpush.msra.mxu0 0.0
      %3245 = vmatpush.msra.mxu0 0.0
      %3246 = vmatpush.msra.mxu0 0.0
      %3247 = vmatpush.msra.mxu0 0.0
      %3248 = vmatpush.msra.mxu0 0.0
      %3249 = vmatpush.msra.mxu0 %v3232
      %3250 = vmatmul.f32.gmra.mxu0 %v3070
      %v3251 = vpop.f32.mrf.mxu0
      %v3252 = vadd.f32 0.0, %v3251
      %3253 = vmatmul.f32.gmra.mxu0 %v3073
      %v3254 = vpop.f32.mrf.mxu0
      %v3255 = vadd.f32 0.0, %v3254
      %3256 = vmatmul.f32.gmra.mxu0 %v3076
      %v3257 = vpop.f32.mrf.mxu0
      %v3258 = vadd.f32 0.0, %v3257
      %3259 = vmatmul.f32.gmra.mxu0 %v3079
      %v3260 = vpop.f32.mrf.mxu0
      %v3261 = vadd.f32 0.0, %v3260
      %3262 = vmatmul.f32.gmra.mxu0 %v3082
      %v3263 = vpop.f32.mrf.mxu0
      %v3264 = vadd.f32 0.0, %v3263
      %3265 = vmatmul.f32.gmra.mxu0 %v3085
      %v3266 = vpop.f32.mrf.mxu0
      %v3267 = vadd.f32 0.0, %v3266
      %3268 = vmatmul.f32.gmra.mxu0 %v3088
      %v3269 = vpop.f32.mrf.mxu0
      %v3270 = vadd.f32 0.0, %v3269
      %3271 = vmatmul.f32.gmra.mxu0 %v3091
      %v3272 = vpop.f32.mrf.mxu0
      %v3273 = vadd.f32 0.0, %v3272
      %3274 = vmatmul.f32.gmra.mxu0 %v3094
      %v3275 = vpop.f32.mrf.mxu0
      %v3276 = vadd.f32 0.0, %v3275
      %3277 = vmatmul.f32.gmra.mxu0 %v3097
      %v3278 = vpop.f32.mrf.mxu0
      %v3279 = vadd.f32 0.0, %v3278
      %3280 = vmatmul.f32.gmra.mxu0 %v3100
      %v3281 = vpop.f32.mrf.mxu0
      %v3282 = vadd.f32 0.0, %v3281
      %3283 = vmatmul.f32.gmra.mxu0 %v3103
      %v3284 = vpop.f32.mrf.mxu0
      %v3285 = vadd.f32 0.0, %v3284
      %3286 = vmatmul.f32.gmra.mxu0 %v3106
      %v3287 = vpop.f32.mrf.mxu0
      %v3288 = vadd.f32 0.0, %v3287
      %3289 = vmatmul.f32.gmra.mxu0 %v3109
      %v3290 = vpop.f32.mrf.mxu0
      %v3291 = vadd.f32 0.0, %v3290
      %3292 = vmatmul.f32.gmra.mxu0 %v3112
      %v3293 = vpop.f32.mrf.mxu0
      %v3294 = vadd.f32 0.0, %v3293
      %3295 = vmatmul.f32.gmra.mxu0 %v3115
      %v3296 = vpop.f32.mrf.mxu0
      %v3297 = vadd.f32 0.0, %v3296
      %3298 = vmatmul.f32.gmra.mxu0 %v3118
      %v3299 = vpop.f32.mrf.mxu0
      %v3300 = vadd.f32 0.0, %v3299
      %3301 = vmatmul.f32.gmra.mxu0 %v3121
      %v3302 = vpop.f32.mrf.mxu0
      %v3303 = vadd.f32 0.0, %v3302
      %3304 = vmatmul.f32.gmra.mxu0 %v3124
      %v3305 = vpop.f32.mrf.mxu0
      %v3306 = vadd.f32 0.0, %v3305
      %3307 = vmatmul.f32.gmra.mxu0 %v3127
      %v3308 = vpop.f32.mrf.mxu0
      %v3309 = vadd.f32 0.0, %v3308
      %3310 = vmatmul.f32.gmra.mxu0 %v3130
      %v3311 = vpop.f32.mrf.mxu0
      %v3312 = vadd.f32 0.0, %v3311
      %3313 = vmatmul.f32.gmra.mxu0 %v3133
      %v3314 = vpop.f32.mrf.mxu0
      %v3315 = vadd.f32 0.0, %v3314
      %3316 = vmatmul.f32.gmra.mxu0 %v3136
      %v3317 = vpop.f32.mrf.mxu0
      %v3318 = vadd.f32 0.0, %v3317
      %3319 = vmatmul.f32.gmra.mxu0 %v3139
      %v3320 = vpop.f32.mrf.mxu0
      %v3321 = vadd.f32 0.0, %v3320
      %3322 = vmatmul.f32.gmra.mxu0 %v3142
      %v3323 = vpop.f32.mrf.mxu0
      %v3324 = vadd.f32 0.0, %v3323
      %3325 = vmatmul.f32.gmra.mxu0 %v3145
      %v3326 = vpop.f32.mrf.mxu0
      %v3327 = vadd.f32 0.0, %v3326
      %3328 = vmatmul.f32.gmra.mxu0 %v3148
      %v3329 = vpop.f32.mrf.mxu0
      %v3330 = vadd.f32 0.0, %v3329
      %3331 = vmatmul.f32.gmra.mxu0 %v3151
      %v3332 = vpop.f32.mrf.mxu0
      %v3333 = vadd.f32 0.0, %v3332
      %3334 = vmatmul.f32.gmra.mxu0 %v3154
      %v3335 = vpop.f32.mrf.mxu0
      %v3336 = vadd.f32 0.0, %v3335
      %3337 = vmatmul.f32.gmra.mxu0 %v3157
      %v3338 = vpop.f32.mrf.mxu0
      %v3339 = vadd.f32 0.0, %v3338
      %3340 = vmatmul.f32.gmra.mxu0 %v3160
      %v3341 = vpop.f32.mrf.mxu0
      %v3342 = vadd.f32 0.0, %v3341
      %3343 = vmatmul.f32.gmra.mxu0 %v3163
      %v3344 = vpop.f32.mrf.mxu0
      %v3345 = vadd.f32 0.0, %v3344
      %3346 = vmatmul.f32.gmra.mxu0 %v3166
      %v3347 = vpop.f32.mrf.mxu0
      %v3348 = vadd.f32 0.0, %v3347
      %3349 = vmatmul.f32.gmra.mxu0 %v3169
      %v3350 = vpop.f32.mrf.mxu0
      %v3351 = vadd.f32 0.0, %v3350
      %3352 = vmatmul.f32.gmra.mxu0 %v3172
      %v3353 = vpop.f32.mrf.mxu0
      %v3354 = vadd.f32 0.0, %v3353
      %3355 = vmatmul.f32.gmra.mxu0 %v3175
      %v3356 = vpop.f32.mrf.mxu0
      %v3357 = vadd.f32 0.0, %v3356
      %3358 = vmatmul.f32.gmra.mxu0 %v3178
      %v3359 = vpop.f32.mrf.mxu0
      %v3360 = vadd.f32 0.0, %v3359
      %3361 = vmatmul.f32.gmra.mxu0 %v3181
      %v3362 = vpop.f32.mrf.mxu0
      %v3363 = vadd.f32 0.0, %v3362
      %3364 = vmatmul.f32.gmra.mxu0 %v3184
      %v3365 = vpop.f32.mrf.mxu0
      %v3366 = vadd.f32 0.0, %v3365
      %3367 = vmatmul.f32.gmra.mxu0 %v3187
      %v3368 = vpop.f32.mrf.mxu0
      %v3369 = vadd.f32 0.0, %v3368
      %3370 = vmatmul.f32.gmra.mxu0 %v3190
      %v3371 = vpop.f32.mrf.mxu0
      %v3372 = vadd.f32 0.0, %v3371
      %3373 = vmatmul.f32.gmra.mxu0 %v3193
      %v3374 = vpop.f32.mrf.mxu0
      %v3375 = vadd.f32 0.0, %v3374
      %3376 = vmatmul.f32.gmra.mxu0 %v3196
      %v3377 = vpop.f32.mrf.mxu0
      %v3378 = vadd.f32 0.0, %v3377
      %3379 = vmatmul.f32.gmra.mxu0 %v3199
      %v3380 = vpop.f32.mrf.mxu0
      %v3381 = vadd.f32 0.0, %v3380
      %3382 = vmatmul.f32.gmra.mxu0 %v3202
      %v3383 = vpop.f32.mrf.mxu0
      %v3384 = vadd.f32 0.0, %v3383
      %3385 = vmatmul.f32.gmra.mxu0 %v3205
      %v3386 = vpop.f32.mrf.mxu0
      %v3387 = vadd.f32 0.0, %v3386
      %3388 = vmatmul.f32.gmra.mxu0 %v3208
      %v3389 = vpop.f32.mrf.mxu0
      %v3390 = vadd.f32 0.0, %v3389
      %3391 = vmatmul.f32.gmra.mxu0 %v3211
      %v3392 = vpop.f32.mrf.mxu0
      %v3393 = vadd.f32 0.0, %v3392
      %3394 = vmatmul.f32.gmra.mxu0 %v3214
      %v3395 = vpop.f32.mrf.mxu0
      %v3396 = vadd.f32 0.0, %v3395
      %3397 = vmatmul.f32.gmra.mxu0 %v3217
      %v3398 = vpop.f32.mrf.mxu0
      %v3399 = vadd.f32 0.0, %v3398
      %3400 = vmatmul.f32.gmra.mxu0 %v3220
      %v3401 = vpop.f32.mrf.mxu0
      %v3402 = vadd.f32 0.0, %v3401
      %3403 = vmatmul.f32.gmra.mxu0 %v3223
      %v3404 = vpop.f32.mrf.mxu0
      %v3405 = vadd.f32 0.0, %v3404
      %3406 = vmatmul.f32.gmra.mxu0 %v3226
      %v3407 = vpop.f32.mrf.mxu0
      %v3408 = vadd.f32 0.0, %v3407
      %3409 = vmatmul.f32.gmra.mxu0 %v3229
      %v3410 = vpop.f32.mrf.mxu0
      %v3411 = vadd.f32 0.0, %v3410
      %3412 = vdwg.mxu0
      %v3413 = vadd.f32 %v2959, %v3252
      %v3414 = vadd.f32 %v2960, %v3255
      %v3415 = vadd.f32 %v2961, %v3258
      %v3416 = vadd.f32 %v2962, %v3261
      %v3417 = vadd.f32 %v2963, %v3264
      %v3418 = vadd.f32 %v2964, %v3267
      %v3419 = vadd.f32 %v2965, %v3270
      %v3420 = vadd.f32 %v2966, %v3273
      %v3421 = vadd.f32 %v2967, %v3276
      %v3422 = vadd.f32 %v2968, %v3279
      %v3423 = vadd.f32 %v2969, %v3282
      %v3424 = vadd.f32 %v2970, %v3285
      %v3425 = vadd.f32 %v2971, %v3288
      %v3426 = vadd.f32 %v2972, %v3291
      %v3427 = vadd.f32 %v2973, %v3294
      %v3428 = vadd.f32 %v2974, %v3297
      %v3429 = vadd.f32 %v2975, %v3300
      %v3430 = vadd.f32 %v2976, %v3303
      %v3431 = vadd.f32 %v2977, %v3306
      %v3432 = vadd.f32 %v2978, %v3309
      %v3433 = vadd.f32 %v2979, %v3312
      %v3434 = vadd.f32 %v2980, %v3315
      %v3435 = vadd.f32 %v2981, %v3318
      %v3436 = vadd.f32 %v2982, %v3321
      %v3437 = vadd.f32 %v2983, %v3324
      %v3438 = vadd.f32 %v2984, %v3327
      %v3439 = vadd.f32 %v2985, %v3330
      %v3440 = vadd.f32 %v2986, %v3333
      %v3441 = vadd.f32 %v2987, %v3336
      %v3442 = vadd.f32 %v2988, %v3339
      %v3443 = vadd.f32 %v2989, %v3342
      %v3444 = vadd.f32 %v2990, %v3345
      %v3445 = vadd.f32 %v2991, %v3348
      %v3446 = vadd.f32 %v2992, %v3351
      %v3447 = vadd.f32 %v2993, %v3354
      %v3448 = vadd.f32 %v2994, %v3357
      %v3449 = vadd.f32 %v2995, %v3360
      %v3450 = vadd.f32 %v2996, %v3363
      %v3451 = vadd.f32 %v2997, %v3366
      %v3452 = vadd.f32 %v2998, %v3369
      %v3453 = vadd.f32 %v2999, %v3372
      %v3454 = vadd.f32 %v3000, %v3375
      %v3455 = vadd.f32 %v3001, %v3378
      %v3456 = vadd.f32 %v3002, %v3381
      %v3457 = vadd.f32 %v3003, %v3384
      %v3458 = vadd.f32 %v3004, %v3387
      %v3459 = vadd.f32 %v3005, %v3390
      %v3460 = vadd.f32 %v3006, %v3393
      %v3461 = vadd.f32 %v3007, %v3396
      %v3462 = vadd.f32 %v3008, %v3399
      %v3463 = vadd.f32 %v3009, %v3402
      %v3464 = vadd.f32 %v3010, %v3405
      %v3465 = vadd.f32 %v3011, %v3408
      %v3466 = vadd.f32 %v3012, %v3411
      %v3467 = vld [vmem:[%s386 + $0x31] sm:$0xff]
      %v3468 = vld [vmem:[%s386 + $0x39] sm:$0xff]
      %v3469 = vld [vmem:[%s386 + $0x41] sm:$0xff]
      %v3470 = vld [vmem:[%s386 + $0x49] sm:$0xff]
      %v3471 = vld [vmem:[%s386 + $0x51] sm:$0xff]
      %v3472 = vld [vmem:[%s386 + $0x59] sm:$0xff]
      %v3473 = vld [vmem:[%s386 + $0x61] sm:$0xff]
      %v3474 = vld [vmem:[%s386 + $0x69] sm:$0xff]
      %v3475 = vld [vmem:[%s386 + $0x71] sm:$0xff]
      %v3476 = vld [vmem:[%s386 + $0x79] sm:$0xff]
      %v3477 = vld [vmem:[%s386 + $0x81] sm:$0xff]
      %v3478 = vld [vmem:[%s386 + $0x89] sm:$0xff]
      %v3479 = vld [vmem:[%s386 + $0x91] sm:$0xff]
      %v3480 = vld [vmem:[%s386 + $0x99] sm:$0xff]
      %v3481 = vld [vmem:[%s386 + $0xa1] sm:$0xff]
      %v3482 = vld [vmem:[%s386 + $0xa9] sm:$0xff]
      %v3483 = vld [vmem:[%s386 + $0xb1] sm:$0xff]
      %v3484 = vld [vmem:[%s386 + $0xb9] sm:$0xff]
      %v3485 = vld [vmem:[%s386 + $0xc1] sm:$0xff]
      %v3486 = vld [vmem:[%s386 + $0xc9] sm:$0xff]
      %v3487 = vld [vmem:[%s386 + $0xd1] sm:$0xff]
      %v3488 = vld [vmem:[%s386 + $0xd9] sm:$0xff]
      %v3489 = vld [vmem:[%s386 + $0xe1] sm:$0xff]
      %v3490 = vld [vmem:[%s386 + $0xe9] sm:$0xff]
      %v3491 = vld [vmem:[%s386 + $0xf1] sm:$0xff]
      %v3492 = vld [vmem:[%s386 + $0xf9] sm:$0xff]
      %v3493 = vld [vmem:[%s386 + $0x101] sm:$0xff]
      %v3494 = vld [vmem:[%s386 + $0x109] sm:$0xff]
      %v3495 = vld [vmem:[%s386 + $0x111] sm:$0xff]
      %v3496 = vld [vmem:[%s386 + $0x119] sm:$0xff]
      %v3497 = vld [vmem:[%s386 + $0x121] sm:$0xff]
      %v3498 = vld [vmem:[%s386 + $0x129] sm:$0xff]
      %v3499 = vld [vmem:[%s386 + $0x131] sm:$0xff]
      %v3500 = vld [vmem:[%s386 + $0x139] sm:$0xff]
      %v3501 = vld [vmem:[%s386 + $0x141] sm:$0xff]
      %v3502 = vld [vmem:[%s386 + $0x149] sm:$0xff]
      %v3503 = vld [vmem:[%s386 + $0x151] sm:$0xff]
      %v3504 = vld [vmem:[%s386 + $0x159] sm:$0xff]
      %v3505 = vld [vmem:[%s386 + $0x161] sm:$0xff]
      %v3506 = vld [vmem:[%s386 + $0x169] sm:$0xff]
      %v3507 = vld [vmem:[%s386 + $0x171] sm:$0xff]
      %v3508 = vld [vmem:[%s386 + $0x179] sm:$0xff]
      %v3509 = vld [vmem:[%s386 + $0x181] sm:$0xff]
      %v3510 = vld [vmem:[%s386 + $0x189] sm:$0xff]
      %v3511 = vld [vmem:[%s386 + $0x191] sm:$0xff]
      %v3512 = vld [vmem:[%s386 + $0x199] sm:$0xff]
      %v3513 = vld [vmem:[%s386 + $0x1a1] sm:$0xff]
      %v3514 = vld [vmem:[%s386 + $0x1a9] sm:$0xff]
      %v3515 = vld [vmem:[%s386 + $0x1b1] sm:$0xff]
      %v3516 = vld [vmem:[%s386 + $0x1b9] sm:$0xff]
      %v3517 = vld [vmem:[%s386 + $0x1c1] sm:$0xff]
      %v3518 = vld [vmem:[%s386 + $0x1c9] sm:$0xff]
      %v3519 = vld [vmem:[%s386 + $0x1d1] sm:$0xff]
      %v3520 = vld [vmem:[%s386 + $0x1d9] sm:$0xff]
      %s3521 = scalar_lea.vmem %s2, 28
      %v3522 = vld [vmem:[%s3521] sm:$0xf]
      %v3524 = vsel %vm507, %v3467, 0
      %v3527 = vsel %vm507, %v3468, 0
      %v3530 = vsel %vm507, %v3469, 0
      %v3533 = vsel %vm507, %v3470, 0
      %v3536 = vsel %vm507, %v3471, 0
      %v3539 = vsel %vm507, %v3472, 0
      %v3542 = vsel %vm507, %v3473, 0
      %v3545 = vsel %vm507, %v3474, 0
      %v3548 = vsel %vm507, %v3475, 0
      %v3551 = vsel %vm507, %v3476, 0
      %v3554 = vsel %vm507, %v3477, 0
      %v3557 = vsel %vm507, %v3478, 0
      %v3560 = vsel %vm507, %v3479, 0
      %v3563 = vsel %vm507, %v3480, 0
      %v3566 = vsel %vm507, %v3481, 0
      %v3569 = vsel %vm507, %v3482, 0
      %v3572 = vsel %vm507, %v3483, 0
      %v3575 = vsel %vm507, %v3484, 0
      %v3578 = vsel %vm507, %v3485, 0
      %v3581 = vsel %vm507, %v3486, 0
      %v3584 = vsel %vm507, %v3487, 0
      %v3587 = vsel %vm507, %v3488, 0
      %v3590 = vsel %vm507, %v3489, 0
      %v3593 = vsel %vm507, %v3490, 0
      %v3596 = vsel %vm507, %v3491, 0
      %v3599 = vsel %vm507, %v3492, 0
      %v3602 = vsel %vm507, %v3493, 0
      %v3605 = vsel %vm507, %v3494, 0
      %v3608 = vsel %vm507, %v3495, 0
      %v3611 = vsel %vm507, %v3496, 0
      %v3614 = vsel %vm507, %v3497, 0
      %v3617 = vsel %vm507, %v3498, 0
      %v3620 = vsel %vm507, %v3499, 0
      %v3623 = vsel %vm507, %v3500, 0
      %v3626 = vsel %vm507, %v3501, 0
      %v3629 = vsel %vm507, %v3502, 0
      %v3632 = vsel %vm507, %v3503, 0
      %v3635 = vsel %vm507, %v3504, 0
      %v3638 = vsel %vm507, %v3505, 0
      %v3641 = vsel %vm507, %v3506, 0
      %v3644 = vsel %vm507, %v3507, 0
      %v3647 = vsel %vm507, %v3508, 0
      %v3650 = vsel %vm507, %v3509, 0
      %v3653 = vsel %vm507, %v3510, 0
      %v3656 = vsel %vm507, %v3511, 0
      %v3659 = vsel %vm507, %v3512, 0
      %v3662 = vsel %vm507, %v3513, 0
      %v3665 = vsel %vm507, %v3514, 0
      %v3668 = vsel %vm507, %v3515, 0
      %v3671 = vsel %vm507, %v3516, 0
      %v3674 = vsel %vm507, %v3517, 0
      %v3677 = vsel %vm507, %v3518, 0
      %v3680 = vsel %vm507, %v3519, 0
      %v3683 = vsel %vm507, %v3520, 0
      %v3686 = vsel %vm670, %v3522, 0
      %3688 = vmatpush.msra.mxu0 0.0
      %3689 = vmatpush.msra.mxu0 0.0
      %3690 = vmatpush.msra.mxu0 0.0
      %3691 = vmatpush.msra.mxu0 0.0
      %3692 = vmatpush.msra.mxu0 0.0
      %3693 = vmatpush.msra.mxu0 0.0
      %3694 = vmatpush.msra.mxu0 0.0
      %3695 = vmatpush.msra.mxu0 0.0
      %3696 = vmatpush.msra.mxu0 0.0
      %3697 = vmatpush.msra.mxu0 0.0
      %3698 = vmatpush.msra.mxu0 0.0
      %3699 = vmatpush.msra.mxu0 0.0
      %3700 = vmatpush.msra.mxu0 0.0
      %3701 = vmatpush.msra.mxu0 0.0
      %3702 = vmatpush.msra.mxu0 0.0
      %3703 = vmatpush.msra.mxu0 %v3686
      %3704 = vmatmul.f32.gmra.mxu0 %v3524
      %v3705 = vpop.f32.mrf.mxu0
      %v3706 = vadd.f32 0.0, %v3705
      %3707 = vmatmul.f32.gmra.mxu0 %v3527
      %v3708 = vpop.f32.mrf.mxu0
      %v3709 = vadd.f32 0.0, %v3708
      %3710 = vmatmul.f32.gmra.mxu0 %v3530
      %v3711 = vpop.f32.mrf.mxu0
      %v3712 = vadd.f32 0.0, %v3711
      %3713 = vmatmul.f32.gmra.mxu0 %v3533
      %v3714 = vpop.f32.mrf.mxu0
      %v3715 = vadd.f32 0.0, %v3714
      %3716 = vmatmul.f32.gmra.mxu0 %v3536
      %v3717 = vpop.f32.mrf.mxu0
      %v3718 = vadd.f32 0.0, %v3717
      %3719 = vmatmul.f32.gmra.mxu0 %v3539
      %v3720 = vpop.f32.mrf.mxu0
      %v3721 = vadd.f32 0.0, %v3720
      %3722 = vmatmul.f32.gmra.mxu0 %v3542
      %v3723 = vpop.f32.mrf.mxu0
      %v3724 = vadd.f32 0.0, %v3723
      %3725 = vmatmul.f32.gmra.mxu0 %v3545
      %v3726 = vpop.f32.mrf.mxu0
      %v3727 = vadd.f32 0.0, %v3726
      %3728 = vmatmul.f32.gmra.mxu0 %v3548
      %v3729 = vpop.f32.mrf.mxu0
      %v3730 = vadd.f32 0.0, %v3729
      %3731 = vmatmul.f32.gmra.mxu0 %v3551
      %v3732 = vpop.f32.mrf.mxu0
      %v3733 = vadd.f32 0.0, %v3732
      %3734 = vmatmul.f32.gmra.mxu0 %v3554
      %v3735 = vpop.f32.mrf.mxu0
      %v3736 = vadd.f32 0.0, %v3735
      %3737 = vmatmul.f32.gmra.mxu0 %v3557
      %v3738 = vpop.f32.mrf.mxu0
      %v3739 = vadd.f32 0.0, %v3738
      %3740 = vmatmul.f32.gmra.mxu0 %v3560
      %v3741 = vpop.f32.mrf.mxu0
      %v3742 = vadd.f32 0.0, %v3741
      %3743 = vmatmul.f32.gmra.mxu0 %v3563
      %v3744 = vpop.f32.mrf.mxu0
      %v3745 = vadd.f32 0.0, %v3744
      %3746 = vmatmul.f32.gmra.mxu0 %v3566
      %v3747 = vpop.f32.mrf.mxu0
      %v3748 = vadd.f32 0.0, %v3747
      %3749 = vmatmul.f32.gmra.mxu0 %v3569
      %v3750 = vpop.f32.mrf.mxu0
      %v3751 = vadd.f32 0.0, %v3750
      %3752 = vmatmul.f32.gmra.mxu0 %v3572
      %v3753 = vpop.f32.mrf.mxu0
      %v3754 = vadd.f32 0.0, %v3753
      %3755 = vmatmul.f32.gmra.mxu0 %v3575
      %v3756 = vpop.f32.mrf.mxu0
      %v3757 = vadd.f32 0.0, %v3756
      %3758 = vmatmul.f32.gmra.mxu0 %v3578
      %v3759 = vpop.f32.mrf.mxu0
      %v3760 = vadd.f32 0.0, %v3759
      %3761 = vmatmul.f32.gmra.mxu0 %v3581
      %v3762 = vpop.f32.mrf.mxu0
      %v3763 = vadd.f32 0.0, %v3762
      %3764 = vmatmul.f32.gmra.mxu0 %v3584
      %v3765 = vpop.f32.mrf.mxu0
      %v3766 = vadd.f32 0.0, %v3765
      %3767 = vmatmul.f32.gmra.mxu0 %v3587
      %v3768 = vpop.f32.mrf.mxu0
      %v3769 = vadd.f32 0.0, %v3768
      %3770 = vmatmul.f32.gmra.mxu0 %v3590
      %v3771 = vpop.f32.mrf.mxu0
      %v3772 = vadd.f32 0.0, %v3771
      %3773 = vmatmul.f32.gmra.mxu0 %v3593
      %v3774 = vpop.f32.mrf.mxu0
      %v3775 = vadd.f32 0.0, %v3774
      %3776 = vmatmul.f32.gmra.mxu0 %v3596
      %v3777 = vpop.f32.mrf.mxu0
      %v3778 = vadd.f32 0.0, %v3777
      %3779 = vmatmul.f32.gmra.mxu0 %v3599
      %v3780 = vpop.f32.mrf.mxu0
      %v3781 = vadd.f32 0.0, %v3780
      %3782 = vmatmul.f32.gmra.mxu0 %v3602
      %v3783 = vpop.f32.mrf.mxu0
      %v3784 = vadd.f32 0.0, %v3783
      %3785 = vmatmul.f32.gmra.mxu0 %v3605
      %v3786 = vpop.f32.mrf.mxu0
      %v3787 = vadd.f32 0.0, %v3786
      %3788 = vmatmul.f32.gmra.mxu0 %v3608
      %v3789 = vpop.f32.mrf.mxu0
      %v3790 = vadd.f32 0.0, %v3789
      %3791 = vmatmul.f32.gmra.mxu0 %v3611
      %v3792 = vpop.f32.mrf.mxu0
      %v3793 = vadd.f32 0.0, %v3792
      %3794 = vmatmul.f32.gmra.mxu0 %v3614
      %v3795 = vpop.f32.mrf.mxu0
      %v3796 = vadd.f32 0.0, %v3795
      %3797 = vmatmul.f32.gmra.mxu0 %v3617
      %v3798 = vpop.f32.mrf.mxu0
      %v3799 = vadd.f32 0.0, %v3798
      %3800 = vmatmul.f32.gmra.mxu0 %v3620
      %v3801 = vpop.f32.mrf.mxu0
      %v3802 = vadd.f32 0.0, %v3801
      %3803 = vmatmul.f32.gmra.mxu0 %v3623
      %v3804 = vpop.f32.mrf.mxu0
      %v3805 = vadd.f32 0.0, %v3804
      %3806 = vmatmul.f32.gmra.mxu0 %v3626
      %v3807 = vpop.f32.mrf.mxu0
      %v3808 = vadd.f32 0.0, %v3807
      %3809 = vmatmul.f32.gmra.mxu0 %v3629
      %v3810 = vpop.f32.mrf.mxu0
      %v3811 = vadd.f32 0.0, %v3810
      %3812 = vmatmul.f32.gmra.mxu0 %v3632
      %v3813 = vpop.f32.mrf.mxu0
      %v3814 = vadd.f32 0.0, %v3813
      %3815 = vmatmul.f32.gmra.mxu0 %v3635
      %v3816 = vpop.f32.mrf.mxu0
      %v3817 = vadd.f32 0.0, %v3816
      %3818 = vmatmul.f32.gmra.mxu0 %v3638
      %v3819 = vpop.f32.mrf.mxu0
      %v3820 = vadd.f32 0.0, %v3819
      %3821 = vmatmul.f32.gmra.mxu0 %v3641
      %v3822 = vpop.f32.mrf.mxu0
      %v3823 = vadd.f32 0.0, %v3822
      %3824 = vmatmul.f32.gmra.mxu0 %v3644
      %v3825 = vpop.f32.mrf.mxu0
      %v3826 = vadd.f32 0.0, %v3825
      %3827 = vmatmul.f32.gmra.mxu0 %v3647
      %v3828 = vpop.f32.mrf.mxu0
      %v3829 = vadd.f32 0.0, %v3828
      %3830 = vmatmul.f32.gmra.mxu0 %v3650
      %v3831 = vpop.f32.mrf.mxu0
      %v3832 = vadd.f32 0.0, %v3831
      %3833 = vmatmul.f32.gmra.mxu0 %v3653
      %v3834 = vpop.f32.mrf.mxu0
      %v3835 = vadd.f32 0.0, %v3834
      %3836 = vmatmul.f32.gmra.mxu0 %v3656
      %v3837 = vpop.f32.mrf.mxu0
      %v3838 = vadd.f32 0.0, %v3837
      %3839 = vmatmul.f32.gmra.mxu0 %v3659
      %v3840 = vpop.f32.mrf.mxu0
      %v3841 = vadd.f32 0.0, %v3840
      %3842 = vmatmul.f32.gmra.mxu0 %v3662
      %v3843 = vpop.f32.mrf.mxu0
      %v3844 = vadd.f32 0.0, %v3843
      %3845 = vmatmul.f32.gmra.mxu0 %v3665
      %v3846 = vpop.f32.mrf.mxu0
      %v3847 = vadd.f32 0.0, %v3846
      %3848 = vmatmul.f32.gmra.mxu0 %v3668
      %v3849 = vpop.f32.mrf.mxu0
      %v3850 = vadd.f32 0.0, %v3849
      %3851 = vmatmul.f32.gmra.mxu0 %v3671
      %v3852 = vpop.f32.mrf.mxu0
      %v3853 = vadd.f32 0.0, %v3852
      %3854 = vmatmul.f32.gmra.mxu0 %v3674
      %v3855 = vpop.f32.mrf.mxu0
      %v3856 = vadd.f32 0.0, %v3855
      %3857 = vmatmul.f32.gmra.mxu0 %v3677
      %v3858 = vpop.f32.mrf.mxu0
      %v3859 = vadd.f32 0.0, %v3858
      %3860 = vmatmul.f32.gmra.mxu0 %v3680
      %v3861 = vpop.f32.mrf.mxu0
      %v3862 = vadd.f32 0.0, %v3861
      %3863 = vmatmul.f32.gmra.mxu0 %v3683
      %v3864 = vpop.f32.mrf.mxu0
      %v3865 = vadd.f32 0.0, %v3864
      %3866 = vdwg.mxu0
      %v3867 = vadd.f32 %v3413, %v3706
      %v3868 = vadd.f32 %v3414, %v3709
      %v3869 = vadd.f32 %v3415, %v3712
      %v3870 = vadd.f32 %v3416, %v3715
      %v3871 = vadd.f32 %v3417, %v3718
      %v3872 = vadd.f32 %v3418, %v3721
      %v3873 = vadd.f32 %v3419, %v3724
      %v3874 = vadd.f32 %v3420, %v3727
      %v3875 = vadd.f32 %v3421, %v3730
      %v3876 = vadd.f32 %v3422, %v3733
      %v3877 = vadd.f32 %v3423, %v3736
      %v3878 = vadd.f32 %v3424, %v3739
      %v3879 = vadd.f32 %v3425, %v3742
      %v3880 = vadd.f32 %v3426, %v3745
      %v3881 = vadd.f32 %v3427, %v3748
      %v3882 = vadd.f32 %v3428, %v3751
      %v3883 = vadd.f32 %v3429, %v3754
      %v3884 = vadd.f32 %v3430, %v3757
      %v3885 = vadd.f32 %v3431, %v3760
      %v3886 = vadd.f32 %v3432, %v3763
      %v3887 = vadd.f32 %v3433, %v3766
      %v3888 = vadd.f32 %v3434, %v3769
      %v3889 = vadd.f32 %v3435, %v3772
      %v3890 = vadd.f32 %v3436, %v3775
      %v3891 = vadd.f32 %v3437, %v3778
      %v3892 = vadd.f32 %v3438, %v3781
      %v3893 = vadd.f32 %v3439, %v3784
      %v3894 = vadd.f32 %v3440, %v3787
      %v3895 = vadd.f32 %v3441, %v3790
      %v3896 = vadd.f32 %v3442, %v3793
      %v3897 = vadd.f32 %v3443, %v3796
      %v3898 = vadd.f32 %v3444, %v3799
      %v3899 = vadd.f32 %v3445, %v3802
      %v3900 = vadd.f32 %v3446, %v3805
      %v3901 = vadd.f32 %v3447, %v3808
      %v3902 = vadd.f32 %v3448, %v3811
      %v3903 = vadd.f32 %v3449, %v3814
      %v3904 = vadd.f32 %v3450, %v3817
      %v3905 = vadd.f32 %v3451, %v3820
      %v3906 = vadd.f32 %v3452, %v3823
      %v3907 = vadd.f32 %v3453, %v3826
      %v3908 = vadd.f32 %v3454, %v3829
      %v3909 = vadd.f32 %v3455, %v3832
      %v3910 = vadd.f32 %v3456, %v3835
      %v3911 = vadd.f32 %v3457, %v3838
      %v3912 = vadd.f32 %v3458, %v3841
      %v3913 = vadd.f32 %v3459, %v3844
      %v3914 = vadd.f32 %v3460, %v3847
      %v3915 = vadd.f32 %v3461, %v3850
      %v3916 = vadd.f32 %v3462, %v3853
      %v3917 = vadd.f32 %v3463, %v3856
      %v3918 = vadd.f32 %v3464, %v3859
      %v3919 = vadd.f32 %v3465, %v3862
      %v3920 = vadd.f32 %v3466, %v3865
      %v3921 = vld [vmem:[%s386 + $0x32] sm:$0xff]
      %v3922 = vld [vmem:[%s386 + $0x3a] sm:$0xff]
      %v3923 = vld [vmem:[%s386 + $0x42] sm:$0xff]
      %v3924 = vld [vmem:[%s386 + $0x4a] sm:$0xff]
      %v3925 = vld [vmem:[%s386 + $0x52] sm:$0xff]
      %v3926 = vld [vmem:[%s386 + $0x5a] sm:$0xff]
      %v3927 = vld [vmem:[%s386 + $0x62] sm:$0xff]
      %v3928 = vld [vmem:[%s386 + $0x6a] sm:$0xff]
      %v3929 = vld [vmem:[%s386 + $0x72] sm:$0xff]
      %v3930 = vld [vmem:[%s386 + $0x7a] sm:$0xff]
      %v3931 = vld [vmem:[%s386 + $0x82] sm:$0xff]
      %v3932 = vld [vmem:[%s386 + $0x8a] sm:$0xff]
      %v3933 = vld [vmem:[%s386 + $0x92] sm:$0xff]
      %v3934 = vld [vmem:[%s386 + $0x9a] sm:$0xff]
      %v3935 = vld [vmem:[%s386 + $0xa2] sm:$0xff]
      %v3936 = vld [vmem:[%s386 + $0xaa] sm:$0xff]
      %v3937 = vld [vmem:[%s386 + $0xb2] sm:$0xff]
      %v3938 = vld [vmem:[%s386 + $0xba] sm:$0xff]
      %v3939 = vld [vmem:[%s386 + $0xc2] sm:$0xff]
      %v3940 = vld [vmem:[%s386 + $0xca] sm:$0xff]
      %v3941 = vld [vmem:[%s386 + $0xd2] sm:$0xff]
      %v3942 = vld [vmem:[%s386 + $0xda] sm:$0xff]
      %v3943 = vld [vmem:[%s386 + $0xe2] sm:$0xff]
      %v3944 = vld [vmem:[%s386 + $0xea] sm:$0xff]
      %v3945 = vld [vmem:[%s386 + $0xf2] sm:$0xff]
      %v3946 = vld [vmem:[%s386 + $0xfa] sm:$0xff]
      %v3947 = vld [vmem:[%s386 + $0x102] sm:$0xff]
      %v3948 = vld [vmem:[%s386 + $0x10a] sm:$0xff]
      %v3949 = vld [vmem:[%s386 + $0x112] sm:$0xff]
      %v3950 = vld [vmem:[%s386 + $0x11a] sm:$0xff]
      %v3951 = vld [vmem:[%s386 + $0x122] sm:$0xff]
      %v3952 = vld [vmem:[%s386 + $0x12a] sm:$0xff]
      %v3953 = vld [vmem:[%s386 + $0x132] sm:$0xff]
      %v3954 = vld [vmem:[%s386 + $0x13a] sm:$0xff]
      %v3955 = vld [vmem:[%s386 + $0x142] sm:$0xff]
      %v3956 = vld [vmem:[%s386 + $0x14a] sm:$0xff]
      %v3957 = vld [vmem:[%s386 + $0x152] sm:$0xff]
      %v3958 = vld [vmem:[%s386 + $0x15a] sm:$0xff]
      %v3959 = vld [vmem:[%s386 + $0x162] sm:$0xff]
      %v3960 = vld [vmem:[%s386 + $0x16a] sm:$0xff]
      %v3961 = vld [vmem:[%s386 + $0x172] sm:$0xff]
      %v3962 = vld [vmem:[%s386 + $0x17a] sm:$0xff]
      %v3963 = vld [vmem:[%s386 + $0x182] sm:$0xff]
      %v3964 = vld [vmem:[%s386 + $0x18a] sm:$0xff]
      %v3965 = vld [vmem:[%s386 + $0x192] sm:$0xff]
      %v3966 = vld [vmem:[%s386 + $0x19a] sm:$0xff]
      %v3967 = vld [vmem:[%s386 + $0x1a2] sm:$0xff]
      %v3968 = vld [vmem:[%s386 + $0x1aa] sm:$0xff]
      %v3969 = vld [vmem:[%s386 + $0x1b2] sm:$0xff]
      %v3970 = vld [vmem:[%s386 + $0x1ba] sm:$0xff]
      %v3971 = vld [vmem:[%s386 + $0x1c2] sm:$0xff]
      %v3972 = vld [vmem:[%s386 + $0x1ca] sm:$0xff]
      %v3973 = vld [vmem:[%s386 + $0x1d2] sm:$0xff]
      %v3974 = vld [vmem:[%s386 + $0x1da] sm:$0xff]
      %s3975 = scalar_lea.vmem %s2, 32
      %v3976 = vld [vmem:[%s3975] sm:$0xf]
      %v3978 = vsel %vm507, %v3921, 0
      %v3981 = vsel %vm507, %v3922, 0
      %v3984 = vsel %vm507, %v3923, 0
      %v3987 = vsel %vm507, %v3924, 0
      %v3990 = vsel %vm507, %v3925, 0
      %v3993 = vsel %vm507, %v3926, 0
      %v3996 = vsel %vm507, %v3927, 0
      %v3999 = vsel %vm507, %v3928, 0
      %v4002 = vsel %vm507, %v3929, 0
      %v4005 = vsel %vm507, %v3930, 0
      %v4008 = vsel %vm507, %v3931, 0
      %v4011 = vsel %vm507, %v3932, 0
      %v4014 = vsel %vm507, %v3933, 0
      %v4017 = vsel %vm507, %v3934, 0
      %v4020 = vsel %vm507, %v3935, 0
      %v4023 = vsel %vm507, %v3936, 0
      %v4026 = vsel %vm507, %v3937, 0
      %v4029 = vsel %vm507, %v3938, 0
      %v4032 = vsel %vm507, %v3939, 0
      %v4035 = vsel %vm507, %v3940, 0
      %v4038 = vsel %vm507, %v3941, 0
      %v4041 = vsel %vm507, %v3942, 0
      %v4044 = vsel %vm507, %v3943, 0
      %v4047 = vsel %vm507, %v3944, 0
      %v4050 = vsel %vm507, %v3945, 0
      %v4053 = vsel %vm507, %v3946, 0
      %v4056 = vsel %vm507, %v3947, 0
      %v4059 = vsel %vm507, %v3948, 0
      %v4062 = vsel %vm507, %v3949, 0
      %v4065 = vsel %vm507, %v3950, 0
      %v4068 = vsel %vm507, %v3951, 0
      %v4071 = vsel %vm507, %v3952, 0
      %v4074 = vsel %vm507, %v3953, 0
      %v4077 = vsel %vm507, %v3954, 0
      %v4080 = vsel %vm507, %v3955, 0
      %v4083 = vsel %vm507, %v3956, 0
      %v4086 = vsel %vm507, %v3957, 0
      %v4089 = vsel %vm507, %v3958, 0
      %v4092 = vsel %vm507, %v3959, 0
      %v4095 = vsel %vm507, %v3960, 0
      %v4098 = vsel %vm507, %v3961, 0
      %v4101 = vsel %vm507, %v3962, 0
      %v4104 = vsel %vm507, %v3963, 0
      %v4107 = vsel %vm507, %v3964, 0
      %v4110 = vsel %vm507, %v3965, 0
      %v4113 = vsel %vm507, %v3966, 0
      %v4116 = vsel %vm507, %v3967, 0
      %v4119 = vsel %vm507, %v3968, 0
      %v4122 = vsel %vm507, %v3969, 0
      %v4125 = vsel %vm507, %v3970, 0
      %v4128 = vsel %vm507, %v3971, 0
      %v4131 = vsel %vm507, %v3972, 0
      %v4134 = vsel %vm507, %v3973, 0
      %v4137 = vsel %vm507, %v3974, 0
      %v4140 = vsel %vm670, %v3976, 0
      %4142 = vmatpush.msra.mxu0 0.0
      %4143 = vmatpush.msra.mxu0 0.0
      %4144 = vmatpush.msra.mxu0 0.0
      %4145 = vmatpush.msra.mxu0 0.0
      %4146 = vmatpush.msra.mxu0 0.0
      %4147 = vmatpush.msra.mxu0 0.0
      %4148 = vmatpush.msra.mxu0 0.0
      %4149 = vmatpush.msra.mxu0 0.0
      %4150 = vmatpush.msra.mxu0 0.0
      %4151 = vmatpush.msra.mxu0 0.0
      %4152 = vmatpush.msra.mxu0 0.0
      %4153 = vmatpush.msra.mxu0 0.0
      %4154 = vmatpush.msra.mxu0 0.0
      %4155 = vmatpush.msra.mxu0 0.0
      %4156 = vmatpush.msra.mxu0 0.0
      %4157 = vmatpush.msra.mxu0 %v4140
      %4158 = vmatmul.f32.gmra.mxu0 %v3978
      %v4159 = vpop.f32.mrf.mxu0
      %v4160 = vadd.f32 0.0, %v4159
      %4161 = vmatmul.f32.gmra.mxu0 %v3981
      %v4162 = vpop.f32.mrf.mxu0
      %v4163 = vadd.f32 0.0, %v4162
      %4164 = vmatmul.f32.gmra.mxu0 %v3984
      %v4165 = vpop.f32.mrf.mxu0
      %v4166 = vadd.f32 0.0, %v4165
      %4167 = vmatmul.f32.gmra.mxu0 %v3987
      %v4168 = vpop.f32.mrf.mxu0
      %v4169 = vadd.f32 0.0, %v4168
      %4170 = vmatmul.f32.gmra.mxu0 %v3990
      %v4171 = vpop.f32.mrf.mxu0
      %v4172 = vadd.f32 0.0, %v4171
      %4173 = vmatmul.f32.gmra.mxu0 %v3993
      %v4174 = vpop.f32.mrf.mxu0
      %v4175 = vadd.f32 0.0, %v4174
      %4176 = vmatmul.f32.gmra.mxu0 %v3996
      %v4177 = vpop.f32.mrf.mxu0
      %v4178 = vadd.f32 0.0, %v4177
      %4179 = vmatmul.f32.gmra.mxu0 %v3999
      %v4180 = vpop.f32.mrf.mxu0
      %v4181 = vadd.f32 0.0, %v4180
      %4182 = vmatmul.f32.gmra.mxu0 %v4002
      %v4183 = vpop.f32.mrf.mxu0
      %v4184 = vadd.f32 0.0, %v4183
      %4185 = vmatmul.f32.gmra.mxu0 %v4005
      %v4186 = vpop.f32.mrf.mxu0
      %v4187 = vadd.f32 0.0, %v4186
      %4188 = vmatmul.f32.gmra.mxu0 %v4008
      %v4189 = vpop.f32.mrf.mxu0
      %v4190 = vadd.f32 0.0, %v4189
      %4191 = vmatmul.f32.gmra.mxu0 %v4011
      %v4192 = vpop.f32.mrf.mxu0
      %v4193 = vadd.f32 0.0, %v4192
      %4194 = vmatmul.f32.gmra.mxu0 %v4014
      %v4195 = vpop.f32.mrf.mxu0
      %v4196 = vadd.f32 0.0, %v4195
      %4197 = vmatmul.f32.gmra.mxu0 %v4017
      %v4198 = vpop.f32.mrf.mxu0
      %v4199 = vadd.f32 0.0, %v4198
      %4200 = vmatmul.f32.gmra.mxu0 %v4020
      %v4201 = vpop.f32.mrf.mxu0
      %v4202 = vadd.f32 0.0, %v4201
      %4203 = vmatmul.f32.gmra.mxu0 %v4023
      %v4204 = vpop.f32.mrf.mxu0
      %v4205 = vadd.f32 0.0, %v4204
      %4206 = vmatmul.f32.gmra.mxu0 %v4026
      %v4207 = vpop.f32.mrf.mxu0
      %v4208 = vadd.f32 0.0, %v4207
      %4209 = vmatmul.f32.gmra.mxu0 %v4029
      %v4210 = vpop.f32.mrf.mxu0
      %v4211 = vadd.f32 0.0, %v4210
      %4212 = vmatmul.f32.gmra.mxu0 %v4032
      %v4213 = vpop.f32.mrf.mxu0
      %v4214 = vadd.f32 0.0, %v4213
      %4215 = vmatmul.f32.gmra.mxu0 %v4035
      %v4216 = vpop.f32.mrf.mxu0
      %v4217 = vadd.f32 0.0, %v4216
      %4218 = vmatmul.f32.gmra.mxu0 %v4038
      %v4219 = vpop.f32.mrf.mxu0
      %v4220 = vadd.f32 0.0, %v4219
      %4221 = vmatmul.f32.gmra.mxu0 %v4041
      %v4222 = vpop.f32.mrf.mxu0
      %v4223 = vadd.f32 0.0, %v4222
      %4224 = vmatmul.f32.gmra.mxu0 %v4044
      %v4225 = vpop.f32.mrf.mxu0
      %v4226 = vadd.f32 0.0, %v4225
      %4227 = vmatmul.f32.gmra.mxu0 %v4047
      %v4228 = vpop.f32.mrf.mxu0
      %v4229 = vadd.f32 0.0, %v4228
      %4230 = vmatmul.f32.gmra.mxu0 %v4050
      %v4231 = vpop.f32.mrf.mxu0
      %v4232 = vadd.f32 0.0, %v4231
      %4233 = vmatmul.f32.gmra.mxu0 %v4053
      %v4234 = vpop.f32.mrf.mxu0
      %v4235 = vadd.f32 0.0, %v4234
      %4236 = vmatmul.f32.gmra.mxu0 %v4056
      %v4237 = vpop.f32.mrf.mxu0
      %v4238 = vadd.f32 0.0, %v4237
      %4239 = vmatmul.f32.gmra.mxu0 %v4059
      %v4240 = vpop.f32.mrf.mxu0
      %v4241 = vadd.f32 0.0, %v4240
      %4242 = vmatmul.f32.gmra.mxu0 %v4062
      %v4243 = vpop.f32.mrf.mxu0
      %v4244 = vadd.f32 0.0, %v4243
      %4245 = vmatmul.f32.gmra.mxu0 %v4065
      %v4246 = vpop.f32.mrf.mxu0
      %v4247 = vadd.f32 0.0, %v4246
      %4248 = vmatmul.f32.gmra.mxu0 %v4068
      %v4249 = vpop.f32.mrf.mxu0
      %v4250 = vadd.f32 0.0, %v4249
      %4251 = vmatmul.f32.gmra.mxu0 %v4071
      %v4252 = vpop.f32.mrf.mxu0
      %v4253 = vadd.f32 0.0, %v4252
      %4254 = vmatmul.f32.gmra.mxu0 %v4074
      %v4255 = vpop.f32.mrf.mxu0
      %v4256 = vadd.f32 0.0, %v4255
      %4257 = vmatmul.f32.gmra.mxu0 %v4077
      %v4258 = vpop.f32.mrf.mxu0
      %v4259 = vadd.f32 0.0, %v4258
      %4260 = vmatmul.f32.gmra.mxu0 %v4080
      %v4261 = vpop.f32.mrf.mxu0
      %v4262 = vadd.f32 0.0, %v4261
      %4263 = vmatmul.f32.gmra.mxu0 %v4083
      %v4264 = vpop.f32.mrf.mxu0
      %v4265 = vadd.f32 0.0, %v4264
      %4266 = vmatmul.f32.gmra.mxu0 %v4086
      %v4267 = vpop.f32.mrf.mxu0
      %v4268 = vadd.f32 0.0, %v4267
      %4269 = vmatmul.f32.gmra.mxu0 %v4089
      %v4270 = vpop.f32.mrf.mxu0
      %v4271 = vadd.f32 0.0, %v4270
      %4272 = vmatmul.f32.gmra.mxu0 %v4092
      %v4273 = vpop.f32.mrf.mxu0
      %v4274 = vadd.f32 0.0, %v4273
      %4275 = vmatmul.f32.gmra.mxu0 %v4095
      %v4276 = vpop.f32.mrf.mxu0
      %v4277 = vadd.f32 0.0, %v4276
      %4278 = vmatmul.f32.gmra.mxu0 %v4098
      %v4279 = vpop.f32.mrf.mxu0
      %v4280 = vadd.f32 0.0, %v4279
      %4281 = vmatmul.f32.gmra.mxu0 %v4101
      %v4282 = vpop.f32.mrf.mxu0
      %v4283 = vadd.f32 0.0, %v4282
      %4284 = vmatmul.f32.gmra.mxu0 %v4104
      %v4285 = vpop.f32.mrf.mxu0
      %v4286 = vadd.f32 0.0, %v4285
      %4287 = vmatmul.f32.gmra.mxu0 %v4107
      %v4288 = vpop.f32.mrf.mxu0
      %v4289 = vadd.f32 0.0, %v4288
      %4290 = vmatmul.f32.gmra.mxu0 %v4110
      %v4291 = vpop.f32.mrf.mxu0
      %v4292 = vadd.f32 0.0, %v4291
      %4293 = vmatmul.f32.gmra.mxu0 %v4113
      %v4294 = vpop.f32.mrf.mxu0
      %v4295 = vadd.f32 0.0, %v4294
      %4296 = vmatmul.f32.gmra.mxu0 %v4116
      %v4297 = vpop.f32.mrf.mxu0
      %v4298 = vadd.f32 0.0, %v4297
      %4299 = vmatmul.f32.gmra.mxu0 %v4119
      %v4300 = vpop.f32.mrf.mxu0
      %v4301 = vadd.f32 0.0, %v4300
      %4302 = vmatmul.f32.gmra.mxu0 %v4122
      %v4303 = vpop.f32.mrf.mxu0
      %v4304 = vadd.f32 0.0, %v4303
      %4305 = vmatmul.f32.gmra.mxu0 %v4125
      %v4306 = vpop.f32.mrf.mxu0
      %v4307 = vadd.f32 0.0, %v4306
      %4308 = vmatmul.f32.gmra.mxu0 %v4128
      %v4309 = vpop.f32.mrf.mxu0
      %v4310 = vadd.f32 0.0, %v4309
      %4311 = vmatmul.f32.gmra.mxu0 %v4131
      %v4312 = vpop.f32.mrf.mxu0
      %v4313 = vadd.f32 0.0, %v4312
      %4314 = vmatmul.f32.gmra.mxu0 %v4134
      %v4315 = vpop.f32.mrf.mxu0
      %v4316 = vadd.f32 0.0, %v4315
      %4317 = vmatmul.f32.gmra.mxu0 %v4137
      %v4318 = vpop.f32.mrf.mxu0
      %v4319 = vadd.f32 0.0, %v4318
      %4320 = vdwg.mxu0
      %v4321 = vadd.f32 %v3867, %v4160
      %v4322 = vadd.f32 %v3868, %v4163
      %v4323 = vadd.f32 %v3869, %v4166
      %v4324 = vadd.f32 %v3870, %v4169
      %v4325 = vadd.f32 %v3871, %v4172
      %v4326 = vadd.f32 %v3872, %v4175
      %v4327 = vadd.f32 %v3873, %v4178
      %v4328 = vadd.f32 %v3874, %v4181
      %v4329 = vadd.f32 %v3875, %v4184
      %v4330 = vadd.f32 %v3876, %v4187
      %v4331 = vadd.f32 %v3877, %v4190
      %v4332 = vadd.f32 %v3878, %v4193
      %v4333 = vadd.f32 %v3879, %v4196
      %v4334 = vadd.f32 %v3880, %v4199
      %v4335 = vadd.f32 %v3881, %v4202
      %v4336 = vadd.f32 %v3882, %v4205
      %v4337 = vadd.f32 %v3883, %v4208
      %v4338 = vadd.f32 %v3884, %v4211
      %v4339 = vadd.f32 %v3885, %v4214
      %v4340 = vadd.f32 %v3886, %v4217
      %v4341 = vadd.f32 %v3887, %v4220
      %v4342 = vadd.f32 %v3888, %v4223
      %v4343 = vadd.f32 %v3889, %v4226
      %v4344 = vadd.f32 %v3890, %v4229
      %v4345 = vadd.f32 %v3891, %v4232
      %v4346 = vadd.f32 %v3892, %v4235
      %v4347 = vadd.f32 %v3893, %v4238
      %v4348 = vadd.f32 %v3894, %v4241
      %v4349 = vadd.f32 %v3895, %v4244
      %v4350 = vadd.f32 %v3896, %v4247
      %v4351 = vadd.f32 %v3897, %v4250
      %v4352 = vadd.f32 %v3898, %v4253
      %v4353 = vadd.f32 %v3899, %v4256
      %v4354 = vadd.f32 %v3900, %v4259
      %v4355 = vadd.f32 %v3901, %v4262
      %v4356 = vadd.f32 %v3902, %v4265
      %v4357 = vadd.f32 %v3903, %v4268
      %v4358 = vadd.f32 %v3904, %v4271
      %v4359 = vadd.f32 %v3905, %v4274
      %v4360 = vadd.f32 %v3906, %v4277
      %v4361 = vadd.f32 %v3907, %v4280
      %v4362 = vadd.f32 %v3908, %v4283
      %v4363 = vadd.f32 %v3909, %v4286
      %v4364 = vadd.f32 %v3910, %v4289
      %v4365 = vadd.f32 %v3911, %v4292
      %v4366 = vadd.f32 %v3912, %v4295
      %v4367 = vadd.f32 %v3913, %v4298
      %v4368 = vadd.f32 %v3914, %v4301
      %v4369 = vadd.f32 %v3915, %v4304
      %v4370 = vadd.f32 %v3916, %v4307
      %v4371 = vadd.f32 %v3917, %v4310
      %v4372 = vadd.f32 %v3918, %v4313
      %v4373 = vadd.f32 %v3919, %v4316
      %v4374 = vadd.f32 %v3920, %v4319
      %v4375 = vld [vmem:[%s3] sm:$0x1]
      %v4377 = vperm.slane %v4375, 0
      %v4379 = vadd.f32 %v4321, %v4377
      %v4380 = vadd.f32 %v4322, %v4377
      %v4381 = vadd.f32 %v4323, %v4377
      %v4382 = vadd.f32 %v4324, %v4377
      %v4383 = vadd.f32 %v4325, %v4377
      %v4384 = vadd.f32 %v4326, %v4377
      %v4385 = vadd.f32 %v4327, %v4377
      %v4386 = vadd.f32 %v4328, %v4377
      %v4387 = vadd.f32 %v4329, %v4377
      %v4388 = vadd.f32 %v4330, %v4377
      %v4389 = vadd.f32 %v4331, %v4377
      %v4390 = vadd.f32 %v4332, %v4377
      %v4391 = vadd.f32 %v4333, %v4377
      %v4392 = vadd.f32 %v4334, %v4377
      %v4393 = vadd.f32 %v4335, %v4377
      %v4394 = vadd.f32 %v4336, %v4377
      %v4395 = vadd.f32 %v4337, %v4377
      %v4396 = vadd.f32 %v4338, %v4377
      %v4397 = vadd.f32 %v4339, %v4377
      %v4398 = vadd.f32 %v4340, %v4377
      %v4399 = vadd.f32 %v4341, %v4377
      %v4400 = vadd.f32 %v4342, %v4377
      %v4401 = vadd.f32 %v4343, %v4377
      %v4402 = vadd.f32 %v4344, %v4377
      %v4403 = vadd.f32 %v4345, %v4377
      %v4404 = vadd.f32 %v4346, %v4377
      %v4405 = vadd.f32 %v4347, %v4377
      %v4406 = vadd.f32 %v4348, %v4377
      %v4407 = vadd.f32 %v4349, %v4377
      %v4408 = vadd.f32 %v4350, %v4377
      %v4409 = vadd.f32 %v4351, %v4377
      %v4410 = vadd.f32 %v4352, %v4377
      %v4411 = vadd.f32 %v4353, %v4377
      %v4412 = vadd.f32 %v4354, %v4377
      %v4413 = vadd.f32 %v4355, %v4377
      %v4414 = vadd.f32 %v4356, %v4377
      %v4415 = vadd.f32 %v4357, %v4377
      %v4416 = vadd.f32 %v4358, %v4377
      %v4417 = vadd.f32 %v4359, %v4377
      %v4418 = vadd.f32 %v4360, %v4377
      %v4419 = vadd.f32 %v4361, %v4377
      %v4420 = vadd.f32 %v4362, %v4377
      %v4421 = vadd.f32 %v4363, %v4377
      %v4422 = vadd.f32 %v4364, %v4377
      %v4423 = vadd.f32 %v4365, %v4377
      %v4424 = vadd.f32 %v4366, %v4377
      %v4425 = vadd.f32 %v4367, %v4377
      %v4426 = vadd.f32 %v4368, %v4377
      %v4427 = vadd.f32 %v4369, %v4377
      %v4428 = vadd.f32 %v4370, %v4377
      %v4429 = vadd.f32 %v4371, %v4377
      %v4430 = vadd.f32 %v4372, %v4377
      %v4431 = vadd.f32 %v4373, %v4377
      %v4432 = vadd.f32 %v4374, %v4377
      %vm4433 = vcmask 64512
      %4434 = vst.msk [vmem:[#allocation3] sm:$0xff] %vm4433, %v4379
      %4435 = vst.msk [vmem:[#allocation3 + $0x8] sm:$0xff] %vm4433, %v4380
      %4436 = vst.msk [vmem:[#allocation3 + $0x10] sm:$0xff] %vm4433, %v4381
      %4437 = vst.msk [vmem:[#allocation3 + $0x18] sm:$0xff] %vm4433, %v4382
      %4438 = vst.msk [vmem:[#allocation3 + $0x20] sm:$0xff] %vm4433, %v4383
      %4439 = vst.msk [vmem:[#allocation3 + $0x28] sm:$0xff] %vm4433, %v4384
      %4440 = vst.msk [vmem:[#allocation3 + $0x30] sm:$0xff] %vm4433, %v4385
      %4441 = vst.msk [vmem:[#allocation3 + $0x38] sm:$0xff] %vm4433, %v4386
      %4442 = vst.msk [vmem:[#allocation3 + $0x40] sm:$0xff] %vm4433, %v4387
      %4443 = vst.msk [vmem:[#allocation3 + $0x48] sm:$0xff] %vm4433, %v4388
      %4444 = vst.msk [vmem:[#allocation3 + $0x50] sm:$0xff] %vm4433, %v4389
      %4445 = vst.msk [vmem:[#allocation3 + $0x58] sm:$0xff] %vm4433, %v4390
      %4446 = vst.msk [vmem:[#allocation3 + $0x60] sm:$0xff] %vm4433, %v4391
      %4447 = vst.msk [vmem:[#allocation3 + $0x68] sm:$0xff] %vm4433, %v4392
      %4448 = vst.msk [vmem:[#allocation3 + $0x70] sm:$0xff] %vm4433, %v4393
      %4449 = vst.msk [vmem:[#allocation3 + $0x78] sm:$0xff] %vm4433, %v4394
      %4450 = vst.msk [vmem:[#allocation3 + $0x80] sm:$0xff] %vm4433, %v4395
      %4451 = vst.msk [vmem:[#allocation3 + $0x88] sm:$0xff] %vm4433, %v4396
      %4452 = vst.msk [vmem:[#allocation3 + $0x90] sm:$0xff] %vm4433, %v4397
      %4453 = vst.msk [vmem:[#allocation3 + $0x98] sm:$0xff] %vm4433, %v4398
      %4454 = vst.msk [vmem:[#allocation3 + $0xa0] sm:$0xff] %vm4433, %v4399
      %4455 = vst.msk [vmem:[#allocation3 + $0xa8] sm:$0xff] %vm4433, %v4400
      %4456 = vst.msk [vmem:[#allocation3 + $0xb0] sm:$0xff] %vm4433, %v4401
      %4457 = vst.msk [vmem:[#allocation3 + $0xb8] sm:$0xff] %vm4433, %v4402
      %4458 = vst.msk [vmem:[#allocation3 + $0xc0] sm:$0xff] %vm4433, %v4403
      %4459 = vst.msk [vmem:[#allocation3 + $0xc8] sm:$0xff] %vm4433, %v4404
      %4460 = vst.msk [vmem:[#allocation3 + $0xd0] sm:$0xff] %vm4433, %v4405
      %4461 = vst.msk [vmem:[#allocation3 + $0xd8] sm:$0xff] %vm4433, %v4406
      %4462 = vst.msk [vmem:[#allocation3 + $0xe0] sm:$0xff] %vm4433, %v4407
      %4463 = vst.msk [vmem:[#allocation3 + $0xe8] sm:$0xff] %vm4433, %v4408
      %4464 = vst.msk [vmem:[#allocation3 + $0xf0] sm:$0xff] %vm4433, %v4409
      %4465 = vst.msk [vmem:[#allocation3 + $0xf8] sm:$0xff] %vm4433, %v4410
      %4466 = vst.msk [vmem:[#allocation3 + $0x100] sm:$0xff] %vm4433, %v4411
      %4467 = vst.msk [vmem:[#allocation3 + $0x108] sm:$0xff] %vm4433, %v4412
      %4468 = vst.msk [vmem:[#allocation3 + $0x110] sm:$0xff] %vm4433, %v4413
      %4469 = vst.msk [vmem:[#allocation3 + $0x118] sm:$0xff] %vm4433, %v4414
      %4470 = vst.msk [vmem:[#allocation3 + $0x120] sm:$0xff] %vm4433, %v4415
      %4471 = vst.msk [vmem:[#allocation3 + $0x128] sm:$0xff] %vm4433, %v4416
      %4472 = vst.msk [vmem:[#allocation3 + $0x130] sm:$0xff] %vm4433, %v4417
      %4473 = vst.msk [vmem:[#allocation3 + $0x138] sm:$0xff] %vm4433, %v4418
      %4474 = vst.msk [vmem:[#allocation3 + $0x140] sm:$0xff] %vm4433, %v4419
      %4475 = vst.msk [vmem:[#allocation3 + $0x148] sm:$0xff] %vm4433, %v4420
      %4476 = vst.msk [vmem:[#allocation3 + $0x150] sm:$0xff] %vm4433, %v4421
      %4477 = vst.msk [vmem:[#allocation3 + $0x158] sm:$0xff] %vm4433, %v4422
      %4478 = vst.msk [vmem:[#allocation3 + $0x160] sm:$0xff] %vm4433, %v4423
      %4479 = vst.msk [vmem:[#allocation3 + $0x168] sm:$0xff] %vm4433, %v4424
      %4480 = vst.msk [vmem:[#allocation3 + $0x170] sm:$0xff] %vm4433, %v4425
      %4481 = vst.msk [vmem:[#allocation3 + $0x178] sm:$0xff] %vm4433, %v4426
      %4482 = vst.msk [vmem:[#allocation3 + $0x180] sm:$0xff] %vm4433, %v4427
      %4483 = vst.msk [vmem:[#allocation3 + $0x188] sm:$0xff] %vm4433, %v4428
      %4484 = vst.msk [vmem:[#allocation3 + $0x190] sm:$0xff] %vm4433, %v4429
      %4485 = vst.msk [vmem:[#allocation3 + $0x198] sm:$0xff] %vm4433, %v4430
      %4486 = vst.msk [vmem:[#allocation3 + $0x1a0] sm:$0xff] %vm4433, %v4431
      %4487 = vst.msk [vmem:[#allocation3 + $0x1a8] sm:$0xff] %vm4433, %v4432
      %v4488 = vld [vmem:[%s4] sm:$0x1]
      %v4490 = vperm.slane %v4488, 0
      %v4492 = vmul.f32 %v4379, %v4490
      %v4493 = vmul.f32 %v4380, %v4490
      %v4494 = vmul.f32 %v4381, %v4490
      %v4495 = vmul.f32 %v4382, %v4490
      %v4496 = vmul.f32 %v4383, %v4490
      %v4497 = vmul.f32 %v4384, %v4490
      %v4498 = vmul.f32 %v4385, %v4490
      %v4499 = vmul.f32 %v4386, %v4490
      %v4500 = vmul.f32 %v4387, %v4490
      %v4501 = vmul.f32 %v4388, %v4490
      %v4502 = vmul.f32 %v4389, %v4490
      %v4503 = vmul.f32 %v4390, %v4490
      %v4504 = vmul.f32 %v4391, %v4490
      %v4505 = vmul.f32 %v4392, %v4490
      %v4506 = vmul.f32 %v4393, %v4490
      %v4507 = vmul.f32 %v4394, %v4490
      %v4508 = vmul.f32 %v4395, %v4490
      %v4509 = vmul.f32 %v4396, %v4490
      %v4510 = vmul.f32 %v4397, %v4490
      %v4511 = vmul.f32 %v4398, %v4490
      %v4512 = vmul.f32 %v4399, %v4490
      %v4513 = vmul.f32 %v4400, %v4490
      %v4514 = vmul.f32 %v4401, %v4490
      %v4515 = vmul.f32 %v4402, %v4490
      %v4516 = vmul.f32 %v4403, %v4490
      %v4517 = vmul.f32 %v4404, %v4490
      %v4518 = vmul.f32 %v4405, %v4490
      %v4519 = vmul.f32 %v4406, %v4490
      %v4520 = vmul.f32 %v4407, %v4490
      %v4521 = vmul.f32 %v4408, %v4490
      %v4522 = vmul.f32 %v4409, %v4490
      %v4523 = vmul.f32 %v4410, %v4490
      %v4524 = vmul.f32 %v4411, %v4490
      %v4525 = vmul.f32 %v4412, %v4490
      %v4526 = vmul.f32 %v4413, %v4490
      %v4527 = vmul.f32 %v4414, %v4490
      %v4528 = vmul.f32 %v4415, %v4490
      %v4529 = vmul.f32 %v4416, %v4490
      %v4530 = vmul.f32 %v4417, %v4490
      %v4531 = vmul.f32 %v4418, %v4490
      %v4532 = vmul.f32 %v4419, %v4490
      %v4533 = vmul.f32 %v4420, %v4490
      %v4534 = vmul.f32 %v4421, %v4490
      %v4535 = vmul.f32 %v4422, %v4490
      %v4536 = vmul.f32 %v4423, %v4490
      %v4537 = vmul.f32 %v4424, %v4490
      %v4538 = vmul.f32 %v4425, %v4490
      %v4539 = vmul.f32 %v4426, %v4490
      %v4540 = vmul.f32 %v4427, %v4490
      %v4541 = vmul.f32 %v4428, %v4490
      %v4542 = vmul.f32 %v4429, %v4490
      %v4543 = vmul.f32 %v4430, %v4490
      %v4544 = vmul.f32 %v4431, %v4490
      %v4545 = vmul.f32 %v4432, %v4490
      %v4546 = vld [vmem:[%s5] sm:$0x1]
      %v4548 = vperm.slane %v4546, 0
      %v4550 = vadd.f32 %v4492, %v4548
      %v4551 = vadd.f32 %v4493, %v4548
      %v4552 = vadd.f32 %v4494, %v4548
      %v4553 = vadd.f32 %v4495, %v4548
      %v4554 = vadd.f32 %v4496, %v4548
      %v4555 = vadd.f32 %v4497, %v4548
      %v4556 = vadd.f32 %v4498, %v4548
      %v4557 = vadd.f32 %v4499, %v4548
      %v4558 = vadd.f32 %v4500, %v4548
      %v4559 = vadd.f32 %v4501, %v4548
      %v4560 = vadd.f32 %v4502, %v4548
      %v4561 = vadd.f32 %v4503, %v4548
      %v4562 = vadd.f32 %v4504, %v4548
      %v4563 = vadd.f32 %v4505, %v4548
      %v4564 = vadd.f32 %v4506, %v4548
      %v4565 = vadd.f32 %v4507, %v4548
      %v4566 = vadd.f32 %v4508, %v4548
      %v4567 = vadd.f32 %v4509, %v4548
      %v4568 = vadd.f32 %v4510, %v4548
      %v4569 = vadd.f32 %v4511, %v4548
      %v4570 = vadd.f32 %v4512, %v4548
      %v4571 = vadd.f32 %v4513, %v4548
      %v4572 = vadd.f32 %v4514, %v4548
      %v4573 = vadd.f32 %v4515, %v4548
      %v4574 = vadd.f32 %v4516, %v4548
      %v4575 = vadd.f32 %v4517, %v4548
      %v4576 = vadd.f32 %v4518, %v4548
      %v4577 = vadd.f32 %v4519, %v4548
      %v4578 = vadd.f32 %v4520, %v4548
      %v4579 = vadd.f32 %v4521, %v4548
      %v4580 = vadd.f32 %v4522, %v4548
      %v4581 = vadd.f32 %v4523, %v4548
      %v4582 = vadd.f32 %v4524, %v4548
      %v4583 = vadd.f32 %v4525, %v4548
      %v4584 = vadd.f32 %v4526, %v4548
      %v4585 = vadd.f32 %v4527, %v4548
      %v4586 = vadd.f32 %v4528, %v4548
      %v4587 = vadd.f32 %v4529, %v4548
      %v4588 = vadd.f32 %v4530, %v4548
      %v4589 = vadd.f32 %v4531, %v4548
      %v4590 = vadd.f32 %v4532, %v4548
      %v4591 = vadd.f32 %v4533, %v4548
      %v4592 = vadd.f32 %v4534, %v4548
      %v4593 = vadd.f32 %v4535, %v4548
      %v4594 = vadd.f32 %v4536, %v4548
      %v4595 = vadd.f32 %v4537, %v4548
      %v4596 = vadd.f32 %v4538, %v4548
      %v4597 = vadd.f32 %v4539, %v4548
      %v4598 = vadd.f32 %v4540, %v4548
      %v4599 = vadd.f32 %v4541, %v4548
      %v4600 = vadd.f32 %v4542, %v4548
      %v4601 = vadd.f32 %v4543, %v4548
      %v4602 = vadd.f32 %v4544, %v4548
      %v4603 = vadd.f32 %v4545, %v4548
      %v4604 = vmax.f32 %v4550, 0.0
      %v4605 = vmax.f32 %v4551, 0.0
      %v4606 = vmax.f32 %v4552, 0.0
      %v4607 = vmax.f32 %v4553, 0.0
      %v4608 = vmax.f32 %v4554, 0.0
      %v4609 = vmax.f32 %v4555, 0.0
      %v4610 = vmax.f32 %v4556, 0.0
      %v4611 = vmax.f32 %v4557, 0.0
      %v4612 = vmax.f32 %v4558, 0.0
      %v4613 = vmax.f32 %v4559, 0.0
      %v4614 = vmax.f32 %v4560, 0.0
      %v4615 = vmax.f32 %v4561, 0.0
      %v4616 = vmax.f32 %v4562, 0.0
      %v4617 = vmax.f32 %v4563, 0.0
      %v4618 = vmax.f32 %v4564, 0.0
      %v4619 = vmax.f32 %v4565, 0.0
      %v4620 = vmax.f32 %v4566, 0.0
      %v4621 = vmax.f32 %v4567, 0.0
      %v4622 = vmax.f32 %v4568, 0.0
      %v4623 = vmax.f32 %v4569, 0.0
      %v4624 = vmax.f32 %v4570, 0.0
      %v4625 = vmax.f32 %v4571, 0.0
      %v4626 = vmax.f32 %v4572, 0.0
      %v4627 = vmax.f32 %v4573, 0.0
      %v4628 = vmax.f32 %v4574, 0.0
      %v4629 = vmax.f32 %v4575, 0.0
      %v4630 = vmax.f32 %v4576, 0.0
      %v4631 = vmax.f32 %v4577, 0.0
      %v4632 = vmax.f32 %v4578, 0.0
      %v4633 = vmax.f32 %v4579, 0.0
      %v4634 = vmax.f32 %v4580, 0.0
      %v4635 = vmax.f32 %v4581, 0.0
      %v4636 = vmax.f32 %v4582, 0.0
      %v4637 = vmax.f32 %v4583, 0.0
      %v4638 = vmax.f32 %v4584, 0.0
      %v4639 = vmax.f32 %v4585, 0.0
      %v4640 = vmax.f32 %v4586, 0.0
      %v4641 = vmax.f32 %v4587, 0.0
      %v4642 = vmax.f32 %v4588, 0.0
      %v4643 = vmax.f32 %v4589, 0.0
      %v4644 = vmax.f32 %v4590, 0.0
      %v4645 = vmax.f32 %v4591, 0.0
      %v4646 = vmax.f32 %v4592, 0.0
      %v4647 = vmax.f32 %v4593, 0.0
      %v4648 = vmax.f32 %v4594, 0.0
      %v4649 = vmax.f32 %v4595, 0.0
      %v4650 = vmax.f32 %v4596, 0.0
      %v4651 = vmax.f32 %v4597, 0.0
      %v4652 = vmax.f32 %v4598, 0.0
      %v4653 = vmax.f32 %v4599, 0.0
      %v4654 = vmax.f32 %v4600, 0.0
      %v4655 = vmax.f32 %v4601, 0.0
      %v4656 = vmax.f32 %v4602, 0.0
      %v4657 = vmax.f32 %v4603, 0.0
      %v4658 = vlaneseq
      %v4659 = vshrl.u32 %v4658, 7
      %v4660 = vadd.s32 %v4659, 8
      %v4661 = vadd.s32 %v4659, 16
      %v4662 = vadd.s32 %v4659, 24
      %v4663 = vadd.s32 %v4659, 32
      %v4664 = vadd.s32 %v4659, 40
      %v4665 = vadd.s32 %v4659, 48
      %v4666 = vadd.s32 %v4659, 56
      %v4667 = vadd.s32 %v4659, 64
      %v4668 = vadd.s32 %v4659, 72
      %v4669 = vadd.s32 %v4659, 80
      %v4670 = vadd.s32 %v4659, 88
      %v4671 = vadd.s32 %v4659, 96
      %v4672 = vadd.s32 %v4659, 104
      %v4673 = vadd.s32 %v4659, 112
      %v4674 = vadd.s32 %v4659, 120
      %v4675 = vadd.s32 %v4659, 128
      %v4676 = vadd.s32 %v4659, 136
      %v4677 = vadd.s32 %v4659, 144
      %v4678 = vadd.s32 %v4659, 152
      %v4679 = vadd.s32 %v4659, 160
      %v4680 = vadd.s32 %v4659, 168
      %v4681 = vadd.s32 %v4659, 176
      %v4682 = vadd.s32 %v4659, 184
      %v4683 = vadd.s32 %v4659, 192
      %v4684 = vadd.s32 %v4659, 200
      %v4685 = vadd.s32 %v4659, 208
      %v4686 = vadd.s32 %v4659, 216
      %v4687 = vadd.s32 %v4659, 224
      %v4688 = vadd.s32 %v4659, 232
      %v4689 = vadd.s32 %v4659, 240
      %v4690 = vadd.s32 %v4659, 248
      %v4691 = vadd.s32 %v4659, 256
      %v4692 = vadd.s32 %v4659, 264
      %v4693 = vadd.s32 %v4659, 272
      %v4694 = vadd.s32 %v4659, 280
      %v4695 = vadd.s32 %v4659, 288
      %v4696 = vadd.s32 %v4659, 296
      %v4697 = vadd.s32 %v4659, 304
      %v4698 = vadd.s32 %v4659, 312
      %v4699 = vadd.s32 %v4659, 320
      %v4700 = vadd.s32 %v4659, 328
      %v4701 = vadd.s32 %v4659, 336
      %v4702 = vadd.s32 %v4659, 344
      %v4703 = vadd.s32 %v4659, 352
      %v4704 = vadd.s32 %v4659, 360
      %v4705 = vadd.s32 %v4659, 368
      %v4706 = vadd.s32 %v4659, 376
      %v4707 = vadd.s32 %v4659, 384
      %v4708 = vadd.s32 %v4659, 392
      %v4709 = vadd.s32 %v4659, 400
      %v4710 = vadd.s32 %v4659, 408
      %v4711 = vadd.s32 %v4659, 416
      %v4712 = vadd.s32 %v4659, 424
      %p4713 = scmp.eq.s32.totalorder %s26, 0
      %s4714 = scalar_select %p4713, 24, 0
      %s4715 = smul.u32 %s26, 16
      %s4716 = ssub.s32 17, %s4715
      %s4717 = smul.u32 %s4716, 24
      %v4718 = vstv %s4714
      %vm4719 = vcmp.ge.s32.totalorder %v4659, %v4718
      %vm4720 = vcmp.ge.s32.totalorder %v4660, %v4718
      %vm4721 = vcmp.ge.s32.totalorder %v4661, %v4718
      %vm4722 = vcmp.ge.s32.totalorder %v4662, %v4718
      %vm4723 = vcmp.ge.s32.totalorder %v4663, %v4718
      %vm4724 = vcmp.ge.s32.totalorder %v4664, %v4718
      %vm4725 = vcmp.ge.s32.totalorder %v4665, %v4718
      %vm4726 = vcmp.ge.s32.totalorder %v4666, %v4718
      %vm4727 = vcmp.ge.s32.totalorder %v4667, %v4718
      %vm4728 = vcmp.ge.s32.totalorder %v4668, %v4718
      %vm4729 = vcmp.ge.s32.totalorder %v4669, %v4718
      %vm4730 = vcmp.ge.s32.totalorder %v4670, %v4718
      %vm4731 = vcmp.ge.s32.totalorder %v4671, %v4718
      %vm4732 = vcmp.ge.s32.totalorder %v4672, %v4718
      %vm4733 = vcmp.ge.s32.totalorder %v4673, %v4718
      %vm4734 = vcmp.ge.s32.totalorder %v4674, %v4718
      %vm4735 = vcmp.ge.s32.totalorder %v4675, %v4718
      %vm4736 = vcmp.ge.s32.totalorder %v4676, %v4718
      %vm4737 = vcmp.ge.s32.totalorder %v4677, %v4718
      %vm4738 = vcmp.ge.s32.totalorder %v4678, %v4718
      %vm4739 = vcmp.ge.s32.totalorder %v4679, %v4718
      %vm4740 = vcmp.ge.s32.totalorder %v4680, %v4718
      %vm4741 = vcmp.ge.s32.totalorder %v4681, %v4718
      %vm4742 = vcmp.ge.s32.totalorder %v4682, %v4718
      %vm4743 = vcmp.ge.s32.totalorder %v4683, %v4718
      %vm4744 = vcmp.ge.s32.totalorder %v4684, %v4718
      %vm4745 = vcmp.ge.s32.totalorder %v4685, %v4718
      %vm4746 = vcmp.ge.s32.totalorder %v4686, %v4718
      %vm4747 = vcmp.ge.s32.totalorder %v4687, %v4718
      %vm4748 = vcmp.ge.s32.totalorder %v4688, %v4718
      %vm4749 = vcmp.ge.s32.totalorder %v4689, %v4718
      %vm4750 = vcmp.ge.s32.totalorder %v4690, %v4718
      %vm4751 = vcmp.ge.s32.totalorder %v4691, %v4718
      %vm4752 = vcmp.ge.s32.totalorder %v4692, %v4718
      %vm4753 = vcmp.ge.s32.totalorder %v4693, %v4718
      %vm4754 = vcmp.ge.s32.totalorder %v4694, %v4718
      %vm4755 = vcmp.ge.s32.totalorder %v4695, %v4718
      %vm4756 = vcmp.ge.s32.totalorder %v4696, %v4718
      %vm4757 = vcmp.ge.s32.totalorder %v4697, %v4718
      %vm4758 = vcmp.ge.s32.totalorder %v4698, %v4718
      %vm4759 = vcmp.ge.s32.totalorder %v4699, %v4718
      %vm4760 = vcmp.ge.s32.totalorder %v4700, %v4718
      %vm4761 = vcmp.ge.s32.totalorder %v4701, %v4718
      %vm4762 = vcmp.ge.s32.totalorder %v4702, %v4718
      %vm4763 = vcmp.ge.s32.totalorder %v4703, %v4718
      %vm4764 = vcmp.ge.s32.totalorder %v4704, %v4718
      %vm4765 = vcmp.ge.s32.totalorder %v4705, %v4718
      %vm4766 = vcmp.ge.s32.totalorder %v4706, %v4718
      %vm4767 = vcmp.ge.s32.totalorder %v4707, %v4718
      %vm4768 = vcmp.ge.s32.totalorder %v4708, %v4718
      %vm4769 = vcmp.ge.s32.totalorder %v4709, %v4718
      %vm4770 = vcmp.ge.s32.totalorder %v4710, %v4718
      %vm4771 = vcmp.ge.s32.totalorder %v4711, %v4718
      %vm4772 = vcmp.ge.s32.totalorder %v4712, %v4718
      %v4773 = vstv %s4717
      %vm4774 = vcmp.lt.s32.totalorder %v4659, %v4773
      %vm4775 = vcmp.lt.s32.totalorder %v4660, %v4773
      %vm4776 = vcmp.lt.s32.totalorder %v4661, %v4773
      %vm4777 = vcmp.lt.s32.totalorder %v4662, %v4773
      %vm4778 = vcmp.lt.s32.totalorder %v4663, %v4773
      %vm4779 = vcmp.lt.s32.totalorder %v4664, %v4773
      %vm4780 = vcmp.lt.s32.totalorder %v4665, %v4773
      %vm4781 = vcmp.lt.s32.totalorder %v4666, %v4773
      %vm4782 = vcmp.lt.s32.totalorder %v4667, %v4773
      %vm4783 = vcmp.lt.s32.totalorder %v4668, %v4773
      %vm4784 = vcmp.lt.s32.totalorder %v4669, %v4773
      %vm4785 = vcmp.lt.s32.totalorder %v4670, %v4773
      %vm4786 = vcmp.lt.s32.totalorder %v4671, %v4773
      %vm4787 = vcmp.lt.s32.totalorder %v4672, %v4773
      %vm4788 = vcmp.lt.s32.totalorder %v4673, %v4773
      %vm4789 = vcmp.lt.s32.totalorder %v4674, %v4773
      %vm4790 = vcmp.lt.s32.totalorder %v4675, %v4773
      %vm4791 = vcmp.lt.s32.totalorder %v4676, %v4773
      %vm4792 = vcmp.lt.s32.totalorder %v4677, %v4773
      %vm4793 = vcmp.lt.s32.totalorder %v4678, %v4773
      %vm4794 = vcmp.lt.s32.totalorder %v4679, %v4773
      %vm4795 = vcmp.lt.s32.totalorder %v4680, %v4773
      %vm4796 = vcmp.lt.s32.totalorder %v4681, %v4773
      %vm4797 = vcmp.lt.s32.totalorder %v4682, %v4773
      %vm4798 = vcmp.lt.s32.totalorder %v4683, %v4773
      %vm4799 = vcmp.lt.s32.totalorder %v4684, %v4773
      %vm4800 = vcmp.lt.s32.totalorder %v4685, %v4773
      %vm4801 = vcmp.lt.s32.totalorder %v4686, %v4773
      %vm4802 = vcmp.lt.s32.totalorder %v4687, %v4773
      %vm4803 = vcmp.lt.s32.totalorder %v4688, %v4773
      %vm4804 = vcmp.lt.s32.totalorder %v4689, %v4773
      %vm4805 = vcmp.lt.s32.totalorder %v4690, %v4773
      %vm4806 = vcmp.lt.s32.totalorder %v4691, %v4773
      %vm4807 = vcmp.lt.s32.totalorder %v4692, %v4773
      %vm4808 = vcmp.lt.s32.totalorder %v4693, %v4773
      %vm4809 = vcmp.lt.s32.totalorder %v4694, %v4773
      %vm4810 = vcmp.lt.s32.totalorder %v4695, %v4773
      %vm4811 = vcmp.lt.s32.totalorder %v4696, %v4773
      %vm4812 = vcmp.lt.s32.totalorder %v4697, %v4773
      %vm4813 = vcmp.lt.s32.totalorder %v4698, %v4773
      %vm4814 = vcmp.lt.s32.totalorder %v4699, %v4773
      %vm4815 = vcmp.lt.s32.totalorder %v4700, %v4773
      %vm4816 = vcmp.lt.s32.totalorder %v4701, %v4773
      %vm4817 = vcmp.lt.s32.totalorder %v4702, %v4773
      %vm4818 = vcmp.lt.s32.totalorder %v4703, %v4773
      %vm4819 = vcmp.lt.s32.totalorder %v4704, %v4773
      %vm4820 = vcmp.lt.s32.totalorder %v4705, %v4773
      %vm4821 = vcmp.lt.s32.totalorder %v4706, %v4773
      %vm4822 = vcmp.lt.s32.totalorder %v4707, %v4773
      %vm4823 = vcmp.lt.s32.totalorder %v4708, %v4773
      %vm4824 = vcmp.lt.s32.totalorder %v4709, %v4773
      %vm4825 = vcmp.lt.s32.totalorder %v4710, %v4773
      %vm4826 = vcmp.lt.s32.totalorder %v4711, %v4773
      %vm4827 = vcmp.lt.s32.totalorder %v4712, %v4773
      %vm4828 = vmand %vm4719, %vm4774
      %vm4829 = vmand %vm4720, %vm4775
      %vm4830 = vmand %vm4721, %vm4776
      %vm4831 = vmand %vm4722, %vm4777
      %vm4832 = vmand %vm4723, %vm4778
      %vm4833 = vmand %vm4724, %vm4779
      %vm4834 = vmand %vm4725, %vm4780
      %vm4835 = vmand %vm4726, %vm4781
      %vm4836 = vmand %vm4727, %vm4782
      %vm4837 = vmand %vm4728, %vm4783
      %vm4838 = vmand %vm4729, %vm4784
      %vm4839 = vmand %vm4730, %vm4785
      %vm4840 = vmand %vm4731, %vm4786
      %vm4841 = vmand %vm4732, %vm4787
      %vm4842 = vmand %vm4733, %vm4788
      %vm4843 = vmand %vm4734, %vm4789
      %vm4844 = vmand %vm4735, %vm4790
      %vm4845 = vmand %vm4736, %vm4791
      %vm4846 = vmand %vm4737, %vm4792
      %vm4847 = vmand %vm4738, %vm4793
      %vm4848 = vmand %vm4739, %vm4794
      %vm4849 = vmand %vm4740, %vm4795
      %vm4850 = vmand %vm4741, %vm4796
      %vm4851 = vmand %vm4742, %vm4797
      %vm4852 = vmand %vm4743, %vm4798
      %vm4853 = vmand %vm4744, %vm4799
      %vm4854 = vmand %vm4745, %vm4800
      %vm4855 = vmand %vm4746, %vm4801
      %vm4856 = vmand %vm4747, %vm4802
      %vm4857 = vmand %vm4748, %vm4803
      %vm4858 = vmand %vm4749, %vm4804
      %vm4859 = vmand %vm4750, %vm4805
      %vm4860 = vmand %vm4751, %vm4806
      %vm4861 = vmand %vm4752, %vm4807
      %vm4862 = vmand %vm4753, %vm4808
      %vm4863 = vmand %vm4754, %vm4809
      %vm4864 = vmand %vm4755, %vm4810
      %vm4865 = vmand %vm4756, %vm4811
      %vm4866 = vmand %vm4757, %vm4812
      %vm4867 = vmand %vm4758, %vm4813
      %vm4868 = vmand %vm4759, %vm4814
      %vm4869 = vmand %vm4760, %vm4815
      %vm4870 = vmand %vm4761, %vm4816
      %vm4871 = vmand %vm4762, %vm4817
      %vm4872 = vmand %vm4763, %vm4818
      %vm4873 = vmand %vm4764, %vm4819
      %vm4874 = vmand %vm4765, %vm4820
      %vm4875 = vmand %vm4766, %vm4821
      %vm4876 = vmand %vm4767, %vm4822
      %vm4877 = vmand %vm4768, %vm4823
      %vm4878 = vmand %vm4769, %vm4824
      %vm4879 = vmand %vm4770, %vm4825
      %vm4880 = vmand %vm4771, %vm4826
      %vm4881 = vmand %vm4772, %vm4827
      %v4882 = vld [vmem:[%s1] sm:$0xff]
      %v4883 = vld [vmem:[%s1 + $0x8] sm:$0xff]
      %v4884 = vld [vmem:[%s1 + $0x10] sm:$0xff]
      %v4885 = vld [vmem:[%s1 + $0x18] sm:$0xff]
      %v4886 = vld [vmem:[%s1 + $0x20] sm:$0xff]
      %v4887 = vld [vmem:[%s1 + $0x28] sm:$0xff]
      %v4888 = vld [vmem:[%s1 + $0x30] sm:$0xff]
      %v4889 = vld [vmem:[%s1 + $0x38] sm:$0xff]
      %v4890 = vld [vmem:[%s1 + $0x40] sm:$0xff]
      %v4891 = vld [vmem:[%s1 + $0x48] sm:$0xff]
      %v4892 = vld [vmem:[%s1 + $0x50] sm:$0xff]
      %v4893 = vld [vmem:[%s1 + $0x58] sm:$0xff]
      %v4894 = vld [vmem:[%s1 + $0x60] sm:$0xff]
      %v4895 = vld [vmem:[%s1 + $0x68] sm:$0xff]
      %v4896 = vld [vmem:[%s1 + $0x70] sm:$0xff]
      %v4897 = vld [vmem:[%s1 + $0x78] sm:$0xff]
      %v4898 = vld [vmem:[%s1 + $0x80] sm:$0xff]
      %v4899 = vld [vmem:[%s1 + $0x88] sm:$0xff]
      %v4900 = vld [vmem:[%s1 + $0x90] sm:$0xff]
      %v4901 = vld [vmem:[%s1 + $0x98] sm:$0xff]
      %v4902 = vld [vmem:[%s1 + $0xa0] sm:$0xff]
      %v4903 = vld [vmem:[%s1 + $0xa8] sm:$0xff]
      %v4904 = vld [vmem:[%s1 + $0xb0] sm:$0xff]
      %v4905 = vld [vmem:[%s1 + $0xb8] sm:$0xff]
      %v4906 = vld [vmem:[%s1 + $0xc0] sm:$0xff]
      %v4907 = vld [vmem:[%s1 + $0xc8] sm:$0xff]
      %v4908 = vld [vmem:[%s1 + $0xd0] sm:$0xff]
      %v4909 = vld [vmem:[%s1 + $0xd8] sm:$0xff]
      %v4910 = vld [vmem:[%s1 + $0xe0] sm:$0xff]
      %v4911 = vld [vmem:[%s1 + $0xe8] sm:$0xff]
      %v4912 = vld [vmem:[%s1 + $0xf0] sm:$0xff]
      %v4913 = vld [vmem:[%s1 + $0xf8] sm:$0xff]
      %v4914 = vld [vmem:[%s1 + $0x100] sm:$0xff]
      %v4915 = vld [vmem:[%s1 + $0x108] sm:$0xff]
      %v4916 = vld [vmem:[%s1 + $0x110] sm:$0xff]
      %v4917 = vld [vmem:[%s1 + $0x118] sm:$0xff]
      %v4918 = vld [vmem:[%s1 + $0x120] sm:$0xff]
      %v4919 = vld [vmem:[%s1 + $0x128] sm:$0xff]
      %v4920 = vld [vmem:[%s1 + $0x130] sm:$0xff]
      %v4921 = vld [vmem:[%s1 + $0x138] sm:$0xff]
      %v4922 = vld [vmem:[%s1 + $0x140] sm:$0xff]
      %v4923 = vld [vmem:[%s1 + $0x148] sm:$0xff]
      %v4924 = vld [vmem:[%s1 + $0x150] sm:$0xff]
      %v4925 = vld [vmem:[%s1 + $0x158] sm:$0xff]
      %v4926 = vld [vmem:[%s1 + $0x160] sm:$0xff]
      %v4927 = vld [vmem:[%s1 + $0x168] sm:$0xff]
      %v4928 = vld [vmem:[%s1 + $0x170] sm:$0xff]
      %v4929 = vld [vmem:[%s1 + $0x178] sm:$0xff]
      %v4930 = vld [vmem:[%s1 + $0x180] sm:$0xff]
      %v4931 = vld [vmem:[%s1 + $0x188] sm:$0xff]
      %v4932 = vld [vmem:[%s1 + $0x190] sm:$0xff]
      %v4933 = vld [vmem:[%s1 + $0x198] sm:$0xff]
      %v4934 = vld [vmem:[%s1 + $0x1a0] sm:$0xff]
      %v4935 = vld [vmem:[%s1 + $0x1a8] sm:$0xff]
      %vm4936 = vcmp.ne.f32.partialorder %v4882, 0.0
      %vm4937 = vcmp.ne.f32.partialorder %v4883, 0.0
      %vm4938 = vcmp.ne.f32.partialorder %v4884, 0.0
      %vm4939 = vcmp.ne.f32.partialorder %v4885, 0.0
      %vm4940 = vcmp.ne.f32.partialorder %v4886, 0.0
      %vm4941 = vcmp.ne.f32.partialorder %v4887, 0.0
      %vm4942 = vcmp.ne.f32.partialorder %v4888, 0.0
      %vm4943 = vcmp.ne.f32.partialorder %v4889, 0.0
      %vm4944 = vcmp.ne.f32.partialorder %v4890, 0.0
      %vm4945 = vcmp.ne.f32.partialorder %v4891, 0.0
      %vm4946 = vcmp.ne.f32.partialorder %v4892, 0.0
      %vm4947 = vcmp.ne.f32.partialorder %v4893, 0.0
      %vm4948 = vcmp.ne.f32.partialorder %v4894, 0.0
      %vm4949 = vcmp.ne.f32.partialorder %v4895, 0.0
      %vm4950 = vcmp.ne.f32.partialorder %v4896, 0.0
      %vm4951 = vcmp.ne.f32.partialorder %v4897, 0.0
      %vm4952 = vcmp.ne.f32.partialorder %v4898, 0.0
      %vm4953 = vcmp.ne.f32.partialorder %v4899, 0.0
      %vm4954 = vcmp.ne.f32.partialorder %v4900, 0.0
      %vm4955 = vcmp.ne.f32.partialorder %v4901, 0.0
      %vm4956 = vcmp.ne.f32.partialorder %v4902, 0.0
      %vm4957 = vcmp.ne.f32.partialorder %v4903, 0.0
      %vm4958 = vcmp.ne.f32.partialorder %v4904, 0.0
      %vm4959 = vcmp.ne.f32.partialorder %v4905, 0.0
      %vm4960 = vcmp.ne.f32.partialorder %v4906, 0.0
      %vm4961 = vcmp.ne.f32.partialorder %v4907, 0.0
      %vm4962 = vcmp.ne.f32.partialorder %v4908, 0.0
      %vm4963 = vcmp.ne.f32.partialorder %v4909, 0.0
      %vm4964 = vcmp.ne.f32.partialorder %v4910, 0.0
      %vm4965 = vcmp.ne.f32.partialorder %v4911, 0.0
      %vm4966 = vcmp.ne.f32.partialorder %v4912, 0.0
      %vm4967 = vcmp.ne.f32.partialorder %v4913, 0.0
      %vm4968 = vcmp.ne.f32.partialorder %v4914, 0.0
      %vm4969 = vcmp.ne.f32.partialorder %v4915, 0.0
      %vm4970 = vcmp.ne.f32.partialorder %v4916, 0.0
      %vm4971 = vcmp.ne.f32.partialorder %v4917, 0.0
      %vm4972 = vcmp.ne.f32.partialorder %v4918, 0.0
      %vm4973 = vcmp.ne.f32.partialorder %v4919, 0.0
      %vm4974 = vcmp.ne.f32.partialorder %v4920, 0.0
      %vm4975 = vcmp.ne.f32.partialorder %v4921, 0.0
      %vm4976 = vcmp.ne.f32.partialorder %v4922, 0.0
      %vm4977 = vcmp.ne.f32.partialorder %v4923, 0.0
      %vm4978 = vcmp.ne.f32.partialorder %v4924, 0.0
      %vm4979 = vcmp.ne.f32.partialorder %v4925, 0.0
      %vm4980 = vcmp.ne.f32.partialorder %v4926, 0.0
      %vm4981 = vcmp.ne.f32.partialorder %v4927, 0.0
      %vm4982 = vcmp.ne.f32.partialorder %v4928, 0.0
      %vm4983 = vcmp.ne.f32.partialorder %v4929, 0.0
      %vm4984 = vcmp.ne.f32.partialorder %v4930, 0.0
      %vm4985 = vcmp.ne.f32.partialorder %v4931, 0.0
      %vm4986 = vcmp.ne.f32.partialorder %v4932, 0.0
      %vm4987 = vcmp.ne.f32.partialorder %v4933, 0.0
      %vm4988 = vcmp.ne.f32.partialorder %v4934, 0.0
      %vm4989 = vcmp.ne.f32.partialorder %v4935, 0.0
      %vm4990 = vmand %vm4828, %vm4936
      %vm4991 = vmand %vm4829, %vm4937
      %vm4992 = vmand %vm4830, %vm4938
      %vm4993 = vmand %vm4831, %vm4939
      %vm4994 = vmand %vm4832, %vm4940
      %vm4995 = vmand %vm4833, %vm4941
      %vm4996 = vmand %vm4834, %vm4942
      %vm4997 = vmand %vm4835, %vm4943
      %vm4998 = vmand %vm4836, %vm4944
      %vm4999 = vmand %vm4837, %vm4945
      %vm5000 = vmand %vm4838, %vm4946
      %vm5001 = vmand %vm4839, %vm4947
      %vm5002 = vmand %vm4840, %vm4948
      %vm5003 = vmand %vm4841, %vm4949
      %vm5004 = vmand %vm4842, %vm4950
      %vm5005 = vmand %vm4843, %vm4951
      %vm5006 = vmand %vm4844, %vm4952
      %vm5007 = vmand %vm4845, %vm4953
      %vm5008 = vmand %vm4846, %vm4954
      %vm5009 = vmand %vm4847, %vm4955
      %vm5010 = vmand %vm4848, %vm4956
      %vm5011 = vmand %vm4849, %vm4957
      %vm5012 = vmand %vm4850, %vm4958
      %vm5013 = vmand %vm4851, %vm4959
      %vm5014 = vmand %vm4852, %vm4960
      %vm5015 = vmand %vm4853, %vm4961
      %vm5016 = vmand %vm4854, %vm4962
      %vm5017 = vmand %vm4855, %vm4963
      %vm5018 = vmand %vm4856, %vm4964
      %vm5019 = vmand %vm4857, %vm4965
      %vm5020 = vmand %vm4858, %vm4966
      %vm5021 = vmand %vm4859, %vm4967
      %vm5022 = vmand %vm4860, %vm4968
      %vm5023 = vmand %vm4861, %vm4969
      %vm5024 = vmand %vm4862, %vm4970
      %vm5025 = vmand %vm4863, %vm4971
      %vm5026 = vmand %vm4864, %vm4972
      %vm5027 = vmand %vm4865, %vm4973
      %vm5028 = vmand %vm4866, %vm4974
      %vm5029 = vmand %vm4867, %vm4975
      %vm5030 = vmand %vm4868, %vm4976
      %vm5031 = vmand %vm4869, %vm4977
      %vm5032 = vmand %vm4870, %vm4978
      %vm5033 = vmand %vm4871, %vm4979
      %vm5034 = vmand %vm4872, %vm4980
      %vm5035 = vmand %vm4873, %vm4981
      %vm5036 = vmand %vm4874, %vm4982
      %vm5037 = vmand %vm4875, %vm4983
      %vm5038 = vmand %vm4876, %vm4984
      %vm5039 = vmand %vm4877, %vm4985
      %vm5040 = vmand %vm4878, %vm4986
      %vm5041 = vmand %vm4879, %vm4987
      %vm5042 = vmand %vm4880, %vm4988
      %vm5043 = vmand %vm4881, %vm4989
      %v5044 = vsel %vm4990, 1, 0
      %v5045 = vsel %vm4991, 1, 0
      %v5046 = vsel %vm4992, 1, 0
      %v5047 = vsel %vm4993, 1, 0
      %v5048 = vsel %vm4994, 1, 0
      %v5049 = vsel %vm4995, 1, 0
      %v5050 = vsel %vm4996, 1, 0
      %v5051 = vsel %vm4997, 1, 0
      %v5052 = vsel %vm4998, 1, 0
      %v5053 = vsel %vm4999, 1, 0
      %v5054 = vsel %vm5000, 1, 0
      %v5055 = vsel %vm5001, 1, 0
      %v5056 = vsel %vm5002, 1, 0
      %v5057 = vsel %vm5003, 1, 0
      %v5058 = vsel %vm5004, 1, 0
      %v5059 = vsel %vm5005, 1, 0
      %v5060 = vsel %vm5006, 1, 0
      %v5061 = vsel %vm5007, 1, 0
      %v5062 = vsel %vm5008, 1, 0
      %v5063 = vsel %vm5009, 1, 0
      %v5064 = vsel %vm5010, 1, 0
      %v5065 = vsel %vm5011, 1, 0
      %v5066 = vsel %vm5012, 1, 0
      %v5067 = vsel %vm5013, 1, 0
      %v5068 = vsel %vm5014, 1, 0
      %v5069 = vsel %vm5015, 1, 0
      %v5070 = vsel %vm5016, 1, 0
      %v5071 = vsel %vm5017, 1, 0
      %v5072 = vsel %vm5018, 1, 0
      %v5073 = vsel %vm5019, 1, 0
      %v5074 = vsel %vm5020, 1, 0
      %v5075 = vsel %vm5021, 1, 0
      %v5076 = vsel %vm5022, 1, 0
      %v5077 = vsel %vm5023, 1, 0
      %v5078 = vsel %vm5024, 1, 0
      %v5079 = vsel %vm5025, 1, 0
      %v5080 = vsel %vm5026, 1, 0
      %v5081 = vsel %vm5027, 1, 0
      %v5082 = vsel %vm5028, 1, 0
      %v5083 = vsel %vm5029, 1, 0
      %v5084 = vsel %vm5030, 1, 0
      %v5085 = vsel %vm5031, 1, 0
      %v5086 = vsel %vm5032, 1, 0
      %v5087 = vsel %vm5033, 1, 0
      %v5088 = vsel %vm5034, 1, 0
      %v5089 = vsel %vm5035, 1, 0
      %v5090 = vsel %vm5036, 1, 0
      %v5091 = vsel %vm5037, 1, 0
      %v5092 = vsel %vm5038, 1, 0
      %v5093 = vsel %vm5039, 1, 0
      %v5094 = vsel %vm5040, 1, 0
      %v5095 = vsel %vm5041, 1, 0
      %v5096 = vsel %vm5042, 1, 0
      %v5097 = vsel %vm5043, 1, 0
      %5098 = vset.pattern.permute.xlu0 0
      %5099 = vperm.xlu0 %5098, %v5044
      %v5100 = vpop.permute.xlu0 %5099
      %5101 = vset.pattern.permute.xlu0 0
      %5102 = vperm.xlu0 %5101, %v5045
      %v5103 = vpop.permute.xlu0 %5102
      %5104 = vset.pattern.permute.xlu0 0
      %5105 = vperm.xlu0 %5104, %v5046
      %v5106 = vpop.permute.xlu0 %5105
      %5107 = vset.pattern.permute.xlu0 0
      %5108 = vperm.xlu0 %5107, %v5047
      %v5109 = vpop.permute.xlu0 %5108
      %5110 = vset.pattern.permute.xlu0 0
      %5111 = vperm.xlu0 %5110, %v5048
      %v5112 = vpop.permute.xlu0 %5111
      %5113 = vset.pattern.permute.xlu0 0
      %5114 = vperm.xlu0 %5113, %v5049
      %v5115 = vpop.permute.xlu0 %5114
      %5116 = vset.pattern.permute.xlu0 0
      %5117 = vperm.xlu0 %5116, %v5050
      %v5118 = vpop.permute.xlu0 %5117
      %5119 = vset.pattern.permute.xlu0 0
      %5120 = vperm.xlu0 %5119, %v5051
      %v5121 = vpop.permute.xlu0 %5120
      %5122 = vset.pattern.permute.xlu0 0
      %5123 = vperm.xlu0 %5122, %v5052
      %v5124 = vpop.permute.xlu0 %5123
      %5125 = vset.pattern.permute.xlu0 0
      %5126 = vperm.xlu0 %5125, %v5053
      %v5127 = vpop.permute.xlu0 %5126
      %5128 = vset.pattern.permute.xlu0 0
      %5129 = vperm.xlu0 %5128, %v5054
      %v5130 = vpop.permute.xlu0 %5129
      %5131 = vset.pattern.permute.xlu0 0
      %5132 = vperm.xlu0 %5131, %v5055
      %v5133 = vpop.permute.xlu0 %5132
      %5134 = vset.pattern.permute.xlu0 0
      %5135 = vperm.xlu0 %5134, %v5056
      %v5136 = vpop.permute.xlu0 %5135
      %5137 = vset.pattern.permute.xlu0 0
      %5138 = vperm.xlu0 %5137, %v5057
      %v5139 = vpop.permute.xlu0 %5138
      %5140 = vset.pattern.permute.xlu0 0
      %5141 = vperm.xlu0 %5140, %v5058
      %v5142 = vpop.permute.xlu0 %5141
      %5143 = vset.pattern.permute.xlu0 0
      %5144 = vperm.xlu0 %5143, %v5059
      %v5145 = vpop.permute.xlu0 %5144
      %5146 = vset.pattern.permute.xlu0 0
      %5147 = vperm.xlu0 %5146, %v5060
      %v5148 = vpop.permute.xlu0 %5147
      %5149 = vset.pattern.permute.xlu0 0
      %5150 = vperm.xlu0 %5149, %v5061
      %v5151 = vpop.permute.xlu0 %5150
      %5152 = vset.pattern.permute.xlu0 0
      %5153 = vperm.xlu0 %5152, %v5062
      %v5154 = vpop.permute.xlu0 %5153
      %5155 = vset.pattern.permute.xlu0 0
      %5156 = vperm.xlu0 %5155, %v5063
      %v5157 = vpop.permute.xlu0 %5156
      %5158 = vset.pattern.permute.xlu0 0
      %5159 = vperm.xlu0 %5158, %v5064
      %v5160 = vpop.permute.xlu0 %5159
      %5161 = vset.pattern.permute.xlu0 0
      %5162 = vperm.xlu0 %5161, %v5065
      %v5163 = vpop.permute.xlu0 %5162
      %5164 = vset.pattern.permute.xlu0 0
      %5165 = vperm.xlu0 %5164, %v5066
      %v5166 = vpop.permute.xlu0 %5165
      %5167 = vset.pattern.permute.xlu0 0
      %5168 = vperm.xlu0 %5167, %v5067
      %v5169 = vpop.permute.xlu0 %5168
      %5170 = vset.pattern.permute.xlu0 0
      %5171 = vperm.xlu0 %5170, %v5068
      %v5172 = vpop.permute.xlu0 %5171
      %5173 = vset.pattern.permute.xlu0 0
      %5174 = vperm.xlu0 %5173, %v5069
      %v5175 = vpop.permute.xlu0 %5174
      %5176 = vset.pattern.permute.xlu0 0
      %5177 = vperm.xlu0 %5176, %v5070
      %v5178 = vpop.permute.xlu0 %5177
      %5179 = vset.pattern.permute.xlu0 0
      %5180 = vperm.xlu0 %5179, %v5071
      %v5181 = vpop.permute.xlu0 %5180
      %5182 = vset.pattern.permute.xlu0 0
      %5183 = vperm.xlu0 %5182, %v5072
      %v5184 = vpop.permute.xlu0 %5183
      %5185 = vset.pattern.permute.xlu0 0
      %5186 = vperm.xlu0 %5185, %v5073
      %v5187 = vpop.permute.xlu0 %5186
      %5188 = vset.pattern.permute.xlu0 0
      %5189 = vperm.xlu0 %5188, %v5074
      %v5190 = vpop.permute.xlu0 %5189
      %5191 = vset.pattern.permute.xlu0 0
      %5192 = vperm.xlu0 %5191, %v5075
      %v5193 = vpop.permute.xlu0 %5192
      %5194 = vset.pattern.permute.xlu0 0
      %5195 = vperm.xlu0 %5194, %v5076
      %v5196 = vpop.permute.xlu0 %5195
      %5197 = vset.pattern.permute.xlu0 0
      %5198 = vperm.xlu0 %5197, %v5077
      %v5199 = vpop.permute.xlu0 %5198
      %5200 = vset.pattern.permute.xlu0 0
      %5201 = vperm.xlu0 %5200, %v5078
      %v5202 = vpop.permute.xlu0 %5201
      %5203 = vset.pattern.permute.xlu0 0
      %5204 = vperm.xlu0 %5203, %v5079
      %v5205 = vpop.permute.xlu0 %5204
      %5206 = vset.pattern.permute.xlu0 0
      %5207 = vperm.xlu0 %5206, %v5080
      %v5208 = vpop.permute.xlu0 %5207
      %5209 = vset.pattern.permute.xlu0 0
      %5210 = vperm.xlu0 %5209, %v5081
      %v5211 = vpop.permute.xlu0 %5210
      %5212 = vset.pattern.permute.xlu0 0
      %5213 = vperm.xlu0 %5212, %v5082
      %v5214 = vpop.permute.xlu0 %5213
      %5215 = vset.pattern.permute.xlu0 0
      %5216 = vperm.xlu0 %5215, %v5083
      %v5217 = vpop.permute.xlu0 %5216
      %5218 = vset.pattern.permute.xlu0 0
      %5219 = vperm.xlu0 %5218, %v5084
      %v5220 = vpop.permute.xlu0 %5219
      %5221 = vset.pattern.permute.xlu0 0
      %5222 = vperm.xlu0 %5221, %v5085
      %v5223 = vpop.permute.xlu0 %5222
      %5224 = vset.pattern.permute.xlu0 0
      %5225 = vperm.xlu0 %5224, %v5086
      %v5226 = vpop.permute.xlu0 %5225
      %5227 = vset.pattern.permute.xlu0 0
      %5228 = vperm.xlu0 %5227, %v5087
      %v5229 = vpop.permute.xlu0 %5228
      %5230 = vset.pattern.permute.xlu0 0
      %5231 = vperm.xlu0 %5230, %v5088
      %v5232 = vpop.permute.xlu0 %5231
      %5233 = vset.pattern.permute.xlu0 0
      %5234 = vperm.xlu0 %5233, %v5089
      %v5235 = vpop.permute.xlu0 %5234
      %5236 = vset.pattern.permute.xlu0 0
      %5237 = vperm.xlu0 %5236, %v5090
      %v5238 = vpop.permute.xlu0 %5237
      %5239 = vset.pattern.permute.xlu0 0
      %5240 = vperm.xlu0 %5239, %v5091
      %v5241 = vpop.permute.xlu0 %5240
      %5242 = vset.pattern.permute.xlu0 0
      %5243 = vperm.xlu0 %5242, %v5092
      %v5244 = vpop.permute.xlu0 %5243
      %5245 = vset.pattern.permute.xlu0 0
      %5246 = vperm.xlu0 %5245, %v5093
      %v5247 = vpop.permute.xlu0 %5246
      %5248 = vset.pattern.permute.xlu0 0
      %5249 = vperm.xlu0 %5248, %v5094
      %v5250 = vpop.permute.xlu0 %5249
      %5251 = vset.pattern.permute.xlu0 0
      %5252 = vperm.xlu0 %5251, %v5095
      %v5253 = vpop.permute.xlu0 %5252
      %5254 = vset.pattern.permute.xlu0 0
      %5255 = vperm.xlu0 %5254, %v5096
      %v5256 = vpop.permute.xlu0 %5255
      %5257 = vset.pattern.permute.xlu0 0
      %5258 = vperm.xlu0 %5257, %v5097
      %v5259 = vpop.permute.xlu0 %5258
      %vm5260 = vcmp.eq.s32.totalorder %v5100, 1
      %vm5261 = vcmp.eq.s32.totalorder %v5103, 1
      %vm5262 = vcmp.eq.s32.totalorder %v5106, 1
      %vm5263 = vcmp.eq.s32.totalorder %v5109, 1
      %vm5264 = vcmp.eq.s32.totalorder %v5112, 1
      %vm5265 = vcmp.eq.s32.totalorder %v5115, 1
      %vm5266 = vcmp.eq.s32.totalorder %v5118, 1
      %vm5267 = vcmp.eq.s32.totalorder %v5121, 1
      %vm5268 = vcmp.eq.s32.totalorder %v5124, 1
      %vm5269 = vcmp.eq.s32.totalorder %v5127, 1
      %vm5270 = vcmp.eq.s32.totalorder %v5130, 1
      %vm5271 = vcmp.eq.s32.totalorder %v5133, 1
      %vm5272 = vcmp.eq.s32.totalorder %v5136, 1
      %vm5273 = vcmp.eq.s32.totalorder %v5139, 1
      %vm5274 = vcmp.eq.s32.totalorder %v5142, 1
      %vm5275 = vcmp.eq.s32.totalorder %v5145, 1
      %vm5276 = vcmp.eq.s32.totalorder %v5148, 1
      %vm5277 = vcmp.eq.s32.totalorder %v5151, 1
      %vm5278 = vcmp.eq.s32.totalorder %v5154, 1
      %vm5279 = vcmp.eq.s32.totalorder %v5157, 1
      %vm5280 = vcmp.eq.s32.totalorder %v5160, 1
      %vm5281 = vcmp.eq.s32.totalorder %v5163, 1
      %vm5282 = vcmp.eq.s32.totalorder %v5166, 1
      %vm5283 = vcmp.eq.s32.totalorder %v5169, 1
      %vm5284 = vcmp.eq.s32.totalorder %v5172, 1
      %vm5285 = vcmp.eq.s32.totalorder %v5175, 1
      %vm5286 = vcmp.eq.s32.totalorder %v5178, 1
      %vm5287 = vcmp.eq.s32.totalorder %v5181, 1
      %vm5288 = vcmp.eq.s32.totalorder %v5184, 1
      %vm5289 = vcmp.eq.s32.totalorder %v5187, 1
      %vm5290 = vcmp.eq.s32.totalorder %v5190, 1
      %vm5291 = vcmp.eq.s32.totalorder %v5193, 1
      %vm5292 = vcmp.eq.s32.totalorder %v5196, 1
      %vm5293 = vcmp.eq.s32.totalorder %v5199, 1
      %vm5294 = vcmp.eq.s32.totalorder %v5202, 1
      %vm5295 = vcmp.eq.s32.totalorder %v5205, 1
      %vm5296 = vcmp.eq.s32.totalorder %v5208, 1
      %vm5297 = vcmp.eq.s32.totalorder %v5211, 1
      %vm5298 = vcmp.eq.s32.totalorder %v5214, 1
      %vm5299 = vcmp.eq.s32.totalorder %v5217, 1
      %vm5300 = vcmp.eq.s32.totalorder %v5220, 1
      %vm5301 = vcmp.eq.s32.totalorder %v5223, 1
      %vm5302 = vcmp.eq.s32.totalorder %v5226, 1
      %vm5303 = vcmp.eq.s32.totalorder %v5229, 1
      %vm5304 = vcmp.eq.s32.totalorder %v5232, 1
      %vm5305 = vcmp.eq.s32.totalorder %v5235, 1
      %vm5306 = vcmp.eq.s32.totalorder %v5238, 1
      %vm5307 = vcmp.eq.s32.totalorder %v5241, 1
      %vm5308 = vcmp.eq.s32.totalorder %v5244, 1
      %vm5309 = vcmp.eq.s32.totalorder %v5247, 1
      %vm5310 = vcmp.eq.s32.totalorder %v5250, 1
      %vm5311 = vcmp.eq.s32.totalorder %v5253, 1
      %vm5312 = vcmp.eq.s32.totalorder %v5256, 1
      %vm5313 = vcmp.eq.s32.totalorder %v5259, 1
      %v5314 = vsel %vm5260, %v4604, 0.0
      %v5315 = vsel %vm5261, %v4605, 0.0
      %v5316 = vsel %vm5262, %v4606, 0.0
      %v5317 = vsel %vm5263, %v4607, 0.0
      %v5318 = vsel %vm5264, %v4608, 0.0
      %v5319 = vsel %vm5265, %v4609, 0.0
      %v5320 = vsel %vm5266, %v4610, 0.0
      %v5321 = vsel %vm5267, %v4611, 0.0
      %v5322 = vsel %vm5268, %v4612, 0.0
      %v5323 = vsel %vm5269, %v4613, 0.0
      %v5324 = vsel %vm5270, %v4614, 0.0
      %v5325 = vsel %vm5271, %v4615, 0.0
      %v5326 = vsel %vm5272, %v4616, 0.0
      %v5327 = vsel %vm5273, %v4617, 0.0
      %v5328 = vsel %vm5274, %v4618, 0.0
      %v5329 = vsel %vm5275, %v4619, 0.0
      %v5330 = vsel %vm5276, %v4620, 0.0
      %v5331 = vsel %vm5277, %v4621, 0.0
      %v5332 = vsel %vm5278, %v4622, 0.0
      %v5333 = vsel %vm5279, %v4623, 0.0
      %v5334 = vsel %vm5280, %v4624, 0.0
      %v5335 = vsel %vm5281, %v4625, 0.0
      %v5336 = vsel %vm5282, %v4626, 0.0
      %v5337 = vsel %vm5283, %v4627, 0.0
      %v5338 = vsel %vm5284, %v4628, 0.0
      %v5339 = vsel %vm5285, %v4629, 0.0
      %v5340 = vsel %vm5286, %v4630, 0.0
      %v5341 = vsel %vm5287, %v4631, 0.0
      %v5342 = vsel %vm5288, %v4632, 0.0
      %v5343 = vsel %vm5289, %v4633, 0.0
      %v5344 = vsel %vm5290, %v4634, 0.0
      %v5345 = vsel %vm5291, %v4635, 0.0
      %v5346 = vsel %vm5292, %v4636, 0.0
      %v5347 = vsel %vm5293, %v4637, 0.0
      %v5348 = vsel %vm5294, %v4638, 0.0
      %v5349 = vsel %vm5295, %v4639, 0.0
      %v5350 = vsel %vm5296, %v4640, 0.0
      %v5351 = vsel %vm5297, %v4641, 0.0
      %v5352 = vsel %vm5298, %v4642, 0.0
      %v5353 = vsel %vm5299, %v4643, 0.0
      %v5354 = vsel %vm5300, %v4644, 0.0
      %v5355 = vsel %vm5301, %v4645, 0.0
      %v5356 = vsel %vm5302, %v4646, 0.0
      %v5357 = vsel %vm5303, %v4647, 0.0
      %v5358 = vsel %vm5304, %v4648, 0.0
      %v5359 = vsel %vm5305, %v4649, 0.0
      %v5360 = vsel %vm5306, %v4650, 0.0
      %v5361 = vsel %vm5307, %v4651, 0.0
      %v5362 = vsel %vm5308, %v4652, 0.0
      %v5363 = vsel %vm5309, %v4653, 0.0
      %v5364 = vsel %vm5310, %v4654, 0.0
      %v5365 = vsel %vm5311, %v4655, 0.0
      %v5366 = vsel %vm5312, %v4656, 0.0
      %v5367 = vsel %vm5313, %v4657, 0.0
      %5368 = vst.msk [vmem:[#allocation2] sm:$0xff] %vm4433, %v5314
      %5369 = vst.msk [vmem:[#allocation2 + $0x8] sm:$0xff] %vm4433, %v5315
      %5370 = vst.msk [vmem:[#allocation2 + $0x10] sm:$0xff] %vm4433, %v5316
      %5371 = vst.msk [vmem:[#allocation2 + $0x18] sm:$0xff] %vm4433, %v5317
      %5372 = vst.msk [vmem:[#allocation2 + $0x20] sm:$0xff] %vm4433, %v5318
      %5373 = vst.msk [vmem:[#allocation2 + $0x28] sm:$0xff] %vm4433, %v5319
      %5374 = vst.msk [vmem:[#allocation2 + $0x30] sm:$0xff] %vm4433, %v5320
      %5375 = vst.msk [vmem:[#allocation2 + $0x38] sm:$0xff] %vm4433, %v5321
      %5376 = vst.msk [vmem:[#allocation2 + $0x40] sm:$0xff] %vm4433, %v5322
      %5377 = vst.msk [vmem:[#allocation2 + $0x48] sm:$0xff] %vm4433, %v5323
      %5378 = vst.msk [vmem:[#allocation2 + $0x50] sm:$0xff] %vm4433, %v5324
      %5379 = vst.msk [vmem:[#allocation2 + $0x58] sm:$0xff] %vm4433, %v5325
      %5380 = vst.msk [vmem:[#allocation2 + $0x60] sm:$0xff] %vm4433, %v5326
      %5381 = vst.msk [vmem:[#allocation2 + $0x68] sm:$0xff] %vm4433, %v5327
      %5382 = vst.msk [vmem:[#allocation2 + $0x70] sm:$0xff] %vm4433, %v5328
      %5383 = vst.msk [vmem:[#allocation2 + $0x78] sm:$0xff] %vm4433, %v5329
      %5384 = vst.msk [vmem:[#allocation2 + $0x80] sm:$0xff] %vm4433, %v5330
      %5385 = vst.msk [vmem:[#allocation2 + $0x88] sm:$0xff] %vm4433, %v5331
      %5386 = vst.msk [vmem:[#allocation2 + $0x90] sm:$0xff] %vm4433, %v5332
      %5387 = vst.msk [vmem:[#allocation2 + $0x98] sm:$0xff] %vm4433, %v5333
      %5388 = vst.msk [vmem:[#allocation2 + $0xa0] sm:$0xff] %vm4433, %v5334
      %5389 = vst.msk [vmem:[#allocation2 + $0xa8] sm:$0xff] %vm4433, %v5335
      %5390 = vst.msk [vmem:[#allocation2 + $0xb0] sm:$0xff] %vm4433, %v5336
      %5391 = vst.msk [vmem:[#allocation2 + $0xb8] sm:$0xff] %vm4433, %v5337
      %5392 = vst.msk [vmem:[#allocation2 + $0xc0] sm:$0xff] %vm4433, %v5338
      %5393 = vst.msk [vmem:[#allocation2 + $0xc8] sm:$0xff] %vm4433, %v5339
      %5394 = vst.msk [vmem:[#allocation2 + $0xd0] sm:$0xff] %vm4433, %v5340
      %5395 = vst.msk [vmem:[#allocation2 + $0xd8] sm:$0xff] %vm4433, %v5341
      %5396 = vst.msk [vmem:[#allocation2 + $0xe0] sm:$0xff] %vm4433, %v5342
      %5397 = vst.msk [vmem:[#allocation2 + $0xe8] sm:$0xff] %vm4433, %v5343
      %5398 = vst.msk [vmem:[#allocation2 + $0xf0] sm:$0xff] %vm4433, %v5344
      %5399 = vst.msk [vmem:[#allocation2 + $0xf8] sm:$0xff] %vm4433, %v5345
      %5400 = vst.msk [vmem:[#allocation2 + $0x100] sm:$0xff] %vm4433, %v5346
      %5401 = vst.msk [vmem:[#allocation2 + $0x108] sm:$0xff] %vm4433, %v5347
      %5402 = vst.msk [vmem:[#allocation2 + $0x110] sm:$0xff] %vm4433, %v5348
      %5403 = vst.msk [vmem:[#allocation2 + $0x118] sm:$0xff] %vm4433, %v5349
      %5404 = vst.msk [vmem:[#allocation2 + $0x120] sm:$0xff] %vm4433, %v5350
      %5405 = vst.msk [vmem:[#allocation2 + $0x128] sm:$0xff] %vm4433, %v5351
      %5406 = vst.msk [vmem:[#allocation2 + $0x130] sm:$0xff] %vm4433, %v5352
      %5407 = vst.msk [vmem:[#allocation2 + $0x138] sm:$0xff] %vm4433, %v5353
      %5408 = vst.msk [vmem:[#allocation2 + $0x140] sm:$0xff] %vm4433, %v5354
      %5409 = vst.msk [vmem:[#allocation2 + $0x148] sm:$0xff] %vm4433, %v5355
      %5410 = vst.msk [vmem:[#allocation2 + $0x150] sm:$0xff] %vm4433, %v5356
      %5411 = vst.msk [vmem:[#allocation2 + $0x158] sm:$0xff] %vm4433, %v5357
      %5412 = vst.msk [vmem:[#allocation2 + $0x160] sm:$0xff] %vm4433, %v5358
      %5413 = vst.msk [vmem:[#allocation2 + $0x168] sm:$0xff] %vm4433, %v5359
      %5414 = vst.msk [vmem:[#allocation2 + $0x170] sm:$0xff] %vm4433, %v5360
      %5415 = vst.msk [vmem:[#allocation2 + $0x178] sm:$0xff] %vm4433, %v5361
      %5416 = vst.msk [vmem:[#allocation2 + $0x180] sm:$0xff] %vm4433, %v5362
      %5417 = vst.msk [vmem:[#allocation2 + $0x188] sm:$0xff] %vm4433, %v5363
      %5418 = vst.msk [vmem:[#allocation2 + $0x190] sm:$0xff] %vm4433, %v5364
      %5419 = vst.msk [vmem:[#allocation2 + $0x198] sm:$0xff] %vm4433, %v5365
      %5420 = vst.msk [vmem:[#allocation2 + $0x1a0] sm:$0xff] %vm4433, %v5366
      %5421 = vst.msk [vmem:[#allocation2 + $0x1a8] sm:$0xff] %vm4433, %v5367
      %5422 = vst.msk [vmem:[#allocation2 + $0x1b0] sm:$0xff] %vm4433, 0.0
      %5423 = vst.msk [vmem:[#allocation2 + $0x1b8] sm:$0xff] %vm4433, 0.0
      %5424 = vst.msk [vmem:[#allocation2 + $0x1c0] sm:$0xff] %vm4433, 0.0
      %v5425 = vld [vmem:[#allocation2] sm:$0xff]
      %v5426 = vld [vmem:[#allocation2 + $0x8] sm:$0xff]
      %v5427 = vld [vmem:[#allocation2 + $0x10] sm:$0xff]
      %v5428 = vld [vmem:[#allocation2 + $0x18] sm:$0xff]
      %v5429 = vld [vmem:[#allocation2 + $0x20] sm:$0xff]
      %v5430 = vld [vmem:[#allocation2 + $0x28] sm:$0xff]
      %v5431 = vld [vmem:[#allocation2 + $0x30] sm:$0xff]
      %v5432 = vld [vmem:[#allocation2 + $0x38] sm:$0xff]
      %v5433 = vld [vmem:[#allocation2 + $0x40] sm:$0xff]
      %v5434 = vld [vmem:[#allocation2 + $0x48] sm:$0xff]
      %v5435 = vld [vmem:[#allocation2 + $0x50] sm:$0xff]
      %v5436 = vld [vmem:[#allocation2 + $0x58] sm:$0xff]
      %v5437 = vld [vmem:[#allocation2 + $0x60] sm:$0xff]
      %v5438 = vld [vmem:[#allocation2 + $0x68] sm:$0xff]
      %v5439 = vld [vmem:[#allocation2 + $0x70] sm:$0xff]
      %v5440 = vld [vmem:[#allocation2 + $0x78] sm:$0xff]
      %v5441 = vld [vmem:[#allocation2 + $0x80] sm:$0xff]
      %v5442 = vld [vmem:[#allocation2 + $0x88] sm:$0xff]
      %v5443 = vld [vmem:[#allocation2 + $0x90] sm:$0xff]
      %v5444 = vld [vmem:[#allocation2 + $0x98] sm:$0xff]
      %v5445 = vld [vmem:[#allocation2 + $0xa0] sm:$0xff]
      %v5446 = vld [vmem:[#allocation2 + $0xa8] sm:$0xff]
      %v5447 = vld [vmem:[#allocation2 + $0xb0] sm:$0xff]
      %v5448 = vld [vmem:[#allocation2 + $0xb8] sm:$0xff]
      %v5449 = vld [vmem:[#allocation2 + $0xc0] sm:$0xff]
      %v5450 = vld [vmem:[#allocation2 + $0xc8] sm:$0xff]
      %v5451 = vld [vmem:[#allocation2 + $0xd0] sm:$0xff]
      %v5452 = vld [vmem:[#allocation2 + $0xd8] sm:$0xff]
      %v5453 = vld [vmem:[#allocation2 + $0xe0] sm:$0xff]
      %v5454 = vld [vmem:[#allocation2 + $0xe8] sm:$0xff]
      %v5455 = vld [vmem:[#allocation2 + $0xf0] sm:$0xff]
      %v5456 = vld [vmem:[#allocation2 + $0xf8] sm:$0xff]
      %v5457 = vld [vmem:[#allocation2 + $0x100] sm:$0xff]
      %v5458 = vld [vmem:[#allocation2 + $0x108] sm:$0xff]
      %v5459 = vld [vmem:[#allocation2 + $0x110] sm:$0xff]
      %v5460 = vld [vmem:[#allocation2 + $0x118] sm:$0xff]
      %v5461 = vld [vmem:[#allocation2 + $0x120] sm:$0xff]
      %v5462 = vld [vmem:[#allocation2 + $0x128] sm:$0xff]
      %v5463 = vld [vmem:[#allocation2 + $0x130] sm:$0xff]
      %v5464 = vld [vmem:[#allocation2 + $0x138] sm:$0xff]
      %v5465 = vld [vmem:[#allocation2 + $0x140] sm:$0xff]
      %v5466 = vld [vmem:[#allocation2 + $0x148] sm:$0xff]
      %v5467 = vld [vmem:[#allocation2 + $0x150] sm:$0xff]
      %v5468 = vld [vmem:[#allocation2 + $0x158] sm:$0xff]
      %v5469 = vld [vmem:[#allocation2 + $0x160] sm:$0xff]
      %v5470 = vld [vmem:[#allocation2 + $0x168] sm:$0xff]
      %v5471 = vld [vmem:[#allocation2 + $0x170] sm:$0xff]
      %v5472 = vld [vmem:[#allocation2 + $0x178] sm:$0xff]
      %v5473 = vld [vmem:[%s6] sm:$0xff]
      %v5474 = vld [vmem:[#allocation2 + $0x1] sm:$0xff]
      %v5475 = vld [vmem:[#allocation2 + $0x9] sm:$0xff]
      %v5476 = vld [vmem:[#allocation2 + $0x11] sm:$0xff]
      %v5477 = vld [vmem:[#allocation2 + $0x19] sm:$0xff]
      %v5478 = vld [vmem:[#allocation2 + $0x21] sm:$0xff]
      %v5479 = vld [vmem:[#allocation2 + $0x29] sm:$0xff]
      %v5480 = vld [vmem:[#allocation2 + $0x31] sm:$0xff]
      %v5481 = vld [vmem:[#allocation2 + $0x39] sm:$0xff]
      %v5482 = vld [vmem:[#allocation2 + $0x41] sm:$0xff]
      %v5483 = vld [vmem:[#allocation2 + $0x49] sm:$0xff]
      %v5484 = vld [vmem:[#allocation2 + $0x51] sm:$0xff]
      %v5485 = vld [vmem:[#allocation2 + $0x59] sm:$0xff]
      %v5486 = vld [vmem:[#allocation2 + $0x61] sm:$0xff]
      %v5487 = vld [vmem:[#allocation2 + $0x69] sm:$0xff]
      %v5488 = vld [vmem:[#allocation2 + $0x71] sm:$0xff]
      %v5489 = vld [vmem:[#allocation2 + $0x79] sm:$0xff]
      %v5490 = vld [vmem:[#allocation2 + $0x81] sm:$0xff]
      %v5491 = vld [vmem:[#allocation2 + $0x89] sm:$0xff]
      %v5492 = vld [vmem:[#allocation2 + $0x91] sm:$0xff]
      %v5493 = vld [vmem:[#allocation2 + $0x99] sm:$0xff]
      %v5494 = vld [vmem:[#allocation2 + $0xa1] sm:$0xff]
      %v5495 = vld [vmem:[#allocation2 + $0xa9] sm:$0xff]
      %v5496 = vld [vmem:[#allocation2 + $0xb1] sm:$0xff]
      %v5497 = vld [vmem:[#allocation2 + $0xb9] sm:$0xff]
      %v5498 = vld [vmem:[#allocation2 + $0xc1] sm:$0xff]
      %v5499 = vld [vmem:[#allocation2 + $0xc9] sm:$0xff]
      %v5500 = vld [vmem:[#allocation2 + $0xd1] sm:$0xff]
      %v5501 = vld [vmem:[#allocation2 + $0xd9] sm:$0xff]
      %v5502 = vld [vmem:[#allocation2 + $0xe1] sm:$0xff]
      %v5503 = vld [vmem:[#allocation2 + $0xe9] sm:$0xff]
      %v5504 = vld [vmem:[#allocation2 + $0xf1] sm:$0xff]
      %v5505 = vld [vmem:[#allocation2 + $0xf9] sm:$0xff]
      %v5506 = vld [vmem:[#allocation2 + $0x101] sm:$0xff]
      %v5507 = vld [vmem:[#allocation2 + $0x109] sm:$0xff]
      %v5508 = vld [vmem:[#allocation2 + $0x111] sm:$0xff]
      %v5509 = vld [vmem:[#allocation2 + $0x119] sm:$0xff]
      %v5510 = vld [vmem:[#allocation2 + $0x121] sm:$0xff]
      %v5511 = vld [vmem:[#allocation2 + $0x129] sm:$0xff]
      %v5512 = vld [vmem:[#allocation2 + $0x131] sm:$0xff]
      %v5513 = vld [vmem:[#allocation2 + $0x139] sm:$0xff]
      %v5514 = vld [vmem:[#allocation2 + $0x141] sm:$0xff]
      %v5515 = vld [vmem:[#allocation2 + $0x149] sm:$0xff]
      %v5516 = vld [vmem:[#allocation2 + $0x151] sm:$0xff]
      %v5517 = vld [vmem:[#allocation2 + $0x159] sm:$0xff]
      %v5518 = vld [vmem:[#allocation2 + $0x161] sm:$0xff]
      %v5519 = vld [vmem:[#allocation2 + $0x169] sm:$0xff]
      %v5520 = vld [vmem:[#allocation2 + $0x171] sm:$0xff]
      %v5521 = vld [vmem:[#allocation2 + $0x179] sm:$0xff]
      %s5522 = scalar_lea.vmem %s6, 8
      %v5523 = vld [vmem:[%s5522] sm:$0xff]
      %v5525 = vsel %vm4433, %v5474, 0
      %v5528 = vsel %vm4433, %v5475, 0
      %v5531 = vsel %vm4433, %v5476, 0
      %v5534 = vsel %vm4433, %v5477, 0
      %v5537 = vsel %vm4433, %v5478, 0
      %v5540 = vsel %vm4433, %v5479, 0
      %v5543 = vsel %vm4433, %v5480, 0
      %v5546 = vsel %vm4433, %v5481, 0
      %v5549 = vsel %vm4433, %v5482, 0
      %v5552 = vsel %vm4433, %v5483, 0
      %v5555 = vsel %vm4433, %v5484, 0
      %v5558 = vsel %vm4433, %v5485, 0
      %v5561 = vsel %vm4433, %v5486, 0
      %v5564 = vsel %vm4433, %v5487, 0
      %v5567 = vsel %vm4433, %v5488, 0
      %v5570 = vsel %vm4433, %v5489, 0
      %v5573 = vsel %vm4433, %v5490, 0
      %v5576 = vsel %vm4433, %v5491, 0
      %v5579 = vsel %vm4433, %v5492, 0
      %v5582 = vsel %vm4433, %v5493, 0
      %v5585 = vsel %vm4433, %v5494, 0
      %v5588 = vsel %vm4433, %v5495, 0
      %v5591 = vsel %vm4433, %v5496, 0
      %v5594 = vsel %vm4433, %v5497, 0
      %v5597 = vsel %vm4433, %v5498, 0
      %v5600 = vsel %vm4433, %v5499, 0
      %v5603 = vsel %vm4433, %v5500, 0
      %v5606 = vsel %vm4433, %v5501, 0
      %v5609 = vsel %vm4433, %v5502, 0
      %v5612 = vsel %vm4433, %v5503, 0
      %v5615 = vsel %vm4433, %v5504, 0
      %v5618 = vsel %vm4433, %v5505, 0
      %v5621 = vsel %vm4433, %v5506, 0
      %v5624 = vsel %vm4433, %v5507, 0
      %v5627 = vsel %vm4433, %v5508, 0
      %v5630 = vsel %vm4433, %v5509, 0
      %v5633 = vsel %vm4433, %v5510, 0
      %v5636 = vsel %vm4433, %v5511, 0
      %v5639 = vsel %vm4433, %v5512, 0
      %v5642 = vsel %vm4433, %v5513, 0
      %v5645 = vsel %vm4433, %v5514, 0
      %v5648 = vsel %vm4433, %v5515, 0
      %v5651 = vsel %vm4433, %v5516, 0
      %v5654 = vsel %vm4433, %v5517, 0
      %v5657 = vsel %vm4433, %v5518, 0
      %v5660 = vsel %vm4433, %v5519, 0
      %v5663 = vsel %vm4433, %v5520, 0
      %v5666 = vsel %vm4433, %v5521, 0
      %5668 = vmatpush.msra.mxu0 0.0
      %5669 = vmatpush.msra.mxu0 0.0
      %5670 = vmatpush.msra.mxu0 0.0
      %5671 = vmatpush.msra.mxu0 0.0
      %5672 = vmatpush.msra.mxu0 0.0
      %5673 = vmatpush.msra.mxu0 0.0
      %5674 = vmatpush.msra.mxu0 0.0
      %5675 = vmatpush.msra.mxu0 0.0
      %5676 = vmatpush.msra.mxu0 0.0
      %5677 = vmatpush.msra.mxu0 0.0
      %5678 = vmatpush.msra.mxu0 0.0
      %5679 = vmatpush.msra.mxu0 0.0
      %5680 = vmatpush.msra.mxu0 0.0
      %5681 = vmatpush.msra.mxu0 0.0
      %5682 = vmatpush.msra.mxu0 0.0
      %5683 = vmatpush.msra.mxu0 %v5523
      %5684 = vmatmul.f32.gmra.mxu0 %v5525
      %v5685 = vpop.f32.mrf.mxu0
      %v5686 = vadd.f32 0.0, %v5685
      %5687 = vmatmul.f32.gmra.mxu0 %v5528
      %v5688 = vpop.f32.mrf.mxu0
      %v5689 = vadd.f32 0.0, %v5688
      %5690 = vmatmul.f32.gmra.mxu0 %v5531
      %v5691 = vpop.f32.mrf.mxu0
      %v5692 = vadd.f32 0.0, %v5691
      %5693 = vmatmul.f32.gmra.mxu0 %v5534
      %v5694 = vpop.f32.mrf.mxu0
      %v5695 = vadd.f32 0.0, %v5694
      %5696 = vmatmul.f32.gmra.mxu0 %v5537
      %v5697 = vpop.f32.mrf.mxu0
      %v5698 = vadd.f32 0.0, %v5697
      %5699 = vmatmul.f32.gmra.mxu0 %v5540
      %v5700 = vpop.f32.mrf.mxu0
      %v5701 = vadd.f32 0.0, %v5700
      %5702 = vmatmul.f32.gmra.mxu0 %v5543
      %v5703 = vpop.f32.mrf.mxu0
      %v5704 = vadd.f32 0.0, %v5703
      %5705 = vmatmul.f32.gmra.mxu0 %v5546
      %v5706 = vpop.f32.mrf.mxu0
      %v5707 = vadd.f32 0.0, %v5706
      %5708 = vmatmul.f32.gmra.mxu0 %v5549
      %v5709 = vpop.f32.mrf.mxu0
      %v5710 = vadd.f32 0.0, %v5709
      %5711 = vmatmul.f32.gmra.mxu0 %v5552
      %v5712 = vpop.f32.mrf.mxu0
      %v5713 = vadd.f32 0.0, %v5712
      %5714 = vmatmul.f32.gmra.mxu0 %v5555
      %v5715 = vpop.f32.mrf.mxu0
      %v5716 = vadd.f32 0.0, %v5715
      %5717 = vmatmul.f32.gmra.mxu0 %v5558
      %v5718 = vpop.f32.mrf.mxu0
      %v5719 = vadd.f32 0.0, %v5718
      %5720 = vmatmul.f32.gmra.mxu0 %v5561
      %v5721 = vpop.f32.mrf.mxu0
      %v5722 = vadd.f32 0.0, %v5721
      %5723 = vmatmul.f32.gmra.mxu0 %v5564
      %v5724 = vpop.f32.mrf.mxu0
      %v5725 = vadd.f32 0.0, %v5724
      %5726 = vmatmul.f32.gmra.mxu0 %v5567
      %v5727 = vpop.f32.mrf.mxu0
      %v5728 = vadd.f32 0.0, %v5727
      %5729 = vmatmul.f32.gmra.mxu0 %v5570
      %v5730 = vpop.f32.mrf.mxu0
      %v5731 = vadd.f32 0.0, %v5730
      %5732 = vmatmul.f32.gmra.mxu0 %v5573
      %v5733 = vpop.f32.mrf.mxu0
      %v5734 = vadd.f32 0.0, %v5733
      %5735 = vmatmul.f32.gmra.mxu0 %v5576
      %v5736 = vpop.f32.mrf.mxu0
      %v5737 = vadd.f32 0.0, %v5736
      %5738 = vmatmul.f32.gmra.mxu0 %v5579
      %v5739 = vpop.f32.mrf.mxu0
      %v5740 = vadd.f32 0.0, %v5739
      %5741 = vmatmul.f32.gmra.mxu0 %v5582
      %v5742 = vpop.f32.mrf.mxu0
      %v5743 = vadd.f32 0.0, %v5742
      %5744 = vmatmul.f32.gmra.mxu0 %v5585
      %v5745 = vpop.f32.mrf.mxu0
      %v5746 = vadd.f32 0.0, %v5745
      %5747 = vmatmul.f32.gmra.mxu0 %v5588
      %v5748 = vpop.f32.mrf.mxu0
      %v5749 = vadd.f32 0.0, %v5748
      %5750 = vmatmul.f32.gmra.mxu0 %v5591
      %v5751 = vpop.f32.mrf.mxu0
      %v5752 = vadd.f32 0.0, %v5751
      %5753 = vmatmul.f32.gmra.mxu0 %v5594
      %v5754 = vpop.f32.mrf.mxu0
      %v5755 = vadd.f32 0.0, %v5754
      %5756 = vmatmul.f32.gmra.mxu0 %v5597
      %v5757 = vpop.f32.mrf.mxu0
      %v5758 = vadd.f32 0.0, %v5757
      %5759 = vmatmul.f32.gmra.mxu0 %v5600
      %v5760 = vpop.f32.mrf.mxu0
      %v5761 = vadd.f32 0.0, %v5760
      %5762 = vmatmul.f32.gmra.mxu0 %v5603
      %v5763 = vpop.f32.mrf.mxu0
      %v5764 = vadd.f32 0.0, %v5763
      %5765 = vmatmul.f32.gmra.mxu0 %v5606
      %v5766 = vpop.f32.mrf.mxu0
      %v5767 = vadd.f32 0.0, %v5766
      %5768 = vmatmul.f32.gmra.mxu0 %v5609
      %v5769 = vpop.f32.mrf.mxu0
      %v5770 = vadd.f32 0.0, %v5769
      %5771 = vmatmul.f32.gmra.mxu0 %v5612
      %v5772 = vpop.f32.mrf.mxu0
      %v5773 = vadd.f32 0.0, %v5772
      %5774 = vmatmul.f32.gmra.mxu0 %v5615
      %v5775 = vpop.f32.mrf.mxu0
      %v5776 = vadd.f32 0.0, %v5775
      %5777 = vmatmul.f32.gmra.mxu0 %v5618
      %v5778 = vpop.f32.mrf.mxu0
      %v5779 = vadd.f32 0.0, %v5778
      %5780 = vmatmul.f32.gmra.mxu0 %v5621
      %v5781 = vpop.f32.mrf.mxu0
      %v5782 = vadd.f32 0.0, %v5781
      %5783 = vmatmul.f32.gmra.mxu0 %v5624
      %v5784 = vpop.f32.mrf.mxu0
      %v5785 = vadd.f32 0.0, %v5784
      %5786 = vmatmul.f32.gmra.mxu0 %v5627
      %v5787 = vpop.f32.mrf.mxu0
      %v5788 = vadd.f32 0.0, %v5787
      %5789 = vmatmul.f32.gmra.mxu0 %v5630
      %v5790 = vpop.f32.mrf.mxu0
      %v5791 = vadd.f32 0.0, %v5790
      %5792 = vmatmul.f32.gmra.mxu0 %v5633
      %v5793 = vpop.f32.mrf.mxu0
      %v5794 = vadd.f32 0.0, %v5793
      %5795 = vmatmul.f32.gmra.mxu0 %v5636
      %v5796 = vpop.f32.mrf.mxu0
      %v5797 = vadd.f32 0.0, %v5796
      %5798 = vmatmul.f32.gmra.mxu0 %v5639
      %v5799 = vpop.f32.mrf.mxu0
      %v5800 = vadd.f32 0.0, %v5799
      %5801 = vmatmul.f32.gmra.mxu0 %v5642
      %v5802 = vpop.f32.mrf.mxu0
      %v5803 = vadd.f32 0.0, %v5802
      %5804 = vmatmul.f32.gmra.mxu0 %v5645
      %v5805 = vpop.f32.mrf.mxu0
      %v5806 = vadd.f32 0.0, %v5805
      %5807 = vmatmul.f32.gmra.mxu0 %v5648
      %v5808 = vpop.f32.mrf.mxu0
      %v5809 = vadd.f32 0.0, %v5808
      %5810 = vmatmul.f32.gmra.mxu0 %v5651
      %v5811 = vpop.f32.mrf.mxu0
      %v5812 = vadd.f32 0.0, %v5811
      %5813 = vmatmul.f32.gmra.mxu0 %v5654
      %v5814 = vpop.f32.mrf.mxu0
      %v5815 = vadd.f32 0.0, %v5814
      %5816 = vmatmul.f32.gmra.mxu0 %v5657
      %v5817 = vpop.f32.mrf.mxu0
      %v5818 = vadd.f32 0.0, %v5817
      %5819 = vmatmul.f32.gmra.mxu0 %v5660
      %v5820 = vpop.f32.mrf.mxu0
      %v5821 = vadd.f32 0.0, %v5820
      %5822 = vmatmul.f32.gmra.mxu0 %v5663
      %v5823 = vpop.f32.mrf.mxu0
      %v5824 = vadd.f32 0.0, %v5823
      %5825 = vmatmul.f32.gmra.mxu0 %v5666
      %v5826 = vpop.f32.mrf.mxu0
      %v5827 = vadd.f32 0.0, %v5826
      %5828 = vdwg.mxu0
      %v5830 = vsel %vm4433, %v5425, 0
      %v5833 = vsel %vm4433, %v5426, 0
      %v5836 = vsel %vm4433, %v5427, 0
      %v5839 = vsel %vm4433, %v5428, 0
      %v5842 = vsel %vm4433, %v5429, 0
      %v5845 = vsel %vm4433, %v5430, 0
      %v5848 = vsel %vm4433, %v5431, 0
      %v5851 = vsel %vm4433, %v5432, 0
      %v5854 = vsel %vm4433, %v5433, 0
      %v5857 = vsel %vm4433, %v5434, 0
      %v5860 = vsel %vm4433, %v5435, 0
      %v5863 = vsel %vm4433, %v5436, 0
      %v5866 = vsel %vm4433, %v5437, 0
      %v5869 = vsel %vm4433, %v5438, 0
      %v5872 = vsel %vm4433, %v5439, 0
      %v5875 = vsel %vm4433, %v5440, 0
      %v5878 = vsel %vm4433, %v5441, 0
      %v5881 = vsel %vm4433, %v5442, 0
      %v5884 = vsel %vm4433, %v5443, 0
      %v5887 = vsel %vm4433, %v5444, 0
      %v5890 = vsel %vm4433, %v5445, 0
      %v5893 = vsel %vm4433, %v5446, 0
      %v5896 = vsel %vm4433, %v5447, 0
      %v5899 = vsel %vm4433, %v5448, 0
      %v5902 = vsel %vm4433, %v5449, 0
      %v5905 = vsel %vm4433, %v5450, 0
      %v5908 = vsel %vm4433, %v5451, 0
      %v5911 = vsel %vm4433, %v5452, 0
      %v5914 = vsel %vm4433, %v5453, 0
      %v5917 = vsel %vm4433, %v5454, 0
      %v5920 = vsel %vm4433, %v5455, 0
      %v5923 = vsel %vm4433, %v5456, 0
      %v5926 = vsel %vm4433, %v5457, 0
      %v5929 = vsel %vm4433, %v5458, 0
      %v5932 = vsel %vm4433, %v5459, 0
      %v5935 = vsel %vm4433, %v5460, 0
      %v5938 = vsel %vm4433, %v5461, 0
      %v5941 = vsel %vm4433, %v5462, 0
      %v5944 = vsel %vm4433, %v5463, 0
      %v5947 = vsel %vm4433, %v5464, 0
      %v5950 = vsel %vm4433, %v5465, 0
      %v5953 = vsel %vm4433, %v5466, 0
      %v5956 = vsel %vm4433, %v5467, 0
      %v5959 = vsel %vm4433, %v5468, 0
      %v5962 = vsel %vm4433, %v5469, 0
      %v5965 = vsel %vm4433, %v5470, 0
      %v5968 = vsel %vm4433, %v5471, 0
      %v5971 = vsel %vm4433, %v5472, 0
      %5973 = vmatpush.msra.mxu0 0.0
      %5974 = vmatpush.msra.mxu0 0.0
      %5975 = vmatpush.msra.mxu0 0.0
      %5976 = vmatpush.msra.mxu0 0.0
      %5977 = vmatpush.msra.mxu0 0.0
      %5978 = vmatpush.msra.mxu0 0.0
      %5979 = vmatpush.msra.mxu0 0.0
      %5980 = vmatpush.msra.mxu0 0.0
      %5981 = vmatpush.msra.mxu0 0.0
      %5982 = vmatpush.msra.mxu0 0.0
      %5983 = vmatpush.msra.mxu0 0.0
      %5984 = vmatpush.msra.mxu0 0.0
      %5985 = vmatpush.msra.mxu0 0.0
      %5986 = vmatpush.msra.mxu0 0.0
      %5987 = vmatpush.msra.mxu0 0.0
      %5988 = vmatpush.msra.mxu0 %v5473
      %5989 = vmatmul.f32.gmra.mxu0 %v5830
      %v5990 = vpop.f32.mrf.mxu0
      %v5991 = vadd.f32 %v5686, %v5990
      %5992 = vmatmul.f32.gmra.mxu0 %v5833
      %v5993 = vpop.f32.mrf.mxu0
      %v5994 = vadd.f32 %v5689, %v5993
      %5995 = vmatmul.f32.gmra.mxu0 %v5836
      %v5996 = vpop.f32.mrf.mxu0
      %v5997 = vadd.f32 %v5692, %v5996
      %5998 = vmatmul.f32.gmra.mxu0 %v5839
      %v5999 = vpop.f32.mrf.mxu0
      %v6000 = vadd.f32 %v5695, %v5999
      %6001 = vmatmul.f32.gmra.mxu0 %v5842
      %v6002 = vpop.f32.mrf.mxu0
      %v6003 = vadd.f32 %v5698, %v6002
      %6004 = vmatmul.f32.gmra.mxu0 %v5845
      %v6005 = vpop.f32.mrf.mxu0
      %v6006 = vadd.f32 %v5701, %v6005
      %6007 = vmatmul.f32.gmra.mxu0 %v5848
      %v6008 = vpop.f32.mrf.mxu0
      %v6009 = vadd.f32 %v5704, %v6008
      %6010 = vmatmul.f32.gmra.mxu0 %v5851
      %v6011 = vpop.f32.mrf.mxu0
      %v6012 = vadd.f32 %v5707, %v6011
      %6013 = vmatmul.f32.gmra.mxu0 %v5854
      %v6014 = vpop.f32.mrf.mxu0
      %v6015 = vadd.f32 %v5710, %v6014
      %6016 = vmatmul.f32.gmra.mxu0 %v5857
      %v6017 = vpop.f32.mrf.mxu0
      %v6018 = vadd.f32 %v5713, %v6017
      %6019 = vmatmul.f32.gmra.mxu0 %v5860
      %v6020 = vpop.f32.mrf.mxu0
      %v6021 = vadd.f32 %v5716, %v6020
      %6022 = vmatmul.f32.gmra.mxu0 %v5863
      %v6023 = vpop.f32.mrf.mxu0
      %v6024 = vadd.f32 %v5719, %v6023
      %6025 = vmatmul.f32.gmra.mxu0 %v5866
      %v6026 = vpop.f32.mrf.mxu0
      %v6027 = vadd.f32 %v5722, %v6026
      %6028 = vmatmul.f32.gmra.mxu0 %v5869
      %v6029 = vpop.f32.mrf.mxu0
      %v6030 = vadd.f32 %v5725, %v6029
      %6031 = vmatmul.f32.gmra.mxu0 %v5872
      %v6032 = vpop.f32.mrf.mxu0
      %v6033 = vadd.f32 %v5728, %v6032
      %6034 = vmatmul.f32.gmra.mxu0 %v5875
      %v6035 = vpop.f32.mrf.mxu0
      %v6036 = vadd.f32 %v5731, %v6035
      %6037 = vmatmul.f32.gmra.mxu0 %v5878
      %v6038 = vpop.f32.mrf.mxu0
      %v6039 = vadd.f32 %v5734, %v6038
      %6040 = vmatmul.f32.gmra.mxu0 %v5881
      %v6041 = vpop.f32.mrf.mxu0
      %v6042 = vadd.f32 %v5737, %v6041
      %6043 = vmatmul.f32.gmra.mxu0 %v5884
      %v6044 = vpop.f32.mrf.mxu0
      %v6045 = vadd.f32 %v5740, %v6044
      %6046 = vmatmul.f32.gmra.mxu0 %v5887
      %v6047 = vpop.f32.mrf.mxu0
      %v6048 = vadd.f32 %v5743, %v6047
      %6049 = vmatmul.f32.gmra.mxu0 %v5890
      %v6050 = vpop.f32.mrf.mxu0
      %v6051 = vadd.f32 %v5746, %v6050
      %6052 = vmatmul.f32.gmra.mxu0 %v5893
      %v6053 = vpop.f32.mrf.mxu0
      %v6054 = vadd.f32 %v5749, %v6053
      %6055 = vmatmul.f32.gmra.mxu0 %v5896
      %v6056 = vpop.f32.mrf.mxu0
      %v6057 = vadd.f32 %v5752, %v6056
      %6058 = vmatmul.f32.gmra.mxu0 %v5899
      %v6059 = vpop.f32.mrf.mxu0
      %v6060 = vadd.f32 %v5755, %v6059
      %6061 = vmatmul.f32.gmra.mxu0 %v5902
      %v6062 = vpop.f32.mrf.mxu0
      %v6063 = vadd.f32 %v5758, %v6062
      %6064 = vmatmul.f32.gmra.mxu0 %v5905
      %v6065 = vpop.f32.mrf.mxu0
      %v6066 = vadd.f32 %v5761, %v6065
      %6067 = vmatmul.f32.gmra.mxu0 %v5908
      %v6068 = vpop.f32.mrf.mxu0
      %v6069 = vadd.f32 %v5764, %v6068
      %6070 = vmatmul.f32.gmra.mxu0 %v5911
      %v6071 = vpop.f32.mrf.mxu0
      %v6072 = vadd.f32 %v5767, %v6071
      %6073 = vmatmul.f32.gmra.mxu0 %v5914
      %v6074 = vpop.f32.mrf.mxu0
      %v6075 = vadd.f32 %v5770, %v6074
      %6076 = vmatmul.f32.gmra.mxu0 %v5917
      %v6077 = vpop.f32.mrf.mxu0
      %v6078 = vadd.f32 %v5773, %v6077
      %6079 = vmatmul.f32.gmra.mxu0 %v5920
      %v6080 = vpop.f32.mrf.mxu0
      %v6081 = vadd.f32 %v5776, %v6080
      %6082 = vmatmul.f32.gmra.mxu0 %v5923
      %v6083 = vpop.f32.mrf.mxu0
      %v6084 = vadd.f32 %v5779, %v6083
      %6085 = vmatmul.f32.gmra.mxu0 %v5926
      %v6086 = vpop.f32.mrf.mxu0
      %v6087 = vadd.f32 %v5782, %v6086
      %6088 = vmatmul.f32.gmra.mxu0 %v5929
      %v6089 = vpop.f32.mrf.mxu0
      %v6090 = vadd.f32 %v5785, %v6089
      %6091 = vmatmul.f32.gmra.mxu0 %v5932
      %v6092 = vpop.f32.mrf.mxu0
      %v6093 = vadd.f32 %v5788, %v6092
      %6094 = vmatmul.f32.gmra.mxu0 %v5935
      %v6095 = vpop.f32.mrf.mxu0
      %v6096 = vadd.f32 %v5791, %v6095
      %6097 = vmatmul.f32.gmra.mxu0 %v5938
      %v6098 = vpop.f32.mrf.mxu0
      %v6099 = vadd.f32 %v5794, %v6098
      %6100 = vmatmul.f32.gmra.mxu0 %v5941
      %v6101 = vpop.f32.mrf.mxu0
      %v6102 = vadd.f32 %v5797, %v6101
      %6103 = vmatmul.f32.gmra.mxu0 %v5944
      %v6104 = vpop.f32.mrf.mxu0
      %v6105 = vadd.f32 %v5800, %v6104
      %6106 = vmatmul.f32.gmra.mxu0 %v5947
      %v6107 = vpop.f32.mrf.mxu0
      %v6108 = vadd.f32 %v5803, %v6107
      %6109 = vmatmul.f32.gmra.mxu0 %v5950
      %v6110 = vpop.f32.mrf.mxu0
      %v6111 = vadd.f32 %v5806, %v6110
      %6112 = vmatmul.f32.gmra.mxu0 %v5953
      %v6113 = vpop.f32.mrf.mxu0
      %v6114 = vadd.f32 %v5809, %v6113
      %6115 = vmatmul.f32.gmra.mxu0 %v5956
      %v6116 = vpop.f32.mrf.mxu0
      %v6117 = vadd.f32 %v5812, %v6116
      %6118 = vmatmul.f32.gmra.mxu0 %v5959
      %v6119 = vpop.f32.mrf.mxu0
      %v6120 = vadd.f32 %v5815, %v6119
      %6121 = vmatmul.f32.gmra.mxu0 %v5962
      %v6122 = vpop.f32.mrf.mxu0
      %v6123 = vadd.f32 %v5818, %v6122
      %6124 = vmatmul.f32.gmra.mxu0 %v5965
      %v6125 = vpop.f32.mrf.mxu0
      %v6126 = vadd.f32 %v5821, %v6125
      %6127 = vmatmul.f32.gmra.mxu0 %v5968
      %v6128 = vpop.f32.mrf.mxu0
      %v6129 = vadd.f32 %v5824, %v6128
      %6130 = vmatmul.f32.gmra.mxu0 %v5971
      %v6131 = vpop.f32.mrf.mxu0
      %v6132 = vadd.f32 %v5827, %v6131
      %6133 = vdwg.mxu0
      %v6134 = vld [vmem:[#allocation2 + $0x2] sm:$0xff]
      %v6135 = vld [vmem:[#allocation2 + $0xa] sm:$0xff]
      %v6136 = vld [vmem:[#allocation2 + $0x12] sm:$0xff]
      %v6137 = vld [vmem:[#allocation2 + $0x1a] sm:$0xff]
      %v6138 = vld [vmem:[#allocation2 + $0x22] sm:$0xff]
      %v6139 = vld [vmem:[#allocation2 + $0x2a] sm:$0xff]
      %v6140 = vld [vmem:[#allocation2 + $0x32] sm:$0xff]
      %v6141 = vld [vmem:[#allocation2 + $0x3a] sm:$0xff]
      %v6142 = vld [vmem:[#allocation2 + $0x42] sm:$0xff]
      %v6143 = vld [vmem:[#allocation2 + $0x4a] sm:$0xff]
      %v6144 = vld [vmem:[#allocation2 + $0x52] sm:$0xff]
      %v6145 = vld [vmem:[#allocation2 + $0x5a] sm:$0xff]
      %v6146 = vld [vmem:[#allocation2 + $0x62] sm:$0xff]
      %v6147 = vld [vmem:[#allocation2 + $0x6a] sm:$0xff]
      %v6148 = vld [vmem:[#allocation2 + $0x72] sm:$0xff]
      %v6149 = vld [vmem:[#allocation2 + $0x7a] sm:$0xff]
      %v6150 = vld [vmem:[#allocation2 + $0x82] sm:$0xff]
      %v6151 = vld [vmem:[#allocation2 + $0x8a] sm:$0xff]
      %v6152 = vld [vmem:[#allocation2 + $0x92] sm:$0xff]
      %v6153 = vld [vmem:[#allocation2 + $0x9a] sm:$0xff]
      %v6154 = vld [vmem:[#allocation2 + $0xa2] sm:$0xff]
      %v6155 = vld [vmem:[#allocation2 + $0xaa] sm:$0xff]
      %v6156 = vld [vmem:[#allocation2 + $0xb2] sm:$0xff]
      %v6157 = vld [vmem:[#allocation2 + $0xba] sm:$0xff]
      %v6158 = vld [vmem:[#allocation2 + $0xc2] sm:$0xff]
      %v6159 = vld [vmem:[#allocation2 + $0xca] sm:$0xff]
      %v6160 = vld [vmem:[#allocation2 + $0xd2] sm:$0xff]
      %v6161 = vld [vmem:[#allocation2 + $0xda] sm:$0xff]
      %v6162 = vld [vmem:[#allocation2 + $0xe2] sm:$0xff]
      %v6163 = vld [vmem:[#allocation2 + $0xea] sm:$0xff]
      %v6164 = vld [vmem:[#allocation2 + $0xf2] sm:$0xff]
      %v6165 = vld [vmem:[#allocation2 + $0xfa] sm:$0xff]
      %v6166 = vld [vmem:[#allocation2 + $0x102] sm:$0xff]
      %v6167 = vld [vmem:[#allocation2 + $0x10a] sm:$0xff]
      %v6168 = vld [vmem:[#allocation2 + $0x112] sm:$0xff]
      %v6169 = vld [vmem:[#allocation2 + $0x11a] sm:$0xff]
      %v6170 = vld [vmem:[#allocation2 + $0x122] sm:$0xff]
      %v6171 = vld [vmem:[#allocation2 + $0x12a] sm:$0xff]
      %v6172 = vld [vmem:[#allocation2 + $0x132] sm:$0xff]
      %v6173 = vld [vmem:[#allocation2 + $0x13a] sm:$0xff]
      %v6174 = vld [vmem:[#allocation2 + $0x142] sm:$0xff]
      %v6175 = vld [vmem:[#allocation2 + $0x14a] sm:$0xff]
      %v6176 = vld [vmem:[#allocation2 + $0x152] sm:$0xff]
      %v6177 = vld [vmem:[#allocation2 + $0x15a] sm:$0xff]
      %v6178 = vld [vmem:[#allocation2 + $0x162] sm:$0xff]
      %v6179 = vld [vmem:[#allocation2 + $0x16a] sm:$0xff]
      %v6180 = vld [vmem:[#allocation2 + $0x172] sm:$0xff]
      %v6181 = vld [vmem:[#allocation2 + $0x17a] sm:$0xff]
      %s6182 = scalar_lea.vmem %s6, 16
      %v6183 = vld [vmem:[%s6182] sm:$0xff]
      %v6185 = vsel %vm4433, %v6134, 0
      %v6188 = vsel %vm4433, %v6135, 0
      %v6191 = vsel %vm4433, %v6136, 0
      %v6194 = vsel %vm4433, %v6137, 0
      %v6197 = vsel %vm4433, %v6138, 0
      %v6200 = vsel %vm4433, %v6139, 0
      %v6203 = vsel %vm4433, %v6140, 0
      %v6206 = vsel %vm4433, %v6141, 0
      %v6209 = vsel %vm4433, %v6142, 0
      %v6212 = vsel %vm4433, %v6143, 0
      %v6215 = vsel %vm4433, %v6144, 0
      %v6218 = vsel %vm4433, %v6145, 0
      %v6221 = vsel %vm4433, %v6146, 0
      %v6224 = vsel %vm4433, %v6147, 0
      %v6227 = vsel %vm4433, %v6148, 0
      %v6230 = vsel %vm4433, %v6149, 0
      %v6233 = vsel %vm4433, %v6150, 0
      %v6236 = vsel %vm4433, %v6151, 0
      %v6239 = vsel %vm4433, %v6152, 0
      %v6242 = vsel %vm4433, %v6153, 0
      %v6245 = vsel %vm4433, %v6154, 0
      %v6248 = vsel %vm4433, %v6155, 0
      %v6251 = vsel %vm4433, %v6156, 0
      %v6254 = vsel %vm4433, %v6157, 0
      %v6257 = vsel %vm4433, %v6158, 0
      %v6260 = vsel %vm4433, %v6159, 0
      %v6263 = vsel %vm4433, %v6160, 0
      %v6266 = vsel %vm4433, %v6161, 0
      %v6269 = vsel %vm4433, %v6162, 0
      %v6272 = vsel %vm4433, %v6163, 0
      %v6275 = vsel %vm4433, %v6164, 0
      %v6278 = vsel %vm4433, %v6165, 0
      %v6281 = vsel %vm4433, %v6166, 0
      %v6284 = vsel %vm4433, %v6167, 0
      %v6287 = vsel %vm4433, %v6168, 0
      %v6290 = vsel %vm4433, %v6169, 0
      %v6293 = vsel %vm4433, %v6170, 0
      %v6296 = vsel %vm4433, %v6171, 0
      %v6299 = vsel %vm4433, %v6172, 0
      %v6302 = vsel %vm4433, %v6173, 0
      %v6305 = vsel %vm4433, %v6174, 0
      %v6308 = vsel %vm4433, %v6175, 0
      %v6311 = vsel %vm4433, %v6176, 0
      %v6314 = vsel %vm4433, %v6177, 0
      %v6317 = vsel %vm4433, %v6178, 0
      %v6320 = vsel %vm4433, %v6179, 0
      %v6323 = vsel %vm4433, %v6180, 0
      %v6326 = vsel %vm4433, %v6181, 0
      %6328 = vmatpush.msra.mxu0 0.0
      %6329 = vmatpush.msra.mxu0 0.0
      %6330 = vmatpush.msra.mxu0 0.0
      %6331 = vmatpush.msra.mxu0 0.0
      %6332 = vmatpush.msra.mxu0 0.0
      %6333 = vmatpush.msra.mxu0 0.0
      %6334 = vmatpush.msra.mxu0 0.0
      %6335 = vmatpush.msra.mxu0 0.0
      %6336 = vmatpush.msra.mxu0 0.0
      %6337 = vmatpush.msra.mxu0 0.0
      %6338 = vmatpush.msra.mxu0 0.0
      %6339 = vmatpush.msra.mxu0 0.0
      %6340 = vmatpush.msra.mxu0 0.0
      %6341 = vmatpush.msra.mxu0 0.0
      %6342 = vmatpush.msra.mxu0 0.0
      %6343 = vmatpush.msra.mxu0 %v6183
      %6344 = vmatmul.f32.gmra.mxu0 %v6185
      %v6345 = vpop.f32.mrf.mxu0
      %v6346 = vadd.f32 0.0, %v6345
      %6347 = vmatmul.f32.gmra.mxu0 %v6188
      %v6348 = vpop.f32.mrf.mxu0
      %v6349 = vadd.f32 0.0, %v6348
      %6350 = vmatmul.f32.gmra.mxu0 %v6191
      %v6351 = vpop.f32.mrf.mxu0
      %v6352 = vadd.f32 0.0, %v6351
      %6353 = vmatmul.f32.gmra.mxu0 %v6194
      %v6354 = vpop.f32.mrf.mxu0
      %v6355 = vadd.f32 0.0, %v6354
      %6356 = vmatmul.f32.gmra.mxu0 %v6197
      %v6357 = vpop.f32.mrf.mxu0
      %v6358 = vadd.f32 0.0, %v6357
      %6359 = vmatmul.f32.gmra.mxu0 %v6200
      %v6360 = vpop.f32.mrf.mxu0
      %v6361 = vadd.f32 0.0, %v6360
      %6362 = vmatmul.f32.gmra.mxu0 %v6203
      %v6363 = vpop.f32.mrf.mxu0
      %v6364 = vadd.f32 0.0, %v6363
      %6365 = vmatmul.f32.gmra.mxu0 %v6206
      %v6366 = vpop.f32.mrf.mxu0
      %v6367 = vadd.f32 0.0, %v6366
      %6368 = vmatmul.f32.gmra.mxu0 %v6209
      %v6369 = vpop.f32.mrf.mxu0
      %v6370 = vadd.f32 0.0, %v6369
      %6371 = vmatmul.f32.gmra.mxu0 %v6212
      %v6372 = vpop.f32.mrf.mxu0
      %v6373 = vadd.f32 0.0, %v6372
      %6374 = vmatmul.f32.gmra.mxu0 %v6215
      %v6375 = vpop.f32.mrf.mxu0
      %v6376 = vadd.f32 0.0, %v6375
      %6377 = vmatmul.f32.gmra.mxu0 %v6218
      %v6378 = vpop.f32.mrf.mxu0
      %v6379 = vadd.f32 0.0, %v6378
      %6380 = vmatmul.f32.gmra.mxu0 %v6221
      %v6381 = vpop.f32.mrf.mxu0
      %v6382 = vadd.f32 0.0, %v6381
      %6383 = vmatmul.f32.gmra.mxu0 %v6224
      %v6384 = vpop.f32.mrf.mxu0
      %v6385 = vadd.f32 0.0, %v6384
      %6386 = vmatmul.f32.gmra.mxu0 %v6227
      %v6387 = vpop.f32.mrf.mxu0
      %v6388 = vadd.f32 0.0, %v6387
      %6389 = vmatmul.f32.gmra.mxu0 %v6230
      %v6390 = vpop.f32.mrf.mxu0
      %v6391 = vadd.f32 0.0, %v6390
      %6392 = vmatmul.f32.gmra.mxu0 %v6233
      %v6393 = vpop.f32.mrf.mxu0
      %v6394 = vadd.f32 0.0, %v6393
      %6395 = vmatmul.f32.gmra.mxu0 %v6236
      %v6396 = vpop.f32.mrf.mxu0
      %v6397 = vadd.f32 0.0, %v6396
      %6398 = vmatmul.f32.gmra.mxu0 %v6239
      %v6399 = vpop.f32.mrf.mxu0
      %v6400 = vadd.f32 0.0, %v6399
      %6401 = vmatmul.f32.gmra.mxu0 %v6242
      %v6402 = vpop.f32.mrf.mxu0
      %v6403 = vadd.f32 0.0, %v6402
      %6404 = vmatmul.f32.gmra.mxu0 %v6245
      %v6405 = vpop.f32.mrf.mxu0
      %v6406 = vadd.f32 0.0, %v6405
      %6407 = vmatmul.f32.gmra.mxu0 %v6248
      %v6408 = vpop.f32.mrf.mxu0
      %v6409 = vadd.f32 0.0, %v6408
      %6410 = vmatmul.f32.gmra.mxu0 %v6251
      %v6411 = vpop.f32.mrf.mxu0
      %v6412 = vadd.f32 0.0, %v6411
      %6413 = vmatmul.f32.gmra.mxu0 %v6254
      %v6414 = vpop.f32.mrf.mxu0
      %v6415 = vadd.f32 0.0, %v6414
      %6416 = vmatmul.f32.gmra.mxu0 %v6257
      %v6417 = vpop.f32.mrf.mxu0
      %v6418 = vadd.f32 0.0, %v6417
      %6419 = vmatmul.f32.gmra.mxu0 %v6260
      %v6420 = vpop.f32.mrf.mxu0
      %v6421 = vadd.f32 0.0, %v6420
      %6422 = vmatmul.f32.gmra.mxu0 %v6263
      %v6423 = vpop.f32.mrf.mxu0
      %v6424 = vadd.f32 0.0, %v6423
      %6425 = vmatmul.f32.gmra.mxu0 %v6266
      %v6426 = vpop.f32.mrf.mxu0
      %v6427 = vadd.f32 0.0, %v6426
      %6428 = vmatmul.f32.gmra.mxu0 %v6269
      %v6429 = vpop.f32.mrf.mxu0
      %v6430 = vadd.f32 0.0, %v6429
      %6431 = vmatmul.f32.gmra.mxu0 %v6272
      %v6432 = vpop.f32.mrf.mxu0
      %v6433 = vadd.f32 0.0, %v6432
      %6434 = vmatmul.f32.gmra.mxu0 %v6275
      %v6435 = vpop.f32.mrf.mxu0
      %v6436 = vadd.f32 0.0, %v6435
      %6437 = vmatmul.f32.gmra.mxu0 %v6278
      %v6438 = vpop.f32.mrf.mxu0
      %v6439 = vadd.f32 0.0, %v6438
      %6440 = vmatmul.f32.gmra.mxu0 %v6281
      %v6441 = vpop.f32.mrf.mxu0
      %v6442 = vadd.f32 0.0, %v6441
      %6443 = vmatmul.f32.gmra.mxu0 %v6284
      %v6444 = vpop.f32.mrf.mxu0
      %v6445 = vadd.f32 0.0, %v6444
      %6446 = vmatmul.f32.gmra.mxu0 %v6287
      %v6447 = vpop.f32.mrf.mxu0
      %v6448 = vadd.f32 0.0, %v6447
      %6449 = vmatmul.f32.gmra.mxu0 %v6290
      %v6450 = vpop.f32.mrf.mxu0
      %v6451 = vadd.f32 0.0, %v6450
      %6452 = vmatmul.f32.gmra.mxu0 %v6293
      %v6453 = vpop.f32.mrf.mxu0
      %v6454 = vadd.f32 0.0, %v6453
      %6455 = vmatmul.f32.gmra.mxu0 %v6296
      %v6456 = vpop.f32.mrf.mxu0
      %v6457 = vadd.f32 0.0, %v6456
      %6458 = vmatmul.f32.gmra.mxu0 %v6299
      %v6459 = vpop.f32.mrf.mxu0
      %v6460 = vadd.f32 0.0, %v6459
      %6461 = vmatmul.f32.gmra.mxu0 %v6302
      %v6462 = vpop.f32.mrf.mxu0
      %v6463 = vadd.f32 0.0, %v6462
      %6464 = vmatmul.f32.gmra.mxu0 %v6305
      %v6465 = vpop.f32.mrf.mxu0
      %v6466 = vadd.f32 0.0, %v6465
      %6467 = vmatmul.f32.gmra.mxu0 %v6308
      %v6468 = vpop.f32.mrf.mxu0
      %v6469 = vadd.f32 0.0, %v6468
      %6470 = vmatmul.f32.gmra.mxu0 %v6311
      %v6471 = vpop.f32.mrf.mxu0
      %v6472 = vadd.f32 0.0, %v6471
      %6473 = vmatmul.f32.gmra.mxu0 %v6314
      %v6474 = vpop.f32.mrf.mxu0
      %v6475 = vadd.f32 0.0, %v6474
      %6476 = vmatmul.f32.gmra.mxu0 %v6317
      %v6477 = vpop.f32.mrf.mxu0
      %v6478 = vadd.f32 0.0, %v6477
      %6479 = vmatmul.f32.gmra.mxu0 %v6320
      %v6480 = vpop.f32.mrf.mxu0
      %v6481 = vadd.f32 0.0, %v6480
      %6482 = vmatmul.f32.gmra.mxu0 %v6323
      %v6483 = vpop.f32.mrf.mxu0
      %v6484 = vadd.f32 0.0, %v6483
      %6485 = vmatmul.f32.gmra.mxu0 %v6326
      %v6486 = vpop.f32.mrf.mxu0
      %v6487 = vadd.f32 0.0, %v6486
      %6488 = vdwg.mxu0
      %v6489 = vadd.f32 %v5991, %v6346
      %v6490 = vadd.f32 %v5994, %v6349
      %v6491 = vadd.f32 %v5997, %v6352
      %v6492 = vadd.f32 %v6000, %v6355
      %v6493 = vadd.f32 %v6003, %v6358
      %v6494 = vadd.f32 %v6006, %v6361
      %v6495 = vadd.f32 %v6009, %v6364
      %v6496 = vadd.f32 %v6012, %v6367
      %v6497 = vadd.f32 %v6015, %v6370
      %v6498 = vadd.f32 %v6018, %v6373
      %v6499 = vadd.f32 %v6021, %v6376
      %v6500 = vadd.f32 %v6024, %v6379
      %v6501 = vadd.f32 %v6027, %v6382
      %v6502 = vadd.f32 %v6030, %v6385
      %v6503 = vadd.f32 %v6033, %v6388
      %v6504 = vadd.f32 %v6036, %v6391
      %v6505 = vadd.f32 %v6039, %v6394
      %v6506 = vadd.f32 %v6042, %v6397
      %v6507 = vadd.f32 %v6045, %v6400
      %v6508 = vadd.f32 %v6048, %v6403
      %v6509 = vadd.f32 %v6051, %v6406
      %v6510 = vadd.f32 %v6054, %v6409
      %v6511 = vadd.f32 %v6057, %v6412
      %v6512 = vadd.f32 %v6060, %v6415
      %v6513 = vadd.f32 %v6063, %v6418
      %v6514 = vadd.f32 %v6066, %v6421
      %v6515 = vadd.f32 %v6069, %v6424
      %v6516 = vadd.f32 %v6072, %v6427
      %v6517 = vadd.f32 %v6075, %v6430
      %v6518 = vadd.f32 %v6078, %v6433
      %v6519 = vadd.f32 %v6081, %v6436
      %v6520 = vadd.f32 %v6084, %v6439
      %v6521 = vadd.f32 %v6087, %v6442
      %v6522 = vadd.f32 %v6090, %v6445
      %v6523 = vadd.f32 %v6093, %v6448
      %v6524 = vadd.f32 %v6096, %v6451
      %v6525 = vadd.f32 %v6099, %v6454
      %v6526 = vadd.f32 %v6102, %v6457
      %v6527 = vadd.f32 %v6105, %v6460
      %v6528 = vadd.f32 %v6108, %v6463
      %v6529 = vadd.f32 %v6111, %v6466
      %v6530 = vadd.f32 %v6114, %v6469
      %v6531 = vadd.f32 %v6117, %v6472
      %v6532 = vadd.f32 %v6120, %v6475
      %v6533 = vadd.f32 %v6123, %v6478
      %v6534 = vadd.f32 %v6126, %v6481
      %v6535 = vadd.f32 %v6129, %v6484
      %v6536 = vadd.f32 %v6132, %v6487
      %v6537 = vld [vmem:[#allocation2 + $0x18] sm:$0xff]
      %v6538 = vld [vmem:[#allocation2 + $0x20] sm:$0xff]
      %v6539 = vld [vmem:[#allocation2 + $0x28] sm:$0xff]
      %v6540 = vld [vmem:[#allocation2 + $0x30] sm:$0xff]
      %v6541 = vld [vmem:[#allocation2 + $0x38] sm:$0xff]
      %v6542 = vld [vmem:[#allocation2 + $0x40] sm:$0xff]
      %v6543 = vld [vmem:[#allocation2 + $0x48] sm:$0xff]
      %v6544 = vld [vmem:[#allocation2 + $0x50] sm:$0xff]
      %v6545 = vld [vmem:[#allocation2 + $0x58] sm:$0xff]
      %v6546 = vld [vmem:[#allocation2 + $0x60] sm:$0xff]
      %v6547 = vld [vmem:[#allocation2 + $0x68] sm:$0xff]
      %v6548 = vld [vmem:[#allocation2 + $0x70] sm:$0xff]
      %v6549 = vld [vmem:[#allocation2 + $0x78] sm:$0xff]
      %v6550 = vld [vmem:[#allocation2 + $0x80] sm:$0xff]
      %v6551 = vld [vmem:[#allocation2 + $0x88] sm:$0xff]
      %v6552 = vld [vmem:[#allocation2 + $0x90] sm:$0xff]
      %v6553 = vld [vmem:[#allocation2 + $0x98] sm:$0xff]
      %v6554 = vld [vmem:[#allocation2 + $0xa0] sm:$0xff]
      %v6555 = vld [vmem:[#allocation2 + $0xa8] sm:$0xff]
      %v6556 = vld [vmem:[#allocation2 + $0xb0] sm:$0xff]
      %v6557 = vld [vmem:[#allocation2 + $0xb8] sm:$0xff]
      %v6558 = vld [vmem:[#allocation2 + $0xc0] sm:$0xff]
      %v6559 = vld [vmem:[#allocation2 + $0xc8] sm:$0xff]
      %v6560 = vld [vmem:[#allocation2 + $0xd0] sm:$0xff]
      %v6561 = vld [vmem:[#allocation2 + $0xd8] sm:$0xff]
      %v6562 = vld [vmem:[#allocation2 + $0xe0] sm:$0xff]
      %v6563 = vld [vmem:[#allocation2 + $0xe8] sm:$0xff]
      %v6564 = vld [vmem:[#allocation2 + $0xf0] sm:$0xff]
      %v6565 = vld [vmem:[#allocation2 + $0xf8] sm:$0xff]
      %v6566 = vld [vmem:[#allocation2 + $0x100] sm:$0xff]
      %v6567 = vld [vmem:[#allocation2 + $0x108] sm:$0xff]
      %v6568 = vld [vmem:[#allocation2 + $0x110] sm:$0xff]
      %v6569 = vld [vmem:[#allocation2 + $0x118] sm:$0xff]
      %v6570 = vld [vmem:[#allocation2 + $0x120] sm:$0xff]
      %v6571 = vld [vmem:[#allocation2 + $0x128] sm:$0xff]
      %v6572 = vld [vmem:[#allocation2 + $0x130] sm:$0xff]
      %v6573 = vld [vmem:[#allocation2 + $0x138] sm:$0xff]
      %v6574 = vld [vmem:[#allocation2 + $0x140] sm:$0xff]
      %v6575 = vld [vmem:[#allocation2 + $0x148] sm:$0xff]
      %v6576 = vld [vmem:[#allocation2 + $0x150] sm:$0xff]
      %v6577 = vld [vmem:[#allocation2 + $0x158] sm:$0xff]
      %v6578 = vld [vmem:[#allocation2 + $0x160] sm:$0xff]
      %v6579 = vld [vmem:[#allocation2 + $0x168] sm:$0xff]
      %v6580 = vld [vmem:[#allocation2 + $0x170] sm:$0xff]
      %v6581 = vld [vmem:[#allocation2 + $0x178] sm:$0xff]
      %v6582 = vld [vmem:[#allocation2 + $0x180] sm:$0xff]
      %v6583 = vld [vmem:[#allocation2 + $0x188] sm:$0xff]
      %v6584 = vld [vmem:[#allocation2 + $0x190] sm:$0xff]
      %s6585 = scalar_lea.vmem %s6, 24
      %v6586 = vld [vmem:[%s6585] sm:$0xff]
      %v6588 = vsel %vm4433, %v6537, 0
      %v6591 = vsel %vm4433, %v6538, 0
      %v6594 = vsel %vm4433, %v6539, 0
      %v6597 = vsel %vm4433, %v6540, 0
      %v6600 = vsel %vm4433, %v6541, 0
      %v6603 = vsel %vm4433, %v6542, 0
      %v6606 = vsel %vm4433, %v6543, 0
      %v6609 = vsel %vm4433, %v6544, 0
      %v6612 = vsel %vm4433, %v6545, 0
      %v6615 = vsel %vm4433, %v6546, 0
      %v6618 = vsel %vm4433, %v6547, 0
      %v6621 = vsel %vm4433, %v6548, 0
      %v6624 = vsel %vm4433, %v6549, 0
      %v6627 = vsel %vm4433, %v6550, 0
      %v6630 = vsel %vm4433, %v6551, 0
      %v6633 = vsel %vm4433, %v6552, 0
      %v6636 = vsel %vm4433, %v6553, 0
      %v6639 = vsel %vm4433, %v6554, 0
      %v6642 = vsel %vm4433, %v6555, 0
      %v6645 = vsel %vm4433, %v6556, 0
      %v6648 = vsel %vm4433, %v6557, 0
      %v6651 = vsel %vm4433, %v6558, 0
      %v6654 = vsel %vm4433, %v6559, 0
      %v6657 = vsel %vm4433, %v6560, 0
      %v6660 = vsel %vm4433, %v6561, 0
      %v6663 = vsel %vm4433, %v6562, 0
      %v6666 = vsel %vm4433, %v6563, 0
      %v6669 = vsel %vm4433, %v6564, 0
      %v6672 = vsel %vm4433, %v6565, 0
      %v6675 = vsel %vm4433, %v6566, 0
      %v6678 = vsel %vm4433, %v6567, 0
      %v6681 = vsel %vm4433, %v6568, 0
      %v6684 = vsel %vm4433, %v6569, 0
      %v6687 = vsel %vm4433, %v6570, 0
      %v6690 = vsel %vm4433, %v6571, 0
      %v6693 = vsel %vm4433, %v6572, 0
      %v6696 = vsel %vm4433, %v6573, 0
      %v6699 = vsel %vm4433, %v6574, 0
      %v6702 = vsel %vm4433, %v6575, 0
      %v6705 = vsel %vm4433, %v6576, 0
      %v6708 = vsel %vm4433, %v6577, 0
      %v6711 = vsel %vm4433, %v6578, 0
      %v6714 = vsel %vm4433, %v6579, 0
      %v6717 = vsel %vm4433, %v6580, 0
      %v6720 = vsel %vm4433, %v6581, 0
      %v6723 = vsel %vm4433, %v6582, 0
      %v6726 = vsel %vm4433, %v6583, 0
      %v6729 = vsel %vm4433, %v6584, 0
      %6731 = vmatpush.msra.mxu0 0.0
      %6732 = vmatpush.msra.mxu0 0.0
      %6733 = vmatpush.msra.mxu0 0.0
      %6734 = vmatpush.msra.mxu0 0.0
      %6735 = vmatpush.msra.mxu0 0.0
      %6736 = vmatpush.msra.mxu0 0.0
      %6737 = vmatpush.msra.mxu0 0.0
      %6738 = vmatpush.msra.mxu0 0.0
      %6739 = vmatpush.msra.mxu0 0.0
      %6740 = vmatpush.msra.mxu0 0.0
      %6741 = vmatpush.msra.mxu0 0.0
      %6742 = vmatpush.msra.mxu0 0.0
      %6743 = vmatpush.msra.mxu0 0.0
      %6744 = vmatpush.msra.mxu0 0.0
      %6745 = vmatpush.msra.mxu0 0.0
      %6746 = vmatpush.msra.mxu0 %v6586
      %6747 = vmatmul.f32.gmra.mxu0 %v6588
      %v6748 = vpop.f32.mrf.mxu0
      %v6749 = vadd.f32 0.0, %v6748
      %6750 = vmatmul.f32.gmra.mxu0 %v6591
      %v6751 = vpop.f32.mrf.mxu0
      %v6752 = vadd.f32 0.0, %v6751
      %6753 = vmatmul.f32.gmra.mxu0 %v6594
      %v6754 = vpop.f32.mrf.mxu0
      %v6755 = vadd.f32 0.0, %v6754
      %6756 = vmatmul.f32.gmra.mxu0 %v6597
      %v6757 = vpop.f32.mrf.mxu0
      %v6758 = vadd.f32 0.0, %v6757
      %6759 = vmatmul.f32.gmra.mxu0 %v6600
      %v6760 = vpop.f32.mrf.mxu0
      %v6761 = vadd.f32 0.0, %v6760
      %6762 = vmatmul.f32.gmra.mxu0 %v6603
      %v6763 = vpop.f32.mrf.mxu0
      %v6764 = vadd.f32 0.0, %v6763
      %6765 = vmatmul.f32.gmra.mxu0 %v6606
      %v6766 = vpop.f32.mrf.mxu0
      %v6767 = vadd.f32 0.0, %v6766
      %6768 = vmatmul.f32.gmra.mxu0 %v6609
      %v6769 = vpop.f32.mrf.mxu0
      %v6770 = vadd.f32 0.0, %v6769
      %6771 = vmatmul.f32.gmra.mxu0 %v6612
      %v6772 = vpop.f32.mrf.mxu0
      %v6773 = vadd.f32 0.0, %v6772
      %6774 = vmatmul.f32.gmra.mxu0 %v6615
      %v6775 = vpop.f32.mrf.mxu0
      %v6776 = vadd.f32 0.0, %v6775
      %6777 = vmatmul.f32.gmra.mxu0 %v6618
      %v6778 = vpop.f32.mrf.mxu0
      %v6779 = vadd.f32 0.0, %v6778
      %6780 = vmatmul.f32.gmra.mxu0 %v6621
      %v6781 = vpop.f32.mrf.mxu0
      %v6782 = vadd.f32 0.0, %v6781
      %6783 = vmatmul.f32.gmra.mxu0 %v6624
      %v6784 = vpop.f32.mrf.mxu0
      %v6785 = vadd.f32 0.0, %v6784
      %6786 = vmatmul.f32.gmra.mxu0 %v6627
      %v6787 = vpop.f32.mrf.mxu0
      %v6788 = vadd.f32 0.0, %v6787
      %6789 = vmatmul.f32.gmra.mxu0 %v6630
      %v6790 = vpop.f32.mrf.mxu0
      %v6791 = vadd.f32 0.0, %v6790
      %6792 = vmatmul.f32.gmra.mxu0 %v6633
      %v6793 = vpop.f32.mrf.mxu0
      %v6794 = vadd.f32 0.0, %v6793
      %6795 = vmatmul.f32.gmra.mxu0 %v6636
      %v6796 = vpop.f32.mrf.mxu0
      %v6797 = vadd.f32 0.0, %v6796
      %6798 = vmatmul.f32.gmra.mxu0 %v6639
      %v6799 = vpop.f32.mrf.mxu0
      %v6800 = vadd.f32 0.0, %v6799
      %6801 = vmatmul.f32.gmra.mxu0 %v6642
      %v6802 = vpop.f32.mrf.mxu0
      %v6803 = vadd.f32 0.0, %v6802
      %6804 = vmatmul.f32.gmra.mxu0 %v6645
      %v6805 = vpop.f32.mrf.mxu0
      %v6806 = vadd.f32 0.0, %v6805
      %6807 = vmatmul.f32.gmra.mxu0 %v6648
      %v6808 = vpop.f32.mrf.mxu0
      %v6809 = vadd.f32 0.0, %v6808
      %6810 = vmatmul.f32.gmra.mxu0 %v6651
      %v6811 = vpop.f32.mrf.mxu0
      %v6812 = vadd.f32 0.0, %v6811
      %6813 = vmatmul.f32.gmra.mxu0 %v6654
      %v6814 = vpop.f32.mrf.mxu0
      %v6815 = vadd.f32 0.0, %v6814
      %6816 = vmatmul.f32.gmra.mxu0 %v6657
      %v6817 = vpop.f32.mrf.mxu0
      %v6818 = vadd.f32 0.0, %v6817
      %6819 = vmatmul.f32.gmra.mxu0 %v6660
      %v6820 = vpop.f32.mrf.mxu0
      %v6821 = vadd.f32 0.0, %v6820
      %6822 = vmatmul.f32.gmra.mxu0 %v6663
      %v6823 = vpop.f32.mrf.mxu0
      %v6824 = vadd.f32 0.0, %v6823
      %6825 = vmatmul.f32.gmra.mxu0 %v6666
      %v6826 = vpop.f32.mrf.mxu0
      %v6827 = vadd.f32 0.0, %v6826
      %6828 = vmatmul.f32.gmra.mxu0 %v6669
      %v6829 = vpop.f32.mrf.mxu0
      %v6830 = vadd.f32 0.0, %v6829
      %6831 = vmatmul.f32.gmra.mxu0 %v6672
      %v6832 = vpop.f32.mrf.mxu0
      %v6833 = vadd.f32 0.0, %v6832
      %6834 = vmatmul.f32.gmra.mxu0 %v6675
      %v6835 = vpop.f32.mrf.mxu0
      %v6836 = vadd.f32 0.0, %v6835
      %6837 = vmatmul.f32.gmra.mxu0 %v6678
      %v6838 = vpop.f32.mrf.mxu0
      %v6839 = vadd.f32 0.0, %v6838
      %6840 = vmatmul.f32.gmra.mxu0 %v6681
      %v6841 = vpop.f32.mrf.mxu0
      %v6842 = vadd.f32 0.0, %v6841
      %6843 = vmatmul.f32.gmra.mxu0 %v6684
      %v6844 = vpop.f32.mrf.mxu0
      %v6845 = vadd.f32 0.0, %v6844
      %6846 = vmatmul.f32.gmra.mxu0 %v6687
      %v6847 = vpop.f32.mrf.mxu0
      %v6848 = vadd.f32 0.0, %v6847
      %6849 = vmatmul.f32.gmra.mxu0 %v6690
      %v6850 = vpop.f32.mrf.mxu0
      %v6851 = vadd.f32 0.0, %v6850
      %6852 = vmatmul.f32.gmra.mxu0 %v6693
      %v6853 = vpop.f32.mrf.mxu0
      %v6854 = vadd.f32 0.0, %v6853
      %6855 = vmatmul.f32.gmra.mxu0 %v6696
      %v6856 = vpop.f32.mrf.mxu0
      %v6857 = vadd.f32 0.0, %v6856
      %6858 = vmatmul.f32.gmra.mxu0 %v6699
      %v6859 = vpop.f32.mrf.mxu0
      %v6860 = vadd.f32 0.0, %v6859
      %6861 = vmatmul.f32.gmra.mxu0 %v6702
      %v6862 = vpop.f32.mrf.mxu0
      %v6863 = vadd.f32 0.0, %v6862
      %6864 = vmatmul.f32.gmra.mxu0 %v6705
      %v6865 = vpop.f32.mrf.mxu0
      %v6866 = vadd.f32 0.0, %v6865
      %6867 = vmatmul.f32.gmra.mxu0 %v6708
      %v6868 = vpop.f32.mrf.mxu0
      %v6869 = vadd.f32 0.0, %v6868
      %6870 = vmatmul.f32.gmra.mxu0 %v6711
      %v6871 = vpop.f32.mrf.mxu0
      %v6872 = vadd.f32 0.0, %v6871
      %6873 = vmatmul.f32.gmra.mxu0 %v6714
      %v6874 = vpop.f32.mrf.mxu0
      %v6875 = vadd.f32 0.0, %v6874
      %6876 = vmatmul.f32.gmra.mxu0 %v6717
      %v6877 = vpop.f32.mrf.mxu0
      %v6878 = vadd.f32 0.0, %v6877
      %6879 = vmatmul.f32.gmra.mxu0 %v6720
      %v6880 = vpop.f32.mrf.mxu0
      %v6881 = vadd.f32 0.0, %v6880
      %6882 = vmatmul.f32.gmra.mxu0 %v6723
      %v6883 = vpop.f32.mrf.mxu0
      %v6884 = vadd.f32 0.0, %v6883
      %6885 = vmatmul.f32.gmra.mxu0 %v6726
      %v6886 = vpop.f32.mrf.mxu0
      %v6887 = vadd.f32 0.0, %v6886
      %6888 = vmatmul.f32.gmra.mxu0 %v6729
      %v6889 = vpop.f32.mrf.mxu0
      %v6890 = vadd.f32 0.0, %v6889
      %6891 = vdwg.mxu0
      %v6892 = vadd.f32 %v6489, %v6749
      %v6893 = vadd.f32 %v6490, %v6752
      %v6894 = vadd.f32 %v6491, %v6755
      %v6895 = vadd.f32 %v6492, %v6758
      %v6896 = vadd.f32 %v6493, %v6761
      %v6897 = vadd.f32 %v6494, %v6764
      %v6898 = vadd.f32 %v6495, %v6767
      %v6899 = vadd.f32 %v6496, %v6770
      %v6900 = vadd.f32 %v6497, %v6773
      %v6901 = vadd.f32 %v6498, %v6776
      %v6902 = vadd.f32 %v6499, %v6779
      %v6903 = vadd.f32 %v6500, %v6782
      %v6904 = vadd.f32 %v6501, %v6785
      %v6905 = vadd.f32 %v6502, %v6788
      %v6906 = vadd.f32 %v6503, %v6791
      %v6907 = vadd.f32 %v6504, %v6794
      %v6908 = vadd.f32 %v6505, %v6797
      %v6909 = vadd.f32 %v6506, %v6800
      %v6910 = vadd.f32 %v6507, %v6803
      %v6911 = vadd.f32 %v6508, %v6806
      %v6912 = vadd.f32 %v6509, %v6809
      %v6913 = vadd.f32 %v6510, %v6812
      %v6914 = vadd.f32 %v6511, %v6815
      %v6915 = vadd.f32 %v6512, %v6818
      %v6916 = vadd.f32 %v6513, %v6821
      %v6917 = vadd.f32 %v6514, %v6824
      %v6918 = vadd.f32 %v6515, %v6827
      %v6919 = vadd.f32 %v6516, %v6830
      %v6920 = vadd.f32 %v6517, %v6833
      %v6921 = vadd.f32 %v6518, %v6836
      %v6922 = vadd.f32 %v6519, %v6839
      %v6923 = vadd.f32 %v6520, %v6842
      %v6924 = vadd.f32 %v6521, %v6845
      %v6925 = vadd.f32 %v6522, %v6848
      %v6926 = vadd.f32 %v6523, %v6851
      %v6927 = vadd.f32 %v6524, %v6854
      %v6928 = vadd.f32 %v6525, %v6857
      %v6929 = vadd.f32 %v6526, %v6860
      %v6930 = vadd.f32 %v6527, %v6863
      %v6931 = vadd.f32 %v6528, %v6866
      %v6932 = vadd.f32 %v6529, %v6869
      %v6933 = vadd.f32 %v6530, %v6872
      %v6934 = vadd.f32 %v6531, %v6875
      %v6935 = vadd.f32 %v6532, %v6878
      %v6936 = vadd.f32 %v6533, %v6881
      %v6937 = vadd.f32 %v6534, %v6884
      %v6938 = vadd.f32 %v6535, %v6887
      %v6939 = vadd.f32 %v6536, %v6890
      %v6940 = vld [vmem:[#allocation2 + $0x19] sm:$0xff]
      %v6941 = vld [vmem:[#allocation2 + $0x21] sm:$0xff]
      %v6942 = vld [vmem:[#allocation2 + $0x29] sm:$0xff]
      %v6943 = vld [vmem:[#allocation2 + $0x31] sm:$0xff]
      %v6944 = vld [vmem:[#allocation2 + $0x39] sm:$0xff]
      %v6945 = vld [vmem:[#allocation2 + $0x41] sm:$0xff]
      %v6946 = vld [vmem:[#allocation2 + $0x49] sm:$0xff]
      %v6947 = vld [vmem:[#allocation2 + $0x51] sm:$0xff]
      %v6948 = vld [vmem:[#allocation2 + $0x59] sm:$0xff]
      %v6949 = vld [vmem:[#allocation2 + $0x61] sm:$0xff]
      %v6950 = vld [vmem:[#allocation2 + $0x69] sm:$0xff]
      %v6951 = vld [vmem:[#allocation2 + $0x71] sm:$0xff]
      %v6952 = vld [vmem:[#allocation2 + $0x79] sm:$0xff]
      %v6953 = vld [vmem:[#allocation2 + $0x81] sm:$0xff]
      %v6954 = vld [vmem:[#allocation2 + $0x89] sm:$0xff]
      %v6955 = vld [vmem:[#allocation2 + $0x91] sm:$0xff]
      %v6956 = vld [vmem:[#allocation2 + $0x99] sm:$0xff]
      %v6957 = vld [vmem:[#allocation2 + $0xa1] sm:$0xff]
      %v6958 = vld [vmem:[#allocation2 + $0xa9] sm:$0xff]
      %v6959 = vld [vmem:[#allocation2 + $0xb1] sm:$0xff]
      %v6960 = vld [vmem:[#allocation2 + $0xb9] sm:$0xff]
      %v6961 = vld [vmem:[#allocation2 + $0xc1] sm:$0xff]
      %v6962 = vld [vmem:[#allocation2 + $0xc9] sm:$0xff]
      %v6963 = vld [vmem:[#allocation2 + $0xd1] sm:$0xff]
      %v6964 = vld [vmem:[#allocation2 + $0xd9] sm:$0xff]
      %v6965 = vld [vmem:[#allocation2 + $0xe1] sm:$0xff]
      %v6966 = vld [vmem:[#allocation2 + $0xe9] sm:$0xff]
      %v6967 = vld [vmem:[#allocation2 + $0xf1] sm:$0xff]
      %v6968 = vld [vmem:[#allocation2 + $0xf9] sm:$0xff]
      %v6969 = vld [vmem:[#allocation2 + $0x101] sm:$0xff]
      %v6970 = vld [vmem:[#allocation2 + $0x109] sm:$0xff]
      %v6971 = vld [vmem:[#allocation2 + $0x111] sm:$0xff]
      %v6972 = vld [vmem:[#allocation2 + $0x119] sm:$0xff]
      %v6973 = vld [vmem:[#allocation2 + $0x121] sm:$0xff]
      %v6974 = vld [vmem:[#allocation2 + $0x129] sm:$0xff]
      %v6975 = vld [vmem:[#allocation2 + $0x131] sm:$0xff]
      %v6976 = vld [vmem:[#allocation2 + $0x139] sm:$0xff]
      %v6977 = vld [vmem:[#allocation2 + $0x141] sm:$0xff]
      %v6978 = vld [vmem:[#allocation2 + $0x149] sm:$0xff]
      %v6979 = vld [vmem:[#allocation2 + $0x151] sm:$0xff]
      %v6980 = vld [vmem:[#allocation2 + $0x159] sm:$0xff]
      %v6981 = vld [vmem:[#allocation2 + $0x161] sm:$0xff]
      %v6982 = vld [vmem:[#allocation2 + $0x169] sm:$0xff]
      %v6983 = vld [vmem:[#allocation2 + $0x171] sm:$0xff]
      %v6984 = vld [vmem:[#allocation2 + $0x179] sm:$0xff]
      %v6985 = vld [vmem:[#allocation2 + $0x181] sm:$0xff]
      %v6986 = vld [vmem:[#allocation2 + $0x189] sm:$0xff]
      %v6987 = vld [vmem:[#allocation2 + $0x191] sm:$0xff]
      %s6988 = scalar_lea.vmem %s6, 32
      %v6989 = vld [vmem:[%s6988] sm:$0xff]
      %v6991 = vsel %vm4433, %v6940, 0
      %v6994 = vsel %vm4433, %v6941, 0
      %v6997 = vsel %vm4433, %v6942, 0
      %v7000 = vsel %vm4433, %v6943, 0
      %v7003 = vsel %vm4433, %v6944, 0
      %v7006 = vsel %vm4433, %v6945, 0
      %v7009 = vsel %vm4433, %v6946, 0
      %v7012 = vsel %vm4433, %v6947, 0
      %v7015 = vsel %vm4433, %v6948, 0
      %v7018 = vsel %vm4433, %v6949, 0
      %v7021 = vsel %vm4433, %v6950, 0
      %v7024 = vsel %vm4433, %v6951, 0
      %v7027 = vsel %vm4433, %v6952, 0
      %v7030 = vsel %vm4433, %v6953, 0
      %v7033 = vsel %vm4433, %v6954, 0
      %v7036 = vsel %vm4433, %v6955, 0
      %v7039 = vsel %vm4433, %v6956, 0
      %v7042 = vsel %vm4433, %v6957, 0
      %v7045 = vsel %vm4433, %v6958, 0
      %v7048 = vsel %vm4433, %v6959, 0
      %v7051 = vsel %vm4433, %v6960, 0
      %v7054 = vsel %vm4433, %v6961, 0
      %v7057 = vsel %vm4433, %v6962, 0
      %v7060 = vsel %vm4433, %v6963, 0
      %v7063 = vsel %vm4433, %v6964, 0
      %v7066 = vsel %vm4433, %v6965, 0
      %v7069 = vsel %vm4433, %v6966, 0
      %v7072 = vsel %vm4433, %v6967, 0
      %v7075 = vsel %vm4433, %v6968, 0
      %v7078 = vsel %vm4433, %v6969, 0
      %v7081 = vsel %vm4433, %v6970, 0
      %v7084 = vsel %vm4433, %v6971, 0
      %v7087 = vsel %vm4433, %v6972, 0
      %v7090 = vsel %vm4433, %v6973, 0
      %v7093 = vsel %vm4433, %v6974, 0
      %v7096 = vsel %vm4433, %v6975, 0
      %v7099 = vsel %vm4433, %v6976, 0
      %v7102 = vsel %vm4433, %v6977, 0
      %v7105 = vsel %vm4433, %v6978, 0
      %v7108 = vsel %vm4433, %v6979, 0
      %v7111 = vsel %vm4433, %v6980, 0
      %v7114 = vsel %vm4433, %v6981, 0
      %v7117 = vsel %vm4433, %v6982, 0
      %v7120 = vsel %vm4433, %v6983, 0
      %v7123 = vsel %vm4433, %v6984, 0
      %v7126 = vsel %vm4433, %v6985, 0
      %v7129 = vsel %vm4433, %v6986, 0
      %v7132 = vsel %vm4433, %v6987, 0
      %7134 = vmatpush.msra.mxu0 0.0
      %7135 = vmatpush.msra.mxu0 0.0
      %7136 = vmatpush.msra.mxu0 0.0
      %7137 = vmatpush.msra.mxu0 0.0
      %7138 = vmatpush.msra.mxu0 0.0
      %7139 = vmatpush.msra.mxu0 0.0
      %7140 = vmatpush.msra.mxu0 0.0
      %7141 = vmatpush.msra.mxu0 0.0
      %7142 = vmatpush.msra.mxu0 0.0
      %7143 = vmatpush.msra.mxu0 0.0
      %7144 = vmatpush.msra.mxu0 0.0
      %7145 = vmatpush.msra.mxu0 0.0
      %7146 = vmatpush.msra.mxu0 0.0
      %7147 = vmatpush.msra.mxu0 0.0
      %7148 = vmatpush.msra.mxu0 0.0
      %7149 = vmatpush.msra.mxu0 %v6989
      %7150 = vmatmul.f32.gmra.mxu0 %v6991
      %v7151 = vpop.f32.mrf.mxu0
      %v7152 = vadd.f32 0.0, %v7151
      %7153 = vmatmul.f32.gmra.mxu0 %v6994
      %v7154 = vpop.f32.mrf.mxu0
      %v7155 = vadd.f32 0.0, %v7154
      %7156 = vmatmul.f32.gmra.mxu0 %v6997
      %v7157 = vpop.f32.mrf.mxu0
      %v7158 = vadd.f32 0.0, %v7157
      %7159 = vmatmul.f32.gmra.mxu0 %v7000
      %v7160 = vpop.f32.mrf.mxu0
      %v7161 = vadd.f32 0.0, %v7160
      %7162 = vmatmul.f32.gmra.mxu0 %v7003
      %v7163 = vpop.f32.mrf.mxu0
      %v7164 = vadd.f32 0.0, %v7163
      %7165 = vmatmul.f32.gmra.mxu0 %v7006
      %v7166 = vpop.f32.mrf.mxu0
      %v7167 = vadd.f32 0.0, %v7166
      %7168 = vmatmul.f32.gmra.mxu0 %v7009
      %v7169 = vpop.f32.mrf.mxu0
      %v7170 = vadd.f32 0.0, %v7169
      %7171 = vmatmul.f32.gmra.mxu0 %v7012
      %v7172 = vpop.f32.mrf.mxu0
      %v7173 = vadd.f32 0.0, %v7172
      %7174 = vmatmul.f32.gmra.mxu0 %v7015
      %v7175 = vpop.f32.mrf.mxu0
      %v7176 = vadd.f32 0.0, %v7175
      %7177 = vmatmul.f32.gmra.mxu0 %v7018
      %v7178 = vpop.f32.mrf.mxu0
      %v7179 = vadd.f32 0.0, %v7178
      %7180 = vmatmul.f32.gmra.mxu0 %v7021
      %v7181 = vpop.f32.mrf.mxu0
      %v7182 = vadd.f32 0.0, %v7181
      %7183 = vmatmul.f32.gmra.mxu0 %v7024
      %v7184 = vpop.f32.mrf.mxu0
      %v7185 = vadd.f32 0.0, %v7184
      %7186 = vmatmul.f32.gmra.mxu0 %v7027
      %v7187 = vpop.f32.mrf.mxu0
      %v7188 = vadd.f32 0.0, %v7187
      %7189 = vmatmul.f32.gmra.mxu0 %v7030
      %v7190 = vpop.f32.mrf.mxu0
      %v7191 = vadd.f32 0.0, %v7190
      %7192 = vmatmul.f32.gmra.mxu0 %v7033
      %v7193 = vpop.f32.mrf.mxu0
      %v7194 = vadd.f32 0.0, %v7193
      %7195 = vmatmul.f32.gmra.mxu0 %v7036
      %v7196 = vpop.f32.mrf.mxu0
      %v7197 = vadd.f32 0.0, %v7196
      %7198 = vmatmul.f32.gmra.mxu0 %v7039
      %v7199 = vpop.f32.mrf.mxu0
      %v7200 = vadd.f32 0.0, %v7199
      %7201 = vmatmul.f32.gmra.mxu0 %v7042
      %v7202 = vpop.f32.mrf.mxu0
      %v7203 = vadd.f32 0.0, %v7202
      %7204 = vmatmul.f32.gmra.mxu0 %v7045
      %v7205 = vpop.f32.mrf.mxu0
      %v7206 = vadd.f32 0.0, %v7205
      %7207 = vmatmul.f32.gmra.mxu0 %v7048
      %v7208 = vpop.f32.mrf.mxu0
      %v7209 = vadd.f32 0.0, %v7208
      %7210 = vmatmul.f32.gmra.mxu0 %v7051
      %v7211 = vpop.f32.mrf.mxu0
      %v7212 = vadd.f32 0.0, %v7211
      %7213 = vmatmul.f32.gmra.mxu0 %v7054
      %v7214 = vpop.f32.mrf.mxu0
      %v7215 = vadd.f32 0.0, %v7214
      %7216 = vmatmul.f32.gmra.mxu0 %v7057
      %v7217 = vpop.f32.mrf.mxu0
      %v7218 = vadd.f32 0.0, %v7217
      %7219 = vmatmul.f32.gmra.mxu0 %v7060
      %v7220 = vpop.f32.mrf.mxu0
      %v7221 = vadd.f32 0.0, %v7220
      %7222 = vmatmul.f32.gmra.mxu0 %v7063
      %v7223 = vpop.f32.mrf.mxu0
      %v7224 = vadd.f32 0.0, %v7223
      %7225 = vmatmul.f32.gmra.mxu0 %v7066
      %v7226 = vpop.f32.mrf.mxu0
      %v7227 = vadd.f32 0.0, %v7226
      %7228 = vmatmul.f32.gmra.mxu0 %v7069
      %v7229 = vpop.f32.mrf.mxu0
      %v7230 = vadd.f32 0.0, %v7229
      %7231 = vmatmul.f32.gmra.mxu0 %v7072
      %v7232 = vpop.f32.mrf.mxu0
      %v7233 = vadd.f32 0.0, %v7232
      %7234 = vmatmul.f32.gmra.mxu0 %v7075
      %v7235 = vpop.f32.mrf.mxu0
      %v7236 = vadd.f32 0.0, %v7235
      %7237 = vmatmul.f32.gmra.mxu0 %v7078
      %v7238 = vpop.f32.mrf.mxu0
      %v7239 = vadd.f32 0.0, %v7238
      %7240 = vmatmul.f32.gmra.mxu0 %v7081
      %v7241 = vpop.f32.mrf.mxu0
      %v7242 = vadd.f32 0.0, %v7241
      %7243 = vmatmul.f32.gmra.mxu0 %v7084
      %v7244 = vpop.f32.mrf.mxu0
      %v7245 = vadd.f32 0.0, %v7244
      %7246 = vmatmul.f32.gmra.mxu0 %v7087
      %v7247 = vpop.f32.mrf.mxu0
      %v7248 = vadd.f32 0.0, %v7247
      %7249 = vmatmul.f32.gmra.mxu0 %v7090
      %v7250 = vpop.f32.mrf.mxu0
      %v7251 = vadd.f32 0.0, %v7250
      %7252 = vmatmul.f32.gmra.mxu0 %v7093
      %v7253 = vpop.f32.mrf.mxu0
      %v7254 = vadd.f32 0.0, %v7253
      %7255 = vmatmul.f32.gmra.mxu0 %v7096
      %v7256 = vpop.f32.mrf.mxu0
      %v7257 = vadd.f32 0.0, %v7256
      %7258 = vmatmul.f32.gmra.mxu0 %v7099
      %v7259 = vpop.f32.mrf.mxu0
      %v7260 = vadd.f32 0.0, %v7259
      %7261 = vmatmul.f32.gmra.mxu0 %v7102
      %v7262 = vpop.f32.mrf.mxu0
      %v7263 = vadd.f32 0.0, %v7262
      %7264 = vmatmul.f32.gmra.mxu0 %v7105
      %v7265 = vpop.f32.mrf.mxu0
      %v7266 = vadd.f32 0.0, %v7265
      %7267 = vmatmul.f32.gmra.mxu0 %v7108
      %v7268 = vpop.f32.mrf.mxu0
      %v7269 = vadd.f32 0.0, %v7268
      %7270 = vmatmul.f32.gmra.mxu0 %v7111
      %v7271 = vpop.f32.mrf.mxu0
      %v7272 = vadd.f32 0.0, %v7271
      %7273 = vmatmul.f32.gmra.mxu0 %v7114
      %v7274 = vpop.f32.mrf.mxu0
      %v7275 = vadd.f32 0.0, %v7274
      %7276 = vmatmul.f32.gmra.mxu0 %v7117
      %v7277 = vpop.f32.mrf.mxu0
      %v7278 = vadd.f32 0.0, %v7277
      %7279 = vmatmul.f32.gmra.mxu0 %v7120
      %v7280 = vpop.f32.mrf.mxu0
      %v7281 = vadd.f32 0.0, %v7280
      %7282 = vmatmul.f32.gmra.mxu0 %v7123
      %v7283 = vpop.f32.mrf.mxu0
      %v7284 = vadd.f32 0.0, %v7283
      %7285 = vmatmul.f32.gmra.mxu0 %v7126
      %v7286 = vpop.f32.mrf.mxu0
      %v7287 = vadd.f32 0.0, %v7286
      %7288 = vmatmul.f32.gmra.mxu0 %v7129
      %v7289 = vpop.f32.mrf.mxu0
      %v7290 = vadd.f32 0.0, %v7289
      %7291 = vmatmul.f32.gmra.mxu0 %v7132
      %v7292 = vpop.f32.mrf.mxu0
      %v7293 = vadd.f32 0.0, %v7292
      %7294 = vdwg.mxu0
      %v7295 = vadd.f32 %v6892, %v7152
      %v7296 = vadd.f32 %v6893, %v7155
      %v7297 = vadd.f32 %v6894, %v7158
      %v7298 = vadd.f32 %v6895, %v7161
      %v7299 = vadd.f32 %v6896, %v7164
      %v7300 = vadd.f32 %v6897, %v7167
      %v7301 = vadd.f32 %v6898, %v7170
      %v7302 = vadd.f32 %v6899, %v7173
      %v7303 = vadd.f32 %v6900, %v7176
      %v7304 = vadd.f32 %v6901, %v7179
      %v7305 = vadd.f32 %v6902, %v7182
      %v7306 = vadd.f32 %v6903, %v7185
      %v7307 = vadd.f32 %v6904, %v7188
      %v7308 = vadd.f32 %v6905, %v7191
      %v7309 = vadd.f32 %v6906, %v7194
      %v7310 = vadd.f32 %v6907, %v7197
      %v7311 = vadd.f32 %v6908, %v7200
      %v7312 = vadd.f32 %v6909, %v7203
      %v7313 = vadd.f32 %v6910, %v7206
      %v7314 = vadd.f32 %v6911, %v7209
      %v7315 = vadd.f32 %v6912, %v7212
      %v7316 = vadd.f32 %v6913, %v7215
      %v7317 = vadd.f32 %v6914, %v7218
      %v7318 = vadd.f32 %v6915, %v7221
      %v7319 = vadd.f32 %v6916, %v7224
      %v7320 = vadd.f32 %v6917, %v7227
      %v7321 = vadd.f32 %v6918, %v7230
      %v7322 = vadd.f32 %v6919, %v7233
      %v7323 = vadd.f32 %v6920, %v7236
      %v7324 = vadd.f32 %v6921, %v7239
      %v7325 = vadd.f32 %v6922, %v7242
      %v7326 = vadd.f32 %v6923, %v7245
      %v7327 = vadd.f32 %v6924, %v7248
      %v7328 = vadd.f32 %v6925, %v7251
      %v7329 = vadd.f32 %v6926, %v7254
      %v7330 = vadd.f32 %v6927, %v7257
      %v7331 = vadd.f32 %v6928, %v7260
      %v7332 = vadd.f32 %v6929, %v7263
      %v7333 = vadd.f32 %v6930, %v7266
      %v7334 = vadd.f32 %v6931, %v7269
      %v7335 = vadd.f32 %v6932, %v7272
      %v7336 = vadd.f32 %v6933, %v7275
      %v7337 = vadd.f32 %v6934, %v7278
      %v7338 = vadd.f32 %v6935, %v7281
      %v7339 = vadd.f32 %v6936, %v7284
      %v7340 = vadd.f32 %v6937, %v7287
      %v7341 = vadd.f32 %v6938, %v7290
      %v7342 = vadd.f32 %v6939, %v7293
      %v7343 = vld [vmem:[#allocation2 + $0x1a] sm:$0xff]
      %v7344 = vld [vmem:[#allocation2 + $0x22] sm:$0xff]
      %v7345 = vld [vmem:[#allocation2 + $0x2a] sm:$0xff]
      %v7346 = vld [vmem:[#allocation2 + $0x32] sm:$0xff]
      %v7347 = vld [vmem:[#allocation2 + $0x3a] sm:$0xff]
      %v7348 = vld [vmem:[#allocation2 + $0x42] sm:$0xff]
      %v7349 = vld [vmem:[#allocation2 + $0x4a] sm:$0xff]
      %v7350 = vld [vmem:[#allocation2 + $0x52] sm:$0xff]
      %v7351 = vld [vmem:[#allocation2 + $0x5a] sm:$0xff]
      %v7352 = vld [vmem:[#allocation2 + $0x62] sm:$0xff]
      %v7353 = vld [vmem:[#allocation2 + $0x6a] sm:$0xff]
      %v7354 = vld [vmem:[#allocation2 + $0x72] sm:$0xff]
      %v7355 = vld [vmem:[#allocation2 + $0x7a] sm:$0xff]
      %v7356 = vld [vmem:[#allocation2 + $0x82] sm:$0xff]
      %v7357 = vld [vmem:[#allocation2 + $0x8a] sm:$0xff]
      %v7358 = vld [vmem:[#allocation2 + $0x92] sm:$0xff]
      %v7359 = vld [vmem:[#allocation2 + $0x9a] sm:$0xff]
      %v7360 = vld [vmem:[#allocation2 + $0xa2] sm:$0xff]
      %v7361 = vld [vmem:[#allocation2 + $0xaa] sm:$0xff]
      %v7362 = vld [vmem:[#allocation2 + $0xb2] sm:$0xff]
      %v7363 = vld [vmem:[#allocation2 + $0xba] sm:$0xff]
      %v7364 = vld [vmem:[#allocation2 + $0xc2] sm:$0xff]
      %v7365 = vld [vmem:[#allocation2 + $0xca] sm:$0xff]
      %v7366 = vld [vmem:[#allocation2 + $0xd2] sm:$0xff]
      %v7367 = vld [vmem:[#allocation2 + $0xda] sm:$0xff]
      %v7368 = vld [vmem:[#allocation2 + $0xe2] sm:$0xff]
      %v7369 = vld [vmem:[#allocation2 + $0xea] sm:$0xff]
      %v7370 = vld [vmem:[#allocation2 + $0xf2] sm:$0xff]
      %v7371 = vld [vmem:[#allocation2 + $0xfa] sm:$0xff]
      %v7372 = vld [vmem:[#allocation2 + $0x102] sm:$0xff]
      %v7373 = vld [vmem:[#allocation2 + $0x10a] sm:$0xff]
      %v7374 = vld [vmem:[#allocation2 + $0x112] sm:$0xff]
      %v7375 = vld [vmem:[#allocation2 + $0x11a] sm:$0xff]
      %v7376 = vld [vmem:[#allocation2 + $0x122] sm:$0xff]
      %v7377 = vld [vmem:[#allocation2 + $0x12a] sm:$0xff]
      %v7378 = vld [vmem:[#allocation2 + $0x132] sm:$0xff]
      %v7379 = vld [vmem:[#allocation2 + $0x13a] sm:$0xff]
      %v7380 = vld [vmem:[#allocation2 + $0x142] sm:$0xff]
      %v7381 = vld [vmem:[#allocation2 + $0x14a] sm:$0xff]
      %v7382 = vld [vmem:[#allocation2 + $0x152] sm:$0xff]
      %v7383 = vld [vmem:[#allocation2 + $0x15a] sm:$0xff]
      %v7384 = vld [vmem:[#allocation2 + $0x162] sm:$0xff]
      %v7385 = vld [vmem:[#allocation2 + $0x16a] sm:$0xff]
      %v7386 = vld [vmem:[#allocation2 + $0x172] sm:$0xff]
      %v7387 = vld [vmem:[#allocation2 + $0x17a] sm:$0xff]
      %v7388 = vld [vmem:[#allocation2 + $0x182] sm:$0xff]
      %v7389 = vld [vmem:[#allocation2 + $0x18a] sm:$0xff]
      %v7390 = vld [vmem:[#allocation2 + $0x192] sm:$0xff]
      %s7391 = scalar_lea.vmem %s6, 40
      %v7392 = vld [vmem:[%s7391] sm:$0xff]
      %v7394 = vsel %vm4433, %v7343, 0
      %v7397 = vsel %vm4433, %v7344, 0
      %v7400 = vsel %vm4433, %v7345, 0
      %v7403 = vsel %vm4433, %v7346, 0
      %v7406 = vsel %vm4433, %v7347, 0
      %v7409 = vsel %vm4433, %v7348, 0
      %v7412 = vsel %vm4433, %v7349, 0
      %v7415 = vsel %vm4433, %v7350, 0
      %v7418 = vsel %vm4433, %v7351, 0
      %v7421 = vsel %vm4433, %v7352, 0
      %v7424 = vsel %vm4433, %v7353, 0
      %v7427 = vsel %vm4433, %v7354, 0
      %v7430 = vsel %vm4433, %v7355, 0
      %v7433 = vsel %vm4433, %v7356, 0
      %v7436 = vsel %vm4433, %v7357, 0
      %v7439 = vsel %vm4433, %v7358, 0
      %v7442 = vsel %vm4433, %v7359, 0
      %v7445 = vsel %vm4433, %v7360, 0
      %v7448 = vsel %vm4433, %v7361, 0
      %v7451 = vsel %vm4433, %v7362, 0
      %v7454 = vsel %vm4433, %v7363, 0
      %v7457 = vsel %vm4433, %v7364, 0
      %v7460 = vsel %vm4433, %v7365, 0
      %v7463 = vsel %vm4433, %v7366, 0
      %v7466 = vsel %vm4433, %v7367, 0
      %v7469 = vsel %vm4433, %v7368, 0
      %v7472 = vsel %vm4433, %v7369, 0
      %v7475 = vsel %vm4433, %v7370, 0
      %v7478 = vsel %vm4433, %v7371, 0
      %v7481 = vsel %vm4433, %v7372, 0
      %v7484 = vsel %vm4433, %v7373, 0
      %v7487 = vsel %vm4433, %v7374, 0
      %v7490 = vsel %vm4433, %v7375, 0
      %v7493 = vsel %vm4433, %v7376, 0
      %v7496 = vsel %vm4433, %v7377, 0
      %v7499 = vsel %vm4433, %v7378, 0
      %v7502 = vsel %vm4433, %v7379, 0
      %v7505 = vsel %vm4433, %v7380, 0
      %v7508 = vsel %vm4433, %v7381, 0
      %v7511 = vsel %vm4433, %v7382, 0
      %v7514 = vsel %vm4433, %v7383, 0
      %v7517 = vsel %vm4433, %v7384, 0
      %v7520 = vsel %vm4433, %v7385, 0
      %v7523 = vsel %vm4433, %v7386, 0
      %v7526 = vsel %vm4433, %v7387, 0
      %v7529 = vsel %vm4433, %v7388, 0
      %v7532 = vsel %vm4433, %v7389, 0
      %v7535 = vsel %vm4433, %v7390, 0
      %7537 = vmatpush.msra.mxu0 0.0
      %7538 = vmatpush.msra.mxu0 0.0
      %7539 = vmatpush.msra.mxu0 0.0
      %7540 = vmatpush.msra.mxu0 0.0
      %7541 = vmatpush.msra.mxu0 0.0
      %7542 = vmatpush.msra.mxu0 0.0
      %7543 = vmatpush.msra.mxu0 0.0
      %7544 = vmatpush.msra.mxu0 0.0
      %7545 = vmatpush.msra.mxu0 0.0
      %7546 = vmatpush.msra.mxu0 0.0
      %7547 = vmatpush.msra.mxu0 0.0
      %7548 = vmatpush.msra.mxu0 0.0
      %7549 = vmatpush.msra.mxu0 0.0
      %7550 = vmatpush.msra.mxu0 0.0
      %7551 = vmatpush.msra.mxu0 0.0
      %7552 = vmatpush.msra.mxu0 %v7392
      %7553 = vmatmul.f32.gmra.mxu0 %v7394
      %v7554 = vpop.f32.mrf.mxu0
      %v7555 = vadd.f32 0.0, %v7554
      %7556 = vmatmul.f32.gmra.mxu0 %v7397
      %v7557 = vpop.f32.mrf.mxu0
      %v7558 = vadd.f32 0.0, %v7557
      %7559 = vmatmul.f32.gmra.mxu0 %v7400
      %v7560 = vpop.f32.mrf.mxu0
      %v7561 = vadd.f32 0.0, %v7560
      %7562 = vmatmul.f32.gmra.mxu0 %v7403
      %v7563 = vpop.f32.mrf.mxu0
      %v7564 = vadd.f32 0.0, %v7563
      %7565 = vmatmul.f32.gmra.mxu0 %v7406
      %v7566 = vpop.f32.mrf.mxu0
      %v7567 = vadd.f32 0.0, %v7566
      %7568 = vmatmul.f32.gmra.mxu0 %v7409
      %v7569 = vpop.f32.mrf.mxu0
      %v7570 = vadd.f32 0.0, %v7569
      %7571 = vmatmul.f32.gmra.mxu0 %v7412
      %v7572 = vpop.f32.mrf.mxu0
      %v7573 = vadd.f32 0.0, %v7572
      %7574 = vmatmul.f32.gmra.mxu0 %v7415
      %v7575 = vpop.f32.mrf.mxu0
      %v7576 = vadd.f32 0.0, %v7575
      %7577 = vmatmul.f32.gmra.mxu0 %v7418
      %v7578 = vpop.f32.mrf.mxu0
      %v7579 = vadd.f32 0.0, %v7578
      %7580 = vmatmul.f32.gmra.mxu0 %v7421
      %v7581 = vpop.f32.mrf.mxu0
      %v7582 = vadd.f32 0.0, %v7581
      %7583 = vmatmul.f32.gmra.mxu0 %v7424
      %v7584 = vpop.f32.mrf.mxu0
      %v7585 = vadd.f32 0.0, %v7584
      %7586 = vmatmul.f32.gmra.mxu0 %v7427
      %v7587 = vpop.f32.mrf.mxu0
      %v7588 = vadd.f32 0.0, %v7587
      %7589 = vmatmul.f32.gmra.mxu0 %v7430
      %v7590 = vpop.f32.mrf.mxu0
      %v7591 = vadd.f32 0.0, %v7590
      %7592 = vmatmul.f32.gmra.mxu0 %v7433
      %v7593 = vpop.f32.mrf.mxu0
      %v7594 = vadd.f32 0.0, %v7593
      %7595 = vmatmul.f32.gmra.mxu0 %v7436
      %v7596 = vpop.f32.mrf.mxu0
      %v7597 = vadd.f32 0.0, %v7596
      %7598 = vmatmul.f32.gmra.mxu0 %v7439
      %v7599 = vpop.f32.mrf.mxu0
      %v7600 = vadd.f32 0.0, %v7599
      %7601 = vmatmul.f32.gmra.mxu0 %v7442
      %v7602 = vpop.f32.mrf.mxu0
      %v7603 = vadd.f32 0.0, %v7602
      %7604 = vmatmul.f32.gmra.mxu0 %v7445
      %v7605 = vpop.f32.mrf.mxu0
      %v7606 = vadd.f32 0.0, %v7605
      %7607 = vmatmul.f32.gmra.mxu0 %v7448
      %v7608 = vpop.f32.mrf.mxu0
      %v7609 = vadd.f32 0.0, %v7608
      %7610 = vmatmul.f32.gmra.mxu0 %v7451
      %v7611 = vpop.f32.mrf.mxu0
      %v7612 = vadd.f32 0.0, %v7611
      %7613 = vmatmul.f32.gmra.mxu0 %v7454
      %v7614 = vpop.f32.mrf.mxu0
      %v7615 = vadd.f32 0.0, %v7614
      %7616 = vmatmul.f32.gmra.mxu0 %v7457
      %v7617 = vpop.f32.mrf.mxu0
      %v7618 = vadd.f32 0.0, %v7617
      %7619 = vmatmul.f32.gmra.mxu0 %v7460
      %v7620 = vpop.f32.mrf.mxu0
      %v7621 = vadd.f32 0.0, %v7620
      %7622 = vmatmul.f32.gmra.mxu0 %v7463
      %v7623 = vpop.f32.mrf.mxu0
      %v7624 = vadd.f32 0.0, %v7623
      %7625 = vmatmul.f32.gmra.mxu0 %v7466
      %v7626 = vpop.f32.mrf.mxu0
      %v7627 = vadd.f32 0.0, %v7626
      %7628 = vmatmul.f32.gmra.mxu0 %v7469
      %v7629 = vpop.f32.mrf.mxu0
      %v7630 = vadd.f32 0.0, %v7629
      %7631 = vmatmul.f32.gmra.mxu0 %v7472
      %v7632 = vpop.f32.mrf.mxu0
      %v7633 = vadd.f32 0.0, %v7632
      %7634 = vmatmul.f32.gmra.mxu0 %v7475
      %v7635 = vpop.f32.mrf.mxu0
      %v7636 = vadd.f32 0.0, %v7635
      %7637 = vmatmul.f32.gmra.mxu0 %v7478
      %v7638 = vpop.f32.mrf.mxu0
      %v7639 = vadd.f32 0.0, %v7638
      %7640 = vmatmul.f32.gmra.mxu0 %v7481
      %v7641 = vpop.f32.mrf.mxu0
      %v7642 = vadd.f32 0.0, %v7641
      %7643 = vmatmul.f32.gmra.mxu0 %v7484
      %v7644 = vpop.f32.mrf.mxu0
      %v7645 = vadd.f32 0.0, %v7644
      %7646 = vmatmul.f32.gmra.mxu0 %v7487
      %v7647 = vpop.f32.mrf.mxu0
      %v7648 = vadd.f32 0.0, %v7647
      %7649 = vmatmul.f32.gmra.mxu0 %v7490
      %v7650 = vpop.f32.mrf.mxu0
      %v7651 = vadd.f32 0.0, %v7650
      %7652 = vmatmul.f32.gmra.mxu0 %v7493
      %v7653 = vpop.f32.mrf.mxu0
      %v7654 = vadd.f32 0.0, %v7653
      %7655 = vmatmul.f32.gmra.mxu0 %v7496
      %v7656 = vpop.f32.mrf.mxu0
      %v7657 = vadd.f32 0.0, %v7656
      %7658 = vmatmul.f32.gmra.mxu0 %v7499
      %v7659 = vpop.f32.mrf.mxu0
      %v7660 = vadd.f32 0.0, %v7659
      %7661 = vmatmul.f32.gmra.mxu0 %v7502
      %v7662 = vpop.f32.mrf.mxu0
      %v7663 = vadd.f32 0.0, %v7662
      %7664 = vmatmul.f32.gmra.mxu0 %v7505
      %v7665 = vpop.f32.mrf.mxu0
      %v7666 = vadd.f32 0.0, %v7665
      %7667 = vmatmul.f32.gmra.mxu0 %v7508
      %v7668 = vpop.f32.mrf.mxu0
      %v7669 = vadd.f32 0.0, %v7668
      %7670 = vmatmul.f32.gmra.mxu0 %v7511
      %v7671 = vpop.f32.mrf.mxu0
      %v7672 = vadd.f32 0.0, %v7671
      %7673 = vmatmul.f32.gmra.mxu0 %v7514
      %v7674 = vpop.f32.mrf.mxu0
      %v7675 = vadd.f32 0.0, %v7674
      %7676 = vmatmul.f32.gmra.mxu0 %v7517
      %v7677 = vpop.f32.mrf.mxu0
      %v7678 = vadd.f32 0.0, %v7677
      %7679 = vmatmul.f32.gmra.mxu0 %v7520
      %v7680 = vpop.f32.mrf.mxu0
      %v7681 = vadd.f32 0.0, %v7680
      %7682 = vmatmul.f32.gmra.mxu0 %v7523
      %v7683 = vpop.f32.mrf.mxu0
      %v7684 = vadd.f32 0.0, %v7683
      %7685 = vmatmul.f32.gmra.mxu0 %v7526
      %v7686 = vpop.f32.mrf.mxu0
      %v7687 = vadd.f32 0.0, %v7686
      %7688 = vmatmul.f32.gmra.mxu0 %v7529
      %v7689 = vpop.f32.mrf.mxu0
      %v7690 = vadd.f32 0.0, %v7689
      %7691 = vmatmul.f32.gmra.mxu0 %v7532
      %v7692 = vpop.f32.mrf.mxu0
      %v7693 = vadd.f32 0.0, %v7692
      %7694 = vmatmul.f32.gmra.mxu0 %v7535
      %v7695 = vpop.f32.mrf.mxu0
      %v7696 = vadd.f32 0.0, %v7695
      %7697 = vdwg.mxu0
      %v7698 = vadd.f32 %v7295, %v7555
      %v7699 = vadd.f32 %v7296, %v7558
      %v7700 = vadd.f32 %v7297, %v7561
      %v7701 = vadd.f32 %v7298, %v7564
      %v7702 = vadd.f32 %v7299, %v7567
      %v7703 = vadd.f32 %v7300, %v7570
      %v7704 = vadd.f32 %v7301, %v7573
      %v7705 = vadd.f32 %v7302, %v7576
      %v7706 = vadd.f32 %v7303, %v7579
      %v7707 = vadd.f32 %v7304, %v7582
      %v7708 = vadd.f32 %v7305, %v7585
      %v7709 = vadd.f32 %v7306, %v7588
      %v7710 = vadd.f32 %v7307, %v7591
      %v7711 = vadd.f32 %v7308, %v7594
      %v7712 = vadd.f32 %v7309, %v7597
      %v7713 = vadd.f32 %v7310, %v7600
      %v7714 = vadd.f32 %v7311, %v7603
      %v7715 = vadd.f32 %v7312, %v7606
      %v7716 = vadd.f32 %v7313, %v7609
      %v7717 = vadd.f32 %v7314, %v7612
      %v7718 = vadd.f32 %v7315, %v7615
      %v7719 = vadd.f32 %v7316, %v7618
      %v7720 = vadd.f32 %v7317, %v7621
      %v7721 = vadd.f32 %v7318, %v7624
      %v7722 = vadd.f32 %v7319, %v7627
      %v7723 = vadd.f32 %v7320, %v7630
      %v7724 = vadd.f32 %v7321, %v7633
      %v7725 = vadd.f32 %v7322, %v7636
      %v7726 = vadd.f32 %v7323, %v7639
      %v7727 = vadd.f32 %v7324, %v7642
      %v7728 = vadd.f32 %v7325, %v7645
      %v7729 = vadd.f32 %v7326, %v7648
      %v7730 = vadd.f32 %v7327, %v7651
      %v7731 = vadd.f32 %v7328, %v7654
      %v7732 = vadd.f32 %v7329, %v7657
      %v7733 = vadd.f32 %v7330, %v7660
      %v7734 = vadd.f32 %v7331, %v7663
      %v7735 = vadd.f32 %v7332, %v7666
      %v7736 = vadd.f32 %v7333, %v7669
      %v7737 = vadd.f32 %v7334, %v7672
      %v7738 = vadd.f32 %v7335, %v7675
      %v7739 = vadd.f32 %v7336, %v7678
      %v7740 = vadd.f32 %v7337, %v7681
      %v7741 = vadd.f32 %v7338, %v7684
      %v7742 = vadd.f32 %v7339, %v7687
      %v7743 = vadd.f32 %v7340, %v7690
      %v7744 = vadd.f32 %v7341, %v7693
      %v7745 = vadd.f32 %v7342, %v7696
      %v7746 = vld [vmem:[#allocation2 + $0x30] sm:$0xff]
      %v7747 = vld [vmem:[#allocation2 + $0x38] sm:$0xff]
      %v7748 = vld [vmem:[#allocation2 + $0x40] sm:$0xff]
      %v7749 = vld [vmem:[#allocation2 + $0x48] sm:$0xff]
      %v7750 = vld [vmem:[#allocation2 + $0x50] sm:$0xff]
      %v7751 = vld [vmem:[#allocation2 + $0x58] sm:$0xff]
      %v7752 = vld [vmem:[#allocation2 + $0x60] sm:$0xff]
      %v7753 = vld [vmem:[#allocation2 + $0x68] sm:$0xff]
      %v7754 = vld [vmem:[#allocation2 + $0x70] sm:$0xff]
      %v7755 = vld [vmem:[#allocation2 + $0x78] sm:$0xff]
      %v7756 = vld [vmem:[#allocation2 + $0x80] sm:$0xff]
      %v7757 = vld [vmem:[#allocation2 + $0x88] sm:$0xff]
      %v7758 = vld [vmem:[#allocation2 + $0x90] sm:$0xff]
      %v7759 = vld [vmem:[#allocation2 + $0x98] sm:$0xff]
      %v7760 = vld [vmem:[#allocation2 + $0xa0] sm:$0xff]
      %v7761 = vld [vmem:[#allocation2 + $0xa8] sm:$0xff]
      %v7762 = vld [vmem:[#allocation2 + $0xb0] sm:$0xff]
      %v7763 = vld [vmem:[#allocation2 + $0xb8] sm:$0xff]
      %v7764 = vld [vmem:[#allocation2 + $0xc0] sm:$0xff]
      %v7765 = vld [vmem:[#allocation2 + $0xc8] sm:$0xff]
      %v7766 = vld [vmem:[#allocation2 + $0xd0] sm:$0xff]
      %v7767 = vld [vmem:[#allocation2 + $0xd8] sm:$0xff]
      %v7768 = vld [vmem:[#allocation2 + $0xe0] sm:$0xff]
      %v7769 = vld [vmem:[#allocation2 + $0xe8] sm:$0xff]
      %v7770 = vld [vmem:[#allocation2 + $0xf0] sm:$0xff]
      %v7771 = vld [vmem:[#allocation2 + $0xf8] sm:$0xff]
      %v7772 = vld [vmem:[#allocation2 + $0x100] sm:$0xff]
      %v7773 = vld [vmem:[#allocation2 + $0x108] sm:$0xff]
      %v7774 = vld [vmem:[#allocation2 + $0x110] sm:$0xff]
      %v7775 = vld [vmem:[#allocation2 + $0x118] sm:$0xff]
      %v7776 = vld [vmem:[#allocation2 + $0x120] sm:$0xff]
      %v7777 = vld [vmem:[#allocation2 + $0x128] sm:$0xff]
      %v7778 = vld [vmem:[#allocation2 + $0x130] sm:$0xff]
      %v7779 = vld [vmem:[#allocation2 + $0x138] sm:$0xff]
      %v7780 = vld [vmem:[#allocation2 + $0x140] sm:$0xff]
      %v7781 = vld [vmem:[#allocation2 + $0x148] sm:$0xff]
      %v7782 = vld [vmem:[#allocation2 + $0x150] sm:$0xff]
      %v7783 = vld [vmem:[#allocation2 + $0x158] sm:$0xff]
      %v7784 = vld [vmem:[#allocation2 + $0x160] sm:$0xff]
      %v7785 = vld [vmem:[#allocation2 + $0x168] sm:$0xff]
      %v7786 = vld [vmem:[#allocation2 + $0x170] sm:$0xff]
      %v7787 = vld [vmem:[#allocation2 + $0x178] sm:$0xff]
      %v7788 = vld [vmem:[#allocation2 + $0x180] sm:$0xff]
      %v7789 = vld [vmem:[#allocation2 + $0x188] sm:$0xff]
      %v7790 = vld [vmem:[#allocation2 + $0x190] sm:$0xff]
      %v7791 = vld [vmem:[#allocation2 + $0x198] sm:$0xff]
      %v7792 = vld [vmem:[#allocation2 + $0x1a0] sm:$0xff]
      %v7793 = vld [vmem:[#allocation2 + $0x1a8] sm:$0xff]
      %s7794 = scalar_lea.vmem %s6, 48
      %v7795 = vld [vmem:[%s7794] sm:$0xff]
      %v7797 = vsel %vm4433, %v7746, 0
      %v7800 = vsel %vm4433, %v7747, 0
      %v7803 = vsel %vm4433, %v7748, 0
      %v7806 = vsel %vm4433, %v7749, 0
      %v7809 = vsel %vm4433, %v7750, 0
      %v7812 = vsel %vm4433, %v7751, 0
      %v7815 = vsel %vm4433, %v7752, 0
      %v7818 = vsel %vm4433, %v7753, 0
      %v7821 = vsel %vm4433, %v7754, 0
      %v7824 = vsel %vm4433, %v7755, 0
      %v7827 = vsel %vm4433, %v7756, 0
      %v7830 = vsel %vm4433, %v7757, 0
      %v7833 = vsel %vm4433, %v7758, 0
      %v7836 = vsel %vm4433, %v7759, 0
      %v7839 = vsel %vm4433, %v7760, 0
      %v7842 = vsel %vm4433, %v7761, 0
      %v7845 = vsel %vm4433, %v7762, 0
      %v7848 = vsel %vm4433, %v7763, 0
      %v7851 = vsel %vm4433, %v7764, 0
      %v7854 = vsel %vm4433, %v7765, 0
      %v7857 = vsel %vm4433, %v7766, 0
      %v7860 = vsel %vm4433, %v7767, 0
      %v7863 = vsel %vm4433, %v7768, 0
      %v7866 = vsel %vm4433, %v7769, 0
      %v7869 = vsel %vm4433, %v7770, 0
      %v7872 = vsel %vm4433, %v7771, 0
      %v7875 = vsel %vm4433, %v7772, 0
      %v7878 = vsel %vm4433, %v7773, 0
      %v7881 = vsel %vm4433, %v7774, 0
      %v7884 = vsel %vm4433, %v7775, 0
      %v7887 = vsel %vm4433, %v7776, 0
      %v7890 = vsel %vm4433, %v7777, 0
      %v7893 = vsel %vm4433, %v7778, 0
      %v7896 = vsel %vm4433, %v7779, 0
      %v7899 = vsel %vm4433, %v7780, 0
      %v7902 = vsel %vm4433, %v7781, 0
      %v7905 = vsel %vm4433, %v7782, 0
      %v7908 = vsel %vm4433, %v7783, 0
      %v7911 = vsel %vm4433, %v7784, 0
      %v7914 = vsel %vm4433, %v7785, 0
      %v7917 = vsel %vm4433, %v7786, 0
      %v7920 = vsel %vm4433, %v7787, 0
      %v7923 = vsel %vm4433, %v7788, 0
      %v7926 = vsel %vm4433, %v7789, 0
      %v7929 = vsel %vm4433, %v7790, 0
      %v7932 = vsel %vm4433, %v7791, 0
      %v7935 = vsel %vm4433, %v7792, 0
      %v7938 = vsel %vm4433, %v7793, 0
      %7940 = vmatpush.msra.mxu0 0.0
      %7941 = vmatpush.msra.mxu0 0.0
      %7942 = vmatpush.msra.mxu0 0.0
      %7943 = vmatpush.msra.mxu0 0.0
      %7944 = vmatpush.msra.mxu0 0.0
      %7945 = vmatpush.msra.mxu0 0.0
      %7946 = vmatpush.msra.mxu0 0.0
      %7947 = vmatpush.msra.mxu0 0.0
      %7948 = vmatpush.msra.mxu0 0.0
      %7949 = vmatpush.msra.mxu0 0.0
      %7950 = vmatpush.msra.mxu0 0.0
      %7951 = vmatpush.msra.mxu0 0.0
      %7952 = vmatpush.msra.mxu0 0.0
      %7953 = vmatpush.msra.mxu0 0.0
      %7954 = vmatpush.msra.mxu0 0.0
      %7955 = vmatpush.msra.mxu0 %v7795
      %7956 = vmatmul.f32.gmra.mxu0 %v7797
      %v7957 = vpop.f32.mrf.mxu0
      %v7958 = vadd.f32 0.0, %v7957
      %7959 = vmatmul.f32.gmra.mxu0 %v7800
      %v7960 = vpop.f32.mrf.mxu0
      %v7961 = vadd.f32 0.0, %v7960
      %7962 = vmatmul.f32.gmra.mxu0 %v7803
      %v7963 = vpop.f32.mrf.mxu0
      %v7964 = vadd.f32 0.0, %v7963
      %7965 = vmatmul.f32.gmra.mxu0 %v7806
      %v7966 = vpop.f32.mrf.mxu0
      %v7967 = vadd.f32 0.0, %v7966
      %7968 = vmatmul.f32.gmra.mxu0 %v7809
      %v7969 = vpop.f32.mrf.mxu0
      %v7970 = vadd.f32 0.0, %v7969
      %7971 = vmatmul.f32.gmra.mxu0 %v7812
      %v7972 = vpop.f32.mrf.mxu0
      %v7973 = vadd.f32 0.0, %v7972
      %7974 = vmatmul.f32.gmra.mxu0 %v7815
      %v7975 = vpop.f32.mrf.mxu0
      %v7976 = vadd.f32 0.0, %v7975
      %7977 = vmatmul.f32.gmra.mxu0 %v7818
      %v7978 = vpop.f32.mrf.mxu0
      %v7979 = vadd.f32 0.0, %v7978
      %7980 = vmatmul.f32.gmra.mxu0 %v7821
      %v7981 = vpop.f32.mrf.mxu0
      %v7982 = vadd.f32 0.0, %v7981
      %7983 = vmatmul.f32.gmra.mxu0 %v7824
      %v7984 = vpop.f32.mrf.mxu0
      %v7985 = vadd.f32 0.0, %v7984
      %7986 = vmatmul.f32.gmra.mxu0 %v7827
      %v7987 = vpop.f32.mrf.mxu0
      %v7988 = vadd.f32 0.0, %v7987
      %7989 = vmatmul.f32.gmra.mxu0 %v7830
      %v7990 = vpop.f32.mrf.mxu0
      %v7991 = vadd.f32 0.0, %v7990
      %7992 = vmatmul.f32.gmra.mxu0 %v7833
      %v7993 = vpop.f32.mrf.mxu0
      %v7994 = vadd.f32 0.0, %v7993
      %7995 = vmatmul.f32.gmra.mxu0 %v7836
      %v7996 = vpop.f32.mrf.mxu0
      %v7997 = vadd.f32 0.0, %v7996
      %7998 = vmatmul.f32.gmra.mxu0 %v7839
      %v7999 = vpop.f32.mrf.mxu0
      %v8000 = vadd.f32 0.0, %v7999
      %8001 = vmatmul.f32.gmra.mxu0 %v7842
      %v8002 = vpop.f32.mrf.mxu0
      %v8003 = vadd.f32 0.0, %v8002
      %8004 = vmatmul.f32.gmra.mxu0 %v7845
      %v8005 = vpop.f32.mrf.mxu0
      %v8006 = vadd.f32 0.0, %v8005
      %8007 = vmatmul.f32.gmra.mxu0 %v7848
      %v8008 = vpop.f32.mrf.mxu0
      %v8009 = vadd.f32 0.0, %v8008
      %8010 = vmatmul.f32.gmra.mxu0 %v7851
      %v8011 = vpop.f32.mrf.mxu0
      %v8012 = vadd.f32 0.0, %v8011
      %8013 = vmatmul.f32.gmra.mxu0 %v7854
      %v8014 = vpop.f32.mrf.mxu0
      %v8015 = vadd.f32 0.0, %v8014
      %8016 = vmatmul.f32.gmra.mxu0 %v7857
      %v8017 = vpop.f32.mrf.mxu0
      %v8018 = vadd.f32 0.0, %v8017
      %8019 = vmatmul.f32.gmra.mxu0 %v7860
      %v8020 = vpop.f32.mrf.mxu0
      %v8021 = vadd.f32 0.0, %v8020
      %8022 = vmatmul.f32.gmra.mxu0 %v7863
      %v8023 = vpop.f32.mrf.mxu0
      %v8024 = vadd.f32 0.0, %v8023
      %8025 = vmatmul.f32.gmra.mxu0 %v7866
      %v8026 = vpop.f32.mrf.mxu0
      %v8027 = vadd.f32 0.0, %v8026
      %8028 = vmatmul.f32.gmra.mxu0 %v7869
      %v8029 = vpop.f32.mrf.mxu0
      %v8030 = vadd.f32 0.0, %v8029
      %8031 = vmatmul.f32.gmra.mxu0 %v7872
      %v8032 = vpop.f32.mrf.mxu0
      %v8033 = vadd.f32 0.0, %v8032
      %8034 = vmatmul.f32.gmra.mxu0 %v7875
      %v8035 = vpop.f32.mrf.mxu0
      %v8036 = vadd.f32 0.0, %v8035
      %8037 = vmatmul.f32.gmra.mxu0 %v7878
      %v8038 = vpop.f32.mrf.mxu0
      %v8039 = vadd.f32 0.0, %v8038
      %8040 = vmatmul.f32.gmra.mxu0 %v7881
      %v8041 = vpop.f32.mrf.mxu0
      %v8042 = vadd.f32 0.0, %v8041
      %8043 = vmatmul.f32.gmra.mxu0 %v7884
      %v8044 = vpop.f32.mrf.mxu0
      %v8045 = vadd.f32 0.0, %v8044
      %8046 = vmatmul.f32.gmra.mxu0 %v7887
      %v8047 = vpop.f32.mrf.mxu0
      %v8048 = vadd.f32 0.0, %v8047
      %8049 = vmatmul.f32.gmra.mxu0 %v7890
      %v8050 = vpop.f32.mrf.mxu0
      %v8051 = vadd.f32 0.0, %v8050
      %8052 = vmatmul.f32.gmra.mxu0 %v7893
      %v8053 = vpop.f32.mrf.mxu0
      %v8054 = vadd.f32 0.0, %v8053
      %8055 = vmatmul.f32.gmra.mxu0 %v7896
      %v8056 = vpop.f32.mrf.mxu0
      %v8057 = vadd.f32 0.0, %v8056
      %8058 = vmatmul.f32.gmra.mxu0 %v7899
      %v8059 = vpop.f32.mrf.mxu0
      %v8060 = vadd.f32 0.0, %v8059
      %8061 = vmatmul.f32.gmra.mxu0 %v7902
      %v8062 = vpop.f32.mrf.mxu0
      %v8063 = vadd.f32 0.0, %v8062
      %8064 = vmatmul.f32.gmra.mxu0 %v7905
      %v8065 = vpop.f32.mrf.mxu0
      %v8066 = vadd.f32 0.0, %v8065
      %8067 = vmatmul.f32.gmra.mxu0 %v7908
      %v8068 = vpop.f32.mrf.mxu0
      %v8069 = vadd.f32 0.0, %v8068
      %8070 = vmatmul.f32.gmra.mxu0 %v7911
      %v8071 = vpop.f32.mrf.mxu0
      %v8072 = vadd.f32 0.0, %v8071
      %8073 = vmatmul.f32.gmra.mxu0 %v7914
      %v8074 = vpop.f32.mrf.mxu0
      %v8075 = vadd.f32 0.0, %v8074
      %8076 = vmatmul.f32.gmra.mxu0 %v7917
      %v8077 = vpop.f32.mrf.mxu0
      %v8078 = vadd.f32 0.0, %v8077
      %8079 = vmatmul.f32.gmra.mxu0 %v7920
      %v8080 = vpop.f32.mrf.mxu0
      %v8081 = vadd.f32 0.0, %v8080
      %8082 = vmatmul.f32.gmra.mxu0 %v7923
      %v8083 = vpop.f32.mrf.mxu0
      %v8084 = vadd.f32 0.0, %v8083
      %8085 = vmatmul.f32.gmra.mxu0 %v7926
      %v8086 = vpop.f32.mrf.mxu0
      %v8087 = vadd.f32 0.0, %v8086
      %8088 = vmatmul.f32.gmra.mxu0 %v7929
      %v8089 = vpop.f32.mrf.mxu0
      %v8090 = vadd.f32 0.0, %v8089
      %8091 = vmatmul.f32.gmra.mxu0 %v7932
      %v8092 = vpop.f32.mrf.mxu0
      %v8093 = vadd.f32 0.0, %v8092
      %8094 = vmatmul.f32.gmra.mxu0 %v7935
      %v8095 = vpop.f32.mrf.mxu0
      %v8096 = vadd.f32 0.0, %v8095
      %8097 = vmatmul.f32.gmra.mxu0 %v7938
      %v8098 = vpop.f32.mrf.mxu0
      %v8099 = vadd.f32 0.0, %v8098
      %8100 = vdwg.mxu0
      %v8101 = vadd.f32 %v7698, %v7958
      %v8102 = vadd.f32 %v7699, %v7961
      %v8103 = vadd.f32 %v7700, %v7964
      %v8104 = vadd.f32 %v7701, %v7967
      %v8105 = vadd.f32 %v7702, %v7970
      %v8106 = vadd.f32 %v7703, %v7973
      %v8107 = vadd.f32 %v7704, %v7976
      %v8108 = vadd.f32 %v7705, %v7979
      %v8109 = vadd.f32 %v7706, %v7982
      %v8110 = vadd.f32 %v7707, %v7985
      %v8111 = vadd.f32 %v7708, %v7988
      %v8112 = vadd.f32 %v7709, %v7991
      %v8113 = vadd.f32 %v7710, %v7994
      %v8114 = vadd.f32 %v7711, %v7997
      %v8115 = vadd.f32 %v7712, %v8000
      %v8116 = vadd.f32 %v7713, %v8003
      %v8117 = vadd.f32 %v7714, %v8006
      %v8118 = vadd.f32 %v7715, %v8009
      %v8119 = vadd.f32 %v7716, %v8012
      %v8120 = vadd.f32 %v7717, %v8015
      %v8121 = vadd.f32 %v7718, %v8018
      %v8122 = vadd.f32 %v7719, %v8021
      %v8123 = vadd.f32 %v7720, %v8024
      %v8124 = vadd.f32 %v7721, %v8027
      %v8125 = vadd.f32 %v7722, %v8030
      %v8126 = vadd.f32 %v7723, %v8033
      %v8127 = vadd.f32 %v7724, %v8036
      %v8128 = vadd.f32 %v7725, %v8039
      %v8129 = vadd.f32 %v7726, %v8042
      %v8130 = vadd.f32 %v7727, %v8045
      %v8131 = vadd.f32 %v7728, %v8048
      %v8132 = vadd.f32 %v7729, %v8051
      %v8133 = vadd.f32 %v7730, %v8054
      %v8134 = vadd.f32 %v7731, %v8057
      %v8135 = vadd.f32 %v7732, %v8060
      %v8136 = vadd.f32 %v7733, %v8063
      %v8137 = vadd.f32 %v7734, %v8066
      %v8138 = vadd.f32 %v7735, %v8069
      %v8139 = vadd.f32 %v7736, %v8072
      %v8140 = vadd.f32 %v7737, %v8075
      %v8141 = vadd.f32 %v7738, %v8078
      %v8142 = vadd.f32 %v7739, %v8081
      %v8143 = vadd.f32 %v7740, %v8084
      %v8144 = vadd.f32 %v7741, %v8087
      %v8145 = vadd.f32 %v7742, %v8090
      %v8146 = vadd.f32 %v7743, %v8093
      %v8147 = vadd.f32 %v7744, %v8096
      %v8148 = vadd.f32 %v7745, %v8099
      %v8149 = vld [vmem:[#allocation2 + $0x31] sm:$0xff]
      %v8150 = vld [vmem:[#allocation2 + $0x39] sm:$0xff]
      %v8151 = vld [vmem:[#allocation2 + $0x41] sm:$0xff]
      %v8152 = vld [vmem:[#allocation2 + $0x49] sm:$0xff]
      %v8153 = vld [vmem:[#allocation2 + $0x51] sm:$0xff]
      %v8154 = vld [vmem:[#allocation2 + $0x59] sm:$0xff]
      %v8155 = vld [vmem:[#allocation2 + $0x61] sm:$0xff]
      %v8156 = vld [vmem:[#allocation2 + $0x69] sm:$0xff]
      %v8157 = vld [vmem:[#allocation2 + $0x71] sm:$0xff]
      %v8158 = vld [vmem:[#allocation2 + $0x79] sm:$0xff]
      %v8159 = vld [vmem:[#allocation2 + $0x81] sm:$0xff]
      %v8160 = vld [vmem:[#allocation2 + $0x89] sm:$0xff]
      %v8161 = vld [vmem:[#allocation2 + $0x91] sm:$0xff]
      %v8162 = vld [vmem:[#allocation2 + $0x99] sm:$0xff]
      %v8163 = vld [vmem:[#allocation2 + $0xa1] sm:$0xff]
      %v8164 = vld [vmem:[#allocation2 + $0xa9] sm:$0xff]
      %v8165 = vld [vmem:[#allocation2 + $0xb1] sm:$0xff]
      %v8166 = vld [vmem:[#allocation2 + $0xb9] sm:$0xff]
      %v8167 = vld [vmem:[#allocation2 + $0xc1] sm:$0xff]
      %v8168 = vld [vmem:[#allocation2 + $0xc9] sm:$0xff]
      %v8169 = vld [vmem:[#allocation2 + $0xd1] sm:$0xff]
      %v8170 = vld [vmem:[#allocation2 + $0xd9] sm:$0xff]
      %v8171 = vld [vmem:[#allocation2 + $0xe1] sm:$0xff]
      %v8172 = vld [vmem:[#allocation2 + $0xe9] sm:$0xff]
      %v8173 = vld [vmem:[#allocation2 + $0xf1] sm:$0xff]
      %v8174 = vld [vmem:[#allocation2 + $0xf9] sm:$0xff]
      %v8175 = vld [vmem:[#allocation2 + $0x101] sm:$0xff]
      %v8176 = vld [vmem:[#allocation2 + $0x109] sm:$0xff]
      %v8177 = vld [vmem:[#allocation2 + $0x111] sm:$0xff]
      %v8178 = vld [vmem:[#allocation2 + $0x119] sm:$0xff]
      %v8179 = vld [vmem:[#allocation2 + $0x121] sm:$0xff]
      %v8180 = vld [vmem:[#allocation2 + $0x129] sm:$0xff]
      %v8181 = vld [vmem:[#allocation2 + $0x131] sm:$0xff]
      %v8182 = vld [vmem:[#allocation2 + $0x139] sm:$0xff]
      %v8183 = vld [vmem:[#allocation2 + $0x141] sm:$0xff]
      %v8184 = vld [vmem:[#allocation2 + $0x149] sm:$0xff]
      %v8185 = vld [vmem:[#allocation2 + $0x151] sm:$0xff]
      %v8186 = vld [vmem:[#allocation2 + $0x159] sm:$0xff]
      %v8187 = vld [vmem:[#allocation2 + $0x161] sm:$0xff]
      %v8188 = vld [vmem:[#allocation2 + $0x169] sm:$0xff]
      %v8189 = vld [vmem:[#allocation2 + $0x171] sm:$0xff]
      %v8190 = vld [vmem:[#allocation2 + $0x179] sm:$0xff]
      %v8191 = vld [vmem:[#allocation2 + $0x181] sm:$0xff]
      %v8192 = vld [vmem:[#allocation2 + $0x189] sm:$0xff]
      %v8193 = vld [vmem:[#allocation2 + $0x191] sm:$0xff]
      %v8194 = vld [vmem:[#allocation2 + $0x199] sm:$0xff]
      %v8195 = vld [vmem:[#allocation2 + $0x1a1] sm:$0xff]
      %v8196 = vld [vmem:[#allocation2 + $0x1a9] sm:$0xff]
      %s8197 = scalar_lea.vmem %s6, 56
      %v8198 = vld [vmem:[%s8197] sm:$0xff]
      %v8200 = vsel %vm4433, %v8149, 0
      %v8203 = vsel %vm4433, %v8150, 0
      %v8206 = vsel %vm4433, %v8151, 0
      %v8209 = vsel %vm4433, %v8152, 0
      %v8212 = vsel %vm4433, %v8153, 0
      %v8215 = vsel %vm4433, %v8154, 0
      %v8218 = vsel %vm4433, %v8155, 0
      %v8221 = vsel %vm4433, %v8156, 0
      %v8224 = vsel %vm4433, %v8157, 0
      %v8227 = vsel %vm4433, %v8158, 0
      %v8230 = vsel %vm4433, %v8159, 0
      %v8233 = vsel %vm4433, %v8160, 0
      %v8236 = vsel %vm4433, %v8161, 0
      %v8239 = vsel %vm4433, %v8162, 0
      %v8242 = vsel %vm4433, %v8163, 0
      %v8245 = vsel %vm4433, %v8164, 0
      %v8248 = vsel %vm4433, %v8165, 0
      %v8251 = vsel %vm4433, %v8166, 0
      %v8254 = vsel %vm4433, %v8167, 0
      %v8257 = vsel %vm4433, %v8168, 0
      %v8260 = vsel %vm4433, %v8169, 0
      %v8263 = vsel %vm4433, %v8170, 0
      %v8266 = vsel %vm4433, %v8171, 0
      %v8269 = vsel %vm4433, %v8172, 0
      %v8272 = vsel %vm4433, %v8173, 0
      %v8275 = vsel %vm4433, %v8174, 0
      %v8278 = vsel %vm4433, %v8175, 0
      %v8281 = vsel %vm4433, %v8176, 0
      %v8284 = vsel %vm4433, %v8177, 0
      %v8287 = vsel %vm4433, %v8178, 0
      %v8290 = vsel %vm4433, %v8179, 0
      %v8293 = vsel %vm4433, %v8180, 0
      %v8296 = vsel %vm4433, %v8181, 0
      %v8299 = vsel %vm4433, %v8182, 0
      %v8302 = vsel %vm4433, %v8183, 0
      %v8305 = vsel %vm4433, %v8184, 0
      %v8308 = vsel %vm4433, %v8185, 0
      %v8311 = vsel %vm4433, %v8186, 0
      %v8314 = vsel %vm4433, %v8187, 0
      %v8317 = vsel %vm4433, %v8188, 0
      %v8320 = vsel %vm4433, %v8189, 0
      %v8323 = vsel %vm4433, %v8190, 0
      %v8326 = vsel %vm4433, %v8191, 0
      %v8329 = vsel %vm4433, %v8192, 0
      %v8332 = vsel %vm4433, %v8193, 0
      %v8335 = vsel %vm4433, %v8194, 0
      %v8338 = vsel %vm4433, %v8195, 0
      %v8341 = vsel %vm4433, %v8196, 0
      %8343 = vmatpush.msra.mxu0 0.0
      %8344 = vmatpush.msra.mxu0 0.0
      %8345 = vmatpush.msra.mxu0 0.0
      %8346 = vmatpush.msra.mxu0 0.0
      %8347 = vmatpush.msra.mxu0 0.0
      %8348 = vmatpush.msra.mxu0 0.0
      %8349 = vmatpush.msra.mxu0 0.0
      %8350 = vmatpush.msra.mxu0 0.0
      %8351 = vmatpush.msra.mxu0 0.0
      %8352 = vmatpush.msra.mxu0 0.0
      %8353 = vmatpush.msra.mxu0 0.0
      %8354 = vmatpush.msra.mxu0 0.0
      %8355 = vmatpush.msra.mxu0 0.0
      %8356 = vmatpush.msra.mxu0 0.0
      %8357 = vmatpush.msra.mxu0 0.0
      %8358 = vmatpush.msra.mxu0 %v8198
      %8359 = vmatmul.f32.gmra.mxu0 %v8200
      %v8360 = vpop.f32.mrf.mxu0
      %v8361 = vadd.f32 0.0, %v8360
      %8362 = vmatmul.f32.gmra.mxu0 %v8203
      %v8363 = vpop.f32.mrf.mxu0
      %v8364 = vadd.f32 0.0, %v8363
      %8365 = vmatmul.f32.gmra.mxu0 %v8206
      %v8366 = vpop.f32.mrf.mxu0
      %v8367 = vadd.f32 0.0, %v8366
      %8368 = vmatmul.f32.gmra.mxu0 %v8209
      %v8369 = vpop.f32.mrf.mxu0
      %v8370 = vadd.f32 0.0, %v8369
      %8371 = vmatmul.f32.gmra.mxu0 %v8212
      %v8372 = vpop.f32.mrf.mxu0
      %v8373 = vadd.f32 0.0, %v8372
      %8374 = vmatmul.f32.gmra.mxu0 %v8215
      %v8375 = vpop.f32.mrf.mxu0
      %v8376 = vadd.f32 0.0, %v8375
      %8377 = vmatmul.f32.gmra.mxu0 %v8218
      %v8378 = vpop.f32.mrf.mxu0
      %v8379 = vadd.f32 0.0, %v8378
      %8380 = vmatmul.f32.gmra.mxu0 %v8221
      %v8381 = vpop.f32.mrf.mxu0
      %v8382 = vadd.f32 0.0, %v8381
      %8383 = vmatmul.f32.gmra.mxu0 %v8224
      %v8384 = vpop.f32.mrf.mxu0
      %v8385 = vadd.f32 0.0, %v8384
      %8386 = vmatmul.f32.gmra.mxu0 %v8227
      %v8387 = vpop.f32.mrf.mxu0
      %v8388 = vadd.f32 0.0, %v8387
      %8389 = vmatmul.f32.gmra.mxu0 %v8230
      %v8390 = vpop.f32.mrf.mxu0
      %v8391 = vadd.f32 0.0, %v8390
      %8392 = vmatmul.f32.gmra.mxu0 %v8233
      %v8393 = vpop.f32.mrf.mxu0
      %v8394 = vadd.f32 0.0, %v8393
      %8395 = vmatmul.f32.gmra.mxu0 %v8236
      %v8396 = vpop.f32.mrf.mxu0
      %v8397 = vadd.f32 0.0, %v8396
      %8398 = vmatmul.f32.gmra.mxu0 %v8239
      %v8399 = vpop.f32.mrf.mxu0
      %v8400 = vadd.f32 0.0, %v8399
      %8401 = vmatmul.f32.gmra.mxu0 %v8242
      %v8402 = vpop.f32.mrf.mxu0
      %v8403 = vadd.f32 0.0, %v8402
      %8404 = vmatmul.f32.gmra.mxu0 %v8245
      %v8405 = vpop.f32.mrf.mxu0
      %v8406 = vadd.f32 0.0, %v8405
      %8407 = vmatmul.f32.gmra.mxu0 %v8248
      %v8408 = vpop.f32.mrf.mxu0
      %v8409 = vadd.f32 0.0, %v8408
      %8410 = vmatmul.f32.gmra.mxu0 %v8251
      %v8411 = vpop.f32.mrf.mxu0
      %v8412 = vadd.f32 0.0, %v8411
      %8413 = vmatmul.f32.gmra.mxu0 %v8254
      %v8414 = vpop.f32.mrf.mxu0
      %v8415 = vadd.f32 0.0, %v8414
      %8416 = vmatmul.f32.gmra.mxu0 %v8257
      %v8417 = vpop.f32.mrf.mxu0
      %v8418 = vadd.f32 0.0, %v8417
      %8419 = vmatmul.f32.gmra.mxu0 %v8260
      %v8420 = vpop.f32.mrf.mxu0
      %v8421 = vadd.f32 0.0, %v8420
      %8422 = vmatmul.f32.gmra.mxu0 %v8263
      %v8423 = vpop.f32.mrf.mxu0
      %v8424 = vadd.f32 0.0, %v8423
      %8425 = vmatmul.f32.gmra.mxu0 %v8266
      %v8426 = vpop.f32.mrf.mxu0
      %v8427 = vadd.f32 0.0, %v8426
      %8428 = vmatmul.f32.gmra.mxu0 %v8269
      %v8429 = vpop.f32.mrf.mxu0
      %v8430 = vadd.f32 0.0, %v8429
      %8431 = vmatmul.f32.gmra.mxu0 %v8272
      %v8432 = vpop.f32.mrf.mxu0
      %v8433 = vadd.f32 0.0, %v8432
      %8434 = vmatmul.f32.gmra.mxu0 %v8275
      %v8435 = vpop.f32.mrf.mxu0
      %v8436 = vadd.f32 0.0, %v8435
      %8437 = vmatmul.f32.gmra.mxu0 %v8278
      %v8438 = vpop.f32.mrf.mxu0
      %v8439 = vadd.f32 0.0, %v8438
      %8440 = vmatmul.f32.gmra.mxu0 %v8281
      %v8441 = vpop.f32.mrf.mxu0
      %v8442 = vadd.f32 0.0, %v8441
      %8443 = vmatmul.f32.gmra.mxu0 %v8284
      %v8444 = vpop.f32.mrf.mxu0
      %v8445 = vadd.f32 0.0, %v8444
      %8446 = vmatmul.f32.gmra.mxu0 %v8287
      %v8447 = vpop.f32.mrf.mxu0
      %v8448 = vadd.f32 0.0, %v8447
      %8449 = vmatmul.f32.gmra.mxu0 %v8290
      %v8450 = vpop.f32.mrf.mxu0
      %v8451 = vadd.f32 0.0, %v8450
      %8452 = vmatmul.f32.gmra.mxu0 %v8293
      %v8453 = vpop.f32.mrf.mxu0
      %v8454 = vadd.f32 0.0, %v8453
      %8455 = vmatmul.f32.gmra.mxu0 %v8296
      %v8456 = vpop.f32.mrf.mxu0
      %v8457 = vadd.f32 0.0, %v8456
      %8458 = vmatmul.f32.gmra.mxu0 %v8299
      %v8459 = vpop.f32.mrf.mxu0
      %v8460 = vadd.f32 0.0, %v8459
      %8461 = vmatmul.f32.gmra.mxu0 %v8302
      %v8462 = vpop.f32.mrf.mxu0
      %v8463 = vadd.f32 0.0, %v8462
      %8464 = vmatmul.f32.gmra.mxu0 %v8305
      %v8465 = vpop.f32.mrf.mxu0
      %v8466 = vadd.f32 0.0, %v8465
      %8467 = vmatmul.f32.gmra.mxu0 %v8308
      %v8468 = vpop.f32.mrf.mxu0
      %v8469 = vadd.f32 0.0, %v8468
      %8470 = vmatmul.f32.gmra.mxu0 %v8311
      %v8471 = vpop.f32.mrf.mxu0
      %v8472 = vadd.f32 0.0, %v8471
      %8473 = vmatmul.f32.gmra.mxu0 %v8314
      %v8474 = vpop.f32.mrf.mxu0
      %v8475 = vadd.f32 0.0, %v8474
      %8476 = vmatmul.f32.gmra.mxu0 %v8317
      %v8477 = vpop.f32.mrf.mxu0
      %v8478 = vadd.f32 0.0, %v8477
      %8479 = vmatmul.f32.gmra.mxu0 %v8320
      %v8480 = vpop.f32.mrf.mxu0
      %v8481 = vadd.f32 0.0, %v8480
      %8482 = vmatmul.f32.gmra.mxu0 %v8323
      %v8483 = vpop.f32.mrf.mxu0
      %v8484 = vadd.f32 0.0, %v8483
      %8485 = vmatmul.f32.gmra.mxu0 %v8326
      %v8486 = vpop.f32.mrf.mxu0
      %v8487 = vadd.f32 0.0, %v8486
      %8488 = vmatmul.f32.gmra.mxu0 %v8329
      %v8489 = vpop.f32.mrf.mxu0
      %v8490 = vadd.f32 0.0, %v8489
      %8491 = vmatmul.f32.gmra.mxu0 %v8332
      %v8492 = vpop.f32.mrf.mxu0
      %v8493 = vadd.f32 0.0, %v8492
      %8494 = vmatmul.f32.gmra.mxu0 %v8335
      %v8495 = vpop.f32.mrf.mxu0
      %v8496 = vadd.f32 0.0, %v8495
      %8497 = vmatmul.f32.gmra.mxu0 %v8338
      %v8498 = vpop.f32.mrf.mxu0
      %v8499 = vadd.f32 0.0, %v8498
      %8500 = vmatmul.f32.gmra.mxu0 %v8341
      %v8501 = vpop.f32.mrf.mxu0
      %v8502 = vadd.f32 0.0, %v8501
      %8503 = vdwg.mxu0
      %v8504 = vadd.f32 %v8101, %v8361
      %v8505 = vadd.f32 %v8102, %v8364
      %v8506 = vadd.f32 %v8103, %v8367
      %v8507 = vadd.f32 %v8104, %v8370
      %v8508 = vadd.f32 %v8105, %v8373
      %v8509 = vadd.f32 %v8106, %v8376
      %v8510 = vadd.f32 %v8107, %v8379
      %v8511 = vadd.f32 %v8108, %v8382
      %v8512 = vadd.f32 %v8109, %v8385
      %v8513 = vadd.f32 %v8110, %v8388
      %v8514 = vadd.f32 %v8111, %v8391
      %v8515 = vadd.f32 %v8112, %v8394
      %v8516 = vadd.f32 %v8113, %v8397
      %v8517 = vadd.f32 %v8114, %v8400
      %v8518 = vadd.f32 %v8115, %v8403
      %v8519 = vadd.f32 %v8116, %v8406
      %v8520 = vadd.f32 %v8117, %v8409
      %v8521 = vadd.f32 %v8118, %v8412
      %v8522 = vadd.f32 %v8119, %v8415
      %v8523 = vadd.f32 %v8120, %v8418
      %v8524 = vadd.f32 %v8121, %v8421
      %v8525 = vadd.f32 %v8122, %v8424
      %v8526 = vadd.f32 %v8123, %v8427
      %v8527 = vadd.f32 %v8124, %v8430
      %v8528 = vadd.f32 %v8125, %v8433
      %v8529 = vadd.f32 %v8126, %v8436
      %v8530 = vadd.f32 %v8127, %v8439
      %v8531 = vadd.f32 %v8128, %v8442
      %v8532 = vadd.f32 %v8129, %v8445
      %v8533 = vadd.f32 %v8130, %v8448
      %v8534 = vadd.f32 %v8131, %v8451
      %v8535 = vadd.f32 %v8132, %v8454
      %v8536 = vadd.f32 %v8133, %v8457
      %v8537 = vadd.f32 %v8134, %v8460
      %v8538 = vadd.f32 %v8135, %v8463
      %v8539 = vadd.f32 %v8136, %v8466
      %v8540 = vadd.f32 %v8137, %v8469
      %v8541 = vadd.f32 %v8138, %v8472
      %v8542 = vadd.f32 %v8139, %v8475
      %v8543 = vadd.f32 %v8140, %v8478
      %v8544 = vadd.f32 %v8141, %v8481
      %v8545 = vadd.f32 %v8142, %v8484
      %v8546 = vadd.f32 %v8143, %v8487
      %v8547 = vadd.f32 %v8144, %v8490
      %v8548 = vadd.f32 %v8145, %v8493
      %v8549 = vadd.f32 %v8146, %v8496
      %v8550 = vadd.f32 %v8147, %v8499
      %v8551 = vadd.f32 %v8148, %v8502
      %v8552 = vld [vmem:[#allocation2 + $0x32] sm:$0xff]
      %v8553 = vld [vmem:[#allocation2 + $0x3a] sm:$0xff]
      %v8554 = vld [vmem:[#allocation2 + $0x42] sm:$0xff]
      %v8555 = vld [vmem:[#allocation2 + $0x4a] sm:$0xff]
      %v8556 = vld [vmem:[#allocation2 + $0x52] sm:$0xff]
      %v8557 = vld [vmem:[#allocation2 + $0x5a] sm:$0xff]
      %v8558 = vld [vmem:[#allocation2 + $0x62] sm:$0xff]
      %v8559 = vld [vmem:[#allocation2 + $0x6a] sm:$0xff]
      %v8560 = vld [vmem:[#allocation2 + $0x72] sm:$0xff]
      %v8561 = vld [vmem:[#allocation2 + $0x7a] sm:$0xff]
      %v8562 = vld [vmem:[#allocation2 + $0x82] sm:$0xff]
      %v8563 = vld [vmem:[#allocation2 + $0x8a] sm:$0xff]
      %v8564 = vld [vmem:[#allocation2 + $0x92] sm:$0xff]
      %v8565 = vld [vmem:[#allocation2 + $0x9a] sm:$0xff]
      %v8566 = vld [vmem:[#allocation2 + $0xa2] sm:$0xff]
      %v8567 = vld [vmem:[#allocation2 + $0xaa] sm:$0xff]
      %v8568 = vld [vmem:[#allocation2 + $0xb2] sm:$0xff]
      %v8569 = vld [vmem:[#allocation2 + $0xba] sm:$0xff]
      %v8570 = vld [vmem:[#allocation2 + $0xc2] sm:$0xff]
      %v8571 = vld [vmem:[#allocation2 + $0xca] sm:$0xff]
      %v8572 = vld [vmem:[#allocation2 + $0xd2] sm:$0xff]
      %v8573 = vld [vmem:[#allocation2 + $0xda] sm:$0xff]
      %v8574 = vld [vmem:[#allocation2 + $0xe2] sm:$0xff]
      %v8575 = vld [vmem:[#allocation2 + $0xea] sm:$0xff]
      %v8576 = vld [vmem:[#allocation2 + $0xf2] sm:$0xff]
      %v8577 = vld [vmem:[#allocation2 + $0xfa] sm:$0xff]
      %v8578 = vld [vmem:[#allocation2 + $0x102] sm:$0xff]
      %v8579 = vld [vmem:[#allocation2 + $0x10a] sm:$0xff]
      %v8580 = vld [vmem:[#allocation2 + $0x112] sm:$0xff]
      %v8581 = vld [vmem:[#allocation2 + $0x11a] sm:$0xff]
      %v8582 = vld [vmem:[#allocation2 + $0x122] sm:$0xff]
      %v8583 = vld [vmem:[#allocation2 + $0x12a] sm:$0xff]
      %v8584 = vld [vmem:[#allocation2 + $0x132] sm:$0xff]
      %v8585 = vld [vmem:[#allocation2 + $0x13a] sm:$0xff]
      %v8586 = vld [vmem:[#allocation2 + $0x142] sm:$0xff]
      %v8587 = vld [vmem:[#allocation2 + $0x14a] sm:$0xff]
      %v8588 = vld [vmem:[#allocation2 + $0x152] sm:$0xff]
      %v8589 = vld [vmem:[#allocation2 + $0x15a] sm:$0xff]
      %v8590 = vld [vmem:[#allocation2 + $0x162] sm:$0xff]
      %v8591 = vld [vmem:[#allocation2 + $0x16a] sm:$0xff]
      %v8592 = vld [vmem:[#allocation2 + $0x172] sm:$0xff]
      %v8593 = vld [vmem:[#allocation2 + $0x17a] sm:$0xff]
      %v8594 = vld [vmem:[#allocation2 + $0x182] sm:$0xff]
      %v8595 = vld [vmem:[#allocation2 + $0x18a] sm:$0xff]
      %v8596 = vld [vmem:[#allocation2 + $0x192] sm:$0xff]
      %v8597 = vld [vmem:[#allocation2 + $0x19a] sm:$0xff]
      %v8598 = vld [vmem:[#allocation2 + $0x1a2] sm:$0xff]
      %v8599 = vld [vmem:[#allocation2 + $0x1aa] sm:$0xff]
      %s8600 = scalar_lea.vmem %s6, 64
      %v8601 = vld [vmem:[%s8600] sm:$0xff]
      %v8603 = vsel %vm4433, %v8552, 0
      %v8606 = vsel %vm4433, %v8553, 0
      %v8609 = vsel %vm4433, %v8554, 0
      %v8612 = vsel %vm4433, %v8555, 0
      %v8615 = vsel %vm4433, %v8556, 0
      %v8618 = vsel %vm4433, %v8557, 0
      %v8621 = vsel %vm4433, %v8558, 0
      %v8624 = vsel %vm4433, %v8559, 0
      %v8627 = vsel %vm4433, %v8560, 0
      %v8630 = vsel %vm4433, %v8561, 0
      %v8633 = vsel %vm4433, %v8562, 0
      %v8636 = vsel %vm4433, %v8563, 0
      %v8639 = vsel %vm4433, %v8564, 0
      %v8642 = vsel %vm4433, %v8565, 0
      %v8645 = vsel %vm4433, %v8566, 0
      %v8648 = vsel %vm4433, %v8567, 0
      %v8651 = vsel %vm4433, %v8568, 0
      %v8654 = vsel %vm4433, %v8569, 0
      %v8657 = vsel %vm4433, %v8570, 0
      %v8660 = vsel %vm4433, %v8571, 0
      %v8663 = vsel %vm4433, %v8572, 0
      %v8666 = vsel %vm4433, %v8573, 0
      %v8669 = vsel %vm4433, %v8574, 0
      %v8672 = vsel %vm4433, %v8575, 0
      %v8675 = vsel %vm4433, %v8576, 0
      %v8678 = vsel %vm4433, %v8577, 0
      %v8681 = vsel %vm4433, %v8578, 0
      %v8684 = vsel %vm4433, %v8579, 0
      %v8687 = vsel %vm4433, %v8580, 0
      %v8690 = vsel %vm4433, %v8581, 0
      %v8693 = vsel %vm4433, %v8582, 0
      %v8696 = vsel %vm4433, %v8583, 0
      %v8699 = vsel %vm4433, %v8584, 0
      %v8702 = vsel %vm4433, %v8585, 0
      %v8705 = vsel %vm4433, %v8586, 0
      %v8708 = vsel %vm4433, %v8587, 0
      %v8711 = vsel %vm4433, %v8588, 0
      %v8714 = vsel %vm4433, %v8589, 0
      %v8717 = vsel %vm4433, %v8590, 0
      %v8720 = vsel %vm4433, %v8591, 0
      %v8723 = vsel %vm4433, %v8592, 0
      %v8726 = vsel %vm4433, %v8593, 0
      %v8729 = vsel %vm4433, %v8594, 0
      %v8732 = vsel %vm4433, %v8595, 0
      %v8735 = vsel %vm4433, %v8596, 0
      %v8738 = vsel %vm4433, %v8597, 0
      %v8741 = vsel %vm4433, %v8598, 0
      %v8744 = vsel %vm4433, %v8599, 0
      %8746 = vmatpush.msra.mxu0 0.0
      %8747 = vmatpush.msra.mxu0 0.0
      %8748 = vmatpush.msra.mxu0 0.0
      %8749 = vmatpush.msra.mxu0 0.0
      %8750 = vmatpush.msra.mxu0 0.0
      %8751 = vmatpush.msra.mxu0 0.0
      %8752 = vmatpush.msra.mxu0 0.0
      %8753 = vmatpush.msra.mxu0 0.0
      %8754 = vmatpush.msra.mxu0 0.0
      %8755 = vmatpush.msra.mxu0 0.0
      %8756 = vmatpush.msra.mxu0 0.0
      %8757 = vmatpush.msra.mxu0 0.0
      %8758 = vmatpush.msra.mxu0 0.0
      %8759 = vmatpush.msra.mxu0 0.0
      %8760 = vmatpush.msra.mxu0 0.0
      %8761 = vmatpush.msra.mxu0 %v8601
      %8762 = vmatmul.f32.gmra.mxu0 %v8603
      %v8763 = vpop.f32.mrf.mxu0
      %v8764 = vadd.f32 0.0, %v8763
      %8765 = vmatmul.f32.gmra.mxu0 %v8606
      %v8766 = vpop.f32.mrf.mxu0
      %v8767 = vadd.f32 0.0, %v8766
      %8768 = vmatmul.f32.gmra.mxu0 %v8609
      %v8769 = vpop.f32.mrf.mxu0
      %v8770 = vadd.f32 0.0, %v8769
      %8771 = vmatmul.f32.gmra.mxu0 %v8612
      %v8772 = vpop.f32.mrf.mxu0
      %v8773 = vadd.f32 0.0, %v8772
      %8774 = vmatmul.f32.gmra.mxu0 %v8615
      %v8775 = vpop.f32.mrf.mxu0
      %v8776 = vadd.f32 0.0, %v8775
      %8777 = vmatmul.f32.gmra.mxu0 %v8618
      %v8778 = vpop.f32.mrf.mxu0
      %v8779 = vadd.f32 0.0, %v8778
      %8780 = vmatmul.f32.gmra.mxu0 %v8621
      %v8781 = vpop.f32.mrf.mxu0
      %v8782 = vadd.f32 0.0, %v8781
      %8783 = vmatmul.f32.gmra.mxu0 %v8624
      %v8784 = vpop.f32.mrf.mxu0
      %v8785 = vadd.f32 0.0, %v8784
      %8786 = vmatmul.f32.gmra.mxu0 %v8627
      %v8787 = vpop.f32.mrf.mxu0
      %v8788 = vadd.f32 0.0, %v8787
      %8789 = vmatmul.f32.gmra.mxu0 %v8630
      %v8790 = vpop.f32.mrf.mxu0
      %v8791 = vadd.f32 0.0, %v8790
      %8792 = vmatmul.f32.gmra.mxu0 %v8633
      %v8793 = vpop.f32.mrf.mxu0
      %v8794 = vadd.f32 0.0, %v8793
      %8795 = vmatmul.f32.gmra.mxu0 %v8636
      %v8796 = vpop.f32.mrf.mxu0
      %v8797 = vadd.f32 0.0, %v8796
      %8798 = vmatmul.f32.gmra.mxu0 %v8639
      %v8799 = vpop.f32.mrf.mxu0
      %v8800 = vadd.f32 0.0, %v8799
      %8801 = vmatmul.f32.gmra.mxu0 %v8642
      %v8802 = vpop.f32.mrf.mxu0
      %v8803 = vadd.f32 0.0, %v8802
      %8804 = vmatmul.f32.gmra.mxu0 %v8645
      %v8805 = vpop.f32.mrf.mxu0
      %v8806 = vadd.f32 0.0, %v8805
      %8807 = vmatmul.f32.gmra.mxu0 %v8648
      %v8808 = vpop.f32.mrf.mxu0
      %v8809 = vadd.f32 0.0, %v8808
      %8810 = vmatmul.f32.gmra.mxu0 %v8651
      %v8811 = vpop.f32.mrf.mxu0
      %v8812 = vadd.f32 0.0, %v8811
      %8813 = vmatmul.f32.gmra.mxu0 %v8654
      %v8814 = vpop.f32.mrf.mxu0
      %v8815 = vadd.f32 0.0, %v8814
      %8816 = vmatmul.f32.gmra.mxu0 %v8657
      %v8817 = vpop.f32.mrf.mxu0
      %v8818 = vadd.f32 0.0, %v8817
      %8819 = vmatmul.f32.gmra.mxu0 %v8660
      %v8820 = vpop.f32.mrf.mxu0
      %v8821 = vadd.f32 0.0, %v8820
      %8822 = vmatmul.f32.gmra.mxu0 %v8663
      %v8823 = vpop.f32.mrf.mxu0
      %v8824 = vadd.f32 0.0, %v8823
      %8825 = vmatmul.f32.gmra.mxu0 %v8666
      %v8826 = vpop.f32.mrf.mxu0
      %v8827 = vadd.f32 0.0, %v8826
      %8828 = vmatmul.f32.gmra.mxu0 %v8669
      %v8829 = vpop.f32.mrf.mxu0
      %v8830 = vadd.f32 0.0, %v8829
      %8831 = vmatmul.f32.gmra.mxu0 %v8672
      %v8832 = vpop.f32.mrf.mxu0
      %v8833 = vadd.f32 0.0, %v8832
      %8834 = vmatmul.f32.gmra.mxu0 %v8675
      %v8835 = vpop.f32.mrf.mxu0
      %v8836 = vadd.f32 0.0, %v8835
      %8837 = vmatmul.f32.gmra.mxu0 %v8678
      %v8838 = vpop.f32.mrf.mxu0
      %v8839 = vadd.f32 0.0, %v8838
      %8840 = vmatmul.f32.gmra.mxu0 %v8681
      %v8841 = vpop.f32.mrf.mxu0
      %v8842 = vadd.f32 0.0, %v8841
      %8843 = vmatmul.f32.gmra.mxu0 %v8684
      %v8844 = vpop.f32.mrf.mxu0
      %v8845 = vadd.f32 0.0, %v8844
      %8846 = vmatmul.f32.gmra.mxu0 %v8687
      %v8847 = vpop.f32.mrf.mxu0
      %v8848 = vadd.f32 0.0, %v8847
      %8849 = vmatmul.f32.gmra.mxu0 %v8690
      %v8850 = vpop.f32.mrf.mxu0
      %v8851 = vadd.f32 0.0, %v8850
      %8852 = vmatmul.f32.gmra.mxu0 %v8693
      %v8853 = vpop.f32.mrf.mxu0
      %v8854 = vadd.f32 0.0, %v8853
      %8855 = vmatmul.f32.gmra.mxu0 %v8696
      %v8856 = vpop.f32.mrf.mxu0
      %v8857 = vadd.f32 0.0, %v8856
      %8858 = vmatmul.f32.gmra.mxu0 %v8699
      %v8859 = vpop.f32.mrf.mxu0
      %v8860 = vadd.f32 0.0, %v8859
      %8861 = vmatmul.f32.gmra.mxu0 %v8702
      %v8862 = vpop.f32.mrf.mxu0
      %v8863 = vadd.f32 0.0, %v8862
      %8864 = vmatmul.f32.gmra.mxu0 %v8705
      %v8865 = vpop.f32.mrf.mxu0
      %v8866 = vadd.f32 0.0, %v8865
      %8867 = vmatmul.f32.gmra.mxu0 %v8708
      %v8868 = vpop.f32.mrf.mxu0
      %v8869 = vadd.f32 0.0, %v8868
      %8870 = vmatmul.f32.gmra.mxu0 %v8711
      %v8871 = vpop.f32.mrf.mxu0
      %v8872 = vadd.f32 0.0, %v8871
      %8873 = vmatmul.f32.gmra.mxu0 %v8714
      %v8874 = vpop.f32.mrf.mxu0
      %v8875 = vadd.f32 0.0, %v8874
      %8876 = vmatmul.f32.gmra.mxu0 %v8717
      %v8877 = vpop.f32.mrf.mxu0
      %v8878 = vadd.f32 0.0, %v8877
      %8879 = vmatmul.f32.gmra.mxu0 %v8720
      %v8880 = vpop.f32.mrf.mxu0
      %v8881 = vadd.f32 0.0, %v8880
      %8882 = vmatmul.f32.gmra.mxu0 %v8723
      %v8883 = vpop.f32.mrf.mxu0
      %v8884 = vadd.f32 0.0, %v8883
      %8885 = vmatmul.f32.gmra.mxu0 %v8726
      %v8886 = vpop.f32.mrf.mxu0
      %v8887 = vadd.f32 0.0, %v8886
      %8888 = vmatmul.f32.gmra.mxu0 %v8729
      %v8889 = vpop.f32.mrf.mxu0
      %v8890 = vadd.f32 0.0, %v8889
      %8891 = vmatmul.f32.gmra.mxu0 %v8732
      %v8892 = vpop.f32.mrf.mxu0
      %v8893 = vadd.f32 0.0, %v8892
      %8894 = vmatmul.f32.gmra.mxu0 %v8735
      %v8895 = vpop.f32.mrf.mxu0
      %v8896 = vadd.f32 0.0, %v8895
      %8897 = vmatmul.f32.gmra.mxu0 %v8738
      %v8898 = vpop.f32.mrf.mxu0
      %v8899 = vadd.f32 0.0, %v8898
      %8900 = vmatmul.f32.gmra.mxu0 %v8741
      %v8901 = vpop.f32.mrf.mxu0
      %v8902 = vadd.f32 0.0, %v8901
      %8903 = vmatmul.f32.gmra.mxu0 %v8744
      %v8904 = vpop.f32.mrf.mxu0
      %v8905 = vadd.f32 0.0, %v8904
      %8906 = vdwg.mxu0
      %v8907 = vadd.f32 %v8504, %v8764
      %v8908 = vadd.f32 %v8505, %v8767
      %v8909 = vadd.f32 %v8506, %v8770
      %v8910 = vadd.f32 %v8507, %v8773
      %v8911 = vadd.f32 %v8508, %v8776
      %v8912 = vadd.f32 %v8509, %v8779
      %v8913 = vadd.f32 %v8510, %v8782
      %v8914 = vadd.f32 %v8511, %v8785
      %v8915 = vadd.f32 %v8512, %v8788
      %v8916 = vadd.f32 %v8513, %v8791
      %v8917 = vadd.f32 %v8514, %v8794
      %v8918 = vadd.f32 %v8515, %v8797
      %v8919 = vadd.f32 %v8516, %v8800
      %v8920 = vadd.f32 %v8517, %v8803
      %v8921 = vadd.f32 %v8518, %v8806
      %v8922 = vadd.f32 %v8519, %v8809
      %v8923 = vadd.f32 %v8520, %v8812
      %v8924 = vadd.f32 %v8521, %v8815
      %v8925 = vadd.f32 %v8522, %v8818
      %v8926 = vadd.f32 %v8523, %v8821
      %v8927 = vadd.f32 %v8524, %v8824
      %v8928 = vadd.f32 %v8525, %v8827
      %v8929 = vadd.f32 %v8526, %v8830
      %v8930 = vadd.f32 %v8527, %v8833
      %v8931 = vadd.f32 %v8528, %v8836
      %v8932 = vadd.f32 %v8529, %v8839
      %v8933 = vadd.f32 %v8530, %v8842
      %v8934 = vadd.f32 %v8531, %v8845
      %v8935 = vadd.f32 %v8532, %v8848
      %v8936 = vadd.f32 %v8533, %v8851
      %v8937 = vadd.f32 %v8534, %v8854
      %v8938 = vadd.f32 %v8535, %v8857
      %v8939 = vadd.f32 %v8536, %v8860
      %v8940 = vadd.f32 %v8537, %v8863
      %v8941 = vadd.f32 %v8538, %v8866
      %v8942 = vadd.f32 %v8539, %v8869
      %v8943 = vadd.f32 %v8540, %v8872
      %v8944 = vadd.f32 %v8541, %v8875
      %v8945 = vadd.f32 %v8542, %v8878
      %v8946 = vadd.f32 %v8543, %v8881
      %v8947 = vadd.f32 %v8544, %v8884
      %v8948 = vadd.f32 %v8545, %v8887
      %v8949 = vadd.f32 %v8546, %v8890
      %v8950 = vadd.f32 %v8547, %v8893
      %v8951 = vadd.f32 %v8548, %v8896
      %v8952 = vadd.f32 %v8549, %v8899
      %v8953 = vadd.f32 %v8550, %v8902
      %v8954 = vadd.f32 %v8551, %v8905
      %v8955 = vld [vmem:[%s7] sm:$0x1]
      %v8957 = vperm.slane %v8955, 0
      %v8959 = vadd.f32 %v8907, %v8957
      %v8960 = vadd.f32 %v8908, %v8957
      %v8961 = vadd.f32 %v8909, %v8957
      %v8962 = vadd.f32 %v8910, %v8957
      %v8963 = vadd.f32 %v8911, %v8957
      %v8964 = vadd.f32 %v8912, %v8957
      %v8965 = vadd.f32 %v8913, %v8957
      %v8966 = vadd.f32 %v8914, %v8957
      %v8967 = vadd.f32 %v8915, %v8957
      %v8968 = vadd.f32 %v8916, %v8957
      %v8969 = vadd.f32 %v8917, %v8957
      %v8970 = vadd.f32 %v8918, %v8957
      %v8971 = vadd.f32 %v8919, %v8957
      %v8972 = vadd.f32 %v8920, %v8957
      %v8973 = vadd.f32 %v8921, %v8957
      %v8974 = vadd.f32 %v8922, %v8957
      %v8975 = vadd.f32 %v8923, %v8957
      %v8976 = vadd.f32 %v8924, %v8957
      %v8977 = vadd.f32 %v8925, %v8957
      %v8978 = vadd.f32 %v8926, %v8957
      %v8979 = vadd.f32 %v8927, %v8957
      %v8980 = vadd.f32 %v8928, %v8957
      %v8981 = vadd.f32 %v8929, %v8957
      %v8982 = vadd.f32 %v8930, %v8957
      %v8983 = vadd.f32 %v8931, %v8957
      %v8984 = vadd.f32 %v8932, %v8957
      %v8985 = vadd.f32 %v8933, %v8957
      %v8986 = vadd.f32 %v8934, %v8957
      %v8987 = vadd.f32 %v8935, %v8957
      %v8988 = vadd.f32 %v8936, %v8957
      %v8989 = vadd.f32 %v8937, %v8957
      %v8990 = vadd.f32 %v8938, %v8957
      %v8991 = vadd.f32 %v8939, %v8957
      %v8992 = vadd.f32 %v8940, %v8957
      %v8993 = vadd.f32 %v8941, %v8957
      %v8994 = vadd.f32 %v8942, %v8957
      %v8995 = vadd.f32 %v8943, %v8957
      %v8996 = vadd.f32 %v8944, %v8957
      %v8997 = vadd.f32 %v8945, %v8957
      %v8998 = vadd.f32 %v8946, %v8957
      %v8999 = vadd.f32 %v8947, %v8957
      %v9000 = vadd.f32 %v8948, %v8957
      %v9001 = vadd.f32 %v8949, %v8957
      %v9002 = vadd.f32 %v8950, %v8957
      %v9003 = vadd.f32 %v8951, %v8957
      %v9004 = vadd.f32 %v8952, %v8957
      %v9005 = vadd.f32 %v8953, %v8957
      %v9006 = vadd.f32 %v8954, %v8957
      %v9007 = vld [vmem:[%s8] sm:$0x1]
      %v9009 = vperm.slane %v9007, 0
      %v9011 = vmul.f32 %v8959, %v9009
      %v9012 = vmul.f32 %v8960, %v9009
      %v9013 = vmul.f32 %v8961, %v9009
      %v9014 = vmul.f32 %v8962, %v9009
      %v9015 = vmul.f32 %v8963, %v9009
      %v9016 = vmul.f32 %v8964, %v9009
      %v9017 = vmul.f32 %v8965, %v9009
      %v9018 = vmul.f32 %v8966, %v9009
      %v9019 = vmul.f32 %v8967, %v9009
      %v9020 = vmul.f32 %v8968, %v9009
      %v9021 = vmul.f32 %v8969, %v9009
      %v9022 = vmul.f32 %v8970, %v9009
      %v9023 = vmul.f32 %v8971, %v9009
      %v9024 = vmul.f32 %v8972, %v9009
      %v9025 = vmul.f32 %v8973, %v9009
      %v9026 = vmul.f32 %v8974, %v9009
      %v9027 = vmul.f32 %v8975, %v9009
      %v9028 = vmul.f32 %v8976, %v9009
      %v9029 = vmul.f32 %v8977, %v9009
      %v9030 = vmul.f32 %v8978, %v9009
      %v9031 = vmul.f32 %v8979, %v9009
      %v9032 = vmul.f32 %v8980, %v9009
      %v9033 = vmul.f32 %v8981, %v9009
      %v9034 = vmul.f32 %v8982, %v9009
      %v9035 = vmul.f32 %v8983, %v9009
      %v9036 = vmul.f32 %v8984, %v9009
      %v9037 = vmul.f32 %v8985, %v9009
      %v9038 = vmul.f32 %v8986, %v9009
      %v9039 = vmul.f32 %v8987, %v9009
      %v9040 = vmul.f32 %v8988, %v9009
      %v9041 = vmul.f32 %v8989, %v9009
      %v9042 = vmul.f32 %v8990, %v9009
      %v9043 = vmul.f32 %v8991, %v9009
      %v9044 = vmul.f32 %v8992, %v9009
      %v9045 = vmul.f32 %v8993, %v9009
      %v9046 = vmul.f32 %v8994, %v9009
      %v9047 = vmul.f32 %v8995, %v9009
      %v9048 = vmul.f32 %v8996, %v9009
      %v9049 = vmul.f32 %v8997, %v9009
      %v9050 = vmul.f32 %v8998, %v9009
      %v9051 = vmul.f32 %v8999, %v9009
      %v9052 = vmul.f32 %v9000, %v9009
      %v9053 = vmul.f32 %v9001, %v9009
      %v9054 = vmul.f32 %v9002, %v9009
      %v9055 = vmul.f32 %v9003, %v9009
      %v9056 = vmul.f32 %v9004, %v9009
      %v9057 = vmul.f32 %v9005, %v9009
      %v9058 = vmul.f32 %v9006, %v9009
      %v9059 = vld [vmem:[%s9] sm:$0x1]
      %v9061 = vperm.slane %v9059, 0
      %v9063 = vadd.f32 %v9011, %v9061
      %v9064 = vadd.f32 %v9012, %v9061
      %v9065 = vadd.f32 %v9013, %v9061
      %v9066 = vadd.f32 %v9014, %v9061
      %v9067 = vadd.f32 %v9015, %v9061
      %v9068 = vadd.f32 %v9016, %v9061
      %v9069 = vadd.f32 %v9017, %v9061
      %v9070 = vadd.f32 %v9018, %v9061
      %v9071 = vadd.f32 %v9019, %v9061
      %v9072 = vadd.f32 %v9020, %v9061
      %v9073 = vadd.f32 %v9021, %v9061
      %v9074 = vadd.f32 %v9022, %v9061
      %v9075 = vadd.f32 %v9023, %v9061
      %v9076 = vadd.f32 %v9024, %v9061
      %v9077 = vadd.f32 %v9025, %v9061
      %v9078 = vadd.f32 %v9026, %v9061
      %v9079 = vadd.f32 %v9027, %v9061
      %v9080 = vadd.f32 %v9028, %v9061
      %v9081 = vadd.f32 %v9029, %v9061
      %v9082 = vadd.f32 %v9030, %v9061
      %v9083 = vadd.f32 %v9031, %v9061
      %v9084 = vadd.f32 %v9032, %v9061
      %v9085 = vadd.f32 %v9033, %v9061
      %v9086 = vadd.f32 %v9034, %v9061
      %v9087 = vadd.f32 %v9035, %v9061
      %v9088 = vadd.f32 %v9036, %v9061
      %v9089 = vadd.f32 %v9037, %v9061
      %v9090 = vadd.f32 %v9038, %v9061
      %v9091 = vadd.f32 %v9039, %v9061
      %v9092 = vadd.f32 %v9040, %v9061
      %v9093 = vadd.f32 %v9041, %v9061
      %v9094 = vadd.f32 %v9042, %v9061
      %v9095 = vadd.f32 %v9043, %v9061
      %v9096 = vadd.f32 %v9044, %v9061
      %v9097 = vadd.f32 %v9045, %v9061
      %v9098 = vadd.f32 %v9046, %v9061
      %v9099 = vadd.f32 %v9047, %v9061
      %v9100 = vadd.f32 %v9048, %v9061
      %v9101 = vadd.f32 %v9049, %v9061
      %v9102 = vadd.f32 %v9050, %v9061
      %v9103 = vadd.f32 %v9051, %v9061
      %v9104 = vadd.f32 %v9052, %v9061
      %v9105 = vadd.f32 %v9053, %v9061
      %v9106 = vadd.f32 %v9054, %v9061
      %v9107 = vadd.f32 %v9055, %v9061
      %v9108 = vadd.f32 %v9056, %v9061
      %v9109 = vadd.f32 %v9057, %v9061
      %v9110 = vadd.f32 %v9058, %v9061
      %v9111 = vld [vmem:[#allocation3 + $0x19] sm:$0xff]
      %v9112 = vld [vmem:[#allocation3 + $0x21] sm:$0xff]
      %v9113 = vld [vmem:[#allocation3 + $0x29] sm:$0xff]
      %v9114 = vld [vmem:[#allocation3 + $0x31] sm:$0xff]
      %v9115 = vld [vmem:[#allocation3 + $0x39] sm:$0xff]
      %v9116 = vld [vmem:[#allocation3 + $0x41] sm:$0xff]
      %v9117 = vld [vmem:[#allocation3 + $0x49] sm:$0xff]
      %v9118 = vld [vmem:[#allocation3 + $0x51] sm:$0xff]
      %v9119 = vld [vmem:[#allocation3 + $0x59] sm:$0xff]
      %v9120 = vld [vmem:[#allocation3 + $0x61] sm:$0xff]
      %v9121 = vld [vmem:[#allocation3 + $0x69] sm:$0xff]
      %v9122 = vld [vmem:[#allocation3 + $0x71] sm:$0xff]
      %v9123 = vld [vmem:[#allocation3 + $0x79] sm:$0xff]
      %v9124 = vld [vmem:[#allocation3 + $0x81] sm:$0xff]
      %v9125 = vld [vmem:[#allocation3 + $0x89] sm:$0xff]
      %v9126 = vld [vmem:[#allocation3 + $0x91] sm:$0xff]
      %v9127 = vld [vmem:[#allocation3 + $0x99] sm:$0xff]
      %v9128 = vld [vmem:[#allocation3 + $0xa1] sm:$0xff]
      %v9129 = vld [vmem:[#allocation3 + $0xa9] sm:$0xff]
      %v9130 = vld [vmem:[#allocation3 + $0xb1] sm:$0xff]
      %v9131 = vld [vmem:[#allocation3 + $0xb9] sm:$0xff]
      %v9132 = vld [vmem:[#allocation3 + $0xc1] sm:$0xff]
      %v9133 = vld [vmem:[#allocation3 + $0xc9] sm:$0xff]
      %v9134 = vld [vmem:[#allocation3 + $0xd1] sm:$0xff]
      %v9135 = vld [vmem:[#allocation3 + $0xd9] sm:$0xff]
      %v9136 = vld [vmem:[#allocation3 + $0xe1] sm:$0xff]
      %v9137 = vld [vmem:[#allocation3 + $0xe9] sm:$0xff]
      %v9138 = vld [vmem:[#allocation3 + $0xf1] sm:$0xff]
      %v9139 = vld [vmem:[#allocation3 + $0xf9] sm:$0xff]
      %v9140 = vld [vmem:[#allocation3 + $0x101] sm:$0xff]
      %v9141 = vld [vmem:[#allocation3 + $0x109] sm:$0xff]
      %v9142 = vld [vmem:[#allocation3 + $0x111] sm:$0xff]
      %v9143 = vld [vmem:[#allocation3 + $0x119] sm:$0xff]
      %v9144 = vld [vmem:[#allocation3 + $0x121] sm:$0xff]
      %v9145 = vld [vmem:[#allocation3 + $0x129] sm:$0xff]
      %v9146 = vld [vmem:[#allocation3 + $0x131] sm:$0xff]
      %v9147 = vld [vmem:[#allocation3 + $0x139] sm:$0xff]
      %v9148 = vld [vmem:[#allocation3 + $0x141] sm:$0xff]
      %v9149 = vld [vmem:[#allocation3 + $0x149] sm:$0xff]
      %v9150 = vld [vmem:[#allocation3 + $0x151] sm:$0xff]
      %v9151 = vld [vmem:[#allocation3 + $0x159] sm:$0xff]
      %v9152 = vld [vmem:[#allocation3 + $0x161] sm:$0xff]
      %v9153 = vld [vmem:[#allocation3 + $0x169] sm:$0xff]
      %v9154 = vld [vmem:[#allocation3 + $0x171] sm:$0xff]
      %v9155 = vld [vmem:[#allocation3 + $0x179] sm:$0xff]
      %v9156 = vld [vmem:[#allocation3 + $0x181] sm:$0xff]
      %v9157 = vld [vmem:[#allocation3 + $0x189] sm:$0xff]
      %v9158 = vld [vmem:[#allocation3 + $0x191] sm:$0xff]
      %v9159 = vadd.f32 %v9063, %v9111
      %v9160 = vadd.f32 %v9064, %v9112
      %v9161 = vadd.f32 %v9065, %v9113
      %v9162 = vadd.f32 %v9066, %v9114
      %v9163 = vadd.f32 %v9067, %v9115
      %v9164 = vadd.f32 %v9068, %v9116
      %v9165 = vadd.f32 %v9069, %v9117
      %v9166 = vadd.f32 %v9070, %v9118
      %v9167 = vadd.f32 %v9071, %v9119
      %v9168 = vadd.f32 %v9072, %v9120
      %v9169 = vadd.f32 %v9073, %v9121
      %v9170 = vadd.f32 %v9074, %v9122
      %v9171 = vadd.f32 %v9075, %v9123
      %v9172 = vadd.f32 %v9076, %v9124
      %v9173 = vadd.f32 %v9077, %v9125
      %v9174 = vadd.f32 %v9078, %v9126
      %v9175 = vadd.f32 %v9079, %v9127
      %v9176 = vadd.f32 %v9080, %v9128
      %v9177 = vadd.f32 %v9081, %v9129
      %v9178 = vadd.f32 %v9082, %v9130
      %v9179 = vadd.f32 %v9083, %v9131
      %v9180 = vadd.f32 %v9084, %v9132
      %v9181 = vadd.f32 %v9085, %v9133
      %v9182 = vadd.f32 %v9086, %v9134
      %v9183 = vadd.f32 %v9087, %v9135
      %v9184 = vadd.f32 %v9088, %v9136
      %v9185 = vadd.f32 %v9089, %v9137
      %v9186 = vadd.f32 %v9090, %v9138
      %v9187 = vadd.f32 %v9091, %v9139
      %v9188 = vadd.f32 %v9092, %v9140
      %v9189 = vadd.f32 %v9093, %v9141
      %v9190 = vadd.f32 %v9094, %v9142
      %v9191 = vadd.f32 %v9095, %v9143
      %v9192 = vadd.f32 %v9096, %v9144
      %v9193 = vadd.f32 %v9097, %v9145
      %v9194 = vadd.f32 %v9098, %v9146
      %v9195 = vadd.f32 %v9099, %v9147
      %v9196 = vadd.f32 %v9100, %v9148
      %v9197 = vadd.f32 %v9101, %v9149
      %v9198 = vadd.f32 %v9102, %v9150
      %v9199 = vadd.f32 %v9103, %v9151
      %v9200 = vadd.f32 %v9104, %v9152
      %v9201 = vadd.f32 %v9105, %v9153
      %v9202 = vadd.f32 %v9106, %v9154
      %v9203 = vadd.f32 %v9107, %v9155
      %v9204 = vadd.f32 %v9108, %v9156
      %v9205 = vadd.f32 %v9109, %v9157
      %v9206 = vadd.f32 %v9110, %v9158
      %v9207 = vmax.f32 %v9159, 0.0
      %v9208 = vmax.f32 %v9160, 0.0
      %v9209 = vmax.f32 %v9161, 0.0
      %v9210 = vmax.f32 %v9162, 0.0
      %v9211 = vmax.f32 %v9163, 0.0
      %v9212 = vmax.f32 %v9164, 0.0
      %v9213 = vmax.f32 %v9165, 0.0
      %v9214 = vmax.f32 %v9166, 0.0
      %v9215 = vmax.f32 %v9167, 0.0
      %v9216 = vmax.f32 %v9168, 0.0
      %v9217 = vmax.f32 %v9169, 0.0
      %v9218 = vmax.f32 %v9170, 0.0
      %v9219 = vmax.f32 %v9171, 0.0
      %v9220 = vmax.f32 %v9172, 0.0
      %v9221 = vmax.f32 %v9173, 0.0
      %v9222 = vmax.f32 %v9174, 0.0
      %v9223 = vmax.f32 %v9175, 0.0
      %v9224 = vmax.f32 %v9176, 0.0
      %v9225 = vmax.f32 %v9177, 0.0
      %v9226 = vmax.f32 %v9178, 0.0
      %v9227 = vmax.f32 %v9179, 0.0
      %v9228 = vmax.f32 %v9180, 0.0
      %v9229 = vmax.f32 %v9181, 0.0
      %v9230 = vmax.f32 %v9182, 0.0
      %v9231 = vmax.f32 %v9183, 0.0
      %v9232 = vmax.f32 %v9184, 0.0
      %v9233 = vmax.f32 %v9185, 0.0
      %v9234 = vmax.f32 %v9186, 0.0
      %v9235 = vmax.f32 %v9187, 0.0
      %v9236 = vmax.f32 %v9188, 0.0
      %v9237 = vmax.f32 %v9189, 0.0
      %v9238 = vmax.f32 %v9190, 0.0
      %v9239 = vmax.f32 %v9191, 0.0
      %v9240 = vmax.f32 %v9192, 0.0
      %v9241 = vmax.f32 %v9193, 0.0
      %v9242 = vmax.f32 %v9194, 0.0
      %v9243 = vmax.f32 %v9195, 0.0
      %v9244 = vmax.f32 %v9196, 0.0
      %v9245 = vmax.f32 %v9197, 0.0
      %v9246 = vmax.f32 %v9198, 0.0
      %v9247 = vmax.f32 %v9199, 0.0
      %v9248 = vmax.f32 %v9200, 0.0
      %v9249 = vmax.f32 %v9201, 0.0
      %v9250 = vmax.f32 %v9202, 0.0
      %v9251 = vmax.f32 %v9203, 0.0
      %v9252 = vmax.f32 %v9204, 0.0
      %v9253 = vmax.f32 %v9205, 0.0
      %v9254 = vmax.f32 %v9206, 0.0
      %9255 = vst.msk [vmem:[%s395] sm:$0xff] %vm4433, %v9207
      %9256 = vst.msk [vmem:[%s395 + $0x8] sm:$0xff] %vm4433, %v9208
      %9257 = vst.msk [vmem:[%s395 + $0x10] sm:$0xff] %vm4433, %v9209
      %9258 = vst.msk [vmem:[%s395 + $0x18] sm:$0xff] %vm4433, %v9210
      %9259 = vst.msk [vmem:[%s395 + $0x20] sm:$0xff] %vm4433, %v9211
      %9260 = vst.msk [vmem:[%s395 + $0x28] sm:$0xff] %vm4433, %v9212
      %9261 = vst.msk [vmem:[%s395 + $0x30] sm:$0xff] %vm4433, %v9213
      %9262 = vst.msk [vmem:[%s395 + $0x38] sm:$0xff] %vm4433, %v9214
      %9263 = vst.msk [vmem:[%s395 + $0x40] sm:$0xff] %vm4433, %v9215
      %9264 = vst.msk [vmem:[%s395 + $0x48] sm:$0xff] %vm4433, %v9216
      %9265 = vst.msk [vmem:[%s395 + $0x50] sm:$0xff] %vm4433, %v9217
      %9266 = vst.msk [vmem:[%s395 + $0x58] sm:$0xff] %vm4433, %v9218
      %9267 = vst.msk [vmem:[%s395 + $0x60] sm:$0xff] %vm4433, %v9219
      %9268 = vst.msk [vmem:[%s395 + $0x68] sm:$0xff] %vm4433, %v9220
      %9269 = vst.msk [vmem:[%s395 + $0x70] sm:$0xff] %vm4433, %v9221
      %9270 = vst.msk [vmem:[%s395 + $0x78] sm:$0xff] %vm4433, %v9222
      %9271 = vst.msk [vmem:[%s395 + $0x80] sm:$0xff] %vm4433, %v9223
      %9272 = vst.msk [vmem:[%s395 + $0x88] sm:$0xff] %vm4433, %v9224
      %9273 = vst.msk [vmem:[%s395 + $0x90] sm:$0xff] %vm4433, %v9225
      %9274 = vst.msk [vmem:[%s395 + $0x98] sm:$0xff] %vm4433, %v9226
      %9275 = vst.msk [vmem:[%s395 + $0xa0] sm:$0xff] %vm4433, %v9227
      %9276 = vst.msk [vmem:[%s395 + $0xa8] sm:$0xff] %vm4433, %v9228
      %9277 = vst.msk [vmem:[%s395 + $0xb0] sm:$0xff] %vm4433, %v9229
      %9278 = vst.msk [vmem:[%s395 + $0xb8] sm:$0xff] %vm4433, %v9230
      %9279 = vst.msk [vmem:[%s395 + $0xc0] sm:$0xff] %vm4433, %v9231
      %9280 = vst.msk [vmem:[%s395 + $0xc8] sm:$0xff] %vm4433, %v9232
      %9281 = vst.msk [vmem:[%s395 + $0xd0] sm:$0xff] %vm4433, %v9233
      %9282 = vst.msk [vmem:[%s395 + $0xd8] sm:$0xff] %vm4433, %v9234
      %9283 = vst.msk [vmem:[%s395 + $0xe0] sm:$0xff] %vm4433, %v9235
      %9284 = vst.msk [vmem:[%s395 + $0xe8] sm:$0xff] %vm4433, %v9236
      %9285 = vst.msk [vmem:[%s395 + $0xf0] sm:$0xff] %vm4433, %v9237
      %9286 = vst.msk [vmem:[%s395 + $0xf8] sm:$0xff] %vm4433, %v9238
      %9287 = vst.msk [vmem:[%s395 + $0x100] sm:$0xff] %vm4433, %v9239
      %9288 = vst.msk [vmem:[%s395 + $0x108] sm:$0xff] %vm4433, %v9240
      %9289 = vst.msk [vmem:[%s395 + $0x110] sm:$0xff] %vm4433, %v9241
      %9290 = vst.msk [vmem:[%s395 + $0x118] sm:$0xff] %vm4433, %v9242
      %9291 = vst.msk [vmem:[%s395 + $0x120] sm:$0xff] %vm4433, %v9243
      %9292 = vst.msk [vmem:[%s395 + $0x128] sm:$0xff] %vm4433, %v9244
      %9293 = vst.msk [vmem:[%s395 + $0x130] sm:$0xff] %vm4433, %v9245
      %9294 = vst.msk [vmem:[%s395 + $0x138] sm:$0xff] %vm4433, %v9246
      %9295 = vst.msk [vmem:[%s395 + $0x140] sm:$0xff] %vm4433, %v9247
      %9296 = vst.msk [vmem:[%s395 + $0x148] sm:$0xff] %vm4433, %v9248
      %9297 = vst.msk [vmem:[%s395 + $0x150] sm:$0xff] %vm4433, %v9249
      %9298 = vst.msk [vmem:[%s395 + $0x158] sm:$0xff] %vm4433, %v9250
      %9299 = vst.msk [vmem:[%s395 + $0x160] sm:$0xff] %vm4433, %v9251
      %9300 = vst.msk [vmem:[%s395 + $0x168] sm:$0xff] %vm4433, %v9252
      %9301 = vst.msk [vmem:[%s395 + $0x170] sm:$0xff] %vm4433, %v9253
      %9302 = vst.msk [vmem:[%s395 + $0x178] sm:$0xff] %vm4433, %v9254
      %p9303 = scmp.lt.s32.totalorder %s25, 1
      %s9304 = scalar_select %p9303, %s25, 1
      %p9305 = scmp.lt.s32.totalorder %s26, 0
      %s9306 = scalar_select %p9305, %s26, 0
      %s9307 = smul.addr %s9306, 48
      %s9308 = smul.addr %s9304, 48
      %s9309 = sadd.s32 %s9307, %s9308
      %s9310 = smul.addr %s9309, 8
      %s9311 = scalar_lea.vmem %s10, %s9310
      // Predicated region
      $region61: #{tpu_custom_call.1} parent=59 // pred_check
        %p9312 = pneg %p270
      $region62: #{tpu_custom_call.1} parent=59 // pred_check_branch
        %9314 = sbr.rel (%p9312) target = $region64
      $region63: #{tpu_custom_call.1} parent=59 // pred_region
        _
      $region64: #{tpu_custom_call.1} parent=59 // pred_fallthru
        _
    $region60: #{tpu_custom_call.1} parent=5 // pred_fallthru
      _
    %p9315 = scmp.le.s32.totalorder 2, %s16
    // Predicated region
    $region65: #{tpu_custom_call.1} parent=5 // pred_check
      %p9316 = pneg %p9315
    $region66: #{tpu_custom_call.1} parent=5 // pred_check_branch
      %9318 = sbr.rel (%p9316) target = $region68
    $region67: #{tpu_custom_call.1} parent=5 // pred_region
      %s9319 = ssub.s32 %s16, 2
      // Predicated region
      $region69: #{tpu_custom_call.1} parent=67 // pred_check
        %p9320 = pneg %p276
      $region70: #{tpu_custom_call.1} parent=67 // pred_check_branch
        %9322 = sbr.rel (%p9320) target = $region72
      $region71: #{tpu_custom_call.1} parent=67 // pred_region
        %p9323 = scmp.lt.s32.totalorder %s27, 1
        %s9324 = scalar_select %p9323, %s27, 1
        %p9325 = scmp.lt.s32.totalorder %s28, 0
        %s9326 = scalar_select %p9325, %s28, 0
        %s9327 = smul.addr %s9326, 48
        %s9328 = smul.addr %s9324, 48
        %s9329 = sadd.s32 %s9327, %s9328
        %s9330 = smul.addr %s9329, 8
        %s9331 = scalar_lea.vmem %s10, %s9330
      $region72: #{tpu_custom_call.1} parent=67 // pred_fallthru
        _
    $region68: #{tpu_custom_call.1} parent=5 // pred_fallthru
      _
  $region6: #{tpu_custom_call.1} parent=0 // loop_footer
    %s20 = sadd.s32 1, %s16
  $region7: #{tpu_custom_call.1} parent=0 // loop_footer_branch
    %15 = sbr.rel target = $region3
  $region8: #{tpu_custom_call.1} parent=0 // loop_exit
    _

</llo_original>
